<compile_context>
chip_gen: v5e
topology: v5e:2x2
jax: 0.10.0
libtpu: 0.0.40
codegen_flags: <defaults>
</compile_context>

<pallas_src>
import math
import functools

import jax
import jax.numpy as jnp
from jax.experimental import pallas as pl
from jax.experimental.pallas import tpu as pltpu


# =============================================================================
# Kernel A: temporal attention (+dropout(id)+residual+ReLU) + temporal conv GLU
#   per-batch layout: x (N, T, C) -> y (N, Tp, c0), att_t (N, T, T)
#   (the Align zero-pad residual is pre-folded into wconv in the wrapper)
# =============================================================================
def _block_a_kernel(x_ref, wqkv_ref, bqkv_ref, wo_ref, bo_ref,
                    wconv_ref, bconv_ref, y_ref, att_ref):
    _, N, T, C = x_ref.shape
    Kt = wconv_ref.shape[0] // C
    c0 = wconv_ref.shape[1] // 2
    Tp = T - Kt + 1

    x3 = x_ref[0]                                      # (N, T, C)
    xf = x3.reshape(N * T, C)                          # one slab feeds the MXU

    # ---- fused q/k/v projection: single (N*T, C) x (C, 3C) matmul ----
    qkv = jnp.dot(xf, wqkv_ref[...], preferred_element_type=jnp.float32) + bqkv_ref[0]
    q = qkv[:, :C].reshape(N, T, C)
    k = qkv[:, C:2 * C].reshape(N, T, C)
    v = qkv[:, 2 * C:].reshape(N, T, C)

    # ---- single-head full attention over T, batched over the N vertices ----
    s = jnp.einsum('ntd,nmd->ntm', q, k,
                   preferred_element_type=jnp.float32) * (1.0 / math.sqrt(C))
    att = jax.nn.softmax(s, axis=-1)                   # (N, T, T)
    att_ref[0] = att                                   # last dim < 128 -> masked store (tiny)
    o = jnp.einsum('ntm,nmd->ntd', att, v, preferred_element_type=jnp.float32)
    of = jnp.dot(o.reshape(N * T, C), wo_ref[...],
                 preferred_element_type=jnp.float32) + bo_ref[0]
    yt = jnp.maximum(of + xf, 0.0)                     # dropout(eval)=id, +residual, ReLU
    yt3 = yt.reshape(N, T, C)

    # ---- causal temporal conv (Kt,1) + GLU, im2col: ONE matmul ----
    # wconv already contains the [I | 0] Align residual folded into the
    # kk = Kt-1 block of rows (first c0 output columns), so conv[:, :c0]
    # is already (P_conv + x_in).
    xcat = jnp.concatenate(
        [yt3[:, kk:kk + Tp, :].reshape(N * Tp, C) for kk in range(Kt)], axis=1)
    conv = jnp.dot(xcat, wconv_ref[...],
                   preferred_element_type=jnp.float32) + bconv_ref[0]   # (N*Tp, 2*c0)
    glu = conv[:, :c0] * jax.nn.sigmoid(conv[:, c0:])
    y_ref[0] = glu.reshape(N, Tp, c0)


# =============================================================================
# Kernel B: spatial attention (+dropout(id)+residual+ReLU) + Align + Cheb gconv
#   per-batch layout: x (Tp, N, c0) -> y (Tp, N, c1), att_s (Tp, N, N)
#   (the graph-conv residual is pre-folded into wg in the wrapper)
# =============================================================================
def _block_b_kernel(x_ref, wqkv_ref, bqkv_ref, wo_ref, bo_ref,
                    aw_ref, ab_ref, gso_ref, wg_ref, bg_ref, y_ref, att_ref):
    _, Tp, N, c0 = x_ref.shape
    c1 = aw_ref.shape[1]
    Ks = wg_ref.shape[0] // c1

    x3 = x_ref[0]                                      # (Tp, N, c0)
    xf = x3.reshape(Tp * N, c0)

    # ---- fused q/k/v projection ----
    qkv = jnp.dot(xf, wqkv_ref[...], preferred_element_type=jnp.float32) + bqkv_ref[0]
    q = qkv[:, :c0].reshape(Tp, N, c0)
    k = qkv[:, c0:2 * c0].reshape(Tp, N, c0)
    v = qkv[:, 2 * c0:].reshape(Tp, N, c0)

    # ---- single-head full attention over the N vertices, batched over Tp ----
    s = jnp.einsum('tnd,tmd->tnm', q, k,
                   preferred_element_type=jnp.float32) * (1.0 / math.sqrt(c0))
    att = jax.nn.softmax(s, axis=-1)                   # (Tp, N, N)
    att_ref[0] = att
    o = jnp.einsum('tnm,tmd->tnd', att, v, preferred_element_type=jnp.float32)
    of = jnp.dot(o.reshape(Tp * N, c0), wo_ref[...],
                 preferred_element_type=jnp.float32) + bo_ref[0]
    ys = jnp.maximum(of + xf, 0.0)                     # (Tp*N, c0)

    # ---- GraphConvLayer: Align (1x1) + Chebyshev graph conv (+residual) ----
    x0f = jnp.dot(ys, aw_ref[...], preferred_element_type=jnp.float32) + ab_ref[0]
    x0 = x0f.reshape(Tp, N, c1)
    basis = [x0f]
    if Ks > 1:
        gso_b = gso_ref[...]                           # (Tp, N, N), pre-tiled in wrapper
        x_km1 = x0
        x_k = jnp.einsum('tnm,tmc->tnc', gso_b, x0, preferred_element_type=jnp.float32)
        basis.append(x_k.reshape(Tp * N, c1))
        for _ in range(2, Ks):                         # static unroll over Cheb order
            x_kp1 = (2.0 * jnp.einsum('tnm,tmc->tnc', gso_b, x_k,
                                      preferred_element_type=jnp.float32) - x_km1)
            basis.append(x_kp1.reshape(Tp * N, c1))
            x_km1, x_k = x_k, x_kp1
    bcat = jnp.concatenate(basis, axis=1) if Ks > 1 else basis[0]
    # ONE fused (Tp*N, Ks*c1) x (Ks*c1, c1) matmul + bias.
    # wg already has identity folded into its order-0 block -> residual included.
    yg = jnp.dot(bcat, wg_ref[...], preferred_element_type=jnp.float32) + bg_ref[0]
    y_ref[0] = yg.reshape(Tp, N, c1)


# =============================================================================
# Wrapper
# =============================================================================
def _align_matrix(c_in, c_out, w=None, b=None):
    """(A, b) so that `x @ A + b` implements STGCN Align on a channel-last tensor."""
    if c_in == c_out:
        return jnp.eye(c_in, dtype=jnp.float32), jnp.zeros((1, c_out), jnp.float32)
    if c_in < c_out:
        A = jnp.concatenate([jnp.eye(c_in, dtype=jnp.float32),
                             jnp.zeros((c_in, c_out - c_in), jnp.float32)], axis=1)
        return A, jnp.zeros((1, c_out), jnp.float32)
    if w is None:
        # TODO(synk): c_in > c_out Align needs learned 1x1 conv weights.
        raise NotImplementedError("Align with c_in > c_out requires weights")
    return w, (b if b is not None else jnp.zeros((1, c_out), jnp.float32))


def st_block_forward(x_t, params, *, Kt, Ks, c0, c1, gso):
    """ST_Block.forward. x_t: (B, N, T, C) with C == d_model_t == last_block_channel."""
    if isinstance(x_t, (tuple, list)) and len(x_t) == 3:
        x_t = x_t[0]
    B, N, T, C = x_t.shape
    Tp = T - Kt + 1

    # ---- kernel A operands (fused / re-laid-out weights, built once in XLA) ----
    pt = params["att_t"]
    wqkv_t = jnp.concatenate([pt["wq"], pt["wk"], pt["wv"]], axis=1)     # (C, 3C)
    bqkv_t = jnp.concatenate([pt["bq"], pt["bk"], pt["bv"]], axis=1)     # (1, 3C)
    wconv = params["tconv"]["w"].reshape(Kt * C, 2 * c0)                 # im2col weight
    bconv = params["tconv"]["b"]                                         # (1, 2*c0)
    # Fold the Align zero-pad residual into the conv weight: the residual input
    # is exactly the kk = Kt-1 im2col block, so add [I | 0] to those rows.
    apad, _ = _align_matrix(C, c0)                                       # (C, c0)
    wconv = wconv.at[(Kt - 1) * C:Kt * C, :c0].add(apad)

    y_a, att_t = pl.pallas_call(
        _block_a_kernel,
        out_shape=(jax.ShapeDtypeStruct((B, N, Tp, c0), jnp.float32),
                   jax.ShapeDtypeStruct((B, N, T, T), jnp.float32)),
        grid=(B,),
        in_specs=[
            pl.BlockSpec((1, N, T, C), lambda b: (b, 0, 0, 0)),
            pl.BlockSpec((C, 3 * C), lambda b: (0, 0)),
            pl.BlockSpec((1, 3 * C), lambda b: (0, 0)),
            pl.BlockSpec((C, C), lambda b: (0, 0)),
            pl.BlockSpec((1, C), lambda b: (0, 0)),
            pl.BlockSpec((Kt * C, 2 * c0), lambda b: (0, 0)),
            pl.BlockSpec((1, 2 * c0), lambda b: (0, 0)),
        ],
        out_specs=(pl.BlockSpec((1, N, Tp, c0), lambda b: (b, 0, 0, 0)),
                   pl.BlockSpec((1, N, T, T), lambda b: (b, 0, 0, 0))),
        compiler_params=pltpu.CompilerParams(dimension_semantics=("parallel",)),
    )(x_t, wqkv_t, bqkv_t, pt["wo"], pt["bo"], wconv, bconv)

    # Single tiny XLA transpose between the two fused kernels: (B,N,Tp,c0)->(B,Tp,N,c0)
    x_s = jnp.transpose(y_a, (0, 2, 1, 3))

    # ---- kernel B operands ----
    ps = params["att_s"]
    wqkv_s = jnp.concatenate([ps["wq"], ps["wk"], ps["wv"]], axis=1)     # (c0, 3*c0)
    bqkv_s = jnp.concatenate([ps["bq"], ps["bk"], ps["bv"]], axis=1)     # (1, 3*c0)
    gp = params["gconv"]
    aw, ab = _align_matrix(c0, c1, gp.get("align_w"), gp.get("align_b"))
    wg = gp["w"].reshape(Ks * c1, c1)                                    # fused Cheb weight
    # Fold the graph-conv residual (+x_al) into the order-0 block of wg.
    wg = wg.at[:c1, :].add(jnp.eye(c1, dtype=jnp.float32))
    gso_b = jnp.broadcast_to(gso.astype(jnp.float32), (Tp, N, N))        # pre-tiled (3 KB)

    y_b, att_s = pl.pallas_call(
        _block_b_kernel,
        out_shape=(jax.ShapeDtypeStruct((B, Tp, N, c1), jnp.float32),
                   jax.ShapeDtypeStruct((B, Tp, N, N), jnp.float32)),
        grid=(B,),
        in_specs=[
            pl.BlockSpec((1, Tp, N, c0), lambda b: (b, 0, 0, 0)),
            pl.BlockSpec((c0, 3 * c0), lambda b: (0, 0)),
            pl.BlockSpec((1, 3 * c0), lambda b: (0, 0)),
            pl.BlockSpec((c0, c0), lambda b: (0, 0)),
            pl.BlockSpec((1, c0), lambda b: (0, 0)),
            pl.BlockSpec((c0, c1), lambda b: (0, 0)),
            pl.BlockSpec((1, c1), lambda b: (0, 0)),
            pl.BlockSpec((Tp, N, N), lambda b: (0, 0, 0)),
            pl.BlockSpec((Ks * c1, c1), lambda b: (0, 0)),
            pl.BlockSpec((1, c1), lambda b: (0, 0)),
        ],
        out_specs=(pl.BlockSpec((1, Tp, N, c1), lambda b: (b, 0, 0, 0)),
                   pl.BlockSpec((1, Tp, N, N), lambda b: (b, 0, 0, 0))),
        compiler_params=pltpu.CompilerParams(dimension_semantics=("parallel",)),
    )(x_s, wqkv_s, bqkv_s, ps["wo"], ps["bo"], aw, ab, gso_b, wg, gp["b"])

    out = jnp.transpose(y_b, (0, 2, 1, 3))             # (B, N, Tp, c1)  final permute
    # final dropout: eval-mode identity
    return out, att_t, att_s


# =============================================================================
# Pure-JAX reference (correctness check)
# =============================================================================
def _align(x, c_out, w=None, b=None):
    c_in = x.shape[-1]
    if c_in == c_out:
        return x
    if c_in < c_out:
        pad = [(0, 0)] * (x.ndim - 1) + [(0, c_out - c_in)]
        return jnp.pad(x, pad)
    return jnp.dot(x, w) + b


def _ref_attention(x, p):
    D = x.shape[-1]
    q = x @ p["wq"] + p["bq"][0]
    k = x @ p["wk"] + p["bk"][0]
    v = x @ p["wv"] + p["bv"][0]
    s = jnp.einsum("...ld,...md->...lm", q, k) / math.sqrt(D)
    a = jax.nn.softmax(s, axis=-1)
    o = jnp.einsum("...lm,...md->...ld", a, v) @ p["wo"] + p["bo"][0]
    return jnp.maximum(o + x, 0.0), a


def _ref_forward(x_t, params, *, Kt, Ks, c0, c1, gso):
    y_t, att_t = _ref_attention(x_t, params["att_t"])
    x = jnp.transpose(y_t, (0, 2, 1, 3))
    T = x.shape[1]
    Tp = T - Kt + 1
    x_in = _align(x, c0)[:, Kt - 1:, :, :]
    conv = sum(jnp.einsum("btnc,cd->btnd", x[:, k:k + Tp], params["tconv"]["w"][k])
               for k in range(Kt)) + params["tconv"]["b"][0]
    xc = (conv[..., :c0] + x_in) * jax.nn.sigmoid(conv[..., c0:])
    y_s, att_s = _ref_attention(xc, params["att_s"])
    gp = params["gconv"]
    x_al = _align(y_s, c1, gp.get("align_w"), gp.get("align_b"))
    x0 = x_al
    x1 = jnp.einsum("hi,btic->bthc", gso, x_al)
    acc = jnp.einsum("btnc,cd->btnd", x0, gp["w"][0]) + \
          jnp.einsum("btnc,cd->btnd", x1, gp["w"][1])
    xk_1, xk = x0, x1
    for k in range(2, Ks):
        xk1 = 2.0 * jnp.einsum("hi,btic->bthc", gso, xk) - xk_1
        acc = acc + jnp.einsum("btnc,cd->btnd", xk1, gp["w"][k])
        xk_1, xk = xk, xk1
    y_g = acc + gp["b"][0] + x_al
    return jnp.transpose(y_g, (0, 2, 1, 3)), att_t, att_s


# =============================================================================
# Main
# =============================================================================
if __name__ == "__main__":
    # Kt=3, Ks=3, ko=8 -> T = ko + 2 = 10 ; n_vertex N = 10
    # last_block_channel = 32, channels = [48, 32], black_num != 1 -> d_model_t = 32
    B, N, KO, KT, KS = 2, 10, 8, 3, 3
    T = KO + KT - 1
    C_LAST, C0, C1 = 32, 48, 32

    key = jax.random.PRNGKey(0)
    keys = iter(jax.random.split(key, 32))

    def mk(shape, fan_in):
        return (jax.random.normal(next(keys), shape, jnp.float32) / math.sqrt(fan_in))

    def attn_params(d):
        return {"wq": mk((d, d), d), "wk": mk((d, d), d),
                "wv": mk((d, d), d), "wo": mk((d, d), d),
                "bq": mk((1, d), d), "bk": mk((1, d), d),
                "bv": mk((1, d), d), "bo": mk((1, d), d)}

    params = {
        "att_t": attn_params(C_LAST),
        "tconv": {"w": mk((KT, C_LAST, 2 * C0), KT * C_LAST),
                  "b": mk((1, 2 * C0), KT * C_LAST)},
        "att_s": attn_params(C0),
        "gconv": {"align_w": mk((C0, C1), C0), "align_b": mk((1, C1), C0),
                  "w": mk((KS, C1, C1), KS * C1), "b": mk((1, C1), KS * C1)},
    }

    a = jax.random.normal(next(keys), (N, N), jnp.float32)
    gso = ((a + a.T) / (2.0 * N)).astype(jnp.float32)       # symmetric graph shift op
    x_t = jax.random.normal(next(keys), (B, N, T, C_LAST), jnp.float32)

    fwd = jax.jit(functools.partial(st_block_forward, Kt=KT, Ks=KS, c0=C0, c1=C1, gso=gso))
    out, att_t, att_s = fwd(x_t, params)
    jax.block_until_ready(out)

    # Shape + numerical sanity checks against the pure-JAX reference.
    assert out.shape == (B, N, KO, C1), out.shape
    assert att_t.shape == (B, N, T, T), att_t.shape
    assert att_s.shape == (B, KO, N, N), att_s.shape
    ref_out, ref_att_t, ref_att_s = _ref_forward(
        x_t, params, Kt=KT, Ks=KS, c0=C0, c1=C1, gso=gso)
    assert jnp.allclose(out, ref_out, atol=2e-3, rtol=2e-3)
    assert jnp.allclose(att_t, ref_att_t, atol=2e-3)
    assert jnp.allclose(att_s, ref_att_s, atol=2e-3)

    print("KERNEL_OK")
</pallas_src>

<mosaic_0001>
module attributes {stable_mosaic.version = 11 : i64} {
  func.func @_block_a_kernel(%arg0: i32, %arg1: memref<1x10x10x32xf32, #tpu.memory_space<vmem>>, %arg2: memref<32x96xf32, #tpu.memory_space<vmem>>, %arg3: memref<1x96xf32, #tpu.memory_space<vmem>>, %arg4: memref<32x32xf32, #tpu.memory_space<vmem>>, %arg5: memref<1x32xf32, #tpu.memory_space<vmem>>, %arg6: memref<96x96xf32, #tpu.memory_space<vmem>>, %arg7: memref<1x96xf32, #tpu.memory_space<vmem>>, %arg8: memref<1x10x8x48xf32, #tpu.memory_space<vmem>>, %arg9: memref<1x10x10x10xf32, #tpu.memory_space<vmem>>) attributes {dimension_semantics = [#tpu.dimension_semantics<parallel>], iteration_bounds = array<i64: 2>, scalar_prefetch = 0 : i64, scratch_operands = 0 : i64, tpu.core_type = #tpu.core_type<tc>, window_params = [{transform_indices = @transform_0, window_bounds = array<i64: 1, 10, 10, 32>}, {pipeline_mode = #tpu.pipeline_mode<synchronous>, transform_indices = @transform_1, window_bounds = array<i64: 32, 96>}, {pipeline_mode = #tpu.pipeline_mode<synchronous>, transform_indices = @transform_2, window_bounds = array<i64: 1, 96>}, {pipeline_mode = #tpu.pipeline_mode<synchronous>, transform_indices = @transform_3, window_bounds = array<i64: 32, 32>}, {pipeline_mode = #tpu.pipeline_mode<synchronous>, transform_indices = @transform_4, window_bounds = array<i64: 1, 32>}, {pipeline_mode = #tpu.pipeline_mode<synchronous>, transform_indices = @transform_5, window_bounds = array<i64: 96, 96>}, {pipeline_mode = #tpu.pipeline_mode<synchronous>, transform_indices = @transform_6, window_bounds = array<i64: 1, 96>}, {transform_indices = @transform_7, window_bounds = array<i64: 1, 10, 8, 48>}, {transform_indices = @transform_8, window_bounds = array<i64: 1, 10, 10, 10>}]} {
    %c0 = arith.constant 0 : index
    %c0_0 = arith.constant 0 : index
    %c0_1 = arith.constant 0 : index
    %c0_2 = arith.constant 0 : index
    %0 = vector.load %arg1[%c0, %c0_0, %c0_1, %c0_2] : memref<1x10x10x32xf32, #tpu.memory_space<vmem>>, vector<1x10x10x32xf32>
    %1 = vector.shape_cast %0 : vector<1x10x10x32xf32> to vector<10x10x32xf32>
    %2 = vector.shape_cast %1 : vector<10x10x32xf32> to vector<100x32xf32>
    %c0_3 = arith.constant 0 : index
    %c0_4 = arith.constant 0 : index
    %3 = vector.load %arg2[%c0_3, %c0_4] : memref<32x96xf32, #tpu.memory_space<vmem>>, vector<32x96xf32>
    %cst = arith.constant dense<0.000000e+00> : vector<100x96xf32>
    %4 = tpu.matmul %2, %3, %cst {dimension_numbers = #tpu.dot_dimension_numbers<[1], [0], [0], [1], [0, 0, 1, 1], [], []>} : vector<100x32xf32>, vector<32x96xf32>, vector<100x96xf32> -> vector<100x96xf32>
    %c0_5 = arith.constant 0 : index
    %c0_6 = arith.constant 0 : index
    %5 = vector.load %arg3[%c0_5, %c0_6] : memref<1x96xf32, #tpu.memory_space<vmem>>, vector<1x96xf32>
    %6 = vector.shape_cast %5 : vector<1x96xf32> to vector<96xf32>
    %7 = vector.shape_cast %6 : vector<96xf32> to vector<1x96xf32>
    %8 = vector.broadcast %7 : vector<1x96xf32> to vector<100x96xf32>
    %9 = arith.addf %4, %8 : vector<100x96xf32>
    %10 = vector.extract_strided_slice %9 {offsets = [0, 0], sizes = [100, 32], strides = [1, 1]} : vector<100x96xf32> to vector<100x32xf32>
    %11 = vector.shape_cast %10 : vector<100x32xf32> to vector<10x10x32xf32>
    %12 = vector.extract_strided_slice %9 {offsets = [0, 32], sizes = [100, 32], strides = [1, 1]} : vector<100x96xf32> to vector<100x32xf32>
    %13 = vector.shape_cast %12 : vector<100x32xf32> to vector<10x10x32xf32>
    %14 = vector.extract_strided_slice %9 {offsets = [0, 64], sizes = [100, 32], strides = [1, 1]} : vector<100x96xf32> to vector<100x32xf32>
    %15 = vector.shape_cast %14 : vector<100x32xf32> to vector<10x10x32xf32>
    "tpu.trace_start"() <{level = 10 : i32, message = "ntd,nmd->ntm"}> : () -> ()
    %cst_7 = arith.constant dense<0.000000e+00> : vector<10x10x10xf32>
    %16 = tpu.matmul %11, %13, %cst_7 {dimension_numbers = #tpu.dot_dimension_numbers<[2], [2], [1], [1], [0, 0, 0, 1, 1, 1], [0], [0]>} : vector<10x10x32xf32>, vector<10x10x32xf32>, vector<10x10x10xf32> -> vector<10x10x10xf32>
    "tpu.trace_stop"() : () -> ()
    %cst_8 = arith.constant 0.176776692 : f32
    %17 = vector.broadcast %cst_8 : f32 to vector<10x10x10xf32>
    %18 = arith.mulf %16, %17 : vector<10x10x10xf32>
    %cst_9 = arith.constant dense<0xFF800000> : vector<10x10xf32>
    %19 = vector.multi_reduction <maximumf>, %18, %cst_9 [2] : vector<10x10x10xf32> to vector<10x10xf32>
    %cst_10 = arith.constant 0xFF800000 : f32
    %20 = vector.broadcast %cst_10 : f32 to vector<10x10xf32>
    %21 = arith.maximumf %20, %19 : vector<10x10xf32>
    %22 = vector.shape_cast %21 : vector<10x10xf32> to vector<10x10x1xf32>
    %23 = vector.broadcast %22 : vector<10x10x1xf32> to vector<10x10x10xf32>
    %24 = arith.subf %18, %23 : vector<10x10x10xf32>
    %25 = math.exp %24 : vector<10x10x10xf32>
    %cst_11 = arith.constant dense<0.000000e+00> : vector<10x10xf32>
    %26 = vector.multi_reduction <add>, %25, %cst_11 [2] : vector<10x10x10xf32> to vector<10x10xf32>
    %27 = vector.shape_cast %26 : vector<10x10xf32> to vector<10x10x1xf32>
    %28 = vector.broadcast %27 : vector<10x10x1xf32> to vector<10x10x10xf32>
    %29 = arith.divf %25, %28 : vector<10x10x10xf32>
    %c0_12 = arith.constant 0 : index
    %c0_13 = arith.constant 0 : index
    %c0_14 = arith.constant 0 : index
    %c0_15 = arith.constant 0 : index
    %30 = vector.load %arg9[%c0_12, %c0_13, %c0_14, %c0_15] : memref<1x10x10x10xf32, #tpu.memory_space<vmem>>, vector<1x10x10x10xf32>
    %31 = vector.shape_cast %30 : vector<1x10x10x10xf32> to vector<10x10x10xf32>
    %32 = vector.shape_cast %29 : vector<10x10x10xf32> to vector<1x10x10x10xf32>
    tpu.vector_store %arg9[%c0_12, %c0_13, %c0_14, %c0_15], %32 {strides = array<i32>} : memref<1x10x10x10xf32, #tpu.memory_space<vmem>>, vector<1x10x10x10xf32>,
    "tpu.trace_start"() <{level = 10 : i32, message = "ntm,nmd->ntd"}> : () -> ()
    %cst_16 = arith.constant dense<0.000000e+00> : vector<10x10x32xf32>
    %33 = tpu.matmul %29, %15, %cst_16 {dimension_numbers = #tpu.dot_dimension_numbers<[2], [1], [1], [2], [0, 0, 0, 1, 1, 2], [0], [0]>} : vector<10x10x10xf32>, vector<10x10x32xf32>, vector<10x10x32xf32> -> vector<10x10x32xf32>
    "tpu.trace_stop"() : () -> ()
    %34 = vector.shape_cast %33 : vector<10x10x32xf32> to vector<100x32xf32>
    %c0_17 = arith.constant 0 : index
    %c0_18 = arith.constant 0 : index
    %35 = vector.load %arg4[%c0_17, %c0_18] : memref<32x32xf32, #tpu.memory_space<vmem>>, vector<32x32xf32>
    %cst_19 = arith.constant dense<0.000000e+00> : vector<100x32xf32>
    %36 = tpu.matmul %34, %35, %cst_19 {dimension_numbers = #tpu.dot_dimension_numbers<[1], [0], [0], [1], [0, 0, 1, 1], [], []>} : vector<100x32xf32>, vector<32x32xf32>, vector<100x32xf32> -> vector<100x32xf32>
    %c0_20 = arith.constant 0 : index
    %c0_21 = arith.constant 0 : index
    %37 = vector.load %arg5[%c0_20, %c0_21] : memref<1x32xf32, #tpu.memory_space<vmem>>, vector<1x32xf32>
    %38 = vector.shape_cast %37 : vector<1x32xf32> to vector<32xf32>
    %39 = vector.shape_cast %38 : vector<32xf32> to vector<1x32xf32>
    %40 = vector.broadcast %39 : vector<1x32xf32> to vector<100x32xf32>
    %41 = arith.addf %36, %40 : vector<100x32xf32>
    %42 = arith.addf %41, %2 : vector<100x32xf32>
    %cst_22 = arith.constant 0.000000e+00 : f32
    %43 = vector.broadcast %cst_22 : f32 to vector<100x32xf32>
    %44 = arith.maximumf %42, %43 : vector<100x32xf32>
    %45 = vector.shape_cast %44 : vector<100x32xf32> to vector<10x10x32xf32>
    %46 = vector.extract_strided_slice %45 {offsets = [0, 0, 0], sizes = [10, 8, 32], strides = [1, 1, 1]} : vector<10x10x32xf32> to vector<10x8x32xf32>
    %47 = vector.shape_cast %46 : vector<10x8x32xf32> to vector<80x32xf32>
    %48 = vector.extract_strided_slice %45 {offsets = [0, 1, 0], sizes = [10, 8, 32], strides = [1, 1, 1]} : vector<10x10x32xf32> to vector<10x8x32xf32>
    %49 = vector.shape_cast %48 : vector<10x8x32xf32> to vector<80x32xf32>
    %50 = vector.extract_strided_slice %45 {offsets = [0, 2, 0], sizes = [10, 8, 32], strides = [1, 1, 1]} : vector<10x10x32xf32> to vector<10x8x32xf32>
    %51 = vector.shape_cast %50 : vector<10x8x32xf32> to vector<80x32xf32>
    %52 = tpu.concatenate %47, %49, %51 in 1 : vector<80x32xf32>, vector<80x32xf32>, vector<80x32xf32> -> vector<80x96xf32>
    %c0_23 = arith.constant 0 : index
    %c0_24 = arith.constant 0 : index
    %53 = vector.load %arg6[%c0_23, %c0_24] : memref<96x96xf32, #tpu.memory_space<vmem>>, vector<96x96xf32>
    %cst_25 = arith.constant dense<0.000000e+00> : vector<80x96xf32>
    %54 = tpu.matmul %52, %53, %cst_25 {dimension_numbers = #tpu.dot_dimension_numbers<[1], [0], [0], [1], [0, 0, 1, 1], [], []>} : vector<80x96xf32>, vector<96x96xf32>, vector<80x96xf32> -> vector<80x96xf32>
    %c0_26 = arith.constant 0 : index
    %c0_27 = arith.constant 0 : index
    %55 = vector.load %arg7[%c0_26, %c0_27] : memref<1x96xf32, #tpu.memory_space<vmem>>, vector<1x96xf32>
    %56 = vector.shape_cast %55 : vector<1x96xf32> to vector<96xf32>
    %57 = vector.shape_cast %56 : vector<96xf32> to vector<1x96xf32>
    %58 = vector.broadcast %57 : vector<1x96xf32> to vector<80x96xf32>
    %59 = arith.addf %54, %58 : vector<80x96xf32>
    %60 = vector.extract_strided_slice %59 {offsets = [0, 0], sizes = [80, 48], strides = [1, 1]} : vector<80x96xf32> to vector<80x48xf32>
    %61 = vector.extract_strided_slice %59 {offsets = [0, 48], sizes = [80, 48], strides = [1, 1]} : vector<80x96xf32> to vector<80x48xf32>
    %62 = arith.negf %61 : vector<80x48xf32>
    %63 = math.exp %62 : vector<80x48xf32>
    %cst_28 = arith.constant 1.000000e+00 : f32
    %64 = vector.broadcast %cst_28 : f32 to vector<80x48xf32>
    %65 = arith.addf %64, %63 : vector<80x48xf32>
    %66 = arith.divf %64, %65 : vector<80x48xf32>
    %67 = arith.mulf %60, %66 : vector<80x48xf32>
    %68 = vector.shape_cast %67 : vector<80x48xf32> to vector<10x8x48xf32>
    %c0_29 = arith.constant 0 : index
    %c0_30 = arith.constant 0 : index
    %c0_31 = arith.constant 0 : index
    %c0_32 = arith.constant 0 : index
    %69 = vector.load %arg8[%c0_29, %c0_30, %c0_31, %c0_32] : memref<1x10x8x48xf32, #tpu.memory_space<vmem>>, vector<1x10x8x48xf32>
    %70 = vector.shape_cast %69 : vector<1x10x8x48xf32> to vector<10x8x48xf32>
    %71 = vector.shape_cast %68 : vector<10x8x48xf32> to vector<1x10x8x48xf32>
    tpu.vector_store %arg8[%c0_29, %c0_30, %c0_31, %c0_32], %71 {strides = array<i32>} : memref<1x10x8x48xf32, #tpu.memory_space<vmem>>, vector<1x10x8x48xf32>,
    return
  }
  func.func @transform_0(%arg0: i32) -> (i32, i32, i32, i32) {
    %c0_i32 = arith.constant 0 : i32
    %c0_i32_0 = arith.constant 0 : i32
    %c0_i32_1 = arith.constant 0 : i32
    %c0_i32_2 = arith.constant 0 : i32
    return %arg0, %c0_i32, %c0_i32_0, %c0_i32_1 : i32, i32, i32, i32
  }
  func.func @transform_1(%arg0: i32) -> (i32, i32) {
    %c0_i32 = arith.constant 0 : i32
    %c0_i32_0 = arith.constant 0 : i32
    %c0_i32_1 = arith.constant 0 : i32
    return %c0_i32, %c0_i32_0 : i32, i32
  }
  func.func @transform_2(%arg0: i32) -> (i32, i32) {
    %c0_i32 = arith.constant 0 : i32
    %c0_i32_0 = arith.constant 0 : i32
    %c0_i32_1 = arith.constant 0 : i32
    return %c0_i32, %c0_i32_0 : i32, i32
  }
  func.func @transform_3(%arg0: i32) -> (i32, i32) {
    %c0_i32 = arith.constant 0 : i32
    %c0_i32_0 = arith.constant 0 : i32
    %c0_i32_1 = arith.constant 0 : i32
    return %c0_i32, %c0_i32_0 : i32, i32
  }
  func.func @transform_4(%arg0: i32) -> (i32, i32) {
    %c0_i32 = arith.constant 0 : i32
    %c0_i32_0 = arith.constant 0 : i32
    %c0_i32_1 = arith.constant 0 : i32
    return %c0_i32, %c0_i32_0 : i32, i32
  }
  func.func @transform_5(%arg0: i32) -> (i32, i32) {
    %c0_i32 = arith.constant 0 : i32
    %c0_i32_0 = arith.constant 0 : i32
    %c0_i32_1 = arith.constant 0 : i32
    return %c0_i32, %c0_i32_0 : i32, i32
  }
  func.func @transform_6(%arg0: i32) -> (i32, i32) {
    %c0_i32 = arith.constant 0 : i32
    %c0_i32_0 = arith.constant 0 : i32
    %c0_i32_1 = arith.constant 0 : i32
    return %c0_i32, %c0_i32_0 : i32, i32
  }
  func.func @transform_7(%arg0: i32) -> (i32, i32, i32, i32) {
    %c0_i32 = arith.constant 0 : i32
    %c0_i32_0 = arith.constant 0 : i32
    %c0_i32_1 = arith.constant 0 : i32
    %c0_i32_2 = arith.constant 0 : i32
    return %arg0, %c0_i32, %c0_i32_0, %c0_i32_1 : i32, i32, i32, i32
  }
  func.func @transform_8(%arg0: i32) -> (i32, i32, i32, i32) {
    %c0_i32 = arith.constant 0 : i32
    %c0_i32_0 = arith.constant 0 : i32
    %c0_i32_1 = arith.constant 0 : i32
    %c0_i32_2 = arith.constant 0 : i32
    return %arg0, %c0_i32, %c0_i32_0, %c0_i32_1 : i32, i32, i32, i32
  }
}

module attributes {stable_mosaic.version = 11 : i64} {
  func.func @_block_b_kernel(%arg0: i32, %arg1: memref<1x8x10x48xf32, #tpu.memory_space<vmem>>, %arg2: memref<48x144xf32, #tpu.memory_space<vmem>>, %arg3: memref<1x144xf32, #tpu.memory_space<vmem>>, %arg4: memref<48x48xf32, #tpu.memory_space<vmem>>, %arg5: memref<1x48xf32, #tpu.memory_space<vmem>>, %arg6: memref<48x32xf32, #tpu.memory_space<vmem>>, %arg7: memref<1x32xf32, #tpu.memory_space<vmem>>, %arg8: memref<8x10x10xf32, #tpu.memory_space<vmem>>, %arg9: memref<96x32xf32, #tpu.memory_space<vmem>>, %arg10: memref<1x32xf32, #tpu.memory_space<vmem>>, %arg11: memref<1x8x10x32xf32, #tpu.memory_space<vmem>>, %arg12: memref<1x8x10x10xf32, #tpu.memory_space<vmem>>) attributes {dimension_semantics = [#tpu.dimension_semantics<parallel>], iteration_bounds = array<i64: 2>, scalar_prefetch = 0 : i64, scratch_operands = 0 : i64, tpu.core_type = #tpu.core_type<tc>, window_params = [{transform_indices = @transform_0, window_bounds = array<i64: 1, 8, 10, 48>}, {pipeline_mode = #tpu.pipeline_mode<synchronous>, transform_indices = @transform_1, window_bounds = array<i64: 48, 144>}, {pipeline_mode = #tpu.pipeline_mode<synchronous>, transform_indices = @transform_2, window_bounds = array<i64: 1, 144>}, {pipeline_mode = #tpu.pipeline_mode<synchronous>, transform_indices = @transform_3, window_bounds = array<i64: 48, 48>}, {pipeline_mode = #tpu.pipeline_mode<synchronous>, transform_indices = @transform_4, window_bounds = array<i64: 1, 48>}, {pipeline_mode = #tpu.pipeline_mode<synchronous>, transform_indices = @transform_5, window_bounds = array<i64: 48, 32>}, {pipeline_mode = #tpu.pipeline_mode<synchronous>, transform_indices = @transform_6, window_bounds = array<i64: 1, 32>}, {pipeline_mode = #tpu.pipeline_mode<synchronous>, transform_indices = @transform_7, window_bounds = array<i64: 8, 10, 10>}, {pipeline_mode = #tpu.pipeline_mode<synchronous>, transform_indices = @transform_8, window_bounds = array<i64: 96, 32>}, {pipeline_mode = #tpu.pipeline_mode<synchronous>, transform_indices = @transform_9, window_bounds = array<i64: 1, 32>}, {transform_indices = @transform_10, window_bounds = array<i64: 1, 8, 10, 32>}, {transform_indices = @transform_11, window_bounds = array<i64: 1, 8, 10, 10>}]} {
    %c0 = arith.constant 0 : index
    %c0_0 = arith.constant 0 : index
    %c0_1 = arith.constant 0 : index
    %c0_2 = arith.constant 0 : index
    %0 = vector.load %arg1[%c0, %c0_0, %c0_1, %c0_2] : memref<1x8x10x48xf32, #tpu.memory_space<vmem>>, vector<1x8x10x48xf32>
    %1 = vector.shape_cast %0 : vector<1x8x10x48xf32> to vector<8x10x48xf32>
    %2 = vector.shape_cast %1 : vector<8x10x48xf32> to vector<80x48xf32>
    %c0_3 = arith.constant 0 : index
    %c0_4 = arith.constant 0 : index
    %3 = vector.load %arg2[%c0_3, %c0_4] : memref<48x144xf32, #tpu.memory_space<vmem>>, vector<48x144xf32>
    %cst = arith.constant dense<0.000000e+00> : vector<80x144xf32>
    %4 = tpu.matmul %2, %3, %cst {dimension_numbers = #tpu.dot_dimension_numbers<[1], [0], [0], [1], [0, 0, 1, 1], [], []>} : vector<80x48xf32>, vector<48x144xf32>, vector<80x144xf32> -> vector<80x144xf32>
    %c0_5 = arith.constant 0 : index
    %c0_6 = arith.constant 0 : index
    %5 = vector.load %arg3[%c0_5, %c0_6] : memref<1x144xf32, #tpu.memory_space<vmem>>, vector<1x144xf32>
    %6 = vector.shape_cast %5 : vector<1x144xf32> to vector<144xf32>
    %7 = vector.shape_cast %6 : vector<144xf32> to vector<1x144xf32>
    %8 = vector.broadcast %7 : vector<1x144xf32> to vector<80x144xf32>
    %9 = arith.addf %4, %8 : vector<80x144xf32>
    %10 = vector.extract_strided_slice %9 {offsets = [0, 0], sizes = [80, 48], strides = [1, 1]} : vector<80x144xf32> to vector<80x48xf32>
    %11 = vector.shape_cast %10 : vector<80x48xf32> to vector<8x10x48xf32>
    %12 = vector.extract_strided_slice %9 {offsets = [0, 48], sizes = [80, 48], strides = [1, 1]} : vector<80x144xf32> to vector<80x48xf32>
    %13 = vector.shape_cast %12 : vector<80x48xf32> to vector<8x10x48xf32>
    %14 = vector.extract_strided_slice %9 {offsets = [0, 96], sizes = [80, 48], strides = [1, 1]} : vector<80x144xf32> to vector<80x48xf32>
    %15 = vector.shape_cast %14 : vector<80x48xf32> to vector<8x10x48xf32>
    "tpu.trace_start"() <{level = 10 : i32, message = "tnd,tmd->tnm"}> : () -> ()
    %cst_7 = arith.constant dense<0.000000e+00> : vector<8x10x10xf32>
    %16 = tpu.matmul %11, %13, %cst_7 {dimension_numbers = #tpu.dot_dimension_numbers<[2], [2], [1], [1], [0, 0, 0, 1, 1, 1], [0], [0]>} : vector<8x10x48xf32>, vector<8x10x48xf32>, vector<8x10x10xf32> -> vector<8x10x10xf32>
    "tpu.trace_stop"() : () -> ()
    %cst_8 = arith.constant 0.144337565 : f32
    %17 = vector.broadcast %cst_8 : f32 to vector<8x10x10xf32>
    %18 = arith.mulf %16, %17 : vector<8x10x10xf32>
    %cst_9 = arith.constant dense<0xFF800000> : vector<8x10xf32>
    %19 = vector.multi_reduction <maximumf>, %18, %cst_9 [2] : vector<8x10x10xf32> to vector<8x10xf32>
    %cst_10 = arith.constant 0xFF800000 : f32
    %20 = vector.broadcast %cst_10 : f32 to vector<8x10xf32>
    %21 = arith.maximumf %20, %19 : vector<8x10xf32>
    %22 = vector.shape_cast %21 : vector<8x10xf32> to vector<8x10x1xf32>
    %23 = vector.broadcast %22 : vector<8x10x1xf32> to vector<8x10x10xf32>
    %24 = arith.subf %18, %23 : vector<8x10x10xf32>
    %25 = math.exp %24 : vector<8x10x10xf32>
    %cst_11 = arith.constant dense<0.000000e+00> : vector<8x10xf32>
    %26 = vector.multi_reduction <add>, %25, %cst_11 [2] : vector<8x10x10xf32> to vector<8x10xf32>
    %27 = vector.shape_cast %26 : vector<8x10xf32> to vector<8x10x1xf32>
    %28 = vector.broadcast %27 : vector<8x10x1xf32> to vector<8x10x10xf32>
    %29 = arith.divf %25, %28 : vector<8x10x10xf32>
    %c0_12 = arith.constant 0 : index
    %c0_13 = arith.constant 0 : index
    %c0_14 = arith.constant 0 : index
    %c0_15 = arith.constant 0 : index
    %30 = vector.load %arg12[%c0_12, %c0_13, %c0_14, %c0_15] : memref<1x8x10x10xf32, #tpu.memory_space<vmem>>, vector<1x8x10x10xf32>
    %31 = vector.shape_cast %30 : vector<1x8x10x10xf32> to vector<8x10x10xf32>
    %32 = vector.shape_cast %29 : vector<8x10x10xf32> to vector<1x8x10x10xf32>
    tpu.vector_store %arg12[%c0_12, %c0_13, %c0_14, %c0_15], %32 {strides = array<i32>} : memref<1x8x10x10xf32, #tpu.memory_space<vmem>>, vector<1x8x10x10xf32>,
    "tpu.trace_start"() <{level = 10 : i32, message = "tnm,tmd->tnd"}> : () -> ()
    %cst_16 = arith.constant dense<0.000000e+00> : vector<8x10x48xf32>
    %33 = tpu.matmul %29, %15, %cst_16 {dimension_numbers = #tpu.dot_dimension_numbers<[2], [1], [1], [2], [0, 0, 0, 1, 1, 2], [0], [0]>} : vector<8x10x10xf32>, vector<8x10x48xf32>, vector<8x10x48xf32> -> vector<8x10x48xf32>
    "tpu.trace_stop"() : () -> ()
    %34 = vector.shape_cast %33 : vector<8x10x48xf32> to vector<80x48xf32>
    %c0_17 = arith.constant 0 : index
    %c0_18 = arith.constant 0 : index
    %35 = vector.load %arg4[%c0_17, %c0_18] : memref<48x48xf32, #tpu.memory_space<vmem>>, vector<48x48xf32>
    %cst_19 = arith.constant dense<0.000000e+00> : vector<80x48xf32>
    %36 = tpu.matmul %34, %35, %cst_19 {dimension_numbers = #tpu.dot_dimension_numbers<[1], [0], [0], [1], [0, 0, 1, 1], [], []>} : vector<80x48xf32>, vector<48x48xf32>, vector<80x48xf32> -> vector<80x48xf32>
    %c0_20 = arith.constant 0 : index
    %c0_21 = arith.constant 0 : index
    %37 = vector.load %arg5[%c0_20, %c0_21] : memref<1x48xf32, #tpu.memory_space<vmem>>, vector<1x48xf32>
    %38 = vector.shape_cast %37 : vector<1x48xf32> to vector<48xf32>
    %39 = vector.shape_cast %38 : vector<48xf32> to vector<1x48xf32>
    %40 = vector.broadcast %39 : vector<1x48xf32> to vector<80x48xf32>
    %41 = arith.addf %36, %40 : vector<80x48xf32>
    %42 = arith.addf %41, %2 : vector<80x48xf32>
    %cst_22 = arith.constant 0.000000e+00 : f32
    %43 = vector.broadcast %cst_22 : f32 to vector<80x48xf32>
    %44 = arith.maximumf %42, %43 : vector<80x48xf32>
    %c0_23 = arith.constant 0 : index
    %c0_24 = arith.constant 0 : index
    %45 = vector.load %arg6[%c0_23, %c0_24] : memref<48x32xf32, #tpu.memory_space<vmem>>, vector<48x32xf32>
    %cst_25 = arith.constant dense<0.000000e+00> : vector<80x32xf32>
    %46 = tpu.matmul %44, %45, %cst_25 {dimension_numbers = #tpu.dot_dimension_numbers<[1], [0], [0], [1], [0, 0, 1, 1], [], []>} : vector<80x48xf32>, vector<48x32xf32>, vector<80x32xf32> -> vector<80x32xf32>
    %c0_26 = arith.constant 0 : index
    %c0_27 = arith.constant 0 : index
    %47 = vector.load %arg7[%c0_26, %c0_27] : memref<1x32xf32, #tpu.memory_space<vmem>>, vector<1x32xf32>
    %48 = vector.shape_cast %47 : vector<1x32xf32> to vector<32xf32>
    %49 = vector.shape_cast %48 : vector<32xf32> to vector<1x32xf32>
    %50 = vector.broadcast %49 : vector<1x32xf32> to vector<80x32xf32>
    %51 = arith.addf %46, %50 : vector<80x32xf32>
    %52 = vector.shape_cast %51 : vector<80x32xf32> to vector<8x10x32xf32>
    %c0_28 = arith.constant 0 : index
    %c0_29 = arith.constant 0 : index
    %c0_30 = arith.constant 0 : index
    %53 = vector.load %arg8[%c0_28, %c0_29, %c0_30] : memref<8x10x10xf32, #tpu.memory_space<vmem>>, vector<8x10x10xf32>
    "tpu.trace_start"() <{level = 10 : i32, message = "tnm,tmc->tnc"}> : () -> ()
    %cst_31 = arith.constant dense<0.000000e+00> : vector<8x10x32xf32>
    %54 = tpu.matmul %53, %52, %cst_31 {dimension_numbers = #tpu.dot_dimension_numbers<[2], [1], [1], [2], [0, 0, 0, 1, 1, 2], [0], [0]>} : vector<8x10x10xf32>, vector<8x10x32xf32>, vector<8x10x32xf32> -> vector<8x10x32xf32>
    "tpu.trace_stop"() : () -> ()
    %55 = vector.shape_cast %54 : vector<8x10x32xf32> to vector<80x32xf32>
    "tpu.trace_start"() <{level = 10 : i32, message = "tnm,tmc->tnc"}> : () -> ()
    %cst_32 = arith.constant dense<0.000000e+00> : vector<8x10x32xf32>
    %56 = tpu.matmul %53, %54, %cst_32 {dimension_numbers = #tpu.dot_dimension_numbers<[2], [1], [1], [2], [0, 0, 0, 1, 1, 2], [0], [0]>} : vector<8x10x10xf32>, vector<8x10x32xf32>, vector<8x10x32xf32> -> vector<8x10x32xf32>
    "tpu.trace_stop"() : () -> ()
    %cst_33 = arith.constant 2.000000e+00 : f32
    %57 = vector.broadcast %cst_33 : f32 to vector<8x10x32xf32>
    %58 = arith.mulf %57, %56 : vector<8x10x32xf32>
    %59 = arith.subf %58, %52 : vector<8x10x32xf32>
    %60 = vector.shape_cast %59 : vector<8x10x32xf32> to vector<80x32xf32>
    %61 = tpu.concatenate %51, %55, %60 in 1 : vector<80x32xf32>, vector<80x32xf32>, vector<80x32xf32> -> vector<80x96xf32>
    %c0_34 = arith.constant 0 : index
    %c0_35 = arith.constant 0 : index
    %62 = vector.load %arg9[%c0_34, %c0_35] : memref<96x32xf32, #tpu.memory_space<vmem>>, vector<96x32xf32>
    %cst_36 = arith.constant dense<0.000000e+00> : vector<80x32xf32>
    %63 = tpu.matmul %61, %62, %cst_36 {dimension_numbers = #tpu.dot_dimension_numbers<[1], [0], [0], [1], [0, 0, 1, 1], [], []>} : vector<80x96xf32>, vector<96x32xf32>, vector<80x32xf32> -> vector<80x32xf32>
    %c0_37 = arith.constant 0 : index
    %c0_38 = arith.constant 0 : index
    %64 = vector.load %arg10[%c0_37, %c0_38] : memref<1x32xf32, #tpu.memory_space<vmem>>, vector<1x32xf32>
    %65 = vector.shape_cast %64 : vector<1x32xf32> to vector<32xf32>
    %66 = vector.shape_cast %65 : vector<32xf32> to vector<1x32xf32>
    %67 = vector.broadcast %66 : vector<1x32xf32> to vector<80x32xf32>
    %68 = arith.addf %63, %67 : vector<80x32xf32>
    %69 = vector.shape_cast %68 : vector<80x32xf32> to vector<8x10x32xf32>
    %c0_39 = arith.constant 0 : index
    %c0_40 = arith.constant 0 : index
    %c0_41 = arith.constant 0 : index
    %c0_42 = arith.constant 0 : index
    %70 = vector.load %arg11[%c0_39, %c0_40, %c0_41, %c0_42] : memref<1x8x10x32xf32, #tpu.memory_space<vmem>>, vector<1x8x10x32xf32>
    %71 = vector.shape_cast %70 : vector<1x8x10x32xf32> to vector<8x10x32xf32>
    %72 = vector.shape_cast %69 : vector<8x10x32xf32> to vector<1x8x10x32xf32>
    tpu.vector_store %arg11[%c0_39, %c0_40, %c0_41, %c0_42], %72 {strides = array<i32>} : memref<1x8x10x32xf32, #tpu.memory_space<vmem>>, vector<1x8x10x32xf32>,
    return
  }
  func.func @transform_0(%arg0: i32) -> (i32, i32, i32, i32) {
    %c0_i32 = arith.constant 0 : i32
    %c0_i32_0 = arith.constant 0 : i32
    %c0_i32_1 = arith.constant 0 : i32
    %c0_i32_2 = arith.constant 0 : i32
    return %arg0, %c0_i32, %c0_i32_0, %c0_i32_1 : i32, i32, i32, i32
  }
  func.func @transform_1(%arg0: i32) -> (i32, i32) {
    %c0_i32 = arith.constant 0 : i32
    %c0_i32_0 = arith.constant 0 : i32
    %c0_i32_1 = arith.constant 0 : i32
    return %c0_i32, %c0_i32_0 : i32, i32
  }
  func.func @transform_2(%arg0: i32) -> (i32, i32) {
    %c0_i32 = arith.constant 0 : i32
    %c0_i32_0 = arith.constant 0 : i32
    %c0_i32_1 = arith.constant 0 : i32
    return %c0_i32, %c0_i32_0 : i32, i32
  }
  func.func @transform_3(%arg0: i32) -> (i32, i32) {
    %c0_i32 = arith.constant 0 : i32
    %c0_i32_0 = arith.constant 0 : i32
    %c0_i32_1 = arith.constant 0 : i32
    return %c0_i32, %c0_i32_0 : i32, i32
  }
  func.func @transform_4(%arg0: i32) -> (i32, i32) {
    %c0_i32 = arith.constant 0 : i32
    %c0_i32_0 = arith.constant 0 : i32
    %c0_i32_1 = arith.constant 0 : i32
    return %c0_i32, %c0_i32_0 : i32, i32
  }
  func.func @transform_5(%arg0: i32) -> (i32, i32) {
    %c0_i32 = arith.constant 0 : i32
    %c0_i32_0 = arith.constant 0 : i32
    %c0_i32_1 = arith.constant 0 : i32
    return %c0_i32, %c0_i32_0 : i32, i32
  }
  func.func @transform_6(%arg0: i32) -> (i32, i32) {
    %c0_i32 = arith.constant 0 : i32
    %c0_i32_0 = arith.constant 0 : i32
    %c0_i32_1 = arith.constant 0 : i32
    return %c0_i32, %c0_i32_0 : i32, i32
  }
  func.func @transform_7(%arg0: i32) -> (i32, i32, i32) {
    %c0_i32 = arith.constant 0 : i32
    %c0_i32_0 = arith.constant 0 : i32
    %c0_i32_1 = arith.constant 0 : i32
    %c0_i32_2 = arith.constant 0 : i32
    return %c0_i32, %c0_i32_0, %c0_i32_1 : i32, i32, i32
  }
  func.func @transform_8(%arg0: i32) -> (i32, i32) {
    %c0_i32 = arith.constant 0 : i32
    %c0_i32_0 = arith.constant 0 : i32
    %c0_i32_1 = arith.constant 0 : i32
    return %c0_i32, %c0_i32_0 : i32, i32
  }
  func.func @transform_9(%arg0: i32) -> (i32, i32) {
    %c0_i32 = arith.constant 0 : i32
    %c0_i32_0 = arith.constant 0 : i32
    %c0_i32_1 = arith.constant 0 : i32
    return %c0_i32, %c0_i32_0 : i32, i32
  }
  func.func @transform_10(%arg0: i32) -> (i32, i32, i32, i32) {
    %c0_i32 = arith.constant 0 : i32
    %c0_i32_0 = arith.constant 0 : i32
    %c0_i32_1 = arith.constant 0 : i32
    %c0_i32_2 = arith.constant 0 : i32
    return %arg0, %c0_i32, %c0_i32_0, %c0_i32_1 : i32, i32, i32, i32
  }
  func.func @transform_11(%arg0: i32) -> (i32, i32, i32, i32) {
    %c0_i32 = arith.constant 0 : i32
    %c0_i32_0 = arith.constant 0 : i32
    %c0_i32_1 = arith.constant 0 : i32
    %c0_i32_2 = arith.constant 0 : i32
    return %arg0, %c0_i32, %c0_i32_0, %c0_i32_1 : i32, i32, i32, i32
  }
}

</mosaic_0001>

<llo_original>
// kernel: st_block_forward.2
$region0: #{st_block_forward.2}
  #allocation0 [shape = 'u32[]', space=smem, size = 0x4, offset = 0x4, fixed_abs, tag = 'smem constant byte address 0x4 - core index']
  #allocation1 [shape = 'u32[72,128]{1,0:T(1,128)}', space=vmem, size = 0x9000, scoped, tag = 'internal scratch']
  %s0 = inlined_call_operand.vmem [shape: f32[2,10,10,32], index: 0, kind: input, shape index: {}]
  %s1 = inlined_call_operand.vmem [shape: f32[32,96], index: 1, kind: input, shape index: {}]
  %s2 = inlined_call_operand.vmem [shape: f32[1,96], index: 2, kind: input, shape index: {}]
  %s3 = inlined_call_operand.vmem [shape: f32[32,32], index: 3, kind: input, shape index: {}]
  %s4 = inlined_call_operand.vmem [shape: f32[1,32], index: 4, kind: input, shape index: {}]
  %s5 = inlined_call_operand.vmem [shape: f32[96,96], index: 5, kind: input, shape index: {}]
  %s6 = inlined_call_operand.vmem [shape: f32[1,96], index: 6, kind: input, shape index: {}]
  %s7 = inlined_call_operand.vmem [shape: f32[2,10,8,48], index: 7, kind: output, shape index: {0}]
  %s8 = inlined_call_operand.vmem [shape: f32[2,10,10,10], index: 8, kind: output, shape index: {1}]
  %9 = xla_tuple %s7, %s8
  %s10 = sld [smem:[#allocation0]]
  $region69: #{st_block_forward.2} parent=0
    _
  %s12 = ssub.s32 1, %s10
  %s13 = scalar_select 0, %s12, %s10
  loop: start=0, step=1, limit=4
  $region2: #{st_block_forward.2} parent=0 // loop_pre_header
    _
  $region3: #{st_block_forward.2} parent=0 // loop_header
    %s15 = sphi 0, %s19
    %p16 = scmp.ge.s32.totalorder %s15, 4
    %s25 = sphi 0, %s27
    %s28 = sphi 0, %s25
    %s29 = sphi 0, %s28
    %s45 = sphi 0, %s29
    %s49 = sphi 0, %s49
    %s51 = sphi 0, %s49
    %s52 = sphi 0, %s51
    %s66 = sphi 0, %s52
    %s70 = sphi 0, %s70
    %s72 = sphi 0, %s70
    %s73 = sphi 0, %s72
    %s87 = sphi 0, %s73
    %s91 = sphi 0, %s91
    %s93 = sphi 0, %s91
    %s94 = sphi 0, %s93
    %s108 = sphi 0, %s94
    %s112 = sphi 0, %s112
    %s114 = sphi 0, %s112
    %s115 = sphi 0, %s114
    %s129 = sphi 0, %s115
    %s133 = sphi 0, %s133
    %s135 = sphi 0, %s133
    %s136 = sphi 0, %s135
    %s150 = sphi 0, %s136
    %s154 = sphi 0, %s154
    %s156 = sphi 0, %s154
    %s157 = sphi 0, %s156
    %s171 = sphi 0, %s157
    %s177 = sphi 0, %s179
    %s180 = sphi 0, %s177
    %s181 = sphi 0, %s180
    %s197 = sphi 0, %s181
    %s203 = sphi 0, %s205
    %s206 = sphi 0, %s203
    %s207 = sphi 0, %s206
    %s223 = sphi 0, %s207
  $region4: #{st_block_forward.2} parent=0 // loop_header_branch
    %18 = sbr.rel (%p16) target = $region8
  $region5: #{st_block_forward.2} parent=0 // loop_body
    %s20 = ssub.s32 %s15, 1
    %s21 = ssub.s32 %s15, 2
    %s22 = sadd.s32 %s15, 1
    %s23 = ssub.s32 %s15, %s22
    %p24 = scmp.eq.s32.totalorder %s23, 0
    %s26 = sadd.s32 %s25, 1
    %s27 = scalar_select %p24, %s25, %s26
    %p30 = pneg %p24
    %p31 = scmp.eq.s32.totalorder %s15, 1
    %p32 = por %p30, %p31
    %p33 = scmp.ne.s32.totalorder %s25, %s28
    %p34 = scmp.eq.s32.totalorder %s15, 0
    %p35 = por %p33, %p34
    %p36 = scmp.ne.s32.totalorder %s25, %s28
    %p37 = scmp.eq.s32.totalorder %s20, 1
    %p38 = por %p36, %p37
    %p39 = scmp.ne.s32.totalorder %s28, %s29
    %p40 = scmp.eq.s32.totalorder %s20, 0
    %p41 = por %p39, %p40
    %p42 = scmp.ne.s32.totalorder %s28, %s29
    %p43 = scmp.eq.s32.totalorder %s21, 1
    %p44 = por %p42, %p43
    %p46 = scmp.ne.s32.totalorder %s29, %s45
    %p47 = scmp.eq.s32.totalorder %s21, 0
    %p48 = por %p46, %p47
    %s50 = sadd.s32 %s49, 1
    %p53 = scmp.eq.s32.totalorder %s15, 1
    %p54 = scmp.ne.s32.totalorder %s49, %s51
    %p55 = scmp.eq.s32.totalorder %s15, 0
    %p56 = por %p54, %p55
    %p57 = scmp.ne.s32.totalorder %s49, %s51
    %p58 = scmp.eq.s32.totalorder %s20, 1
    %p59 = por %p57, %p58
    %p60 = scmp.ne.s32.totalorder %s51, %s52
    %p61 = scmp.eq.s32.totalorder %s20, 0
    %p62 = por %p60, %p61
    %p63 = scmp.ne.s32.totalorder %s51, %s52
    %p64 = scmp.eq.s32.totalorder %s21, 1
    %p65 = por %p63, %p64
    %p67 = scmp.ne.s32.totalorder %s52, %s66
    %p68 = scmp.eq.s32.totalorder %s21, 0
    %p69 = por %p67, %p68
    %s71 = sadd.s32 %s70, 1
    %p74 = scmp.eq.s32.totalorder %s15, 1
    %p75 = scmp.ne.s32.totalorder %s70, %s72
    %p76 = scmp.eq.s32.totalorder %s15, 0
    %p77 = por %p75, %p76
    %p78 = scmp.ne.s32.totalorder %s70, %s72
    %p79 = scmp.eq.s32.totalorder %s20, 1
    %p80 = por %p78, %p79
    %p81 = scmp.ne.s32.totalorder %s72, %s73
    %p82 = scmp.eq.s32.totalorder %s20, 0
    %p83 = por %p81, %p82
    %p84 = scmp.ne.s32.totalorder %s72, %s73
    %p85 = scmp.eq.s32.totalorder %s21, 1
    %p86 = por %p84, %p85
    %p88 = scmp.ne.s32.totalorder %s73, %s87
    %p89 = scmp.eq.s32.totalorder %s21, 0
    %p90 = por %p88, %p89
    %s92 = sadd.s32 %s91, 1
    %p95 = scmp.eq.s32.totalorder %s15, 1
    %p96 = scmp.ne.s32.totalorder %s91, %s93
    %p97 = scmp.eq.s32.totalorder %s15, 0
    %p98 = por %p96, %p97
    %p99 = scmp.ne.s32.totalorder %s91, %s93
    %p100 = scmp.eq.s32.totalorder %s20, 1
    %p101 = por %p99, %p100
    %p102 = scmp.ne.s32.totalorder %s93, %s94
    %p103 = scmp.eq.s32.totalorder %s20, 0
    %p104 = por %p102, %p103
    %p105 = scmp.ne.s32.totalorder %s93, %s94
    %p106 = scmp.eq.s32.totalorder %s21, 1
    %p107 = por %p105, %p106
    %p109 = scmp.ne.s32.totalorder %s94, %s108
    %p110 = scmp.eq.s32.totalorder %s21, 0
    %p111 = por %p109, %p110
    %s113 = sadd.s32 %s112, 1
    %p116 = scmp.eq.s32.totalorder %s15, 1
    %p117 = scmp.ne.s32.totalorder %s112, %s114
    %p118 = scmp.eq.s32.totalorder %s15, 0
    %p119 = por %p117, %p118
    %p120 = scmp.ne.s32.totalorder %s112, %s114
    %p121 = scmp.eq.s32.totalorder %s20, 1
    %p122 = por %p120, %p121
    %p123 = scmp.ne.s32.totalorder %s114, %s115
    %p124 = scmp.eq.s32.totalorder %s20, 0
    %p125 = por %p123, %p124
    %p126 = scmp.ne.s32.totalorder %s114, %s115
    %p127 = scmp.eq.s32.totalorder %s21, 1
    %p128 = por %p126, %p127
    %p130 = scmp.ne.s32.totalorder %s115, %s129
    %p131 = scmp.eq.s32.totalorder %s21, 0
    %p132 = por %p130, %p131
    %s134 = sadd.s32 %s133, 1
    %p137 = scmp.eq.s32.totalorder %s15, 1
    %p138 = scmp.ne.s32.totalorder %s133, %s135
    %p139 = scmp.eq.s32.totalorder %s15, 0
    %p140 = por %p138, %p139
    %p141 = scmp.ne.s32.totalorder %s133, %s135
    %p142 = scmp.eq.s32.totalorder %s20, 1
    %p143 = por %p141, %p142
    %p144 = scmp.ne.s32.totalorder %s135, %s136
    %p145 = scmp.eq.s32.totalorder %s20, 0
    %p146 = por %p144, %p145
    %p147 = scmp.ne.s32.totalorder %s135, %s136
    %p148 = scmp.eq.s32.totalorder %s21, 1
    %p149 = por %p147, %p148
    %p151 = scmp.ne.s32.totalorder %s136, %s150
    %p152 = scmp.eq.s32.totalorder %s21, 0
    %p153 = por %p151, %p152
    %s155 = sadd.s32 %s154, 1
    %p158 = scmp.eq.s32.totalorder %s15, 1
    %p159 = scmp.ne.s32.totalorder %s154, %s156
    %p160 = scmp.eq.s32.totalorder %s15, 0
    %p161 = por %p159, %p160
    %p162 = scmp.ne.s32.totalorder %s154, %s156
    %p163 = scmp.eq.s32.totalorder %s20, 1
    %p164 = por %p162, %p163
    %p165 = scmp.ne.s32.totalorder %s156, %s157
    %p166 = scmp.eq.s32.totalorder %s20, 0
    %p167 = por %p165, %p166
    %p168 = scmp.ne.s32.totalorder %s156, %s157
    %p169 = scmp.eq.s32.totalorder %s21, 1
    %p170 = por %p168, %p169
    %p172 = scmp.ne.s32.totalorder %s157, %s171
    %p173 = scmp.eq.s32.totalorder %s21, 0
    %p174 = por %p172, %p173
    %s175 = ssub.s32 %s15, %s22
    %p176 = scmp.eq.s32.totalorder %s175, 0
    %s178 = sadd.s32 %s177, 1
    %s179 = scalar_select %p176, %s177, %s178
    %p182 = pneg %p176
    %p183 = scmp.eq.s32.totalorder %s15, 1
    %p184 = por %p182, %p183
    %p185 = scmp.ne.s32.totalorder %s177, %s180
    %p186 = scmp.eq.s32.totalorder %s15, 0
    %p187 = por %p185, %p186
    %p188 = scmp.ne.s32.totalorder %s177, %s180
    %p189 = scmp.eq.s32.totalorder %s20, 1
    %p190 = por %p188, %p189
    %p191 = scmp.ne.s32.totalorder %s180, %s181
    %p192 = scmp.eq.s32.totalorder %s20, 0
    %p193 = por %p191, %p192
    %p194 = scmp.ne.s32.totalorder %s180, %s181
    %p195 = scmp.eq.s32.totalorder %s21, 1
    %p196 = por %p194, %p195
    %p198 = scmp.ne.s32.totalorder %s181, %s197
    %p199 = scmp.eq.s32.totalorder %s21, 0
    %p200 = por %p198, %p199
    %s201 = ssub.s32 %s15, %s22
    %p202 = scmp.eq.s32.totalorder %s201, 0
    %s204 = sadd.s32 %s203, 1
    %s205 = scalar_select %p202, %s203, %s204
    %p208 = pneg %p202
    %p209 = scmp.eq.s32.totalorder %s15, 1
    %p210 = por %p208, %p209
    %p211 = scmp.ne.s32.totalorder %s203, %s206
    %p212 = scmp.eq.s32.totalorder %s15, 0
    %p213 = por %p211, %p212
    %p214 = scmp.ne.s32.totalorder %s203, %s206
    %p215 = scmp.eq.s32.totalorder %s20, 1
    %p216 = por %p214, %p215
    %p217 = scmp.ne.s32.totalorder %s206, %s207
    %p218 = scmp.eq.s32.totalorder %s20, 0
    %p219 = por %p217, %p218
    %p220 = scmp.ne.s32.totalorder %s206, %s207
    %p221 = scmp.eq.s32.totalorder %s21, 1
    %p222 = por %p220, %p221
    %p224 = scmp.ne.s32.totalorder %s207, %s223
    %p225 = scmp.eq.s32.totalorder %s21, 0
    %p226 = por %p224, %p225
    %p227 = scmp.le.s32.totalorder 1, %s15
    %p228 = scmp.lt.s32.totalorder %s15, 3
    %p229 = pnand %p227, %p228
    %p230 = pneg %p229
    // Predicated region
    $region9: #{st_block_forward.2} parent=5 // pred_check
      _
    $region10: #{st_block_forward.2} parent=5 // pred_check_branch
      %232 = sbr.rel (%p229) target = $region12
    $region11: #{st_block_forward.2} parent=5 // pred_region
      %s233 = ssub.s32 %s15, 1
      // Predicated region
      $region13: #{st_block_forward.2} parent=11 // pred_check
        %p234 = pneg %p62
      $region14: #{st_block_forward.2} parent=11 // pred_check_branch
        %236 = sbr.rel (%p234) target = $region16
      $region15: #{st_block_forward.2} parent=11 // pred_region
        _
      $region16: #{st_block_forward.2} parent=11 // pred_fallthru
        _
      // Predicated region
      $region17: #{st_block_forward.2} parent=11 // pred_check
        %p237 = pneg %p83
      $region18: #{st_block_forward.2} parent=11 // pred_check_branch
        %239 = sbr.rel (%p237) target = $region20
      $region19: #{st_block_forward.2} parent=11 // pred_region
        _
      $region20: #{st_block_forward.2} parent=11 // pred_fallthru
        _
      // Predicated region
      $region21: #{st_block_forward.2} parent=11 // pred_check
        %p240 = pneg %p104
      $region22: #{st_block_forward.2} parent=11 // pred_check_branch
        %242 = sbr.rel (%p240) target = $region24
      $region23: #{st_block_forward.2} parent=11 // pred_region
        _
      $region24: #{st_block_forward.2} parent=11 // pred_fallthru
        _
      // Predicated region
      $region25: #{st_block_forward.2} parent=11 // pred_check
        %p243 = pneg %p125
      $region26: #{st_block_forward.2} parent=11 // pred_check_branch
        %245 = sbr.rel (%p243) target = $region28
      $region27: #{st_block_forward.2} parent=11 // pred_region
        _
      $region28: #{st_block_forward.2} parent=11 // pred_fallthru
        _
      // Predicated region
      $region29: #{st_block_forward.2} parent=11 // pred_check
        %p246 = pneg %p146
      $region30: #{st_block_forward.2} parent=11 // pred_check_branch
        %248 = sbr.rel (%p246) target = $region32
      $region31: #{st_block_forward.2} parent=11 // pred_region
        _
      $region32: #{st_block_forward.2} parent=11 // pred_fallthru
        _
      // Predicated region
      $region33: #{st_block_forward.2} parent=11 // pred_check
        %p249 = pneg %p167
      $region34: #{st_block_forward.2} parent=11 // pred_check_branch
        %251 = sbr.rel (%p249) target = $region36
      $region35: #{st_block_forward.2} parent=11 // pred_region
        _
      $region36: #{st_block_forward.2} parent=11 // pred_fallthru
        _
    $region12: #{st_block_forward.2} parent=5 // pred_fallthru
      _
    %p252 = scmp.lt.s32.totalorder %s15, 2
    // Predicated region
    $region37: #{st_block_forward.2} parent=5 // pred_check
      %p253 = pneg %p252
    $region38: #{st_block_forward.2} parent=5 // pred_check_branch
      %255 = sbr.rel (%p253) target = $region40
    $region39: #{st_block_forward.2} parent=5 // pred_region
      // Predicated region
      $region41: #{st_block_forward.2} parent=39 // pred_check
        %p256 = pneg %p35
      $region42: #{st_block_forward.2} parent=39 // pred_check_branch
        %258 = sbr.rel (%p256) target = $region44
      $region43: #{st_block_forward.2} parent=39 // pred_region
        %p259 = scmp.lt.s32.totalorder %s15, 1
        %s260 = scalar_select %p259, %s15, 1
        %s261 = smul.addr %s260, 20
        %s262 = smul.addr %s261, 8
        %s263 = scalar_lea.vmem %s0, %s262
      $region44: #{st_block_forward.2} parent=39 // pred_fallthru
        _
    $region40: #{st_block_forward.2} parent=5 // pred_fallthru
      _
    %p264 = scmp.le.s32.totalorder 1, %s15
    %p265 = scmp.lt.s32.totalorder %s15, 3
    %p266 = pnand %p264, %p265
    %p267 = pneg %p266
    // Predicated region
    $region45: #{st_block_forward.2} parent=5 // pred_check
      _
    $region46: #{st_block_forward.2} parent=5 // pred_check_branch
      %269 = sbr.rel (%p266) target = $region48
    $region47: #{st_block_forward.2} parent=5 // pred_region
      %s270 = ssub.s32 %s15, 1
      %p271 = scmp.lt.s32.totalorder %s20, 1
      %s272 = scalar_select %p271, %s20, 1
      %s273 = smul.addr %s272, 20
      %s274 = smul.addr %s273, 8
      %s275 = scalar_lea.vmem %s0, %s274
      %p276 = pneg %p41
      %p277 = pneg %p38
      %p278 = pneg %p62
      %p279 = pneg %p59
      %p280 = pneg %p83
      %p281 = pneg %p80
      %p282 = pneg %p104
      %p283 = pneg %p101
      %p284 = pneg %p125
      %p285 = pneg %p122
      %p286 = pneg %p146
      %p287 = pneg %p143
      %p288 = pneg %p167
      %p289 = pneg %p164
      %p290 = pneg %p193
      %p291 = pneg %p190
      %p292 = scmp.lt.s32.totalorder %s20, 1
      %s293 = scalar_select %p292, %s20, 1
      %s294 = smul.addr %s293, 10
      %s295 = smul.addr %s294, 8
      %s296 = scalar_lea.vmem %s7, %s295
      %p297 = pneg %p219
      %p298 = pneg %p216
      %p299 = scmp.lt.s32.totalorder %s20, 1
      %s300 = scalar_select %p299, %s20, 1
      %s301 = smul.addr %s300, 20
      %s302 = smul.addr %s301, 8
      %s303 = scalar_lea.vmem %s8, %s302
      %p304 = scmp.lt.s32.totalorder %s20, 1
      %s305 = scalar_select %p304, %s20, 1
      %s306 = smul.addr %s305, 20
      %s307 = smul.addr %s306, 8
      %s308 = scalar_lea.vmem %s0, %s307
      %p309 = scmp.lt.s32.totalorder %s20, 1
      %s310 = scalar_select %p309, %s20, 1
      %s311 = smul.addr %s310, 10
      %s312 = smul.addr %s311, 8
      %s313 = scalar_lea.vmem %s7, %s312
      %p314 = scmp.lt.s32.totalorder %s20, 1
      %s315 = scalar_select %p314, %s20, 1
      %s316 = smul.addr %s315, 20
      %s317 = smul.addr %s316, 8
      %s318 = scalar_lea.vmem %s8, %s317
      %v319 = vld [vmem:[%s308] sm:$0xff]
      %v320 = vld [vmem:[%s308 + $0x8] sm:$0x3]
      %v321 = vld [vmem:[%s308 + $0x10] sm:$0xff]
      %v322 = vld [vmem:[%s308 + $0x18] sm:$0x3]
      %v323 = vld [vmem:[%s308 + $0x20] sm:$0xff]
      %v324 = vld [vmem:[%s308 + $0x28] sm:$0x3]
      %v325 = vld [vmem:[%s308 + $0x30] sm:$0xff]
      %v326 = vld [vmem:[%s308 + $0x38] sm:$0x3]
      %v327 = vld [vmem:[%s308 + $0x40] sm:$0xff]
      %v328 = vld [vmem:[%s308 + $0x48] sm:$0x3]
      %v329 = vld [vmem:[%s308 + $0x50] sm:$0xff]
      %v330 = vld [vmem:[%s308 + $0x58] sm:$0x3]
      %v331 = vld [vmem:[%s308 + $0x60] sm:$0xff]
      %v332 = vld [vmem:[%s308 + $0x68] sm:$0x3]
      %v333 = vld [vmem:[%s308 + $0x70] sm:$0xff]
      %v334 = vld [vmem:[%s308 + $0x78] sm:$0x3]
      %v335 = vld [vmem:[%s308 + $0x80] sm:$0xff]
      %v336 = vld [vmem:[%s308 + $0x88] sm:$0x3]
      %v337 = vld [vmem:[%s308 + $0x90] sm:$0xff]
      %v338 = vld [vmem:[%s308 + $0x98] sm:$0x3]
      %v359 = vrot.slane %v319, 2
      %v360 = vrot.slane %v319, 4
      %v361 = vrot.slane %v319, 6
      %v362 = vrot.slane %v321, 2
      %v363 = vrot.slane %v321, 4
      %v364 = vrot.slane %v321, 6
      %v365 = vrot.slane %v323, 2
      %v366 = vrot.slane %v323, 4
      %v367 = vrot.slane %v323, 6
      %v368 = vrot.slane %v325, 2
      %v369 = vrot.slane %v325, 4
      %v370 = vrot.slane %v325, 6
      %v371 = vrot.slane %v327, 2
      %v372 = vrot.slane %v327, 4
      %v373 = vrot.slane %v327, 6
      %v374 = vrot.slane %v329, 2
      %v375 = vrot.slane %v329, 4
      %v376 = vrot.slane %v329, 6
      %v377 = vrot.slane %v331, 2
      %v378 = vrot.slane %v331, 4
      %v379 = vrot.slane %v331, 6
      %v380 = vrot.slane %v333, 2
      %v381 = vrot.slane %v333, 4
      %v382 = vrot.slane %v333, 6
      %v383 = vrot.slane %v335, 2
      %v384 = vrot.slane %v335, 4
      %v385 = vrot.slane %v335, 6
      %v386 = vrot.slane %v337, 2
      %v387 = vrot.slane %v337, 4
      %v388 = vrot.slane %v337, 6
      %v389 = vld [vmem:[%s1] sm:$0xff]
      %v390 = vld [vmem:[%s1 + $0x8] sm:$0xff]
      %v391 = vld [vmem:[%s1 + $0x10] sm:$0xff]
      %v392 = vld [vmem:[%s1 + $0x18] sm:$0xff]
      %v393 = vld [vmem:[%s2] sm:$0x1]
      %v395 = vperm.slane %v393, 0
      %397 = vst [vmem:[#allocation1] ss:$4 sm:$0xff] %v319
      %s398 = scalar_lea.vmem [#allocation1], 1
      %399 = vst [vmem:[%s398] ss:$4 sm:$0xff] %v359
      %s400 = scalar_lea.vmem [#allocation1], 2
      %401 = vst [vmem:[%s400] ss:$4 sm:$0xff] %v360
      %s402 = scalar_lea.vmem [#allocation1], 3
      %403 = vst [vmem:[%s402] ss:$4 sm:$0xff] %v361
      %s404 = scalar_lea.vmem [#allocation1], 32
      %405 = vst [vmem:[%s404] ss:$4 sm:$0xff] %v320
      %s406 = scalar_lea.vmem [#allocation1], 33
      %407 = vst [vmem:[%s406] ss:$4 sm:$0xff] %v321
      %s408 = scalar_lea.vmem [#allocation1], 34
      %409 = vst [vmem:[%s408] ss:$4 sm:$0xff] %v362
      %s410 = scalar_lea.vmem [#allocation1], 35
      %411 = vst [vmem:[%s410] ss:$4 sm:$0xff] %v363
      %v412 = vld.sshfl [vmem:[#allocation1] sm:$0xff pattern:$0x73625140]
      %v413 = vld.sshfl [vmem:[#allocation1 + $0x20] sm:$0xff pattern:$0x73625140]
      %414 = vst [vmem:[#allocation1] ss:$4 sm:$0xff] %v364
      %415 = vst [vmem:[%s398] ss:$4 sm:$0xff] %v322
      %416 = vst [vmem:[%s400] ss:$4 sm:$0xff] %v323
      %417 = vst [vmem:[%s402] ss:$4 sm:$0xff] %v365
      %418 = vst [vmem:[%s404] ss:$4 sm:$0xff] %v366
      %419 = vst [vmem:[%s406] ss:$4 sm:$0xff] %v367
      %420 = vst [vmem:[%s408] ss:$4 sm:$0xff] %v324
      %421 = vst [vmem:[%s410] ss:$4 sm:$0xff] %v325
      %v422 = vld.sshfl [vmem:[#allocation1] sm:$0xff pattern:$0x73625140]
      %v423 = vld.sshfl [vmem:[#allocation1 + $0x20] sm:$0xff pattern:$0x73625140]
      %424 = vst [vmem:[#allocation1] ss:$4 sm:$0xff] %v368
      %425 = vst [vmem:[%s398] ss:$4 sm:$0xff] %v369
      %426 = vst [vmem:[%s400] ss:$4 sm:$0xff] %v370
      %427 = vst [vmem:[%s402] ss:$4 sm:$0xff] %v326
      %428 = vst [vmem:[%s404] ss:$4 sm:$0xff] %v327
      %429 = vst [vmem:[%s406] ss:$4 sm:$0xff] %v371
      %430 = vst [vmem:[%s408] ss:$4 sm:$0xff] %v372
      %431 = vst [vmem:[%s410] ss:$4 sm:$0xff] %v373
      %v432 = vld.sshfl [vmem:[#allocation1] sm:$0xff pattern:$0x73625140]
      %v433 = vld.sshfl [vmem:[#allocation1 + $0x20] sm:$0xff pattern:$0x73625140]
      %434 = vst [vmem:[#allocation1] ss:$4 sm:$0xff] %v328
      %435 = vst [vmem:[%s398] ss:$4 sm:$0xff] %v329
      %436 = vst [vmem:[%s400] ss:$4 sm:$0xff] %v374
      %437 = vst [vmem:[%s402] ss:$4 sm:$0xff] %v375
      %438 = vst [vmem:[%s404] ss:$4 sm:$0xff] %v376
      %439 = vst [vmem:[%s406] ss:$4 sm:$0xff] %v330
      %440 = vst [vmem:[%s408] ss:$4 sm:$0xff] %v331
      %441 = vst [vmem:[%s410] ss:$4 sm:$0xff] %v377
      %v442 = vld.sshfl [vmem:[#allocation1] sm:$0xff pattern:$0x73625140]
      %v443 = vld.sshfl [vmem:[#allocation1 + $0x20] sm:$0xff pattern:$0x73625140]
      %444 = vst [vmem:[#allocation1] ss:$4 sm:$0xff] %v378
      %445 = vst [vmem:[%s398] ss:$4 sm:$0xff] %v379
      %446 = vst [vmem:[%s400] ss:$4 sm:$0xff] %v332
      %447 = vst [vmem:[%s402] ss:$4 sm:$0xff] %v333
      %448 = vst [vmem:[%s404] ss:$4 sm:$0xff] %v380
      %449 = vst [vmem:[%s406] ss:$4 sm:$0xff] %v381
      %450 = vst [vmem:[%s408] ss:$4 sm:$0xff] %v382
      %451 = vst [vmem:[%s410] ss:$4 sm:$0xff] %v334
      %v452 = vld.sshfl [vmem:[#allocation1] sm:$0xff pattern:$0x73625140]
      %v453 = vld.sshfl [vmem:[#allocation1 + $0x20] sm:$0xff pattern:$0x73625140]
      %454 = vst [vmem:[#allocation1] ss:$4 sm:$0xff] %v335
      %455 = vst [vmem:[%s398] ss:$4 sm:$0xff] %v383
      %456 = vst [vmem:[%s400] ss:$4 sm:$0xff] %v384
      %457 = vst [vmem:[%s402] ss:$4 sm:$0xff] %v385
      %458 = vst [vmem:[%s404] ss:$4 sm:$0xff] %v336
      %459 = vst [vmem:[%s406] ss:$4 sm:$0xff] %v337
      %460 = vst [vmem:[%s408] ss:$4 sm:$0xff] %v386
      %461 = vst [vmem:[%s410] ss:$4 sm:$0xff] %v387
      %v462 = vld.sshfl [vmem:[#allocation1] sm:$0xff pattern:$0x73625140]
      %v463 = vld.sshfl [vmem:[#allocation1 + $0x20] sm:$0xff pattern:$0x73625140]
      %464 = vst [vmem:[#allocation1] ss:$4 sm:$0xff] %v388
      %465 = vst [vmem:[%s398] ss:$4 sm:$0xff] %v338
      %v466 = vld.sshfl [vmem:[#allocation1] sm:$0xff pattern:$0x73625140]
      %vm467 = vcmask 261120
      %v468 = vsel %vm467, %v412, 0
      %v470 = vsel %vm467, %v413, 0
      %v472 = vsel %vm467, %v422, 0
      %v474 = vsel %vm467, %v423, 0
      %v476 = vsel %vm467, %v432, 0
      %v478 = vsel %vm467, %v433, 0
      %v480 = vsel %vm467, %v442, 0
      %v482 = vsel %vm467, %v443, 0
      %v484 = vsel %vm467, %v452, 0
      %v486 = vsel %vm467, %v453, 0
      %v488 = vsel %vm467, %v462, 0
      %v490 = vsel %vm467, %v463, 0
      %v492 = vsel %vm467, %v466, 0
      %494 = vmatpush.msra.mxu0 0.0
      %495 = vmatpush.msra.mxu0 0.0
      %496 = vmatpush.msra.mxu0 0.0
      %497 = vmatpush.msra.mxu0 0.0
      %498 = vmatpush.msra.mxu0 0.0
      %499 = vmatpush.msra.mxu0 0.0
      %500 = vmatpush.msra.mxu0 0.0
      %501 = vmatpush.msra.mxu0 0.0
      %502 = vmatpush.msra.mxu0 0.0
      %503 = vmatpush.msra.mxu0 0.0
      %504 = vmatpush.msra.mxu0 0.0
      %505 = vmatpush.msra.mxu0 0.0
      %506 = vmatpush.msra.mxu0 %v392
      %507 = vmatpush.msra.mxu0 %v391
      %508 = vmatpush.msra.mxu0 %v390
      %509 = vmatpush.msra.mxu0 %v389
      %510 = vmatmul.f32.gmra.mxu0 %v468
      %v511 = vpop.f32.mrf.mxu0
      %v512 = vadd.f32 %v395, %v511
      %513 = vmatmul.f32.gmra.mxu0 %v470
      %v514 = vpop.f32.mrf.mxu0
      %v515 = vadd.f32 %v395, %v514
      %516 = vmatmul.f32.gmra.mxu0 %v472
      %v517 = vpop.f32.mrf.mxu0
      %v518 = vadd.f32 %v395, %v517
      %519 = vmatmul.f32.gmra.mxu0 %v474
      %v520 = vpop.f32.mrf.mxu0
      %v521 = vadd.f32 %v395, %v520
      %522 = vmatmul.f32.gmra.mxu0 %v476
      %v523 = vpop.f32.mrf.mxu0
      %v524 = vadd.f32 %v395, %v523
      %525 = vmatmul.f32.gmra.mxu0 %v478
      %v526 = vpop.f32.mrf.mxu0
      %v527 = vadd.f32 %v395, %v526
      %528 = vmatmul.f32.gmra.mxu0 %v480
      %v529 = vpop.f32.mrf.mxu0
      %v530 = vadd.f32 %v395, %v529
      %531 = vmatmul.f32.gmra.mxu0 %v482
      %v532 = vpop.f32.mrf.mxu0
      %v533 = vadd.f32 %v395, %v532
      %534 = vmatmul.f32.gmra.mxu0 %v484
      %v535 = vpop.f32.mrf.mxu0
      %v536 = vadd.f32 %v395, %v535
      %537 = vmatmul.f32.gmra.mxu0 %v486
      %v538 = vpop.f32.mrf.mxu0
      %v539 = vadd.f32 %v395, %v538
      %540 = vmatmul.f32.gmra.mxu0 %v488
      %v541 = vpop.f32.mrf.mxu0
      %v542 = vadd.f32 %v395, %v541
      %543 = vmatmul.f32.gmra.mxu0 %v490
      %v544 = vpop.f32.mrf.mxu0
      %v545 = vadd.f32 %v395, %v544
      %546 = vmatmul.f32.gmra.mxu0 %v492
      %v547 = vpop.f32.mrf.mxu0
      %v548 = vadd.f32 %v395, %v547
      %549 = vdwg.mxu0
      %v563 = vrot.slane %v512, 2
      %v564 = vrot.slane %v512, 4
      %v565 = vrot.slane %v512, 6
      %v566 = vrot.slane %v515, 2
      %v567 = vrot.slane %v515, 4
      %v568 = vrot.slane %v515, 6
      %v569 = vrot.slane %v518, 2
      %v570 = vrot.slane %v518, 4
      %v571 = vrot.slane %v518, 6
      %v572 = vrot.slane %v521, 2
      %v573 = vrot.slane %v521, 4
      %v574 = vrot.slane %v521, 6
      %v575 = vrot.slane %v524, 2
      %v576 = vrot.slane %v524, 4
      %v577 = vrot.slane %v524, 6
      %v578 = vrot.slane %v527, 2
      %v579 = vrot.slane %v527, 4
      %v580 = vrot.slane %v527, 6
      %v581 = vrot.slane %v530, 2
      %v582 = vrot.slane %v530, 4
      %v583 = vrot.slane %v530, 6
      %v584 = vrot.slane %v533, 2
      %v585 = vrot.slane %v533, 4
      %v586 = vrot.slane %v533, 6
      %v587 = vrot.slane %v536, 2
      %v588 = vrot.slane %v536, 4
      %v589 = vrot.slane %v536, 6
      %v590 = vrot.slane %v539, 2
      %v591 = vrot.slane %v539, 4
      %v592 = vrot.slane %v539, 6
      %v593 = vrot.slane %v542, 2
      %v594 = vrot.slane %v542, 4
      %v595 = vrot.slane %v542, 6
      %v596 = vrot.slane %v545, 2
      %v597 = vrot.slane %v545, 4
      %v598 = vrot.slane %v545, 6
      %v599 = vrot.slane %v548, 2
      %600 = vst [vmem:[#allocation1] ss:$4 sm:$0xff] %v512
      %s601 = scalar_lea.vmem [#allocation1], 1
      %602 = vst [vmem:[%s601] ss:$4 sm:$0xff] %v563
      %s603 = scalar_lea.vmem [#allocation1], 2
      %604 = vst [vmem:[%s603] ss:$4 sm:$0xff] %v564
      %s605 = scalar_lea.vmem [#allocation1], 3
      %606 = vst [vmem:[%s605] ss:$4 sm:$0xff] %v565
      %s607 = scalar_lea.vmem [#allocation1], 32
      %608 = vst [vmem:[%s607] ss:$4 sm:$0xff] %v515
      %v609 = vld.sshfl [vmem:[#allocation1] sm:$0xff pattern:$0x73625140]
      %v610 = vld.sshfl [vmem:[#allocation1 + $0x20] sm:$0xff pattern:$0x73625140]
      %611 = vst [vmem:[#allocation1] ss:$4 sm:$0xff] %v512
      %s612 = scalar_lea.vmem [#allocation1], 1
      %613 = vst [vmem:[%s612] ss:$4 sm:$0xff] %v563
      %s614 = scalar_lea.vmem [#allocation1], 2
      %615 = vst [vmem:[%s614] ss:$4 sm:$0xff] %v564
      %s616 = scalar_lea.vmem [#allocation1], 3
      %617 = vst [vmem:[%s616] ss:$4 sm:$0xff] %v565
      %s618 = scalar_lea.vmem [#allocation1], 32
      %619 = vst [vmem:[%s618] ss:$4 sm:$0xff] %v515
      %v620 = vld.sshfl [vmem:[#allocation1] sm:$0xff pattern:$0x73625140]
      %v621 = vld.sshfl [vmem:[#allocation1 + $0x20] sm:$0xff pattern:$0x73625140]
      %622 = vrot.lane.b32.xlu0 %v620, 96
      %v623 = vpop.permute.xlu0 %622
      %624 = vrot.lane.b32.xlu0 %v621, 96
      %v625 = vpop.permute.xlu0 %624
      %v626 = vsel %vm467, %v609, 0
      %v628 = vsel %vm467, %v610, 0
      %v630 = vsel %vm467, %v623, 0
      %v632 = vsel %vm467, %v625, 0
      %634 = vmatpush.xpose.msra.mxu0 0.0
      %635 = vmatpush.xpose.msra.mxu0 0.0
      %636 = vmatpush.xpose.msra.mxu0 0.0
      %637 = vmatpush.xpose.msra.mxu0 0.0
      %638 = vmatpush.xpose.msra.mxu0 0.0
      %639 = vmatpush.xpose.msra.mxu0 0.0
      %640 = vmatpush.xpose.msra.mxu0 0.0
      %641 = vmatpush.xpose.msra.mxu0 0.0
      %642 = vmatpush.xpose.msra.mxu0 0.0
      %643 = vmatpush.xpose.msra.mxu0 0.0
      %644 = vmatpush.xpose.msra.mxu0 0.0
      %645 = vmatpush.xpose.msra.mxu0 0.0
      %646 = vmatpush.xpose.msra.mxu0 0.0
      %647 = vmatpush.xpose.msra.mxu0 0.0
      %648 = vmatpush.xpose.msra.mxu0 %v632
      %649 = vmatpush.xpose.msra.mxu0 %v630
      %650 = vmatmul.f32.gmra.mxu0 %v626
      %v651 = vpop.f32.mrf.mxu0
      %v652 = vadd.f32 0.0, %v651
      %653 = vmatmul.f32.gmra.mxu0 %v628
      %v654 = vpop.f32.mrf.mxu0
      %v655 = vadd.f32 0.0, %v654
      %656 = vdwg.mxu0
      %657 = vst [vmem:[#allocation1] ss:$4 sm:$0xff] %v566
      %s658 = scalar_lea.vmem [#allocation1], 1
      %659 = vst [vmem:[%s658] ss:$4 sm:$0xff] %v567
      %s660 = scalar_lea.vmem [#allocation1], 2
      %661 = vst [vmem:[%s660] ss:$4 sm:$0xff] %v568
      %s662 = scalar_lea.vmem [#allocation1], 3
      %663 = vst [vmem:[%s662] ss:$4 sm:$0xff] %v518
      %s664 = scalar_lea.vmem [#allocation1], 32
      %665 = vst [vmem:[%s664] ss:$4 sm:$0xff] %v569
      %v666 = vld.sshfl [vmem:[#allocation1] sm:$0xff pattern:$0x73625140]
      %v667 = vld.sshfl [vmem:[#allocation1 + $0x20] sm:$0xff pattern:$0x73625140]
      %668 = vst [vmem:[#allocation1] ss:$4 sm:$0xff] %v566
      %s669 = scalar_lea.vmem [#allocation1], 1
      %670 = vst [vmem:[%s669] ss:$4 sm:$0xff] %v567
      %s671 = scalar_lea.vmem [#allocation1], 2
      %672 = vst [vmem:[%s671] ss:$4 sm:$0xff] %v568
      %s673 = scalar_lea.vmem [#allocation1], 3
      %674 = vst [vmem:[%s673] ss:$4 sm:$0xff] %v518
      %s675 = scalar_lea.vmem [#allocation1], 32
      %676 = vst [vmem:[%s675] ss:$4 sm:$0xff] %v569
      %v677 = vld.sshfl [vmem:[#allocation1] sm:$0xff pattern:$0x73625140]
      %v678 = vld.sshfl [vmem:[#allocation1 + $0x20] sm:$0xff pattern:$0x73625140]
      %679 = vrot.lane.b32.xlu0 %v677, 96
      %v680 = vpop.permute.xlu0 %679
      %681 = vrot.lane.b32.xlu0 %v678, 96
      %v682 = vpop.permute.xlu0 %681
      %v683 = vsel %vm467, %v666, 0
      %v685 = vsel %vm467, %v667, 0
      %v687 = vsel %vm467, %v680, 0
      %v689 = vsel %vm467, %v682, 0
      %691 = vmatpush.xpose.msra.mxu0 0.0
      %692 = vmatpush.xpose.msra.mxu0 0.0
      %693 = vmatpush.xpose.msra.mxu0 0.0
      %694 = vmatpush.xpose.msra.mxu0 0.0
      %695 = vmatpush.xpose.msra.mxu0 0.0
      %696 = vmatpush.xpose.msra.mxu0 0.0
      %697 = vmatpush.xpose.msra.mxu0 0.0
      %698 = vmatpush.xpose.msra.mxu0 0.0
      %699 = vmatpush.xpose.msra.mxu0 0.0
      %700 = vmatpush.xpose.msra.mxu0 0.0
      %701 = vmatpush.xpose.msra.mxu0 0.0
      %702 = vmatpush.xpose.msra.mxu0 0.0
      %703 = vmatpush.xpose.msra.mxu0 0.0
      %704 = vmatpush.xpose.msra.mxu0 0.0
      %705 = vmatpush.xpose.msra.mxu0 %v689
      %706 = vmatpush.xpose.msra.mxu0 %v687
      %707 = vmatmul.f32.gmra.mxu0 %v683
      %v708 = vpop.f32.mrf.mxu0
      %v709 = vadd.f32 0.0, %v708
      %710 = vmatmul.f32.gmra.mxu0 %v685
      %v711 = vpop.f32.mrf.mxu0
      %v712 = vadd.f32 0.0, %v711
      %713 = vdwg.mxu0
      %714 = vst [vmem:[#allocation1] ss:$4 sm:$0xff] %v570
      %s715 = scalar_lea.vmem [#allocation1], 1
      %716 = vst [vmem:[%s715] ss:$4 sm:$0xff] %v571
      %s717 = scalar_lea.vmem [#allocation1], 2
      %718 = vst [vmem:[%s717] ss:$4 sm:$0xff] %v521
      %s719 = scalar_lea.vmem [#allocation1], 3
      %720 = vst [vmem:[%s719] ss:$4 sm:$0xff] %v572
      %s721 = scalar_lea.vmem [#allocation1], 32
      %722 = vst [vmem:[%s721] ss:$4 sm:$0xff] %v573
      %v723 = vld.sshfl [vmem:[#allocation1] sm:$0xff pattern:$0x73625140]
      %v724 = vld.sshfl [vmem:[#allocation1 + $0x20] sm:$0xff pattern:$0x73625140]
      %725 = vst [vmem:[#allocation1] ss:$4 sm:$0xff] %v570
      %s726 = scalar_lea.vmem [#allocation1], 1
      %727 = vst [vmem:[%s726] ss:$4 sm:$0xff] %v571
      %s728 = scalar_lea.vmem [#allocation1], 2
      %729 = vst [vmem:[%s728] ss:$4 sm:$0xff] %v521
      %s730 = scalar_lea.vmem [#allocation1], 3
      %731 = vst [vmem:[%s730] ss:$4 sm:$0xff] %v572
      %s732 = scalar_lea.vmem [#allocation1], 32
      %733 = vst [vmem:[%s732] ss:$4 sm:$0xff] %v573
      %v734 = vld.sshfl [vmem:[#allocation1] sm:$0xff pattern:$0x73625140]
      %v735 = vld.sshfl [vmem:[#allocation1 + $0x20] sm:$0xff pattern:$0x73625140]
      %736 = vrot.lane.b32.xlu0 %v734, 96
      %v737 = vpop.permute.xlu0 %736
      %738 = vrot.lane.b32.xlu0 %v735, 96
      %v739 = vpop.permute.xlu0 %738
      %v740 = vsel %vm467, %v723, 0
      %v742 = vsel %vm467, %v724, 0
      %v744 = vsel %vm467, %v737, 0
      %v746 = vsel %vm467, %v739, 0
      %748 = vmatpush.xpose.msra.mxu0 0.0
      %749 = vmatpush.xpose.msra.mxu0 0.0
      %750 = vmatpush.xpose.msra.mxu0 0.0
      %751 = vmatpush.xpose.msra.mxu0 0.0
      %752 = vmatpush.xpose.msra.mxu0 0.0
      %753 = vmatpush.xpose.msra.mxu0 0.0
      %754 = vmatpush.xpose.msra.mxu0 0.0
      %755 = vmatpush.xpose.msra.mxu0 0.0
      %756 = vmatpush.xpose.msra.mxu0 0.0
      %757 = vmatpush.xpose.msra.mxu0 0.0
      %758 = vmatpush.xpose.msra.mxu0 0.0
      %759 = vmatpush.xpose.msra.mxu0 0.0
      %760 = vmatpush.xpose.msra.mxu0 0.0
      %761 = vmatpush.xpose.msra.mxu0 0.0
      %762 = vmatpush.xpose.msra.mxu0 %v746
      %763 = vmatpush.xpose.msra.mxu0 %v744
      %764 = vmatmul.f32.gmra.mxu0 %v740
      %v765 = vpop.f32.mrf.mxu0
      %v766 = vadd.f32 0.0, %v765
      %767 = vmatmul.f32.gmra.mxu0 %v742
      %v768 = vpop.f32.mrf.mxu0
      %v769 = vadd.f32 0.0, %v768
      %770 = vdwg.mxu0
      %771 = vst [vmem:[#allocation1] ss:$4 sm:$0xff] %v574
      %s772 = scalar_lea.vmem [#allocation1], 1
      %773 = vst [vmem:[%s772] ss:$4 sm:$0xff] %v524
      %s774 = scalar_lea.vmem [#allocation1], 2
      %775 = vst [vmem:[%s774] ss:$4 sm:$0xff] %v575
      %s776 = scalar_lea.vmem [#allocation1], 3
      %777 = vst [vmem:[%s776] ss:$4 sm:$0xff] %v576
      %s778 = scalar_lea.vmem [#allocation1], 32
      %779 = vst [vmem:[%s778] ss:$4 sm:$0xff] %v577
      %v780 = vld.sshfl [vmem:[#allocation1] sm:$0xff pattern:$0x73625140]
      %v781 = vld.sshfl [vmem:[#allocation1 + $0x20] sm:$0xff pattern:$0x73625140]
      %782 = vst [vmem:[#allocation1] ss:$4 sm:$0xff] %v574
      %s783 = scalar_lea.vmem [#allocation1], 1
      %784 = vst [vmem:[%s783] ss:$4 sm:$0xff] %v524
      %s785 = scalar_lea.vmem [#allocation1], 2
      %786 = vst [vmem:[%s785] ss:$4 sm:$0xff] %v575
      %s787 = scalar_lea.vmem [#allocation1], 3
      %788 = vst [vmem:[%s787] ss:$4 sm:$0xff] %v576
      %s789 = scalar_lea.vmem [#allocation1], 32
      %790 = vst [vmem:[%s789] ss:$4 sm:$0xff] %v577
      %v791 = vld.sshfl [vmem:[#allocation1] sm:$0xff pattern:$0x73625140]
      %v792 = vld.sshfl [vmem:[#allocation1 + $0x20] sm:$0xff pattern:$0x73625140]
      %793 = vrot.lane.b32.xlu0 %v791, 96
      %v794 = vpop.permute.xlu0 %793
      %795 = vrot.lane.b32.xlu0 %v792, 96
      %v796 = vpop.permute.xlu0 %795
      %v797 = vsel %vm467, %v780, 0
      %v799 = vsel %vm467, %v781, 0
      %v801 = vsel %vm467, %v794, 0
      %v803 = vsel %vm467, %v796, 0
      %805 = vmatpush.xpose.msra.mxu0 0.0
      %806 = vmatpush.xpose.msra.mxu0 0.0
      %807 = vmatpush.xpose.msra.mxu0 0.0
      %808 = vmatpush.xpose.msra.mxu0 0.0
      %809 = vmatpush.xpose.msra.mxu0 0.0
      %810 = vmatpush.xpose.msra.mxu0 0.0
      %811 = vmatpush.xpose.msra.mxu0 0.0
      %812 = vmatpush.xpose.msra.mxu0 0.0
      %813 = vmatpush.xpose.msra.mxu0 0.0
      %814 = vmatpush.xpose.msra.mxu0 0.0
      %815 = vmatpush.xpose.msra.mxu0 0.0
      %816 = vmatpush.xpose.msra.mxu0 0.0
      %817 = vmatpush.xpose.msra.mxu0 0.0
      %818 = vmatpush.xpose.msra.mxu0 0.0
      %819 = vmatpush.xpose.msra.mxu0 %v803
      %820 = vmatpush.xpose.msra.mxu0 %v801
      %821 = vmatmul.f32.gmra.mxu0 %v797
      %v822 = vpop.f32.mrf.mxu0
      %v823 = vadd.f32 0.0, %v822
      %824 = vmatmul.f32.gmra.mxu0 %v799
      %v825 = vpop.f32.mrf.mxu0
      %v826 = vadd.f32 0.0, %v825
      %827 = vdwg.mxu0
      %828 = vst [vmem:[#allocation1] ss:$4 sm:$0xff] %v527
      %s829 = scalar_lea.vmem [#allocation1], 1
      %830 = vst [vmem:[%s829] ss:$4 sm:$0xff] %v578
      %s831 = scalar_lea.vmem [#allocation1], 2
      %832 = vst [vmem:[%s831] ss:$4 sm:$0xff] %v579
      %s833 = scalar_lea.vmem [#allocation1], 3
      %834 = vst [vmem:[%s833] ss:$4 sm:$0xff] %v580
      %s835 = scalar_lea.vmem [#allocation1], 32
      %836 = vst [vmem:[%s835] ss:$4 sm:$0xff] %v530
      %v837 = vld.sshfl [vmem:[#allocation1] sm:$0xff pattern:$0x73625140]
      %v838 = vld.sshfl [vmem:[#allocation1 + $0x20] sm:$0xff pattern:$0x73625140]
      %839 = vst [vmem:[#allocation1] ss:$4 sm:$0xff] %v527
      %s840 = scalar_lea.vmem [#allocation1], 1
      %841 = vst [vmem:[%s840] ss:$4 sm:$0xff] %v578
      %s842 = scalar_lea.vmem [#allocation1], 2
      %843 = vst [vmem:[%s842] ss:$4 sm:$0xff] %v579
      %s844 = scalar_lea.vmem [#allocation1], 3
      %845 = vst [vmem:[%s844] ss:$4 sm:$0xff] %v580
      %s846 = scalar_lea.vmem [#allocation1], 32
      %847 = vst [vmem:[%s846] ss:$4 sm:$0xff] %v530
      %v848 = vld.sshfl [vmem:[#allocation1] sm:$0xff pattern:$0x73625140]
      %v849 = vld.sshfl [vmem:[#allocation1 + $0x20] sm:$0xff pattern:$0x73625140]
      %850 = vrot.lane.b32.xlu0 %v848, 96
      %v851 = vpop.permute.xlu0 %850
      %852 = vrot.lane.b32.xlu0 %v849, 96
      %v853 = vpop.permute.xlu0 %852
      %v854 = vsel %vm467, %v837, 0
      %v856 = vsel %vm467, %v838, 0
      %v858 = vsel %vm467, %v851, 0
      %v860 = vsel %vm467, %v853, 0
      %862 = vmatpush.xpose.msra.mxu0 0.0
      %863 = vmatpush.xpose.msra.mxu0 0.0
      %864 = vmatpush.xpose.msra.mxu0 0.0
      %865 = vmatpush.xpose.msra.mxu0 0.0
      %866 = vmatpush.xpose.msra.mxu0 0.0
      %867 = vmatpush.xpose.msra.mxu0 0.0
      %868 = vmatpush.xpose.msra.mxu0 0.0
      %869 = vmatpush.xpose.msra.mxu0 0.0
      %870 = vmatpush.xpose.msra.mxu0 0.0
      %871 = vmatpush.xpose.msra.mxu0 0.0
      %872 = vmatpush.xpose.msra.mxu0 0.0
      %873 = vmatpush.xpose.msra.mxu0 0.0
      %874 = vmatpush.xpose.msra.mxu0 0.0
      %875 = vmatpush.xpose.msra.mxu0 0.0
      %876 = vmatpush.xpose.msra.mxu0 %v860
      %877 = vmatpush.xpose.msra.mxu0 %v858
      %878 = vmatmul.f32.gmra.mxu0 %v854
      %v879 = vpop.f32.mrf.mxu0
      %v880 = vadd.f32 0.0, %v879
      %881 = vmatmul.f32.gmra.mxu0 %v856
      %v882 = vpop.f32.mrf.mxu0
      %v883 = vadd.f32 0.0, %v882
      %884 = vdwg.mxu0
      %885 = vst [vmem:[#allocation1] ss:$4 sm:$0xff] %v581
      %s886 = scalar_lea.vmem [#allocation1], 1
      %887 = vst [vmem:[%s886] ss:$4 sm:$0xff] %v582
      %s888 = scalar_lea.vmem [#allocation1], 2
      %889 = vst [vmem:[%s888] ss:$4 sm:$0xff] %v583
      %s890 = scalar_lea.vmem [#allocation1], 3
      %891 = vst [vmem:[%s890] ss:$4 sm:$0xff] %v533
      %s892 = scalar_lea.vmem [#allocation1], 32
      %893 = vst [vmem:[%s892] ss:$4 sm:$0xff] %v584
      %v894 = vld.sshfl [vmem:[#allocation1] sm:$0xff pattern:$0x73625140]
      %v895 = vld.sshfl [vmem:[#allocation1 + $0x20] sm:$0xff pattern:$0x73625140]
      %896 = vst [vmem:[#allocation1] ss:$4 sm:$0xff] %v581
      %s897 = scalar_lea.vmem [#allocation1], 1
      %898 = vst [vmem:[%s897] ss:$4 sm:$0xff] %v582
      %s899 = scalar_lea.vmem [#allocation1], 2
      %900 = vst [vmem:[%s899] ss:$4 sm:$0xff] %v583
      %s901 = scalar_lea.vmem [#allocation1], 3
      %902 = vst [vmem:[%s901] ss:$4 sm:$0xff] %v533
      %s903 = scalar_lea.vmem [#allocation1], 32
      %904 = vst [vmem:[%s903] ss:$4 sm:$0xff] %v584
      %v905 = vld.sshfl [vmem:[#allocation1] sm:$0xff pattern:$0x73625140]
      %v906 = vld.sshfl [vmem:[#allocation1 + $0x20] sm:$0xff pattern:$0x73625140]
      %907 = vrot.lane.b32.xlu0 %v905, 96
      %v908 = vpop.permute.xlu0 %907
      %909 = vrot.lane.b32.xlu0 %v906, 96
      %v910 = vpop.permute.xlu0 %909
      %v911 = vsel %vm467, %v894, 0
      %v913 = vsel %vm467, %v895, 0
      %v915 = vsel %vm467, %v908, 0
      %v917 = vsel %vm467, %v910, 0
      %919 = vmatpush.xpose.msra.mxu0 0.0
      %920 = vmatpush.xpose.msra.mxu0 0.0
      %921 = vmatpush.xpose.msra.mxu0 0.0
      %922 = vmatpush.xpose.msra.mxu0 0.0
      %923 = vmatpush.xpose.msra.mxu0 0.0
      %924 = vmatpush.xpose.msra.mxu0 0.0
      %925 = vmatpush.xpose.msra.mxu0 0.0
      %926 = vmatpush.xpose.msra.mxu0 0.0
      %927 = vmatpush.xpose.msra.mxu0 0.0
      %928 = vmatpush.xpose.msra.mxu0 0.0
      %929 = vmatpush.xpose.msra.mxu0 0.0
      %930 = vmatpush.xpose.msra.mxu0 0.0
      %931 = vmatpush.xpose.msra.mxu0 0.0
      %932 = vmatpush.xpose.msra.mxu0 0.0
      %933 = vmatpush.xpose.msra.mxu0 %v917
      %934 = vmatpush.xpose.msra.mxu0 %v915
      %935 = vmatmul.f32.gmra.mxu0 %v911
      %v936 = vpop.f32.mrf.mxu0
      %v937 = vadd.f32 0.0, %v936
      %938 = vmatmul.f32.gmra.mxu0 %v913
      %v939 = vpop.f32.mrf.mxu0
      %v940 = vadd.f32 0.0, %v939
      %941 = vdwg.mxu0
      %942 = vst [vmem:[#allocation1] ss:$4 sm:$0xff] %v585
      %s943 = scalar_lea.vmem [#allocation1], 1
      %944 = vst [vmem:[%s943] ss:$4 sm:$0xff] %v586
      %s945 = scalar_lea.vmem [#allocation1], 2
      %946 = vst [vmem:[%s945] ss:$4 sm:$0xff] %v536
      %s947 = scalar_lea.vmem [#allocation1], 3
      %948 = vst [vmem:[%s947] ss:$4 sm:$0xff] %v587
      %s949 = scalar_lea.vmem [#allocation1], 32
      %950 = vst [vmem:[%s949] ss:$4 sm:$0xff] %v588
      %v951 = vld.sshfl [vmem:[#allocation1] sm:$0xff pattern:$0x73625140]
      %v952 = vld.sshfl [vmem:[#allocation1 + $0x20] sm:$0xff pattern:$0x73625140]
      %953 = vst [vmem:[#allocation1] ss:$4 sm:$0xff] %v585
      %s954 = scalar_lea.vmem [#allocation1], 1
      %955 = vst [vmem:[%s954] ss:$4 sm:$0xff] %v586
      %s956 = scalar_lea.vmem [#allocation1], 2
      %957 = vst [vmem:[%s956] ss:$4 sm:$0xff] %v536
      %s958 = scalar_lea.vmem [#allocation1], 3
      %959 = vst [vmem:[%s958] ss:$4 sm:$0xff] %v587
      %s960 = scalar_lea.vmem [#allocation1], 32
      %961 = vst [vmem:[%s960] ss:$4 sm:$0xff] %v588
      %v962 = vld.sshfl [vmem:[#allocation1] sm:$0xff pattern:$0x73625140]
      %v963 = vld.sshfl [vmem:[#allocation1 + $0x20] sm:$0xff pattern:$0x73625140]
      %964 = vrot.lane.b32.xlu0 %v962, 96
      %v965 = vpop.permute.xlu0 %964
      %966 = vrot.lane.b32.xlu0 %v963, 96
      %v967 = vpop.permute.xlu0 %966
      %v968 = vsel %vm467, %v951, 0
      %v970 = vsel %vm467, %v952, 0
      %v972 = vsel %vm467, %v965, 0
      %v974 = vsel %vm467, %v967, 0
      %976 = vmatpush.xpose.msra.mxu0 0.0
      %977 = vmatpush.xpose.msra.mxu0 0.0
      %978 = vmatpush.xpose.msra.mxu0 0.0
      %979 = vmatpush.xpose.msra.mxu0 0.0
      %980 = vmatpush.xpose.msra.mxu0 0.0
      %981 = vmatpush.xpose.msra.mxu0 0.0
      %982 = vmatpush.xpose.msra.mxu0 0.0
      %983 = vmatpush.xpose.msra.mxu0 0.0
      %984 = vmatpush.xpose.msra.mxu0 0.0
      %985 = vmatpush.xpose.msra.mxu0 0.0
      %986 = vmatpush.xpose.msra.mxu0 0.0
      %987 = vmatpush.xpose.msra.mxu0 0.0
      %988 = vmatpush.xpose.msra.mxu0 0.0
      %989 = vmatpush.xpose.msra.mxu0 0.0
      %990 = vmatpush.xpose.msra.mxu0 %v974
      %991 = vmatpush.xpose.msra.mxu0 %v972
      %992 = vmatmul.f32.gmra.mxu0 %v968
      %v993 = vpop.f32.mrf.mxu0
      %v994 = vadd.f32 0.0, %v993
      %995 = vmatmul.f32.gmra.mxu0 %v970
      %v996 = vpop.f32.mrf.mxu0
      %v997 = vadd.f32 0.0, %v996
      %998 = vdwg.mxu0
      %999 = vst [vmem:[#allocation1] ss:$4 sm:$0xff] %v589
      %s1000 = scalar_lea.vmem [#allocation1], 1
      %1001 = vst [vmem:[%s1000] ss:$4 sm:$0xff] %v539
      %s1002 = scalar_lea.vmem [#allocation1], 2
      %1003 = vst [vmem:[%s1002] ss:$4 sm:$0xff] %v590
      %s1004 = scalar_lea.vmem [#allocation1], 3
      %1005 = vst [vmem:[%s1004] ss:$4 sm:$0xff] %v591
      %s1006 = scalar_lea.vmem [#allocation1], 32
      %1007 = vst [vmem:[%s1006] ss:$4 sm:$0xff] %v592
      %v1008 = vld.sshfl [vmem:[#allocation1] sm:$0xff pattern:$0x73625140]
      %v1009 = vld.sshfl [vmem:[#allocation1 + $0x20] sm:$0xff pattern:$0x73625140]
      %1010 = vst [vmem:[#allocation1] ss:$4 sm:$0xff] %v589
      %s1011 = scalar_lea.vmem [#allocation1], 1
      %1012 = vst [vmem:[%s1011] ss:$4 sm:$0xff] %v539
      %s1013 = scalar_lea.vmem [#allocation1], 2
      %1014 = vst [vmem:[%s1013] ss:$4 sm:$0xff] %v590
      %s1015 = scalar_lea.vmem [#allocation1], 3
      %1016 = vst [vmem:[%s1015] ss:$4 sm:$0xff] %v591
      %s1017 = scalar_lea.vmem [#allocation1], 32
      %1018 = vst [vmem:[%s1017] ss:$4 sm:$0xff] %v592
      %v1019 = vld.sshfl [vmem:[#allocation1] sm:$0xff pattern:$0x73625140]
      %v1020 = vld.sshfl [vmem:[#allocation1 + $0x20] sm:$0xff pattern:$0x73625140]
      %1021 = vrot.lane.b32.xlu0 %v1019, 96
      %v1022 = vpop.permute.xlu0 %1021
      %1023 = vrot.lane.b32.xlu0 %v1020, 96
      %v1024 = vpop.permute.xlu0 %1023
      %v1025 = vsel %vm467, %v1008, 0
      %v1027 = vsel %vm467, %v1009, 0
      %v1029 = vsel %vm467, %v1022, 0
      %v1031 = vsel %vm467, %v1024, 0
      %1033 = vmatpush.xpose.msra.mxu0 0.0
      %1034 = vmatpush.xpose.msra.mxu0 0.0
      %1035 = vmatpush.xpose.msra.mxu0 0.0
      %1036 = vmatpush.xpose.msra.mxu0 0.0
      %1037 = vmatpush.xpose.msra.mxu0 0.0
      %1038 = vmatpush.xpose.msra.mxu0 0.0
      %1039 = vmatpush.xpose.msra.mxu0 0.0
      %1040 = vmatpush.xpose.msra.mxu0 0.0
      %1041 = vmatpush.xpose.msra.mxu0 0.0
      %1042 = vmatpush.xpose.msra.mxu0 0.0
      %1043 = vmatpush.xpose.msra.mxu0 0.0
      %1044 = vmatpush.xpose.msra.mxu0 0.0
      %1045 = vmatpush.xpose.msra.mxu0 0.0
      %1046 = vmatpush.xpose.msra.mxu0 0.0
      %1047 = vmatpush.xpose.msra.mxu0 %v1031
      %1048 = vmatpush.xpose.msra.mxu0 %v1029
      %1049 = vmatmul.f32.gmra.mxu0 %v1025
      %v1050 = vpop.f32.mrf.mxu0
      %v1051 = vadd.f32 0.0, %v1050
      %1052 = vmatmul.f32.gmra.mxu0 %v1027
      %v1053 = vpop.f32.mrf.mxu0
      %v1054 = vadd.f32 0.0, %v1053
      %1055 = vdwg.mxu0
      %1056 = vst [vmem:[#allocation1] ss:$4 sm:$0xff] %v542
      %s1057 = scalar_lea.vmem [#allocation1], 1
      %1058 = vst [vmem:[%s1057] ss:$4 sm:$0xff] %v593
      %s1059 = scalar_lea.vmem [#allocation1], 2
      %1060 = vst [vmem:[%s1059] ss:$4 sm:$0xff] %v594
      %s1061 = scalar_lea.vmem [#allocation1], 3
      %1062 = vst [vmem:[%s1061] ss:$4 sm:$0xff] %v595
      %s1063 = scalar_lea.vmem [#allocation1], 32
      %1064 = vst [vmem:[%s1063] ss:$4 sm:$0xff] %v545
      %v1065 = vld.sshfl [vmem:[#allocation1] sm:$0xff pattern:$0x73625140]
      %v1066 = vld.sshfl [vmem:[#allocation1 + $0x20] sm:$0xff pattern:$0x73625140]
      %1067 = vst [vmem:[#allocation1] ss:$4 sm:$0xff] %v542
      %s1068 = scalar_lea.vmem [#allocation1], 1
      %1069 = vst [vmem:[%s1068] ss:$4 sm:$0xff] %v593
      %s1070 = scalar_lea.vmem [#allocation1], 2
      %1071 = vst [vmem:[%s1070] ss:$4 sm:$0xff] %v594
      %s1072 = scalar_lea.vmem [#allocation1], 3
      %1073 = vst [vmem:[%s1072] ss:$4 sm:$0xff] %v595
      %s1074 = scalar_lea.vmem [#allocation1], 32
      %1075 = vst [vmem:[%s1074] ss:$4 sm:$0xff] %v545
      %v1076 = vld.sshfl [vmem:[#allocation1] sm:$0xff pattern:$0x73625140]
      %v1077 = vld.sshfl [vmem:[#allocation1 + $0x20] sm:$0xff pattern:$0x73625140]
      %1078 = vrot.lane.b32.xlu0 %v1076, 96
      %v1079 = vpop.permute.xlu0 %1078
      %1080 = vrot.lane.b32.xlu0 %v1077, 96
      %v1081 = vpop.permute.xlu0 %1080
      %v1082 = vsel %vm467, %v1065, 0
      %v1084 = vsel %vm467, %v1066, 0
      %v1086 = vsel %vm467, %v1079, 0
      %v1088 = vsel %vm467, %v1081, 0
      %1090 = vmatpush.xpose.msra.mxu0 0.0
      %1091 = vmatpush.xpose.msra.mxu0 0.0
      %1092 = vmatpush.xpose.msra.mxu0 0.0
      %1093 = vmatpush.xpose.msra.mxu0 0.0
      %1094 = vmatpush.xpose.msra.mxu0 0.0
      %1095 = vmatpush.xpose.msra.mxu0 0.0
      %1096 = vmatpush.xpose.msra.mxu0 0.0
      %1097 = vmatpush.xpose.msra.mxu0 0.0
      %1098 = vmatpush.xpose.msra.mxu0 0.0
      %1099 = vmatpush.xpose.msra.mxu0 0.0
      %1100 = vmatpush.xpose.msra.mxu0 0.0
      %1101 = vmatpush.xpose.msra.mxu0 0.0
      %1102 = vmatpush.xpose.msra.mxu0 0.0
      %1103 = vmatpush.xpose.msra.mxu0 0.0
      %1104 = vmatpush.xpose.msra.mxu0 %v1088
      %1105 = vmatpush.xpose.msra.mxu0 %v1086
      %1106 = vmatmul.f32.gmra.mxu0 %v1082
      %v1107 = vpop.f32.mrf.mxu0
      %v1108 = vadd.f32 0.0, %v1107
      %1109 = vmatmul.f32.gmra.mxu0 %v1084
      %v1110 = vpop.f32.mrf.mxu0
      %v1111 = vadd.f32 0.0, %v1110
      %1112 = vdwg.mxu0
      %1113 = vst [vmem:[#allocation1] ss:$4 sm:$0xff] %v596
      %s1114 = scalar_lea.vmem [#allocation1], 1
      %1115 = vst [vmem:[%s1114] ss:$4 sm:$0xff] %v597
      %s1116 = scalar_lea.vmem [#allocation1], 2
      %1117 = vst [vmem:[%s1116] ss:$4 sm:$0xff] %v598
      %s1118 = scalar_lea.vmem [#allocation1], 3
      %1119 = vst [vmem:[%s1118] ss:$4 sm:$0xff] %v548
      %s1120 = scalar_lea.vmem [#allocation1], 32
      %1121 = vst [vmem:[%s1120] ss:$4 sm:$0xff] %v599
      %v1122 = vld.sshfl [vmem:[#allocation1] sm:$0xff pattern:$0x73625140]
      %v1123 = vld.sshfl [vmem:[#allocation1 + $0x20] sm:$0xff pattern:$0x73625140]
      %1124 = vst [vmem:[#allocation1] ss:$4 sm:$0xff] %v596
      %s1125 = scalar_lea.vmem [#allocation1], 1
      %1126 = vst [vmem:[%s1125] ss:$4 sm:$0xff] %v597
      %s1127 = scalar_lea.vmem [#allocation1], 2
      %1128 = vst [vmem:[%s1127] ss:$4 sm:$0xff] %v598
      %s1129 = scalar_lea.vmem [#allocation1], 3
      %1130 = vst [vmem:[%s1129] ss:$4 sm:$0xff] %v548
      %s1131 = scalar_lea.vmem [#allocation1], 32
      %1132 = vst [vmem:[%s1131] ss:$4 sm:$0xff] %v599
      %v1133 = vld.sshfl [vmem:[#allocation1] sm:$0xff pattern:$0x73625140]
      %v1134 = vld.sshfl [vmem:[#allocation1 + $0x20] sm:$0xff pattern:$0x73625140]
      %1135 = vrot.lane.b32.xlu0 %v1133, 96
      %v1136 = vpop.permute.xlu0 %1135
      %1137 = vrot.lane.b32.xlu0 %v1134, 96
      %v1138 = vpop.permute.xlu0 %1137
      %v1139 = vsel %vm467, %v1122, 0
      %v1141 = vsel %vm467, %v1123, 0
      %v1143 = vsel %vm467, %v1136, 0
      %v1145 = vsel %vm467, %v1138, 0
      %1147 = vmatpush.xpose.msra.mxu0 0.0
      %1148 = vmatpush.xpose.msra.mxu0 0.0
      %1149 = vmatpush.xpose.msra.mxu0 0.0
      %1150 = vmatpush.xpose.msra.mxu0 0.0
      %1151 = vmatpush.xpose.msra.mxu0 0.0
      %1152 = vmatpush.xpose.msra.mxu0 0.0
      %1153 = vmatpush.xpose.msra.mxu0 0.0
      %1154 = vmatpush.xpose.msra.mxu0 0.0
      %1155 = vmatpush.xpose.msra.mxu0 0.0
      %1156 = vmatpush.xpose.msra.mxu0 0.0
      %1157 = vmatpush.xpose.msra.mxu0 0.0
      %1158 = vmatpush.xpose.msra.mxu0 0.0
      %1159 = vmatpush.xpose.msra.mxu0 0.0
      %1160 = vmatpush.xpose.msra.mxu0 0.0
      %1161 = vmatpush.xpose.msra.mxu0 %v1145
      %1162 = vmatpush.xpose.msra.mxu0 %v1143
      %1163 = vmatmul.f32.gmra.mxu0 %v1139
      %v1164 = vpop.f32.mrf.mxu0
      %v1165 = vadd.f32 0.0, %v1164
      %1166 = vmatmul.f32.gmra.mxu0 %v1141
      %v1167 = vpop.f32.mrf.mxu0
      %v1168 = vadd.f32 0.0, %v1167
      %1169 = vdwg.mxu0
      %v1170 = vmul.f32 %v652, 0.17677669
      %v1171 = vmul.f32 %v655, 0.17677669
      %v1172 = vmul.f32 %v709, 0.17677669
      %v1173 = vmul.f32 %v712, 0.17677669
      %v1174 = vmul.f32 %v766, 0.17677669
      %v1175 = vmul.f32 %v769, 0.17677669
      %v1176 = vmul.f32 %v823, 0.17677669
      %v1177 = vmul.f32 %v826, 0.17677669
      %v1178 = vmul.f32 %v880, 0.17677669
      %v1179 = vmul.f32 %v883, 0.17677669
      %v1180 = vmul.f32 %v937, 0.17677669
      %v1181 = vmul.f32 %v940, 0.17677669
      %v1182 = vmul.f32 %v994, 0.17677669
      %v1183 = vmul.f32 %v997, 0.17677669
      %v1184 = vmul.f32 %v1051, 0.17677669
      %v1185 = vmul.f32 %v1054, 0.17677669
      %v1186 = vmul.f32 %v1108, 0.17677669
      %v1187 = vmul.f32 %v1111, 0.17677669
      %v1188 = vmul.f32 %v1165, 0.17677669
      %v1189 = vmul.f32 %v1168, 0.17677669
      %vm1190 = vcmask 80896
      %v1191 = vsel %vm1190, %v1170, -inf
      %1192 = vmax.xlane.f32.xlu0 %v1191
      %v1193 = vpop.xlane.xlu0 %1192
      %vm1194 = vcmask 74752
      %v1195 = vsel %vm1194, %v1171, -inf
      %1196 = vmax.xlane.f32.xlu0 %v1195
      %v1197 = vpop.xlane.xlu0 %1196
      %v1198 = vsel %vm1190, %v1172, -inf
      %1199 = vmax.xlane.f32.xlu0 %v1198
      %v1200 = vpop.xlane.xlu0 %1199
      %v1201 = vsel %vm1194, %v1173, -inf
      %1202 = vmax.xlane.f32.xlu0 %v1201
      %v1203 = vpop.xlane.xlu0 %1202
      %v1204 = vsel %vm1190, %v1174, -inf
      %1205 = vmax.xlane.f32.xlu0 %v1204
      %v1206 = vpop.xlane.xlu0 %1205
      %v1207 = vsel %vm1194, %v1175, -inf
      %1208 = vmax.xlane.f32.xlu0 %v1207
      %v1209 = vpop.xlane.xlu0 %1208
      %v1210 = vsel %vm1190, %v1176, -inf
      %1211 = vmax.xlane.f32.xlu0 %v1210
      %v1212 = vpop.xlane.xlu0 %1211
      %v1213 = vsel %vm1194, %v1177, -inf
      %1214 = vmax.xlane.f32.xlu0 %v1213
      %v1215 = vpop.xlane.xlu0 %1214
      %v1216 = vsel %vm1190, %v1178, -inf
      %1217 = vmax.xlane.f32.xlu0 %v1216
      %v1218 = vpop.xlane.xlu0 %1217
      %v1219 = vsel %vm1194, %v1179, -inf
      %1220 = vmax.xlane.f32.xlu0 %v1219
      %v1221 = vpop.xlane.xlu0 %1220
      %v1222 = vsel %vm1190, %v1180, -inf
      %1223 = vmax.xlane.f32.xlu0 %v1222
      %v1224 = vpop.xlane.xlu0 %1223
      %v1225 = vsel %vm1194, %v1181, -inf
      %1226 = vmax.xlane.f32.xlu0 %v1225
      %v1227 = vpop.xlane.xlu0 %1226
      %v1228 = vsel %vm1190, %v1182, -inf
      %1229 = vmax.xlane.f32.xlu0 %v1228
      %v1230 = vpop.xlane.xlu0 %1229
      %v1231 = vsel %vm1194, %v1183, -inf
      %1232 = vmax.xlane.f32.xlu0 %v1231
      %v1233 = vpop.xlane.xlu0 %1232
      %v1234 = vsel %vm1190, %v1184, -inf
      %1235 = vmax.xlane.f32.xlu0 %v1234
      %v1236 = vpop.xlane.xlu0 %1235
      %v1237 = vsel %vm1194, %v1185, -inf
      %1238 = vmax.xlane.f32.xlu0 %v1237
      %v1239 = vpop.xlane.xlu0 %1238
      %v1240 = vsel %vm1190, %v1186, -inf
      %1241 = vmax.xlane.f32.xlu0 %v1240
      %v1242 = vpop.xlane.xlu0 %1241
      %v1243 = vsel %vm1194, %v1187, -inf
      %1244 = vmax.xlane.f32.xlu0 %v1243
      %v1245 = vpop.xlane.xlu0 %1244
      %v1246 = vsel %vm1190, %v1188, -inf
      %1247 = vmax.xlane.f32.xlu0 %v1246
      %v1248 = vpop.xlane.xlu0 %1247
      %v1249 = vsel %vm1194, %v1189, -inf
      %1250 = vmax.xlane.f32.xlu0 %v1249
      %v1251 = vpop.xlane.xlu0 %1250
      %v1252 = vsub.f32 %v1170, %v1193
      %v1253 = vsub.f32 %v1171, %v1197
      %v1254 = vsub.f32 %v1172, %v1200
      %v1255 = vsub.f32 %v1173, %v1203
      %v1256 = vsub.f32 %v1174, %v1206
      %v1257 = vsub.f32 %v1175, %v1209
      %v1258 = vsub.f32 %v1176, %v1212
      %v1259 = vsub.f32 %v1177, %v1215
      %v1260 = vsub.f32 %v1178, %v1218
      %v1261 = vsub.f32 %v1179, %v1221
      %v1262 = vsub.f32 %v1180, %v1224
      %v1263 = vsub.f32 %v1181, %v1227
      %v1264 = vsub.f32 %v1182, %v1230
      %v1265 = vsub.f32 %v1183, %v1233
      %v1266 = vsub.f32 %v1184, %v1236
      %v1267 = vsub.f32 %v1185, %v1239
      %v1268 = vsub.f32 %v1186, %v1242
      %v1269 = vsub.f32 %v1187, %v1245
      %v1270 = vsub.f32 %v1188, %v1248
      %v1271 = vsub.f32 %v1189, %v1251
      %v1272 = vmul.f32 %v1252, 1.442695
      %v1273 = vpow.pop %v1272
      %v1274 = vmul.f32 %v1253, 1.442695
      %v1275 = vpow.pop %v1274
      %v1276 = vmul.f32 %v1254, 1.442695
      %v1277 = vpow.pop %v1276
      %v1278 = vmul.f32 %v1255, 1.442695
      %v1279 = vpow.pop %v1278
      %v1280 = vmul.f32 %v1256, 1.442695
      %v1281 = vpow.pop %v1280
      %v1282 = vmul.f32 %v1257, 1.442695
      %v1283 = vpow.pop %v1282
      %v1284 = vmul.f32 %v1258, 1.442695
      %v1285 = vpow.pop %v1284
      %v1286 = vmul.f32 %v1259, 1.442695
      %v1287 = vpow.pop %v1286
      %v1288 = vmul.f32 %v1260, 1.442695
      %v1289 = vpow.pop %v1288
      %v1290 = vmul.f32 %v1261, 1.442695
      %v1291 = vpow.pop %v1290
      %v1292 = vmul.f32 %v1262, 1.442695
      %v1293 = vpow.pop %v1292
      %v1294 = vmul.f32 %v1263, 1.442695
      %v1295 = vpow.pop %v1294
      %v1296 = vmul.f32 %v1264, 1.442695
      %v1297 = vpow.pop %v1296
      %v1298 = vmul.f32 %v1265, 1.442695
      %v1299 = vpow.pop %v1298
      %v1300 = vmul.f32 %v1266, 1.442695
      %v1301 = vpow.pop %v1300
      %v1302 = vmul.f32 %v1267, 1.442695
      %v1303 = vpow.pop %v1302
      %v1304 = vmul.f32 %v1268, 1.442695
      %v1305 = vpow.pop %v1304
      %v1306 = vmul.f32 %v1269, 1.442695
      %v1307 = vpow.pop %v1306
      %v1308 = vmul.f32 %v1270, 1.442695
      %v1309 = vpow.pop %v1308
      %v1310 = vmul.f32 %v1271, 1.442695
      %v1311 = vpow.pop %v1310
      %v1312 = vsel %vm1190, %v1273, 0.0
      %1313 = vadd.xlane.f32.xlu0 %v1312
      %v1314 = vpop.xlane.xlu0 %1313
      %v1315 = vsel %vm1194, %v1275, 0.0
      %1316 = vadd.xlane.f32.xlu0 %v1315
      %v1317 = vpop.xlane.xlu0 %1316
      %v1318 = vsel %vm1190, %v1277, 0.0
      %1319 = vadd.xlane.f32.xlu0 %v1318
      %v1320 = vpop.xlane.xlu0 %1319
      %v1321 = vsel %vm1194, %v1279, 0.0
      %1322 = vadd.xlane.f32.xlu0 %v1321
      %v1323 = vpop.xlane.xlu0 %1322
      %v1324 = vsel %vm1190, %v1281, 0.0
      %1325 = vadd.xlane.f32.xlu0 %v1324
      %v1326 = vpop.xlane.xlu0 %1325
      %v1327 = vsel %vm1194, %v1283, 0.0
      %1328 = vadd.xlane.f32.xlu0 %v1327
      %v1329 = vpop.xlane.xlu0 %1328
      %v1330 = vsel %vm1190, %v1285, 0.0
      %1331 = vadd.xlane.f32.xlu0 %v1330
      %v1332 = vpop.xlane.xlu0 %1331
      %v1333 = vsel %vm1194, %v1287, 0.0
      %1334 = vadd.xlane.f32.xlu0 %v1333
      %v1335 = vpop.xlane.xlu0 %1334
      %v1336 = vsel %vm1190, %v1289, 0.0
      %1337 = vadd.xlane.f32.xlu0 %v1336
      %v1338 = vpop.xlane.xlu0 %1337
      %v1339 = vsel %vm1194, %v1291, 0.0
      %1340 = vadd.xlane.f32.xlu0 %v1339
      %v1341 = vpop.xlane.xlu0 %1340
      %v1342 = vsel %vm1190, %v1293, 0.0
      %1343 = vadd.xlane.f32.xlu0 %v1342
      %v1344 = vpop.xlane.xlu0 %1343
      %v1345 = vsel %vm1194, %v1295, 0.0
      %1346 = vadd.xlane.f32.xlu0 %v1345
      %v1347 = vpop.xlane.xlu0 %1346
      %v1348 = vsel %vm1190, %v1297, 0.0
      %1349 = vadd.xlane.f32.xlu0 %v1348
      %v1350 = vpop.xlane.xlu0 %1349
      %v1351 = vsel %vm1194, %v1299, 0.0
      %1352 = vadd.xlane.f32.xlu0 %v1351
      %v1353 = vpop.xlane.xlu0 %1352
      %v1354 = vsel %vm1190, %v1301, 0.0
      %1355 = vadd.xlane.f32.xlu0 %v1354
      %v1356 = vpop.xlane.xlu0 %1355
      %v1357 = vsel %vm1194, %v1303, 0.0
      %1358 = vadd.xlane.f32.xlu0 %v1357
      %v1359 = vpop.xlane.xlu0 %1358
      %v1360 = vsel %vm1190, %v1305, 0.0
      %1361 = vadd.xlane.f32.xlu0 %v1360
      %v1362 = vpop.xlane.xlu0 %1361
      %v1363 = vsel %vm1194, %v1307, 0.0
      %1364 = vadd.xlane.f32.xlu0 %v1363
      %v1365 = vpop.xlane.xlu0 %1364
      %v1366 = vsel %vm1190, %v1309, 0.0
      %1367 = vadd.xlane.f32.xlu0 %v1366
      %v1368 = vpop.xlane.xlu0 %1367
      %v1369 = vsel %vm1194, %v1311, 0.0
      %1370 = vadd.xlane.f32.xlu0 %v1369
      %v1371 = vpop.xlane.xlu0 %1370
      %v1372 = vrcp.pop %v1314
      %v1373 = vmul.f32 %v1314, %v1372
      %v1374 = vsub.f32 1.0, %v1373
      %v1375 = vmul.f32 %v1372, %v1374
      %v1376 = vadd.f32 %v1372, %v1375
      %vm1377 = vweird.f32 %v1314
      %vm1378 = vweird.f32 %v1372
      %vm1379 = vmor %vm1377, %vm1378
      %v1380 = vsel %vm1379, %v1372, %v1376
      %v1381 = vand.u32 2147483647, %v1314
      %vm1382 = vcmp.eq.f32.partialorder %v1381, 8.507059e+37
      %v1383 = vand.u32 %v1314, 2147483648
      %v1384 = vor.u32 1.1754944e-38, %v1383
      %v1385 = vsel %vm1382, %v1384, %v1380
      %v1386 = vmul.f32 %v1273, %v1385
      %v1387 = vrcp.pop %v1317
      %v1388 = vmul.f32 %v1317, %v1387
      %v1389 = vsub.f32 1.0, %v1388
      %v1390 = vmul.f32 %v1387, %v1389
      %v1391 = vadd.f32 %v1387, %v1390
      %vm1392 = vweird.f32 %v1317
      %vm1393 = vweird.f32 %v1387
      %vm1394 = vmor %vm1392, %vm1393
      %v1395 = vsel %vm1394, %v1387, %v1391
      %v1396 = vand.u32 2147483647, %v1317
      %vm1397 = vcmp.eq.f32.partialorder %v1396, 8.507059e+37
      %v1398 = vand.u32 %v1317, 2147483648
      %v1399 = vor.u32 1.1754944e-38, %v1398
      %v1400 = vsel %vm1397, %v1399, %v1395
      %v1401 = vmul.f32 %v1275, %v1400
      %v1402 = vrcp.pop %v1320
      %v1403 = vmul.f32 %v1320, %v1402
      %v1404 = vsub.f32 1.0, %v1403
      %v1405 = vmul.f32 %v1402, %v1404
      %v1406 = vadd.f32 %v1402, %v1405
      %vm1407 = vweird.f32 %v1320
      %vm1408 = vweird.f32 %v1402
      %vm1409 = vmor %vm1407, %vm1408
      %v1410 = vsel %vm1409, %v1402, %v1406
      %v1411 = vand.u32 2147483647, %v1320
      %vm1412 = vcmp.eq.f32.partialorder %v1411, 8.507059e+37
      %v1413 = vand.u32 %v1320, 2147483648
      %v1414 = vor.u32 1.1754944e-38, %v1413
      %v1415 = vsel %vm1412, %v1414, %v1410
      %v1416 = vmul.f32 %v1277, %v1415
      %v1417 = vrcp.pop %v1323
      %v1418 = vmul.f32 %v1323, %v1417
      %v1419 = vsub.f32 1.0, %v1418
      %v1420 = vmul.f32 %v1417, %v1419
      %v1421 = vadd.f32 %v1417, %v1420
      %vm1422 = vweird.f32 %v1323
      %vm1423 = vweird.f32 %v1417
      %vm1424 = vmor %vm1422, %vm1423
      %v1425 = vsel %vm1424, %v1417, %v1421
      %v1426 = vand.u32 2147483647, %v1323
      %vm1427 = vcmp.eq.f32.partialorder %v1426, 8.507059e+37
      %v1428 = vand.u32 %v1323, 2147483648
      %v1429 = vor.u32 1.1754944e-38, %v1428
      %v1430 = vsel %vm1427, %v1429, %v1425
      %v1431 = vmul.f32 %v1279, %v1430
      %v1432 = vrcp.pop %v1326
      %v1433 = vmul.f32 %v1326, %v1432
      %v1434 = vsub.f32 1.0, %v1433
      %v1435 = vmul.f32 %v1432, %v1434
      %v1436 = vadd.f32 %v1432, %v1435
      %vm1437 = vweird.f32 %v1326
      %vm1438 = vweird.f32 %v1432
      %vm1439 = vmor %vm1437, %vm1438
      %v1440 = vsel %vm1439, %v1432, %v1436
      %v1441 = vand.u32 2147483647, %v1326
      %vm1442 = vcmp.eq.f32.partialorder %v1441, 8.507059e+37
      %v1443 = vand.u32 %v1326, 2147483648
      %v1444 = vor.u32 1.1754944e-38, %v1443
      %v1445 = vsel %vm1442, %v1444, %v1440
      %v1446 = vmul.f32 %v1281, %v1445
      %v1447 = vrcp.pop %v1329
      %v1448 = vmul.f32 %v1329, %v1447
      %v1449 = vsub.f32 1.0, %v1448
      %v1450 = vmul.f32 %v1447, %v1449
      %v1451 = vadd.f32 %v1447, %v1450
      %vm1452 = vweird.f32 %v1329
      %vm1453 = vweird.f32 %v1447
      %vm1454 = vmor %vm1452, %vm1453
      %v1455 = vsel %vm1454, %v1447, %v1451
      %v1456 = vand.u32 2147483647, %v1329
      %vm1457 = vcmp.eq.f32.partialorder %v1456, 8.507059e+37
      %v1458 = vand.u32 %v1329, 2147483648
      %v1459 = vor.u32 1.1754944e-38, %v1458
      %v1460 = vsel %vm1457, %v1459, %v1455
      %v1461 = vmul.f32 %v1283, %v1460
      %v1462 = vrcp.pop %v1332
      %v1463 = vmul.f32 %v1332, %v1462
      %v1464 = vsub.f32 1.0, %v1463
      %v1465 = vmul.f32 %v1462, %v1464
      %v1466 = vadd.f32 %v1462, %v1465
      %vm1467 = vweird.f32 %v1332
      %vm1468 = vweird.f32 %v1462
      %vm1469 = vmor %vm1467, %vm1468
      %v1470 = vsel %vm1469, %v1462, %v1466
      %v1471 = vand.u32 2147483647, %v1332
      %vm1472 = vcmp.eq.f32.partialorder %v1471, 8.507059e+37
      %v1473 = vand.u32 %v1332, 2147483648
      %v1474 = vor.u32 1.1754944e-38, %v1473
      %v1475 = vsel %vm1472, %v1474, %v1470
      %v1476 = vmul.f32 %v1285, %v1475
      %v1477 = vrcp.pop %v1335
      %v1478 = vmul.f32 %v1335, %v1477
      %v1479 = vsub.f32 1.0, %v1478
      %v1480 = vmul.f32 %v1477, %v1479
      %v1481 = vadd.f32 %v1477, %v1480
      %vm1482 = vweird.f32 %v1335
      %vm1483 = vweird.f32 %v1477
      %vm1484 = vmor %vm1482, %vm1483
      %v1485 = vsel %vm1484, %v1477, %v1481
      %v1486 = vand.u32 2147483647, %v1335
      %vm1487 = vcmp.eq.f32.partialorder %v1486, 8.507059e+37
      %v1488 = vand.u32 %v1335, 2147483648
      %v1489 = vor.u32 1.1754944e-38, %v1488
      %v1490 = vsel %vm1487, %v1489, %v1485
      %v1491 = vmul.f32 %v1287, %v1490
      %v1492 = vrcp.pop %v1338
      %v1493 = vmul.f32 %v1338, %v1492
      %v1494 = vsub.f32 1.0, %v1493
      %v1495 = vmul.f32 %v1492, %v1494
      %v1496 = vadd.f32 %v1492, %v1495
      %vm1497 = vweird.f32 %v1338
      %vm1498 = vweird.f32 %v1492
      %vm1499 = vmor %vm1497, %vm1498
      %v1500 = vsel %vm1499, %v1492, %v1496
      %v1501 = vand.u32 2147483647, %v1338
      %vm1502 = vcmp.eq.f32.partialorder %v1501, 8.507059e+37
      %v1503 = vand.u32 %v1338, 2147483648
      %v1504 = vor.u32 1.1754944e-38, %v1503
      %v1505 = vsel %vm1502, %v1504, %v1500
      %v1506 = vmul.f32 %v1289, %v1505
      %v1507 = vrcp.pop %v1341
      %v1508 = vmul.f32 %v1341, %v1507
      %v1509 = vsub.f32 1.0, %v1508
      %v1510 = vmul.f32 %v1507, %v1509
      %v1511 = vadd.f32 %v1507, %v1510
      %vm1512 = vweird.f32 %v1341
      %vm1513 = vweird.f32 %v1507
      %vm1514 = vmor %vm1512, %vm1513
      %v1515 = vsel %vm1514, %v1507, %v1511
      %v1516 = vand.u32 2147483647, %v1341
      %vm1517 = vcmp.eq.f32.partialorder %v1516, 8.507059e+37
      %v1518 = vand.u32 %v1341, 2147483648
      %v1519 = vor.u32 1.1754944e-38, %v1518
      %v1520 = vsel %vm1517, %v1519, %v1515
      %v1521 = vmul.f32 %v1291, %v1520
      %v1522 = vrcp.pop %v1344
      %v1523 = vmul.f32 %v1344, %v1522
      %v1524 = vsub.f32 1.0, %v1523
      %v1525 = vmul.f32 %v1522, %v1524
      %v1526 = vadd.f32 %v1522, %v1525
      %vm1527 = vweird.f32 %v1344
      %vm1528 = vweird.f32 %v1522
      %vm1529 = vmor %vm1527, %vm1528
      %v1530 = vsel %vm1529, %v1522, %v1526
      %v1531 = vand.u32 2147483647, %v1344
      %vm1532 = vcmp.eq.f32.partialorder %v1531, 8.507059e+37
      %v1533 = vand.u32 %v1344, 2147483648
      %v1534 = vor.u32 1.1754944e-38, %v1533
      %v1535 = vsel %vm1532, %v1534, %v1530
      %v1536 = vmul.f32 %v1293, %v1535
      %v1537 = vrcp.pop %v1347
      %v1538 = vmul.f32 %v1347, %v1537
      %v1539 = vsub.f32 1.0, %v1538
      %v1540 = vmul.f32 %v1537, %v1539
      %v1541 = vadd.f32 %v1537, %v1540
      %vm1542 = vweird.f32 %v1347
      %vm1543 = vweird.f32 %v1537
      %vm1544 = vmor %vm1542, %vm1543
      %v1545 = vsel %vm1544, %v1537, %v1541
      %v1546 = vand.u32 2147483647, %v1347
      %vm1547 = vcmp.eq.f32.partialorder %v1546, 8.507059e+37
      %v1548 = vand.u32 %v1347, 2147483648
      %v1549 = vor.u32 1.1754944e-38, %v1548
      %v1550 = vsel %vm1547, %v1549, %v1545
      %v1551 = vmul.f32 %v1295, %v1550
      %v1552 = vrcp.pop %v1350
      %v1553 = vmul.f32 %v1350, %v1552
      %v1554 = vsub.f32 1.0, %v1553
      %v1555 = vmul.f32 %v1552, %v1554
      %v1556 = vadd.f32 %v1552, %v1555
      %vm1557 = vweird.f32 %v1350
      %vm1558 = vweird.f32 %v1552
      %vm1559 = vmor %vm1557, %vm1558
      %v1560 = vsel %vm1559, %v1552, %v1556
      %v1561 = vand.u32 2147483647, %v1350
      %vm1562 = vcmp.eq.f32.partialorder %v1561, 8.507059e+37
      %v1563 = vand.u32 %v1350, 2147483648
      %v1564 = vor.u32 1.1754944e-38, %v1563
      %v1565 = vsel %vm1562, %v1564, %v1560
      %v1566 = vmul.f32 %v1297, %v1565
      %v1567 = vrcp.pop %v1353
      %v1568 = vmul.f32 %v1353, %v1567
      %v1569 = vsub.f32 1.0, %v1568
      %v1570 = vmul.f32 %v1567, %v1569
      %v1571 = vadd.f32 %v1567, %v1570
      %vm1572 = vweird.f32 %v1353
      %vm1573 = vweird.f32 %v1567
      %vm1574 = vmor %vm1572, %vm1573
      %v1575 = vsel %vm1574, %v1567, %v1571
      %v1576 = vand.u32 2147483647, %v1353
      %vm1577 = vcmp.eq.f32.partialorder %v1576, 8.507059e+37
      %v1578 = vand.u32 %v1353, 2147483648
      %v1579 = vor.u32 1.1754944e-38, %v1578
      %v1580 = vsel %vm1577, %v1579, %v1575
      %v1581 = vmul.f32 %v1299, %v1580
      %v1582 = vrcp.pop %v1356
      %v1583 = vmul.f32 %v1356, %v1582
      %v1584 = vsub.f32 1.0, %v1583
      %v1585 = vmul.f32 %v1582, %v1584
      %v1586 = vadd.f32 %v1582, %v1585
      %vm1587 = vweird.f32 %v1356
      %vm1588 = vweird.f32 %v1582
      %vm1589 = vmor %vm1587, %vm1588
      %v1590 = vsel %vm1589, %v1582, %v1586
      %v1591 = vand.u32 2147483647, %v1356
      %vm1592 = vcmp.eq.f32.partialorder %v1591, 8.507059e+37
      %v1593 = vand.u32 %v1356, 2147483648
      %v1594 = vor.u32 1.1754944e-38, %v1593
      %v1595 = vsel %vm1592, %v1594, %v1590
      %v1596 = vmul.f32 %v1301, %v1595
      %v1597 = vrcp.pop %v1359
      %v1598 = vmul.f32 %v1359, %v1597
      %v1599 = vsub.f32 1.0, %v1598
      %v1600 = vmul.f32 %v1597, %v1599
      %v1601 = vadd.f32 %v1597, %v1600
      %vm1602 = vweird.f32 %v1359
      %vm1603 = vweird.f32 %v1597
      %vm1604 = vmor %vm1602, %vm1603
      %v1605 = vsel %vm1604, %v1597, %v1601
      %v1606 = vand.u32 2147483647, %v1359
      %vm1607 = vcmp.eq.f32.partialorder %v1606, 8.507059e+37
      %v1608 = vand.u32 %v1359, 2147483648
      %v1609 = vor.u32 1.1754944e-38, %v1608
      %v1610 = vsel %vm1607, %v1609, %v1605
      %v1611 = vmul.f32 %v1303, %v1610
      %v1612 = vrcp.pop %v1362
      %v1613 = vmul.f32 %v1362, %v1612
      %v1614 = vsub.f32 1.0, %v1613
      %v1615 = vmul.f32 %v1612, %v1614
      %v1616 = vadd.f32 %v1612, %v1615
      %vm1617 = vweird.f32 %v1362
      %vm1618 = vweird.f32 %v1612
      %vm1619 = vmor %vm1617, %vm1618
      %v1620 = vsel %vm1619, %v1612, %v1616
      %v1621 = vand.u32 2147483647, %v1362
      %vm1622 = vcmp.eq.f32.partialorder %v1621, 8.507059e+37
      %v1623 = vand.u32 %v1362, 2147483648
      %v1624 = vor.u32 1.1754944e-38, %v1623
      %v1625 = vsel %vm1622, %v1624, %v1620
      %v1626 = vmul.f32 %v1305, %v1625
      %v1627 = vrcp.pop %v1365
      %v1628 = vmul.f32 %v1365, %v1627
      %v1629 = vsub.f32 1.0, %v1628
      %v1630 = vmul.f32 %v1627, %v1629
      %v1631 = vadd.f32 %v1627, %v1630
      %vm1632 = vweird.f32 %v1365
      %vm1633 = vweird.f32 %v1627
      %vm1634 = vmor %vm1632, %vm1633
      %v1635 = vsel %vm1634, %v1627, %v1631
      %v1636 = vand.u32 2147483647, %v1365
      %vm1637 = vcmp.eq.f32.partialorder %v1636, 8.507059e+37
      %v1638 = vand.u32 %v1365, 2147483648
      %v1639 = vor.u32 1.1754944e-38, %v1638
      %v1640 = vsel %vm1637, %v1639, %v1635
      %v1641 = vmul.f32 %v1307, %v1640
      %v1642 = vrcp.pop %v1368
      %v1643 = vmul.f32 %v1368, %v1642
      %v1644 = vsub.f32 1.0, %v1643
      %v1645 = vmul.f32 %v1642, %v1644
      %v1646 = vadd.f32 %v1642, %v1645
      %vm1647 = vweird.f32 %v1368
      %vm1648 = vweird.f32 %v1642
      %vm1649 = vmor %vm1647, %vm1648
      %v1650 = vsel %vm1649, %v1642, %v1646
      %v1651 = vand.u32 2147483647, %v1368
      %vm1652 = vcmp.eq.f32.partialorder %v1651, 8.507059e+37
      %v1653 = vand.u32 %v1368, 2147483648
      %v1654 = vor.u32 1.1754944e-38, %v1653
      %v1655 = vsel %vm1652, %v1654, %v1650
      %v1656 = vmul.f32 %v1309, %v1655
      %v1657 = vrcp.pop %v1371
      %v1658 = vmul.f32 %v1371, %v1657
      %v1659 = vsub.f32 1.0, %v1658
      %v1660 = vmul.f32 %v1657, %v1659
      %v1661 = vadd.f32 %v1657, %v1660
      %vm1662 = vweird.f32 %v1371
      %vm1663 = vweird.f32 %v1657
      %vm1664 = vmor %vm1662, %vm1663
      %v1665 = vsel %vm1664, %v1657, %v1661
      %v1666 = vand.u32 2147483647, %v1371
      %vm1667 = vcmp.eq.f32.partialorder %v1666, 8.507059e+37
      %v1668 = vand.u32 %v1371, 2147483648
      %v1669 = vor.u32 1.1754944e-38, %v1668
      %v1670 = vsel %vm1667, %v1669, %v1665
      %v1671 = vmul.f32 %v1311, %v1670
      %1672 = vst.msk [vmem:[%s318] sm:$0xff] %vm1190, %v1386
      %1673 = vst.msk [vmem:[%s318 + $0x8] sm:$0x3] %vm1194, %v1401
      %1674 = vst.msk [vmem:[%s318 + $0x10] sm:$0xff] %vm1190, %v1416
      %1675 = vst.msk [vmem:[%s318 + $0x18] sm:$0x3] %vm1194, %v1431
      %1676 = vst.msk [vmem:[%s318 + $0x20] sm:$0xff] %vm1190, %v1446
      %1677 = vst.msk [vmem:[%s318 + $0x28] sm:$0x3] %vm1194, %v1461
      %1678 = vst.msk [vmem:[%s318 + $0x30] sm:$0xff] %vm1190, %v1476
      %1679 = vst.msk [vmem:[%s318 + $0x38] sm:$0x3] %vm1194, %v1491
      %1680 = vst.msk [vmem:[%s318 + $0x40] sm:$0xff] %vm1190, %v1506
      %1681 = vst.msk [vmem:[%s318 + $0x48] sm:$0x3] %vm1194, %v1521
      %1682 = vst.msk [vmem:[%s318 + $0x50] sm:$0xff] %vm1190, %v1536
      %1683 = vst.msk [vmem:[%s318 + $0x58] sm:$0x3] %vm1194, %v1551
      %1684 = vst.msk [vmem:[%s318 + $0x60] sm:$0xff] %vm1190, %v1566
      %1685 = vst.msk [vmem:[%s318 + $0x68] sm:$0x3] %vm1194, %v1581
      %1686 = vst.msk [vmem:[%s318 + $0x70] sm:$0xff] %vm1190, %v1596
      %1687 = vst.msk [vmem:[%s318 + $0x78] sm:$0x3] %vm1194, %v1611
      %1688 = vst.msk [vmem:[%s318 + $0x80] sm:$0xff] %vm1190, %v1626
      %1689 = vst.msk [vmem:[%s318 + $0x88] sm:$0x3] %vm1194, %v1641
      %1690 = vst.msk [vmem:[%s318 + $0x90] sm:$0xff] %vm1190, %v1656
      %1691 = vst.msk [vmem:[%s318 + $0x98] sm:$0x3] %vm1194, %v1671
      %1692 = vst [vmem:[#allocation1] ss:$4 sm:$0xff] %v512
      %s1693 = scalar_lea.vmem [#allocation1], 1
      %1694 = vst [vmem:[%s1693] ss:$4 sm:$0xff] %v563
      %s1695 = scalar_lea.vmem [#allocation1], 2
      %1696 = vst [vmem:[%s1695] ss:$4 sm:$0xff] %v564
      %s1697 = scalar_lea.vmem [#allocation1], 3
      %1698 = vst [vmem:[%s1697] ss:$4 sm:$0xff] %v565
      %s1699 = scalar_lea.vmem [#allocation1], 32
      %1700 = vst [vmem:[%s1699] ss:$4 sm:$0xff] %v515
      %v1701 = vld.sshfl [vmem:[#allocation1] sm:$0xff pattern:$0x73625140]
      %v1702 = vld.sshfl [vmem:[#allocation1 + $0x20] sm:$0xff pattern:$0x73625140]
      %1703 = vrot.lane.b32.xlu0 %v1701, 64
      %v1704 = vpop.permute.xlu0 %1703
      %1705 = vrot.lane.b32.xlu0 %v1702, 64
      %v1706 = vpop.permute.xlu0 %1705
      %v1709 = vsel %vm1190, %v1386, 0
      %v1712 = vsel %vm1190, %v1401, 0
      %vm1714 = vcmask 1041408
      %v1715 = vsel %vm1714, %v1706, 0
      %1717 = vmatpush.msra.mxu0 0.0
      %1718 = vmatpush.msra.mxu0 0.0
      %1719 = vmatpush.msra.mxu0 0.0
      %1720 = vmatpush.msra.mxu0 0.0
      %1721 = vmatpush.msra.mxu0 0.0
      %1722 = vmatpush.msra.mxu0 0.0
      %1723 = vmatpush.msra.mxu0 0.0
      %1724 = vmatpush.msra.mxu0 0.0
      %1725 = vmatpush.msra.mxu0 0.0
      %1726 = vmatpush.msra.mxu0 0.0
      %1727 = vmatpush.msra.mxu0 0.0
      %1728 = vmatpush.msra.mxu0 0.0
      %1729 = vmatpush.msra.mxu0 0.0
      %1730 = vmatpush.msra.mxu0 0.0
      %1731 = vmatpush.msra.mxu0 %v1715
      %1732 = vmatpush.msra.mxu0 %v1704
      %1733 = vmatmul.f32.gmra.mxu0 %v1709
      %v1734 = vpop.f32.mrf.mxu0
      %v1735 = vadd.f32 0.0, %v1734
      %1736 = vmatmul.f32.gmra.mxu0 %v1712
      %v1737 = vpop.f32.mrf.mxu0
      %v1738 = vadd.f32 0.0, %v1737
      %1739 = vdwg.mxu0
      %1740 = vst [vmem:[#allocation1] ss:$4 sm:$0xff] %v566
      %s1741 = scalar_lea.vmem [#allocation1], 1
      %1742 = vst [vmem:[%s1741] ss:$4 sm:$0xff] %v567
      %s1743 = scalar_lea.vmem [#allocation1], 2
      %1744 = vst [vmem:[%s1743] ss:$4 sm:$0xff] %v568
      %s1745 = scalar_lea.vmem [#allocation1], 3
      %1746 = vst [vmem:[%s1745] ss:$4 sm:$0xff] %v518
      %s1747 = scalar_lea.vmem [#allocation1], 32
      %1748 = vst [vmem:[%s1747] ss:$4 sm:$0xff] %v569
      %v1749 = vld.sshfl [vmem:[#allocation1] sm:$0xff pattern:$0x73625140]
      %v1750 = vld.sshfl [vmem:[#allocation1 + $0x20] sm:$0xff pattern:$0x73625140]
      %1751 = vrot.lane.b32.xlu0 %v1749, 64
      %v1752 = vpop.permute.xlu0 %1751
      %1753 = vrot.lane.b32.xlu0 %v1750, 64
      %v1754 = vpop.permute.xlu0 %1753
      %v1757 = vsel %vm1190, %v1416, 0
      %v1760 = vsel %vm1190, %v1431, 0
      %v1762 = vsel %vm1714, %v1754, 0
      %1764 = vmatpush.msra.mxu0 0.0
      %1765 = vmatpush.msra.mxu0 0.0
      %1766 = vmatpush.msra.mxu0 0.0
      %1767 = vmatpush.msra.mxu0 0.0
      %1768 = vmatpush.msra.mxu0 0.0
      %1769 = vmatpush.msra.mxu0 0.0
      %1770 = vmatpush.msra.mxu0 0.0
      %1771 = vmatpush.msra.mxu0 0.0
      %1772 = vmatpush.msra.mxu0 0.0
      %1773 = vmatpush.msra.mxu0 0.0
      %1774 = vmatpush.msra.mxu0 0.0
      %1775 = vmatpush.msra.mxu0 0.0
      %1776 = vmatpush.msra.mxu0 0.0
      %1777 = vmatpush.msra.mxu0 0.0
      %1778 = vmatpush.msra.mxu0 %v1762
      %1779 = vmatpush.msra.mxu0 %v1752
      %1780 = vmatmul.f32.gmra.mxu0 %v1757
      %v1781 = vpop.f32.mrf.mxu0
      %v1782 = vadd.f32 0.0, %v1781
      %1783 = vmatmul.f32.gmra.mxu0 %v1760
      %v1784 = vpop.f32.mrf.mxu0
      %v1785 = vadd.f32 0.0, %v1784
      %1786 = vdwg.mxu0
      %1787 = vst [vmem:[#allocation1] ss:$4 sm:$0xff] %v570
      %s1788 = scalar_lea.vmem [#allocation1], 1
      %1789 = vst [vmem:[%s1788] ss:$4 sm:$0xff] %v571
      %s1790 = scalar_lea.vmem [#allocation1], 2
      %1791 = vst [vmem:[%s1790] ss:$4 sm:$0xff] %v521
      %s1792 = scalar_lea.vmem [#allocation1], 3
      %1793 = vst [vmem:[%s1792] ss:$4 sm:$0xff] %v572
      %s1794 = scalar_lea.vmem [#allocation1], 32
      %1795 = vst [vmem:[%s1794] ss:$4 sm:$0xff] %v573
      %v1796 = vld.sshfl [vmem:[#allocation1] sm:$0xff pattern:$0x73625140]
      %v1797 = vld.sshfl [vmem:[#allocation1 + $0x20] sm:$0xff pattern:$0x73625140]
      %1798 = vrot.lane.b32.xlu0 %v1796, 64
      %v1799 = vpop.permute.xlu0 %1798
      %1800 = vrot.lane.b32.xlu0 %v1797, 64
      %v1801 = vpop.permute.xlu0 %1800
      %v1804 = vsel %vm1190, %v1446, 0
      %v1807 = vsel %vm1190, %v1461, 0
      %v1809 = vsel %vm1714, %v1801, 0
      %1811 = vmatpush.msra.mxu0 0.0
      %1812 = vmatpush.msra.mxu0 0.0
      %1813 = vmatpush.msra.mxu0 0.0
      %1814 = vmatpush.msra.mxu0 0.0
      %1815 = vmatpush.msra.mxu0 0.0
      %1816 = vmatpush.msra.mxu0 0.0
      %1817 = vmatpush.msra.mxu0 0.0
      %1818 = vmatpush.msra.mxu0 0.0
      %1819 = vmatpush.msra.mxu0 0.0
      %1820 = vmatpush.msra.mxu0 0.0
      %1821 = vmatpush.msra.mxu0 0.0
      %1822 = vmatpush.msra.mxu0 0.0
      %1823 = vmatpush.msra.mxu0 0.0
      %1824 = vmatpush.msra.mxu0 0.0
      %1825 = vmatpush.msra.mxu0 %v1809
      %1826 = vmatpush.msra.mxu0 %v1799
      %1827 = vmatmul.f32.gmra.mxu0 %v1804
      %v1828 = vpop.f32.mrf.mxu0
      %v1829 = vadd.f32 0.0, %v1828
      %1830 = vmatmul.f32.gmra.mxu0 %v1807
      %v1831 = vpop.f32.mrf.mxu0
      %v1832 = vadd.f32 0.0, %v1831
      %1833 = vdwg.mxu0
      %1834 = vst [vmem:[#allocation1] ss:$4 sm:$0xff] %v574
      %s1835 = scalar_lea.vmem [#allocation1], 1
      %1836 = vst [vmem:[%s1835] ss:$4 sm:$0xff] %v524
      %s1837 = scalar_lea.vmem [#allocation1], 2
      %1838 = vst [vmem:[%s1837] ss:$4 sm:$0xff] %v575
      %s1839 = scalar_lea.vmem [#allocation1], 3
      %1840 = vst [vmem:[%s1839] ss:$4 sm:$0xff] %v576
      %s1841 = scalar_lea.vmem [#allocation1], 32
      %1842 = vst [vmem:[%s1841] ss:$4 sm:$0xff] %v577
      %v1843 = vld.sshfl [vmem:[#allocation1] sm:$0xff pattern:$0x73625140]
      %v1844 = vld.sshfl [vmem:[#allocation1 + $0x20] sm:$0xff pattern:$0x73625140]
      %1845 = vrot.lane.b32.xlu0 %v1843, 64
      %v1846 = vpop.permute.xlu0 %1845
      %1847 = vrot.lane.b32.xlu0 %v1844, 64
      %v1848 = vpop.permute.xlu0 %1847
      %v1851 = vsel %vm1190, %v1476, 0
      %v1854 = vsel %vm1190, %v1491, 0
      %v1856 = vsel %vm1714, %v1848, 0
      %1858 = vmatpush.msra.mxu0 0.0
      %1859 = vmatpush.msra.mxu0 0.0
      %1860 = vmatpush.msra.mxu0 0.0
      %1861 = vmatpush.msra.mxu0 0.0
      %1862 = vmatpush.msra.mxu0 0.0
      %1863 = vmatpush.msra.mxu0 0.0
      %1864 = vmatpush.msra.mxu0 0.0
      %1865 = vmatpush.msra.mxu0 0.0
      %1866 = vmatpush.msra.mxu0 0.0
      %1867 = vmatpush.msra.mxu0 0.0
      %1868 = vmatpush.msra.mxu0 0.0
      %1869 = vmatpush.msra.mxu0 0.0
      %1870 = vmatpush.msra.mxu0 0.0
      %1871 = vmatpush.msra.mxu0 0.0
      %1872 = vmatpush.msra.mxu0 %v1856
      %1873 = vmatpush.msra.mxu0 %v1846
      %1874 = vmatmul.f32.gmra.mxu0 %v1851
      %v1875 = vpop.f32.mrf.mxu0
      %v1876 = vadd.f32 0.0, %v1875
      %1877 = vmatmul.f32.gmra.mxu0 %v1854
      %v1878 = vpop.f32.mrf.mxu0
      %v1879 = vadd.f32 0.0, %v1878
      %1880 = vdwg.mxu0
      %1881 = vst [vmem:[#allocation1] ss:$4 sm:$0xff] %v527
      %s1882 = scalar_lea.vmem [#allocation1], 1
      %1883 = vst [vmem:[%s1882] ss:$4 sm:$0xff] %v578
      %s1884 = scalar_lea.vmem [#allocation1], 2
      %1885 = vst [vmem:[%s1884] ss:$4 sm:$0xff] %v579
      %s1886 = scalar_lea.vmem [#allocation1], 3
      %1887 = vst [vmem:[%s1886] ss:$4 sm:$0xff] %v580
      %s1888 = scalar_lea.vmem [#allocation1], 32
      %1889 = vst [vmem:[%s1888] ss:$4 sm:$0xff] %v530
      %v1890 = vld.sshfl [vmem:[#allocation1] sm:$0xff pattern:$0x73625140]
      %v1891 = vld.sshfl [vmem:[#allocation1 + $0x20] sm:$0xff pattern:$0x73625140]
      %1892 = vrot.lane.b32.xlu0 %v1890, 64
      %v1893 = vpop.permute.xlu0 %1892
      %1894 = vrot.lane.b32.xlu0 %v1891, 64
      %v1895 = vpop.permute.xlu0 %1894
      %v1898 = vsel %vm1190, %v1506, 0
      %v1901 = vsel %vm1190, %v1521, 0
      %v1903 = vsel %vm1714, %v1895, 0
      %1905 = vmatpush.msra.mxu0 0.0
      %1906 = vmatpush.msra.mxu0 0.0
      %1907 = vmatpush.msra.mxu0 0.0
      %1908 = vmatpush.msra.mxu0 0.0
      %1909 = vmatpush.msra.mxu0 0.0
      %1910 = vmatpush.msra.mxu0 0.0
      %1911 = vmatpush.msra.mxu0 0.0
      %1912 = vmatpush.msra.mxu0 0.0
      %1913 = vmatpush.msra.mxu0 0.0
      %1914 = vmatpush.msra.mxu0 0.0
      %1915 = vmatpush.msra.mxu0 0.0
      %1916 = vmatpush.msra.mxu0 0.0
      %1917 = vmatpush.msra.mxu0 0.0
      %1918 = vmatpush.msra.mxu0 0.0
      %1919 = vmatpush.msra.mxu0 %v1903
      %1920 = vmatpush.msra.mxu0 %v1893
      %1921 = vmatmul.f32.gmra.mxu0 %v1898
      %v1922 = vpop.f32.mrf.mxu0
      %v1923 = vadd.f32 0.0, %v1922
      %1924 = vmatmul.f32.gmra.mxu0 %v1901
      %v1925 = vpop.f32.mrf.mxu0
      %v1926 = vadd.f32 0.0, %v1925
      %1927 = vdwg.mxu0
      %1928 = vst [vmem:[#allocation1] ss:$4 sm:$0xff] %v581
      %s1929 = scalar_lea.vmem [#allocation1], 1
      %1930 = vst [vmem:[%s1929] ss:$4 sm:$0xff] %v582
      %s1931 = scalar_lea.vmem [#allocation1], 2
      %1932 = vst [vmem:[%s1931] ss:$4 sm:$0xff] %v583
      %s1933 = scalar_lea.vmem [#allocation1], 3
      %1934 = vst [vmem:[%s1933] ss:$4 sm:$0xff] %v533
      %s1935 = scalar_lea.vmem [#allocation1], 32
      %1936 = vst [vmem:[%s1935] ss:$4 sm:$0xff] %v584
      %v1937 = vld.sshfl [vmem:[#allocation1] sm:$0xff pattern:$0x73625140]
      %v1938 = vld.sshfl [vmem:[#allocation1 + $0x20] sm:$0xff pattern:$0x73625140]
      %1939 = vrot.lane.b32.xlu0 %v1937, 64
      %v1940 = vpop.permute.xlu0 %1939
      %1941 = vrot.lane.b32.xlu0 %v1938, 64
      %v1942 = vpop.permute.xlu0 %1941
      %v1945 = vsel %vm1190, %v1536, 0
      %v1948 = vsel %vm1190, %v1551, 0
      %v1950 = vsel %vm1714, %v1942, 0
      %1952 = vmatpush.msra.mxu0 0.0
      %1953 = vmatpush.msra.mxu0 0.0
      %1954 = vmatpush.msra.mxu0 0.0
      %1955 = vmatpush.msra.mxu0 0.0
      %1956 = vmatpush.msra.mxu0 0.0
      %1957 = vmatpush.msra.mxu0 0.0
      %1958 = vmatpush.msra.mxu0 0.0
      %1959 = vmatpush.msra.mxu0 0.0
      %1960 = vmatpush.msra.mxu0 0.0
      %1961 = vmatpush.msra.mxu0 0.0
      %1962 = vmatpush.msra.mxu0 0.0
      %1963 = vmatpush.msra.mxu0 0.0
      %1964 = vmatpush.msra.mxu0 0.0
      %1965 = vmatpush.msra.mxu0 0.0
      %1966 = vmatpush.msra.mxu0 %v1950
      %1967 = vmatpush.msra.mxu0 %v1940
      %1968 = vmatmul.f32.gmra.mxu0 %v1945
      %v1969 = vpop.f32.mrf.mxu0
      %v1970 = vadd.f32 0.0, %v1969
      %1971 = vmatmul.f32.gmra.mxu0 %v1948
      %v1972 = vpop.f32.mrf.mxu0
      %v1973 = vadd.f32 0.0, %v1972
      %1974 = vdwg.mxu0
      %1975 = vst [vmem:[#allocation1] ss:$4 sm:$0xff] %v585
      %s1976 = scalar_lea.vmem [#allocation1], 1
      %1977 = vst [vmem:[%s1976] ss:$4 sm:$0xff] %v586
      %s1978 = scalar_lea.vmem [#allocation1], 2
      %1979 = vst [vmem:[%s1978] ss:$4 sm:$0xff] %v536
      %s1980 = scalar_lea.vmem [#allocation1], 3
      %1981 = vst [vmem:[%s1980] ss:$4 sm:$0xff] %v587
      %s1982 = scalar_lea.vmem [#allocation1], 32
      %1983 = vst [vmem:[%s1982] ss:$4 sm:$0xff] %v588
      %v1984 = vld.sshfl [vmem:[#allocation1] sm:$0xff pattern:$0x73625140]
      %v1985 = vld.sshfl [vmem:[#allocation1 + $0x20] sm:$0xff pattern:$0x73625140]
      %1986 = vrot.lane.b32.xlu0 %v1984, 64
      %v1987 = vpop.permute.xlu0 %1986
      %1988 = vrot.lane.b32.xlu0 %v1985, 64
      %v1989 = vpop.permute.xlu0 %1988
      %v1992 = vsel %vm1190, %v1566, 0
      %v1995 = vsel %vm1190, %v1581, 0
      %v1997 = vsel %vm1714, %v1989, 0
      %1999 = vmatpush.msra.mxu0 0.0
      %2000 = vmatpush.msra.mxu0 0.0
      %2001 = vmatpush.msra.mxu0 0.0
      %2002 = vmatpush.msra.mxu0 0.0
      %2003 = vmatpush.msra.mxu0 0.0
      %2004 = vmatpush.msra.mxu0 0.0
      %2005 = vmatpush.msra.mxu0 0.0
      %2006 = vmatpush.msra.mxu0 0.0
      %2007 = vmatpush.msra.mxu0 0.0
      %2008 = vmatpush.msra.mxu0 0.0
      %2009 = vmatpush.msra.mxu0 0.0
      %2010 = vmatpush.msra.mxu0 0.0
      %2011 = vmatpush.msra.mxu0 0.0
      %2012 = vmatpush.msra.mxu0 0.0
      %2013 = vmatpush.msra.mxu0 %v1997
      %2014 = vmatpush.msra.mxu0 %v1987
      %2015 = vmatmul.f32.gmra.mxu0 %v1992
      %v2016 = vpop.f32.mrf.mxu0
      %v2017 = vadd.f32 0.0, %v2016
      %2018 = vmatmul.f32.gmra.mxu0 %v1995
      %v2019 = vpop.f32.mrf.mxu0
      %v2020 = vadd.f32 0.0, %v2019
      %2021 = vdwg.mxu0
      %2022 = vst [vmem:[#allocation1] ss:$4 sm:$0xff] %v589
      %s2023 = scalar_lea.vmem [#allocation1], 1
      %2024 = vst [vmem:[%s2023] ss:$4 sm:$0xff] %v539
      %s2025 = scalar_lea.vmem [#allocation1], 2
      %2026 = vst [vmem:[%s2025] ss:$4 sm:$0xff] %v590
      %s2027 = scalar_lea.vmem [#allocation1], 3
      %2028 = vst [vmem:[%s2027] ss:$4 sm:$0xff] %v591
      %s2029 = scalar_lea.vmem [#allocation1], 32
      %2030 = vst [vmem:[%s2029] ss:$4 sm:$0xff] %v592
      %v2031 = vld.sshfl [vmem:[#allocation1] sm:$0xff pattern:$0x73625140]
      %v2032 = vld.sshfl [vmem:[#allocation1 + $0x20] sm:$0xff pattern:$0x73625140]
      %2033 = vrot.lane.b32.xlu0 %v2031, 64
      %v2034 = vpop.permute.xlu0 %2033
      %2035 = vrot.lane.b32.xlu0 %v2032, 64
      %v2036 = vpop.permute.xlu0 %2035
      %v2039 = vsel %vm1190, %v1596, 0
      %v2042 = vsel %vm1190, %v1611, 0
      %v2044 = vsel %vm1714, %v2036, 0
      %2046 = vmatpush.msra.mxu0 0.0
      %2047 = vmatpush.msra.mxu0 0.0
      %2048 = vmatpush.msra.mxu0 0.0
      %2049 = vmatpush.msra.mxu0 0.0
      %2050 = vmatpush.msra.mxu0 0.0
      %2051 = vmatpush.msra.mxu0 0.0
      %2052 = vmatpush.msra.mxu0 0.0
      %2053 = vmatpush.msra.mxu0 0.0
      %2054 = vmatpush.msra.mxu0 0.0
      %2055 = vmatpush.msra.mxu0 0.0
      %2056 = vmatpush.msra.mxu0 0.0
      %2057 = vmatpush.msra.mxu0 0.0
      %2058 = vmatpush.msra.mxu0 0.0
      %2059 = vmatpush.msra.mxu0 0.0
      %2060 = vmatpush.msra.mxu0 %v2044
      %2061 = vmatpush.msra.mxu0 %v2034
      %2062 = vmatmul.f32.gmra.mxu0 %v2039
      %v2063 = vpop.f32.mrf.mxu0
      %v2064 = vadd.f32 0.0, %v2063
      %2065 = vmatmul.f32.gmra.mxu0 %v2042
      %v2066 = vpop.f32.mrf.mxu0
      %v2067 = vadd.f32 0.0, %v2066
      %2068 = vdwg.mxu0
      %2069 = vst [vmem:[#allocation1] ss:$4 sm:$0xff] %v542
      %s2070 = scalar_lea.vmem [#allocation1], 1
      %2071 = vst [vmem:[%s2070] ss:$4 sm:$0xff] %v593
      %s2072 = scalar_lea.vmem [#allocation1], 2
      %2073 = vst [vmem:[%s2072] ss:$4 sm:$0xff] %v594
      %s2074 = scalar_lea.vmem [#allocation1], 3
      %2075 = vst [vmem:[%s2074] ss:$4 sm:$0xff] %v595
      %s2076 = scalar_lea.vmem [#allocation1], 32
      %2077 = vst [vmem:[%s2076] ss:$4 sm:$0xff] %v545
      %v2078 = vld.sshfl [vmem:[#allocation1] sm:$0xff pattern:$0x73625140]
      %v2079 = vld.sshfl [vmem:[#allocation1 + $0x20] sm:$0xff pattern:$0x73625140]
      %2080 = vrot.lane.b32.xlu0 %v2078, 64
      %v2081 = vpop.permute.xlu0 %2080
      %2082 = vrot.lane.b32.xlu0 %v2079, 64
      %v2083 = vpop.permute.xlu0 %2082
      %v2086 = vsel %vm1190, %v1626, 0
      %v2089 = vsel %vm1190, %v1641, 0
      %v2091 = vsel %vm1714, %v2083, 0
      %2093 = vmatpush.msra.mxu0 0.0
      %2094 = vmatpush.msra.mxu0 0.0
      %2095 = vmatpush.msra.mxu0 0.0
      %2096 = vmatpush.msra.mxu0 0.0
      %2097 = vmatpush.msra.mxu0 0.0
      %2098 = vmatpush.msra.mxu0 0.0
      %2099 = vmatpush.msra.mxu0 0.0
      %2100 = vmatpush.msra.mxu0 0.0
      %2101 = vmatpush.msra.mxu0 0.0
      %2102 = vmatpush.msra.mxu0 0.0
      %2103 = vmatpush.msra.mxu0 0.0
      %2104 = vmatpush.msra.mxu0 0.0
      %2105 = vmatpush.msra.mxu0 0.0
      %2106 = vmatpush.msra.mxu0 0.0
      %2107 = vmatpush.msra.mxu0 %v2091
      %2108 = vmatpush.msra.mxu0 %v2081
      %2109 = vmatmul.f32.gmra.mxu0 %v2086
      %v2110 = vpop.f32.mrf.mxu0
      %v2111 = vadd.f32 0.0, %v2110
      %2112 = vmatmul.f32.gmra.mxu0 %v2089
      %v2113 = vpop.f32.mrf.mxu0
      %v2114 = vadd.f32 0.0, %v2113
      %2115 = vdwg.mxu0
      %2116 = vst [vmem:[#allocation1] ss:$4 sm:$0xff] %v596
      %s2117 = scalar_lea.vmem [#allocation1], 1
      %2118 = vst [vmem:[%s2117] ss:$4 sm:$0xff] %v597
      %s2119 = scalar_lea.vmem [#allocation1], 2
      %2120 = vst [vmem:[%s2119] ss:$4 sm:$0xff] %v598
      %s2121 = scalar_lea.vmem [#allocation1], 3
      %2122 = vst [vmem:[%s2121] ss:$4 sm:$0xff] %v548
      %s2123 = scalar_lea.vmem [#allocation1], 32
      %2124 = vst [vmem:[%s2123] ss:$4 sm:$0xff] %v599
      %v2125 = vld.sshfl [vmem:[#allocation1] sm:$0xff pattern:$0x73625140]
      %v2126 = vld.sshfl [vmem:[#allocation1 + $0x20] sm:$0xff pattern:$0x73625140]
      %2127 = vrot.lane.b32.xlu0 %v2125, 64
      %v2128 = vpop.permute.xlu0 %2127
      %2129 = vrot.lane.b32.xlu0 %v2126, 64
      %v2130 = vpop.permute.xlu0 %2129
      %v2133 = vsel %vm1190, %v1656, 0
      %v2136 = vsel %vm1190, %v1671, 0
      %v2138 = vsel %vm1714, %v2130, 0
      %2140 = vmatpush.msra.mxu0 0.0
      %2141 = vmatpush.msra.mxu0 0.0
      %2142 = vmatpush.msra.mxu0 0.0
      %2143 = vmatpush.msra.mxu0 0.0
      %2144 = vmatpush.msra.mxu0 0.0
      %2145 = vmatpush.msra.mxu0 0.0
      %2146 = vmatpush.msra.mxu0 0.0
      %2147 = vmatpush.msra.mxu0 0.0
      %2148 = vmatpush.msra.mxu0 0.0
      %2149 = vmatpush.msra.mxu0 0.0
      %2150 = vmatpush.msra.mxu0 0.0
      %2151 = vmatpush.msra.mxu0 0.0
      %2152 = vmatpush.msra.mxu0 0.0
      %2153 = vmatpush.msra.mxu0 0.0
      %2154 = vmatpush.msra.mxu0 %v2138
      %2155 = vmatpush.msra.mxu0 %v2128
      %2156 = vmatmul.f32.gmra.mxu0 %v2133
      %v2157 = vpop.f32.mrf.mxu0
      %v2158 = vadd.f32 0.0, %v2157
      %2159 = vmatmul.f32.gmra.mxu0 %v2136
      %v2160 = vpop.f32.mrf.mxu0
      %v2161 = vadd.f32 0.0, %v2160
      %2162 = vdwg.mxu0
      %v2183 = vrot.slane %v1735, 2
      %v2184 = vrot.slane %v1735, 4
      %v2185 = vrot.slane %v1735, 6
      %v2186 = vrot.slane %v1782, 2
      %v2187 = vrot.slane %v1782, 4
      %v2188 = vrot.slane %v1782, 6
      %v2189 = vrot.slane %v1829, 2
      %v2190 = vrot.slane %v1829, 4
      %v2191 = vrot.slane %v1829, 6
      %v2192 = vrot.slane %v1876, 2
      %v2193 = vrot.slane %v1876, 4
      %v2194 = vrot.slane %v1876, 6
      %v2195 = vrot.slane %v1923, 2
      %v2196 = vrot.slane %v1923, 4
      %v2197 = vrot.slane %v1923, 6
      %v2198 = vrot.slane %v1970, 2
      %v2199 = vrot.slane %v1970, 4
      %v2200 = vrot.slane %v1970, 6
      %v2201 = vrot.slane %v2017, 2
      %v2202 = vrot.slane %v2017, 4
      %v2203 = vrot.slane %v2017, 6
      %v2204 = vrot.slane %v2064, 2
      %v2205 = vrot.slane %v2064, 4
      %v2206 = vrot.slane %v2064, 6
      %v2207 = vrot.slane %v2111, 2
      %v2208 = vrot.slane %v2111, 4
      %v2209 = vrot.slane %v2111, 6
      %v2210 = vrot.slane %v2158, 2
      %v2211 = vrot.slane %v2158, 4
      %v2212 = vrot.slane %v2158, 6
      %v2213 = vld [vmem:[%s3] sm:$0xff]
      %v2214 = vld [vmem:[%s3 + $0x8] sm:$0xff]
      %v2215 = vld [vmem:[%s3 + $0x10] sm:$0xff]
      %v2216 = vld [vmem:[%s3 + $0x18] sm:$0xff]
      %v2217 = vld [vmem:[%s4] sm:$0x1]
      %v2219 = vperm.slane %v2217, 0
      %2221 = vst [vmem:[#allocation1] ss:$4 sm:$0xff] %v1735
      %s2222 = scalar_lea.vmem [#allocation1], 1
      %2223 = vst [vmem:[%s2222] ss:$4 sm:$0xff] %v2183
      %s2224 = scalar_lea.vmem [#allocation1], 2
      %2225 = vst [vmem:[%s2224] ss:$4 sm:$0xff] %v2184
      %s2226 = scalar_lea.vmem [#allocation1], 3
      %2227 = vst [vmem:[%s2226] ss:$4 sm:$0xff] %v2185
      %s2228 = scalar_lea.vmem [#allocation1], 32
      %2229 = vst [vmem:[%s2228] ss:$4 sm:$0xff] %v1738
      %s2230 = scalar_lea.vmem [#allocation1], 33
      %2231 = vst [vmem:[%s2230] ss:$4 sm:$0xff] %v1782
      %s2232 = scalar_lea.vmem [#allocation1], 34
      %2233 = vst [vmem:[%s2232] ss:$4 sm:$0xff] %v2186
      %s2234 = scalar_lea.vmem [#allocation1], 35
      %2235 = vst [vmem:[%s2234] ss:$4 sm:$0xff] %v2187
      %v2236 = vld.sshfl [vmem:[#allocation1] sm:$0xff pattern:$0x73625140]
      %v2237 = vld.sshfl [vmem:[#allocation1 + $0x20] sm:$0xff pattern:$0x73625140]
      %2238 = vst [vmem:[#allocation1] ss:$4 sm:$0xff] %v2188
      %2239 = vst [vmem:[%s2222] ss:$4 sm:$0xff] %v1785
      %2240 = vst [vmem:[%s2224] ss:$4 sm:$0xff] %v1829
      %2241 = vst [vmem:[%s2226] ss:$4 sm:$0xff] %v2189
      %2242 = vst [vmem:[%s2228] ss:$4 sm:$0xff] %v2190
      %2243 = vst [vmem:[%s2230] ss:$4 sm:$0xff] %v2191
      %2244 = vst [vmem:[%s2232] ss:$4 sm:$0xff] %v1832
      %2245 = vst [vmem:[%s2234] ss:$4 sm:$0xff] %v1876
      %v2246 = vld.sshfl [vmem:[#allocation1] sm:$0xff pattern:$0x73625140]
      %v2247 = vld.sshfl [vmem:[#allocation1 + $0x20] sm:$0xff pattern:$0x73625140]
      %2248 = vst [vmem:[#allocation1] ss:$4 sm:$0xff] %v2192
      %2249 = vst [vmem:[%s2222] ss:$4 sm:$0xff] %v2193
      %2250 = vst [vmem:[%s2224] ss:$4 sm:$0xff] %v2194
      %2251 = vst [vmem:[%s2226] ss:$4 sm:$0xff] %v1879
      %2252 = vst [vmem:[%s2228] ss:$4 sm:$0xff] %v1923
      %2253 = vst [vmem:[%s2230] ss:$4 sm:$0xff] %v2195
      %2254 = vst [vmem:[%s2232] ss:$4 sm:$0xff] %v2196
      %2255 = vst [vmem:[%s2234] ss:$4 sm:$0xff] %v2197
      %v2256 = vld.sshfl [vmem:[#allocation1] sm:$0xff pattern:$0x73625140]
      %v2257 = vld.sshfl [vmem:[#allocation1 + $0x20] sm:$0xff pattern:$0x73625140]
      %2258 = vst [vmem:[#allocation1] ss:$4 sm:$0xff] %v1926
      %2259 = vst [vmem:[%s2222] ss:$4 sm:$0xff] %v1970
      %2260 = vst [vmem:[%s2224] ss:$4 sm:$0xff] %v2198
      %2261 = vst [vmem:[%s2226] ss:$4 sm:$0xff] %v2199
      %2262 = vst [vmem:[%s2228] ss:$4 sm:$0xff] %v2200
      %2263 = vst [vmem:[%s2230] ss:$4 sm:$0xff] %v1973
      %2264 = vst [vmem:[%s2232] ss:$4 sm:$0xff] %v2017
      %2265 = vst [vmem:[%s2234] ss:$4 sm:$0xff] %v2201
      %v2266 = vld.sshfl [vmem:[#allocation1] sm:$0xff pattern:$0x73625140]
      %v2267 = vld.sshfl [vmem:[#allocation1 + $0x20] sm:$0xff pattern:$0x73625140]
      %2268 = vst [vmem:[#allocation1] ss:$4 sm:$0xff] %v2202
      %2269 = vst [vmem:[%s2222] ss:$4 sm:$0xff] %v2203
      %2270 = vst [vmem:[%s2224] ss:$4 sm:$0xff] %v2020
      %2271 = vst [vmem:[%s2226] ss:$4 sm:$0xff] %v2064
      %2272 = vst [vmem:[%s2228] ss:$4 sm:$0xff] %v2204
      %2273 = vst [vmem:[%s2230] ss:$4 sm:$0xff] %v2205
      %2274 = vst [vmem:[%s2232] ss:$4 sm:$0xff] %v2206
      %2275 = vst [vmem:[%s2234] ss:$4 sm:$0xff] %v2067
      %v2276 = vld.sshfl [vmem:[#allocation1] sm:$0xff pattern:$0x73625140]
      %v2277 = vld.sshfl [vmem:[#allocation1 + $0x20] sm:$0xff pattern:$0x73625140]
      %2278 = vst [vmem:[#allocation1] ss:$4 sm:$0xff] %v2111
      %2279 = vst [vmem:[%s2222] ss:$4 sm:$0xff] %v2207
      %2280 = vst [vmem:[%s2224] ss:$4 sm:$0xff] %v2208
      %2281 = vst [vmem:[%s2226] ss:$4 sm:$0xff] %v2209
      %2282 = vst [vmem:[%s2228] ss:$4 sm:$0xff] %v2114
      %2283 = vst [vmem:[%s2230] ss:$4 sm:$0xff] %v2158
      %2284 = vst [vmem:[%s2232] ss:$4 sm:$0xff] %v2210
      %2285 = vst [vmem:[%s2234] ss:$4 sm:$0xff] %v2211
      %v2286 = vld.sshfl [vmem:[#allocation1] sm:$0xff pattern:$0x73625140]
      %v2287 = vld.sshfl [vmem:[#allocation1 + $0x20] sm:$0xff pattern:$0x73625140]
      %2288 = vst [vmem:[#allocation1] ss:$4 sm:$0xff] %v2212
      %2289 = vst [vmem:[%s2222] ss:$4 sm:$0xff] %v2161
      %v2290 = vld.sshfl [vmem:[#allocation1] sm:$0xff pattern:$0x73625140]
      %v2291 = vsel %vm467, %v2236, 0
      %v2293 = vsel %vm467, %v2237, 0
      %v2295 = vsel %vm467, %v2246, 0
      %v2297 = vsel %vm467, %v2247, 0
      %v2299 = vsel %vm467, %v2256, 0
      %v2301 = vsel %vm467, %v2257, 0
      %v2303 = vsel %vm467, %v2266, 0
      %v2305 = vsel %vm467, %v2267, 0
      %v2307 = vsel %vm467, %v2276, 0
      %v2309 = vsel %vm467, %v2277, 0
      %v2311 = vsel %vm467, %v2286, 0
      %v2313 = vsel %vm467, %v2287, 0
      %v2315 = vsel %vm467, %v2290, 0
      %2317 = vmatpush.msra.mxu0 0.0
      %2318 = vmatpush.msra.mxu0 0.0
      %2319 = vmatpush.msra.mxu0 0.0
      %2320 = vmatpush.msra.mxu0 0.0
      %2321 = vmatpush.msra.mxu0 0.0
      %2322 = vmatpush.msra.mxu0 0.0
      %2323 = vmatpush.msra.mxu0 0.0
      %2324 = vmatpush.msra.mxu0 0.0
      %2325 = vmatpush.msra.mxu0 0.0
      %2326 = vmatpush.msra.mxu0 0.0
      %2327 = vmatpush.msra.mxu0 0.0
      %2328 = vmatpush.msra.mxu0 0.0
      %2329 = vmatpush.msra.mxu0 %v2216
      %2330 = vmatpush.msra.mxu0 %v2215
      %2331 = vmatpush.msra.mxu0 %v2214
      %2332 = vmatpush.msra.mxu0 %v2213
      %2333 = vmatmul.f32.gmra.mxu0 %v2291
      %v2334 = vpop.f32.mrf.mxu0
      %v2335 = vadd.f32 %v2219, %v2334
      %2336 = vmatmul.f32.gmra.mxu0 %v2293
      %v2337 = vpop.f32.mrf.mxu0
      %v2338 = vadd.f32 %v2219, %v2337
      %2339 = vmatmul.f32.gmra.mxu0 %v2295
      %v2340 = vpop.f32.mrf.mxu0
      %v2341 = vadd.f32 %v2219, %v2340
      %2342 = vmatmul.f32.gmra.mxu0 %v2297
      %v2343 = vpop.f32.mrf.mxu0
      %v2344 = vadd.f32 %v2219, %v2343
      %2345 = vmatmul.f32.gmra.mxu0 %v2299
      %v2346 = vpop.f32.mrf.mxu0
      %v2347 = vadd.f32 %v2219, %v2346
      %2348 = vmatmul.f32.gmra.mxu0 %v2301
      %v2349 = vpop.f32.mrf.mxu0
      %v2350 = vadd.f32 %v2219, %v2349
      %2351 = vmatmul.f32.gmra.mxu0 %v2303
      %v2352 = vpop.f32.mrf.mxu0
      %v2353 = vadd.f32 %v2219, %v2352
      %2354 = vmatmul.f32.gmra.mxu0 %v2305
      %v2355 = vpop.f32.mrf.mxu0
      %v2356 = vadd.f32 %v2219, %v2355
      %2357 = vmatmul.f32.gmra.mxu0 %v2307
      %v2358 = vpop.f32.mrf.mxu0
      %v2359 = vadd.f32 %v2219, %v2358
      %2360 = vmatmul.f32.gmra.mxu0 %v2309
      %v2361 = vpop.f32.mrf.mxu0
      %v2362 = vadd.f32 %v2219, %v2361
      %2363 = vmatmul.f32.gmra.mxu0 %v2311
      %v2364 = vpop.f32.mrf.mxu0
      %v2365 = vadd.f32 %v2219, %v2364
      %2366 = vmatmul.f32.gmra.mxu0 %v2313
      %v2367 = vpop.f32.mrf.mxu0
      %v2368 = vadd.f32 %v2219, %v2367
      %2369 = vmatmul.f32.gmra.mxu0 %v2315
      %v2370 = vpop.f32.mrf.mxu0
      %v2371 = vadd.f32 %v2219, %v2370
      %2372 = vdwg.mxu0
      %2373 = vst [vmem:[#allocation1] ss:$4 sm:$0xff] %v319
      %s2374 = scalar_lea.vmem [#allocation1], 1
      %2375 = vst [vmem:[%s2374] ss:$4 sm:$0xff] %v359
      %s2376 = scalar_lea.vmem [#allocation1], 2
      %2377 = vst [vmem:[%s2376] ss:$4 sm:$0xff] %v360
      %s2378 = scalar_lea.vmem [#allocation1], 3
      %2379 = vst [vmem:[%s2378] ss:$4 sm:$0xff] %v361
      %s2380 = scalar_lea.vmem [#allocation1], 32
      %2381 = vst [vmem:[%s2380] ss:$4 sm:$0xff] %v320
      %s2382 = scalar_lea.vmem [#allocation1], 33
      %2383 = vst [vmem:[%s2382] ss:$4 sm:$0xff] %v321
      %s2384 = scalar_lea.vmem [#allocation1], 34
      %2385 = vst [vmem:[%s2384] ss:$4 sm:$0xff] %v362
      %s2386 = scalar_lea.vmem [#allocation1], 35
      %2387 = vst [vmem:[%s2386] ss:$4 sm:$0xff] %v363
      %v2388 = vld.sshfl [vmem:[#allocation1] sm:$0xff pattern:$0x73625140]
      %v2389 = vld.sshfl [vmem:[#allocation1 + $0x20] sm:$0xff pattern:$0x73625140]
      %2390 = vst [vmem:[#allocation1] ss:$4 sm:$0xff] %v364
      %2391 = vst [vmem:[%s2374] ss:$4 sm:$0xff] %v322
      %2392 = vst [vmem:[%s2376] ss:$4 sm:$0xff] %v323
      %2393 = vst [vmem:[%s2378] ss:$4 sm:$0xff] %v365
      %2394 = vst [vmem:[%s2380] ss:$4 sm:$0xff] %v366
      %2395 = vst [vmem:[%s2382] ss:$4 sm:$0xff] %v367
      %2396 = vst [vmem:[%s2384] ss:$4 sm:$0xff] %v324
      %2397 = vst [vmem:[%s2386] ss:$4 sm:$0xff] %v325
      %v2398 = vld.sshfl [vmem:[#allocation1] sm:$0xff pattern:$0x73625140]
      %v2399 = vld.sshfl [vmem:[#allocation1 + $0x20] sm:$0xff pattern:$0x73625140]
      %2400 = vst [vmem:[#allocation1] ss:$4 sm:$0xff] %v368
      %2401 = vst [vmem:[%s2374] ss:$4 sm:$0xff] %v369
      %2402 = vst [vmem:[%s2376] ss:$4 sm:$0xff] %v370
      %2403 = vst [vmem:[%s2378] ss:$4 sm:$0xff] %v326
      %2404 = vst [vmem:[%s2380] ss:$4 sm:$0xff] %v327
      %2405 = vst [vmem:[%s2382] ss:$4 sm:$0xff] %v371
      %2406 = vst [vmem:[%s2384] ss:$4 sm:$0xff] %v372
      %2407 = vst [vmem:[%s2386] ss:$4 sm:$0xff] %v373
      %v2408 = vld.sshfl [vmem:[#allocation1] sm:$0xff pattern:$0x73625140]
      %v2409 = vld.sshfl [vmem:[#allocation1 + $0x20] sm:$0xff pattern:$0x73625140]
      %2410 = vst [vmem:[#allocation1] ss:$4 sm:$0xff] %v328
      %2411 = vst [vmem:[%s2374] ss:$4 sm:$0xff] %v329
      %2412 = vst [vmem:[%s2376] ss:$4 sm:$0xff] %v374
      %2413 = vst [vmem:[%s2378] ss:$4 sm:$0xff] %v375
      %2414 = vst [vmem:[%s2380] ss:$4 sm:$0xff] %v376
      %2415 = vst [vmem:[%s2382] ss:$4 sm:$0xff] %v330
      %2416 = vst [vmem:[%s2384] ss:$4 sm:$0xff] %v331
      %2417 = vst [vmem:[%s2386] ss:$4 sm:$0xff] %v377
      %v2418 = vld.sshfl [vmem:[#allocation1] sm:$0xff pattern:$0x73625140]
      %v2419 = vld.sshfl [vmem:[#allocation1 + $0x20] sm:$0xff pattern:$0x73625140]
      %2420 = vst [vmem:[#allocation1] ss:$4 sm:$0xff] %v378
      %2421 = vst [vmem:[%s2374] ss:$4 sm:$0xff] %v379
      %2422 = vst [vmem:[%s2376] ss:$4 sm:$0xff] %v332
      %2423 = vst [vmem:[%s2378] ss:$4 sm:$0xff] %v333
      %2424 = vst [vmem:[%s2380] ss:$4 sm:$0xff] %v380
      %2425 = vst [vmem:[%s2382] ss:$4 sm:$0xff] %v381
      %2426 = vst [vmem:[%s2384] ss:$4 sm:$0xff] %v382
      %2427 = vst [vmem:[%s2386] ss:$4 sm:$0xff] %v334
      %v2428 = vld.sshfl [vmem:[#allocation1] sm:$0xff pattern:$0x73625140]
      %v2429 = vld.sshfl [vmem:[#allocation1 + $0x20] sm:$0xff pattern:$0x73625140]
      %2430 = vst [vmem:[#allocation1] ss:$4 sm:$0xff] %v335
      %2431 = vst [vmem:[%s2374] ss:$4 sm:$0xff] %v383
      %2432 = vst [vmem:[%s2376] ss:$4 sm:$0xff] %v384
      %2433 = vst [vmem:[%s2378] ss:$4 sm:$0xff] %v385
      %2434 = vst [vmem:[%s2380] ss:$4 sm:$0xff] %v336
      %2435 = vst [vmem:[%s2382] ss:$4 sm:$0xff] %v337
      %2436 = vst [vmem:[%s2384] ss:$4 sm:$0xff] %v386
      %2437 = vst [vmem:[%s2386] ss:$4 sm:$0xff] %v387
      %v2438 = vld.sshfl [vmem:[#allocation1] sm:$0xff pattern:$0x73625140]
      %v2439 = vld.sshfl [vmem:[#allocation1 + $0x20] sm:$0xff pattern:$0x73625140]
      %2440 = vst [vmem:[#allocation1] ss:$4 sm:$0xff] %v388
      %2441 = vst [vmem:[%s2374] ss:$4 sm:$0xff] %v338
      %v2442 = vld.sshfl [vmem:[#allocation1] sm:$0xff pattern:$0x73625140]
      %v2456 = vadd.f32 %v2335, %v2388
      %v2457 = vadd.f32 %v2338, %v2389
      %v2458 = vadd.f32 %v2341, %v2398
      %v2459 = vadd.f32 %v2344, %v2399
      %v2460 = vadd.f32 %v2347, %v2408
      %v2461 = vadd.f32 %v2350, %v2409
      %v2462 = vadd.f32 %v2353, %v2418
      %v2463 = vadd.f32 %v2356, %v2419
      %v2464 = vadd.f32 %v2359, %v2428
      %v2465 = vadd.f32 %v2362, %v2429
      %v2466 = vadd.f32 %v2365, %v2438
      %v2467 = vadd.f32 %v2368, %v2439
      %v2468 = vadd.f32 %v2371, %v2442
      %v2469 = vmax.f32 %v2456, 0.0
      %v2470 = vmax.f32 %v2457, 0.0
      %v2471 = vmax.f32 %v2458, 0.0
      %v2472 = vmax.f32 %v2459, 0.0
      %v2473 = vmax.f32 %v2460, 0.0
      %v2474 = vmax.f32 %v2461, 0.0
      %v2475 = vmax.f32 %v2462, 0.0
      %v2476 = vmax.f32 %v2463, 0.0
      %v2477 = vmax.f32 %v2464, 0.0
      %v2478 = vmax.f32 %v2465, 0.0
      %v2479 = vmax.f32 %v2466, 0.0
      %v2480 = vmax.f32 %v2467, 0.0
      %v2481 = vmax.f32 %v2468, 0.0
      %v2495 = vrot.slane %v2469, 2
      %v2496 = vrot.slane %v2469, 4
      %v2497 = vrot.slane %v2469, 6
      %v2498 = vrot.slane %v2470, 2
      %v2499 = vrot.slane %v2470, 4
      %v2500 = vrot.slane %v2470, 6
      %v2501 = vrot.slane %v2471, 2
      %v2502 = vrot.slane %v2471, 4
      %v2503 = vrot.slane %v2471, 6
      %v2504 = vrot.slane %v2472, 2
      %v2505 = vrot.slane %v2472, 4
      %v2506 = vrot.slane %v2472, 6
      %v2507 = vrot.slane %v2473, 2
      %v2508 = vrot.slane %v2473, 4
      %v2509 = vrot.slane %v2473, 6
      %v2510 = vrot.slane %v2474, 2
      %v2511 = vrot.slane %v2474, 4
      %v2512 = vrot.slane %v2474, 6
      %v2513 = vrot.slane %v2475, 2
      %v2514 = vrot.slane %v2475, 4
      %v2515 = vrot.slane %v2475, 6
      %v2516 = vrot.slane %v2476, 2
      %v2517 = vrot.slane %v2476, 4
      %v2518 = vrot.slane %v2476, 6
      %v2519 = vrot.slane %v2477, 2
      %v2520 = vrot.slane %v2477, 4
      %v2521 = vrot.slane %v2477, 6
      %v2522 = vrot.slane %v2478, 2
      %v2523 = vrot.slane %v2478, 4
      %v2524 = vrot.slane %v2478, 6
      %v2525 = vrot.slane %v2479, 2
      %v2526 = vrot.slane %v2479, 4
      %v2527 = vrot.slane %v2479, 6
      %v2528 = vrot.slane %v2480, 2
      %v2529 = vrot.slane %v2480, 4
      %v2530 = vrot.slane %v2480, 6
      %v2531 = vrot.slane %v2481, 2
      %vm2532 = vcmask 1040384
      %vm2533 = vcmask 1042434
      %vm2534 = vmor %vm2532, %vm2533
      %vm2535 = vcmask 1044484
      %vm2536 = vmor %vm2534, %vm2535
      %vm2537 = vcmask 1046534
      %vm2538 = vmor %vm2536, %vm2537
      %v2539 = vrot.slane %v2469, 7
      %v2540 = vrot.slane %v2539, 2
      %v2541 = vrot.slane %v2495, 7
      %v2542 = vsel %vm2538, %v2540, %v2541
      %v2543 = vrot.slane %v2541, 2
      %v2544 = vrot.slane %v2496, 7
      %v2545 = vsel %vm2538, %v2543, %v2544
      %v2546 = vrot.slane %v2544, 2
      %v2547 = vrot.slane %v2497, 7
      %v2548 = vsel %vm2538, %v2546, %v2547
      %v2549 = vrot.slane %v2547, 2
      %v2550 = vrot.slane %v2470, 7
      %v2551 = vsel %vm2538, %v2549, %v2550
      %v2552 = vrot.slane %v2498, 7
      %v2553 = vrot.slane %v2552, 2
      %v2554 = vrot.slane %v2499, 7
      %v2555 = vsel %vm2538, %v2553, %v2554
      %v2556 = vrot.slane %v2554, 2
      %v2557 = vrot.slane %v2500, 7
      %v2558 = vsel %vm2538, %v2556, %v2557
      %v2559 = vrot.slane %v2557, 2
      %v2560 = vrot.slane %v2471, 7
      %v2561 = vsel %vm2538, %v2559, %v2560
      %v2562 = vrot.slane %v2560, 2
      %v2563 = vrot.slane %v2501, 7
      %v2564 = vsel %vm2538, %v2562, %v2563
      %v2565 = vrot.slane %v2502, 7
      %v2566 = vrot.slane %v2565, 2
      %v2567 = vrot.slane %v2503, 7
      %v2568 = vsel %vm2538, %v2566, %v2567
      %v2569 = vrot.slane %v2567, 2
      %v2570 = vrot.slane %v2472, 7
      %v2571 = vsel %vm2538, %v2569, %v2570
      %v2572 = vrot.slane %v2570, 2
      %v2573 = vrot.slane %v2504, 7
      %v2574 = vsel %vm2538, %v2572, %v2573
      %v2575 = vrot.slane %v2573, 2
      %v2576 = vrot.slane %v2505, 7
      %v2577 = vsel %vm2538, %v2575, %v2576
      %v2578 = vrot.slane %v2506, 7
      %v2579 = vrot.slane %v2578, 2
      %v2580 = vrot.slane %v2473, 7
      %v2581 = vsel %vm2538, %v2579, %v2580
      %v2582 = vrot.slane %v2580, 2
      %v2583 = vrot.slane %v2507, 7
      %v2584 = vsel %vm2538, %v2582, %v2583
      %v2585 = vrot.slane %v2583, 2
      %v2586 = vrot.slane %v2508, 7
      %v2587 = vsel %vm2538, %v2585, %v2586
      %v2588 = vrot.slane %v2586, 2
      %v2589 = vrot.slane %v2509, 7
      %v2590 = vsel %vm2538, %v2588, %v2589
      %v2591 = vrot.slane %v2474, 7
      %v2592 = vrot.slane %v2591, 2
      %v2593 = vrot.slane %v2510, 7
      %v2594 = vsel %vm2538, %v2592, %v2593
      %v2595 = vrot.slane %v2593, 2
      %v2596 = vrot.slane %v2511, 7
      %v2597 = vsel %vm2538, %v2595, %v2596
      %v2598 = vrot.slane %v2596, 2
      %v2599 = vrot.slane %v2512, 7
      %v2600 = vsel %vm2538, %v2598, %v2599
      %v2601 = vrot.slane %v2599, 2
      %v2602 = vrot.slane %v2475, 7
      %v2603 = vsel %vm2538, %v2601, %v2602
      %v2604 = vrot.slane %v2513, 7
      %v2605 = vrot.slane %v2604, 2
      %v2606 = vrot.slane %v2514, 7
      %v2607 = vsel %vm2538, %v2605, %v2606
      %v2608 = vrot.slane %v2606, 2
      %v2609 = vrot.slane %v2515, 7
      %v2610 = vsel %vm2538, %v2608, %v2609
      %v2611 = vrot.slane %v2609, 2
      %v2612 = vrot.slane %v2476, 7
      %v2613 = vsel %vm2538, %v2611, %v2612
      %v2614 = vrot.slane %v2612, 2
      %v2615 = vrot.slane %v2516, 7
      %v2616 = vsel %vm2538, %v2614, %v2615
      %v2617 = vrot.slane %v2517, 7
      %v2618 = vrot.slane %v2617, 2
      %v2619 = vrot.slane %v2518, 7
      %v2620 = vsel %vm2538, %v2618, %v2619
      %v2621 = vrot.slane %v2619, 2
      %v2622 = vrot.slane %v2477, 7
      %v2623 = vsel %vm2538, %v2621, %v2622
      %v2624 = vrot.slane %v2622, 2
      %v2625 = vrot.slane %v2519, 7
      %v2626 = vsel %vm2538, %v2624, %v2625
      %v2627 = vrot.slane %v2625, 2
      %v2628 = vrot.slane %v2520, 7
      %v2629 = vsel %vm2538, %v2627, %v2628
      %v2630 = vrot.slane %v2521, 7
      %v2631 = vrot.slane %v2630, 2
      %v2632 = vrot.slane %v2478, 7
      %v2633 = vsel %vm2538, %v2631, %v2632
      %v2634 = vrot.slane %v2632, 2
      %v2635 = vrot.slane %v2522, 7
      %v2636 = vsel %vm2538, %v2634, %v2635
      %v2637 = vrot.slane %v2635, 2
      %v2638 = vrot.slane %v2523, 7
      %v2639 = vsel %vm2538, %v2637, %v2638
      %v2640 = vrot.slane %v2638, 2
      %v2641 = vrot.slane %v2524, 7
      %v2642 = vsel %vm2538, %v2640, %v2641
      %v2643 = vrot.slane %v2479, 7
      %v2644 = vrot.slane %v2643, 2
      %v2645 = vrot.slane %v2525, 7
      %v2646 = vsel %vm2538, %v2644, %v2645
      %v2647 = vrot.slane %v2645, 2
      %v2648 = vrot.slane %v2526, 7
      %v2649 = vsel %vm2538, %v2647, %v2648
      %v2650 = vrot.slane %v2648, 2
      %v2651 = vrot.slane %v2527, 7
      %v2652 = vsel %vm2538, %v2650, %v2651
      %v2653 = vrot.slane %v2651, 2
      %v2654 = vrot.slane %v2480, 7
      %v2655 = vsel %vm2538, %v2653, %v2654
      %v2656 = vrot.slane %v2528, 7
      %v2657 = vrot.slane %v2656, 2
      %v2658 = vrot.slane %v2529, 7
      %v2659 = vsel %vm2538, %v2657, %v2658
      %v2660 = vrot.slane %v2658, 2
      %v2661 = vrot.slane %v2530, 7
      %v2662 = vsel %vm2538, %v2660, %v2661
      %v2663 = vrot.slane %v2661, 2
      %v2664 = vrot.slane %v2481, 7
      %v2665 = vsel %vm2538, %v2663, %v2664
      %v2666 = vrot.slane %v2664, 2
      %v2667 = vrot.slane %v2531, 7
      %v2668 = vsel %vm2538, %v2666, %v2667
      %2669 = vst [vmem:[#allocation1] ss:$4 sm:$0xff] %v2469
      %s2670 = scalar_lea.vmem [#allocation1], 1
      %2671 = vst [vmem:[%s2670] ss:$4 sm:$0xff] %v2495
      %s2672 = scalar_lea.vmem [#allocation1], 2
      %2673 = vst [vmem:[%s2672] ss:$4 sm:$0xff] %v2496
      %s2674 = scalar_lea.vmem [#allocation1], 3
      %2675 = vst [vmem:[%s2674] ss:$4 sm:$0xff] %v2497
      %s2676 = scalar_lea.vmem [#allocation1], 32
      %2677 = vst [vmem:[%s2676] ss:$4 sm:$0xff] %v2498
      %s2678 = scalar_lea.vmem [#allocation1], 33
      %2679 = vst [vmem:[%s2678] ss:$4 sm:$0xff] %v2499
      %s2680 = scalar_lea.vmem [#allocation1], 34
      %2681 = vst [vmem:[%s2680] ss:$4 sm:$0xff] %v2500
      %s2682 = scalar_lea.vmem [#allocation1], 35
      %2683 = vst [vmem:[%s2682] ss:$4 sm:$0xff] %v2471
      %v2684 = vld.sshfl [vmem:[#allocation1] sm:$0xff pattern:$0x73625140]
      %v2685 = vld.sshfl [vmem:[#allocation1 + $0x20] sm:$0xff pattern:$0x73625140]
      %2686 = vst [vmem:[#allocation1] ss:$4 sm:$0xff] %v2502
      %2687 = vst [vmem:[%s2670] ss:$4 sm:$0xff] %v2503
      %2688 = vst [vmem:[%s2672] ss:$4 sm:$0xff] %v2472
      %2689 = vst [vmem:[%s2674] ss:$4 sm:$0xff] %v2504
      %2690 = vst [vmem:[%s2676] ss:$4 sm:$0xff] %v2506
      %2691 = vst [vmem:[%s2678] ss:$4 sm:$0xff] %v2473
      %2692 = vst [vmem:[%s2680] ss:$4 sm:$0xff] %v2507
      %2693 = vst [vmem:[%s2682] ss:$4 sm:$0xff] %v2508
      %v2694 = vld.sshfl [vmem:[#allocation1] sm:$0xff pattern:$0x73625140]
      %v2695 = vld.sshfl [vmem:[#allocation1 + $0x20] sm:$0xff pattern:$0x73625140]
      %2696 = vst [vmem:[#allocation1] ss:$4 sm:$0xff] %v2474
      %2697 = vst [vmem:[%s2670] ss:$4 sm:$0xff] %v2510
      %2698 = vst [vmem:[%s2672] ss:$4 sm:$0xff] %v2511
      %2699 = vst [vmem:[%s2674] ss:$4 sm:$0xff] %v2512
      %2700 = vst [vmem:[%s2676] ss:$4 sm:$0xff] %v2513
      %2701 = vst [vmem:[%s2678] ss:$4 sm:$0xff] %v2514
      %2702 = vst [vmem:[%s2680] ss:$4 sm:$0xff] %v2515
      %2703 = vst [vmem:[%s2682] ss:$4 sm:$0xff] %v2476
      %v2704 = vld.sshfl [vmem:[#allocation1] sm:$0xff pattern:$0x73625140]
      %v2705 = vld.sshfl [vmem:[#allocation1 + $0x20] sm:$0xff pattern:$0x73625140]
      %2706 = vst [vmem:[#allocation1] ss:$4 sm:$0xff] %v2517
      %2707 = vst [vmem:[%s2670] ss:$4 sm:$0xff] %v2518
      %2708 = vst [vmem:[%s2672] ss:$4 sm:$0xff] %v2477
      %2709 = vst [vmem:[%s2674] ss:$4 sm:$0xff] %v2519
      %2710 = vst [vmem:[%s2676] ss:$4 sm:$0xff] %v2521
      %2711 = vst [vmem:[%s2678] ss:$4 sm:$0xff] %v2478
      %2712 = vst [vmem:[%s2680] ss:$4 sm:$0xff] %v2522
      %2713 = vst [vmem:[%s2682] ss:$4 sm:$0xff] %v2523
      %v2714 = vld.sshfl [vmem:[#allocation1] sm:$0xff pattern:$0x73625140]
      %v2715 = vld.sshfl [vmem:[#allocation1 + $0x20] sm:$0xff pattern:$0x73625140]
      %2716 = vst [vmem:[#allocation1] ss:$4 sm:$0xff] %v2479
      %2717 = vst [vmem:[%s2670] ss:$4 sm:$0xff] %v2525
      %2718 = vst [vmem:[%s2672] ss:$4 sm:$0xff] %v2526
      %2719 = vst [vmem:[%s2674] ss:$4 sm:$0xff] %v2527
      %2720 = vst [vmem:[%s2676] ss:$4 sm:$0xff] %v2528
      %2721 = vst [vmem:[%s2678] ss:$4 sm:$0xff] %v2529
      %2722 = vst [vmem:[%s2680] ss:$4 sm:$0xff] %v2530
      %2723 = vst [vmem:[%s2682] ss:$4 sm:$0xff] %v2481
      %v2724 = vld.sshfl [vmem:[#allocation1] sm:$0xff pattern:$0x73625140]
      %v2725 = vld.sshfl [vmem:[#allocation1 + $0x20] sm:$0xff pattern:$0x73625140]
      %2736 = vst [vmem:[#allocation1] ss:$4 sm:$0xff] %v2542
      %s2737 = scalar_lea.vmem [#allocation1], 1
      %2738 = vst [vmem:[%s2737] ss:$4 sm:$0xff] %v2545
      %s2739 = scalar_lea.vmem [#allocation1], 2
      %2740 = vst [vmem:[%s2739] ss:$4 sm:$0xff] %v2548
      %s2741 = scalar_lea.vmem [#allocation1], 3
      %2742 = vst [vmem:[%s2741] ss:$4 sm:$0xff] %v2551
      %s2743 = scalar_lea.vmem [#allocation1], 32
      %2744 = vst [vmem:[%s2743] ss:$4 sm:$0xff] %v2555
      %s2745 = scalar_lea.vmem [#allocation1], 33
      %2746 = vst [vmem:[%s2745] ss:$4 sm:$0xff] %v2558
      %s2747 = scalar_lea.vmem [#allocation1], 34
      %2748 = vst [vmem:[%s2747] ss:$4 sm:$0xff] %v2561
      %s2749 = scalar_lea.vmem [#allocation1], 35
      %2750 = vst [vmem:[%s2749] ss:$4 sm:$0xff] %v2564
      %v2751 = vld.sshfl [vmem:[#allocation1] sm:$0xff pattern:$0x73625140]
      %v2752 = vld.sshfl [vmem:[#allocation1 + $0x20] sm:$0xff pattern:$0x73625140]
      %2753 = vst [vmem:[#allocation1] ss:$4 sm:$0xff] %v2568
      %2754 = vst [vmem:[%s2737] ss:$4 sm:$0xff] %v2571
      %2755 = vst [vmem:[%s2739] ss:$4 sm:$0xff] %v2574
      %2756 = vst [vmem:[%s2741] ss:$4 sm:$0xff] %v2577
      %2757 = vst [vmem:[%s2743] ss:$4 sm:$0xff] %v2581
      %2758 = vst [vmem:[%s2745] ss:$4 sm:$0xff] %v2584
      %2759 = vst [vmem:[%s2747] ss:$4 sm:$0xff] %v2587
      %2760 = vst [vmem:[%s2749] ss:$4 sm:$0xff] %v2590
      %v2761 = vld.sshfl [vmem:[#allocation1] sm:$0xff pattern:$0x73625140]
      %v2762 = vld.sshfl [vmem:[#allocation1 + $0x20] sm:$0xff pattern:$0x73625140]
      %2763 = vst [vmem:[#allocation1] ss:$4 sm:$0xff] %v2594
      %2764 = vst [vmem:[%s2737] ss:$4 sm:$0xff] %v2597
      %2765 = vst [vmem:[%s2739] ss:$4 sm:$0xff] %v2600
      %2766 = vst [vmem:[%s2741] ss:$4 sm:$0xff] %v2603
      %2767 = vst [vmem:[%s2743] ss:$4 sm:$0xff] %v2607
      %2768 = vst [vmem:[%s2745] ss:$4 sm:$0xff] %v2610
      %2769 = vst [vmem:[%s2747] ss:$4 sm:$0xff] %v2613
      %2770 = vst [vmem:[%s2749] ss:$4 sm:$0xff] %v2616
      %v2771 = vld.sshfl [vmem:[#allocation1] sm:$0xff pattern:$0x73625140]
      %v2772 = vld.sshfl [vmem:[#allocation1 + $0x20] sm:$0xff pattern:$0x73625140]
      %2773 = vst [vmem:[#allocation1] ss:$4 sm:$0xff] %v2620
      %2774 = vst [vmem:[%s2737] ss:$4 sm:$0xff] %v2623
      %2775 = vst [vmem:[%s2739] ss:$4 sm:$0xff] %v2626
      %2776 = vst [vmem:[%s2741] ss:$4 sm:$0xff] %v2629
      %2777 = vst [vmem:[%s2743] ss:$4 sm:$0xff] %v2633
      %2778 = vst [vmem:[%s2745] ss:$4 sm:$0xff] %v2636
      %2779 = vst [vmem:[%s2747] ss:$4 sm:$0xff] %v2639
      %2780 = vst [vmem:[%s2749] ss:$4 sm:$0xff] %v2642
      %v2781 = vld.sshfl [vmem:[#allocation1] sm:$0xff pattern:$0x73625140]
      %v2782 = vld.sshfl [vmem:[#allocation1 + $0x20] sm:$0xff pattern:$0x73625140]
      %2783 = vst [vmem:[#allocation1] ss:$4 sm:$0xff] %v2646
      %2784 = vst [vmem:[%s2737] ss:$4 sm:$0xff] %v2649
      %2785 = vst [vmem:[%s2739] ss:$4 sm:$0xff] %v2652
      %2786 = vst [vmem:[%s2741] ss:$4 sm:$0xff] %v2655
      %2787 = vst [vmem:[%s2743] ss:$4 sm:$0xff] %v2659
      %2788 = vst [vmem:[%s2745] ss:$4 sm:$0xff] %v2662
      %2789 = vst [vmem:[%s2747] ss:$4 sm:$0xff] %v2665
      %2790 = vst [vmem:[%s2749] ss:$4 sm:$0xff] %v2668
      %v2791 = vld.sshfl [vmem:[#allocation1] sm:$0xff pattern:$0x73625140]
      %v2792 = vld.sshfl [vmem:[#allocation1 + $0x20] sm:$0xff pattern:$0x73625140]
      %2793 = vrot.lane.b32.xlu0 %v2751, 32
      %v2794 = vpop.permute.xlu0 %2793
      %2795 = vrot.lane.b32.xlu0 %v2752, 32
      %v2796 = vpop.permute.xlu0 %2795
      %2797 = vrot.lane.b32.xlu0 %v2761, 32
      %v2798 = vpop.permute.xlu0 %2797
      %2799 = vrot.lane.b32.xlu0 %v2762, 32
      %v2800 = vpop.permute.xlu0 %2799
      %2801 = vrot.lane.b32.xlu0 %v2771, 32
      %v2802 = vpop.permute.xlu0 %2801
      %2803 = vrot.lane.b32.xlu0 %v2772, 32
      %v2804 = vpop.permute.xlu0 %2803
      %2805 = vrot.lane.b32.xlu0 %v2781, 32
      %v2806 = vpop.permute.xlu0 %2805
      %2807 = vrot.lane.b32.xlu0 %v2782, 32
      %v2808 = vpop.permute.xlu0 %2807
      %2809 = vrot.lane.b32.xlu0 %v2791, 32
      %v2810 = vpop.permute.xlu0 %2809
      %2811 = vrot.lane.b32.xlu0 %v2792, 32
      %v2812 = vpop.permute.xlu0 %2811
      %2823 = vst [vmem:[#allocation1] ss:$4 sm:$0xff] %v2495
      %s2824 = scalar_lea.vmem [#allocation1], 1
      %2825 = vst [vmem:[%s2824] ss:$4 sm:$0xff] %v2496
      %s2826 = scalar_lea.vmem [#allocation1], 2
      %2827 = vst [vmem:[%s2826] ss:$4 sm:$0xff] %v2497
      %s2828 = scalar_lea.vmem [#allocation1], 3
      %2829 = vst [vmem:[%s2828] ss:$4 sm:$0xff] %v2470
      %s2830 = scalar_lea.vmem [#allocation1], 32
      %2831 = vst [vmem:[%s2830] ss:$4 sm:$0xff] %v2499
      %s2832 = scalar_lea.vmem [#allocation1], 33
      %2833 = vst [vmem:[%s2832] ss:$4 sm:$0xff] %v2500
      %s2834 = scalar_lea.vmem [#allocation1], 34
      %2835 = vst [vmem:[%s2834] ss:$4 sm:$0xff] %v2471
      %s2836 = scalar_lea.vmem [#allocation1], 35
      %2837 = vst [vmem:[%s2836] ss:$4 sm:$0xff] %v2501
      %v2838 = vld.sshfl [vmem:[#allocation1] sm:$0xff pattern:$0x73625140]
      %v2839 = vld.sshfl [vmem:[#allocation1 + $0x20] sm:$0xff pattern:$0x73625140]
      %2840 = vst [vmem:[#allocation1] ss:$4 sm:$0xff] %v2503
      %2841 = vst [vmem:[%s2824] ss:$4 sm:$0xff] %v2472
      %2842 = vst [vmem:[%s2826] ss:$4 sm:$0xff] %v2504
      %2843 = vst [vmem:[%s2828] ss:$4 sm:$0xff] %v2505
      %2844 = vst [vmem:[%s2830] ss:$4 sm:$0xff] %v2473
      %2845 = vst [vmem:[%s2832] ss:$4 sm:$0xff] %v2507
      %2846 = vst [vmem:[%s2834] ss:$4 sm:$0xff] %v2508
      %2847 = vst [vmem:[%s2836] ss:$4 sm:$0xff] %v2509
      %v2848 = vld.sshfl [vmem:[#allocation1] sm:$0xff pattern:$0x73625140]
      %v2849 = vld.sshfl [vmem:[#allocation1 + $0x20] sm:$0xff pattern:$0x73625140]
      %2850 = vst [vmem:[#allocation1] ss:$4 sm:$0xff] %v2510
      %2851 = vst [vmem:[%s2824] ss:$4 sm:$0xff] %v2511
      %2852 = vst [vmem:[%s2826] ss:$4 sm:$0xff] %v2512
      %2853 = vst [vmem:[%s2828] ss:$4 sm:$0xff] %v2475
      %2854 = vst [vmem:[%s2830] ss:$4 sm:$0xff] %v2514
      %2855 = vst [vmem:[%s2832] ss:$4 sm:$0xff] %v2515
      %2856 = vst [vmem:[%s2834] ss:$4 sm:$0xff] %v2476
      %2857 = vst [vmem:[%s2836] ss:$4 sm:$0xff] %v2516
      %v2858 = vld.sshfl [vmem:[#allocation1] sm:$0xff pattern:$0x73625140]
      %v2859 = vld.sshfl [vmem:[#allocation1 + $0x20] sm:$0xff pattern:$0x73625140]
      %2860 = vst [vmem:[#allocation1] ss:$4 sm:$0xff] %v2518
      %2861 = vst [vmem:[%s2824] ss:$4 sm:$0xff] %v2477
      %2862 = vst [vmem:[%s2826] ss:$4 sm:$0xff] %v2519
      %2863 = vst [vmem:[%s2828] ss:$4 sm:$0xff] %v2520
      %2864 = vst [vmem:[%s2830] ss:$4 sm:$0xff] %v2478
      %2865 = vst [vmem:[%s2832] ss:$4 sm:$0xff] %v2522
      %2866 = vst [vmem:[%s2834] ss:$4 sm:$0xff] %v2523
      %2867 = vst [vmem:[%s2836] ss:$4 sm:$0xff] %v2524
      %v2868 = vld.sshfl [vmem:[#allocation1] sm:$0xff pattern:$0x73625140]
      %v2869 = vld.sshfl [vmem:[#allocation1 + $0x20] sm:$0xff pattern:$0x73625140]
      %2870 = vst [vmem:[#allocation1] ss:$4 sm:$0xff] %v2525
      %2871 = vst [vmem:[%s2824] ss:$4 sm:$0xff] %v2526
      %2872 = vst [vmem:[%s2826] ss:$4 sm:$0xff] %v2527
      %2873 = vst [vmem:[%s2828] ss:$4 sm:$0xff] %v2480
      %2874 = vst [vmem:[%s2830] ss:$4 sm:$0xff] %v2529
      %2875 = vst [vmem:[%s2832] ss:$4 sm:$0xff] %v2530
      %2876 = vst [vmem:[%s2834] ss:$4 sm:$0xff] %v2481
      %2877 = vst [vmem:[%s2836] ss:$4 sm:$0xff] %v2531
      %v2878 = vld.sshfl [vmem:[#allocation1] sm:$0xff pattern:$0x73625140]
      %v2879 = vld.sshfl [vmem:[#allocation1 + $0x20] sm:$0xff pattern:$0x73625140]
      %2880 = vrot.lane.b32.xlu0 %v2838, 64
      %v2881 = vpop.permute.xlu0 %2880
      %2882 = vrot.lane.b32.xlu0 %v2839, 64
      %v2883 = vpop.permute.xlu0 %2882
      %2884 = vrot.lane.b32.xlu0 %v2848, 64
      %v2885 = vpop.permute.xlu0 %2884
      %2886 = vrot.lane.b32.xlu0 %v2849, 64
      %v2887 = vpop.permute.xlu0 %2886
      %2888 = vrot.lane.b32.xlu0 %v2858, 64
      %v2889 = vpop.permute.xlu0 %2888
      %2890 = vrot.lane.b32.xlu0 %v2859, 64
      %v2891 = vpop.permute.xlu0 %2890
      %2892 = vrot.lane.b32.xlu0 %v2868, 64
      %v2893 = vpop.permute.xlu0 %2892
      %2894 = vrot.lane.b32.xlu0 %v2869, 64
      %v2895 = vpop.permute.xlu0 %2894
      %2896 = vrot.lane.b32.xlu0 %v2878, 64
      %v2897 = vpop.permute.xlu0 %2896
      %2898 = vrot.lane.b32.xlu0 %v2879, 64
      %v2899 = vpop.permute.xlu0 %2898
      %v2910 = vsel %vm467, %v2684, %v2794
      %v2911 = vsel %vm467, %v2685, %v2796
      %v2912 = vsel %vm467, %v2694, %v2798
      %v2913 = vsel %vm467, %v2695, %v2800
      %v2914 = vsel %vm467, %v2704, %v2802
      %v2915 = vsel %vm467, %v2705, %v2804
      %v2916 = vsel %vm467, %v2714, %v2806
      %v2917 = vsel %vm467, %v2715, %v2808
      %v2918 = vsel %vm467, %v2724, %v2810
      %v2919 = vsel %vm467, %v2725, %v2812
      %vm2920 = vcmask 523264
      %v2921 = vsel %vm2920, %v2910, %v2881
      %v2922 = vsel %vm2920, %v2911, %v2883
      %v2923 = vsel %vm2920, %v2912, %v2885
      %v2924 = vsel %vm2920, %v2913, %v2887
      %v2925 = vsel %vm2920, %v2914, %v2889
      %v2926 = vsel %vm2920, %v2915, %v2891
      %v2927 = vsel %vm2920, %v2916, %v2893
      %v2928 = vsel %vm2920, %v2917, %v2895
      %v2929 = vsel %vm2920, %v2918, %v2897
      %v2930 = vsel %vm2920, %v2919, %v2899
      %v2931 = vld [vmem:[%s5] sm:$0xff]
      %v2932 = vld [vmem:[%s5 + $0x8] sm:$0xff]
      %v2933 = vld [vmem:[%s5 + $0x10] sm:$0xff]
      %v2934 = vld [vmem:[%s5 + $0x18] sm:$0xff]
      %v2935 = vld [vmem:[%s5 + $0x20] sm:$0xff]
      %v2936 = vld [vmem:[%s5 + $0x28] sm:$0xff]
      %v2937 = vld [vmem:[%s5 + $0x30] sm:$0xff]
      %v2938 = vld [vmem:[%s5 + $0x38] sm:$0xff]
      %v2939 = vld [vmem:[%s5 + $0x40] sm:$0xff]
      %v2940 = vld [vmem:[%s5 + $0x48] sm:$0xff]
      %v2941 = vld [vmem:[%s5 + $0x50] sm:$0xff]
      %v2942 = vld [vmem:[%s5 + $0x58] sm:$0xff]
      %v2943 = vld [vmem:[%s6] sm:$0x1]
      %v2945 = vperm.slane %v2943, 0
      %vm2947 = vcmask 785408
      %v2949 = vsel %vm2947, %v2921, 0
      %v2952 = vsel %vm2947, %v2922, 0
      %v2955 = vsel %vm2947, %v2923, 0
      %v2958 = vsel %vm2947, %v2924, 0
      %v2961 = vsel %vm2947, %v2925, 0
      %v2964 = vsel %vm2947, %v2926, 0
      %v2967 = vsel %vm2947, %v2927, 0
      %v2970 = vsel %vm2947, %v2928, 0
      %v2973 = vsel %vm2947, %v2929, 0
      %v2976 = vsel %vm2947, %v2930, 0
      %2978 = vmatpush.msra.mxu0 0.0
      %2979 = vmatpush.msra.mxu0 0.0
      %2980 = vmatpush.msra.mxu0 0.0
      %2981 = vmatpush.msra.mxu0 0.0
      %2982 = vmatpush.msra.mxu0 %v2942
      %2983 = vmatpush.msra.mxu0 %v2941
      %2984 = vmatpush.msra.mxu0 %v2940
      %2985 = vmatpush.msra.mxu0 %v2939
      %2986 = vmatpush.msra.mxu0 %v2938
      %2987 = vmatpush.msra.mxu0 %v2937
      %2988 = vmatpush.msra.mxu0 %v2936
      %2989 = vmatpush.msra.mxu0 %v2935
      %2990 = vmatpush.msra.mxu0 %v2934
      %2991 = vmatpush.msra.mxu0 %v2933
      %2992 = vmatpush.msra.mxu0 %v2932
      %2993 = vmatpush.msra.mxu0 %v2931
      %2994 = vmatmul.f32.gmra.mxu0 %v2949
      %v2995 = vpop.f32.mrf.mxu0
      %v2996 = vadd.f32 %v2945, %v2995
      %2997 = vmatmul.f32.gmra.mxu0 %v2952
      %v2998 = vpop.f32.mrf.mxu0
      %v2999 = vadd.f32 %v2945, %v2998
      %3000 = vmatmul.f32.gmra.mxu0 %v2955
      %v3001 = vpop.f32.mrf.mxu0
      %v3002 = vadd.f32 %v2945, %v3001
      %3003 = vmatmul.f32.gmra.mxu0 %v2958
      %v3004 = vpop.f32.mrf.mxu0
      %v3005 = vadd.f32 %v2945, %v3004
      %3006 = vmatmul.f32.gmra.mxu0 %v2961
      %v3007 = vpop.f32.mrf.mxu0
      %v3008 = vadd.f32 %v2945, %v3007
      %3009 = vmatmul.f32.gmra.mxu0 %v2964
      %v3010 = vpop.f32.mrf.mxu0
      %v3011 = vadd.f32 %v2945, %v3010
      %3012 = vmatmul.f32.gmra.mxu0 %v2967
      %v3013 = vpop.f32.mrf.mxu0
      %v3014 = vadd.f32 %v2945, %v3013
      %3015 = vmatmul.f32.gmra.mxu0 %v2970
      %v3016 = vpop.f32.mrf.mxu0
      %v3017 = vadd.f32 %v2945, %v3016
      %3018 = vmatmul.f32.gmra.mxu0 %v2973
      %v3019 = vpop.f32.mrf.mxu0
      %v3020 = vadd.f32 %v2945, %v3019
      %3021 = vmatmul.f32.gmra.mxu0 %v2976
      %v3022 = vpop.f32.mrf.mxu0
      %v3023 = vadd.f32 %v2945, %v3022
      %3024 = vdwg.mxu0
      %v3025 = vxor.u32 %v2996, 2147483648
      %v3026 = vxor.u32 %v2999, 2147483648
      %v3027 = vxor.u32 %v3002, 2147483648
      %v3028 = vxor.u32 %v3005, 2147483648
      %v3029 = vxor.u32 %v3008, 2147483648
      %v3030 = vxor.u32 %v3011, 2147483648
      %v3031 = vxor.u32 %v3014, 2147483648
      %v3032 = vxor.u32 %v3017, 2147483648
      %v3033 = vxor.u32 %v3020, 2147483648
      %v3034 = vxor.u32 %v3023, 2147483648
      %v3035 = vmul.f32 %v3025, 1.442695
      %v3036 = vpow.pop %v3035
      %v3037 = vmul.f32 %v3026, 1.442695
      %v3038 = vpow.pop %v3037
      %v3039 = vmul.f32 %v3027, 1.442695
      %v3040 = vpow.pop %v3039
      %v3041 = vmul.f32 %v3028, 1.442695
      %v3042 = vpow.pop %v3041
      %v3043 = vmul.f32 %v3029, 1.442695
      %v3044 = vpow.pop %v3043
      %v3045 = vmul.f32 %v3030, 1.442695
      %v3046 = vpow.pop %v3045
      %v3047 = vmul.f32 %v3031, 1.442695
      %v3048 = vpow.pop %v3047
      %v3049 = vmul.f32 %v3032, 1.442695
      %v3050 = vpow.pop %v3049
      %v3051 = vmul.f32 %v3033, 1.442695
      %v3052 = vpow.pop %v3051
      %v3053 = vmul.f32 %v3034, 1.442695
      %v3054 = vpow.pop %v3053
      %v3055 = vadd.f32 %v3036, 1.0
      %v3056 = vadd.f32 %v3038, 1.0
      %v3057 = vadd.f32 %v3040, 1.0
      %v3058 = vadd.f32 %v3042, 1.0
      %v3059 = vadd.f32 %v3044, 1.0
      %v3060 = vadd.f32 %v3046, 1.0
      %v3061 = vadd.f32 %v3048, 1.0
      %v3062 = vadd.f32 %v3050, 1.0
      %v3063 = vadd.f32 %v3052, 1.0
      %v3064 = vadd.f32 %v3054, 1.0
      %v3065 = vrcp.pop %v3055
      %v3066 = vmul.f32 %v3055, %v3065
      %v3067 = vsub.f32 1.0, %v3066
      %v3068 = vmul.f32 %v3065, %v3067
      %v3069 = vadd.f32 %v3065, %v3068
      %vm3070 = vweird.f32 %v3055
      %vm3071 = vweird.f32 %v3065
      %vm3072 = vmor %vm3070, %vm3071
      %v3073 = vsel %vm3072, %v3065, %v3069
      %v3074 = vand.u32 2147483647, %v3055
      %vm3075 = vcmp.eq.f32.partialorder %v3074, 8.507059e+37
      %v3076 = vand.u32 %v3055, 2147483648
      %v3077 = vor.u32 1.1754944e-38, %v3076
      %v3078 = vsel %vm3075, %v3077, %v3073
      %v3079 = vmul.f32 1.0, %v3078
      %v3080 = vrcp.pop %v3056
      %v3081 = vmul.f32 %v3056, %v3080
      %v3082 = vsub.f32 1.0, %v3081
      %v3083 = vmul.f32 %v3080, %v3082
      %v3084 = vadd.f32 %v3080, %v3083
      %vm3085 = vweird.f32 %v3056
      %vm3086 = vweird.f32 %v3080
      %vm3087 = vmor %vm3085, %vm3086
      %v3088 = vsel %vm3087, %v3080, %v3084
      %v3089 = vand.u32 2147483647, %v3056
      %vm3090 = vcmp.eq.f32.partialorder %v3089, 8.507059e+37
      %v3091 = vand.u32 %v3056, 2147483648
      %v3092 = vor.u32 1.1754944e-38, %v3091
      %v3093 = vsel %vm3090, %v3092, %v3088
      %v3094 = vmul.f32 1.0, %v3093
      %v3095 = vrcp.pop %v3057
      %v3096 = vmul.f32 %v3057, %v3095
      %v3097 = vsub.f32 1.0, %v3096
      %v3098 = vmul.f32 %v3095, %v3097
      %v3099 = vadd.f32 %v3095, %v3098
      %vm3100 = vweird.f32 %v3057
      %vm3101 = vweird.f32 %v3095
      %vm3102 = vmor %vm3100, %vm3101
      %v3103 = vsel %vm3102, %v3095, %v3099
      %v3104 = vand.u32 2147483647, %v3057
      %vm3105 = vcmp.eq.f32.partialorder %v3104, 8.507059e+37
      %v3106 = vand.u32 %v3057, 2147483648
      %v3107 = vor.u32 1.1754944e-38, %v3106
      %v3108 = vsel %vm3105, %v3107, %v3103
      %v3109 = vmul.f32 1.0, %v3108
      %v3110 = vrcp.pop %v3058
      %v3111 = vmul.f32 %v3058, %v3110
      %v3112 = vsub.f32 1.0, %v3111
      %v3113 = vmul.f32 %v3110, %v3112
      %v3114 = vadd.f32 %v3110, %v3113
      %vm3115 = vweird.f32 %v3058
      %vm3116 = vweird.f32 %v3110
      %vm3117 = vmor %vm3115, %vm3116
      %v3118 = vsel %vm3117, %v3110, %v3114
      %v3119 = vand.u32 2147483647, %v3058
      %vm3120 = vcmp.eq.f32.partialorder %v3119, 8.507059e+37
      %v3121 = vand.u32 %v3058, 2147483648
      %v3122 = vor.u32 1.1754944e-38, %v3121
      %v3123 = vsel %vm3120, %v3122, %v3118
      %v3124 = vmul.f32 1.0, %v3123
      %v3125 = vrcp.pop %v3059
      %v3126 = vmul.f32 %v3059, %v3125
      %v3127 = vsub.f32 1.0, %v3126
      %v3128 = vmul.f32 %v3125, %v3127
      %v3129 = vadd.f32 %v3125, %v3128
      %vm3130 = vweird.f32 %v3059
      %vm3131 = vweird.f32 %v3125
      %vm3132 = vmor %vm3130, %vm3131
      %v3133 = vsel %vm3132, %v3125, %v3129
      %v3134 = vand.u32 2147483647, %v3059
      %vm3135 = vcmp.eq.f32.partialorder %v3134, 8.507059e+37
      %v3136 = vand.u32 %v3059, 2147483648
      %v3137 = vor.u32 1.1754944e-38, %v3136
      %v3138 = vsel %vm3135, %v3137, %v3133
      %v3139 = vmul.f32 1.0, %v3138
      %v3140 = vrcp.pop %v3060
      %v3141 = vmul.f32 %v3060, %v3140
      %v3142 = vsub.f32 1.0, %v3141
      %v3143 = vmul.f32 %v3140, %v3142
      %v3144 = vadd.f32 %v3140, %v3143
      %vm3145 = vweird.f32 %v3060
      %vm3146 = vweird.f32 %v3140
      %vm3147 = vmor %vm3145, %vm3146
      %v3148 = vsel %vm3147, %v3140, %v3144
      %v3149 = vand.u32 2147483647, %v3060
      %vm3150 = vcmp.eq.f32.partialorder %v3149, 8.507059e+37
      %v3151 = vand.u32 %v3060, 2147483648
      %v3152 = vor.u32 1.1754944e-38, %v3151
      %v3153 = vsel %vm3150, %v3152, %v3148
      %v3154 = vmul.f32 1.0, %v3153
      %v3155 = vrcp.pop %v3061
      %v3156 = vmul.f32 %v3061, %v3155
      %v3157 = vsub.f32 1.0, %v3156
      %v3158 = vmul.f32 %v3155, %v3157
      %v3159 = vadd.f32 %v3155, %v3158
      %vm3160 = vweird.f32 %v3061
      %vm3161 = vweird.f32 %v3155
      %vm3162 = vmor %vm3160, %vm3161
      %v3163 = vsel %vm3162, %v3155, %v3159
      %v3164 = vand.u32 2147483647, %v3061
      %vm3165 = vcmp.eq.f32.partialorder %v3164, 8.507059e+37
      %v3166 = vand.u32 %v3061, 2147483648
      %v3167 = vor.u32 1.1754944e-38, %v3166
      %v3168 = vsel %vm3165, %v3167, %v3163
      %v3169 = vmul.f32 1.0, %v3168
      %v3170 = vrcp.pop %v3062
      %v3171 = vmul.f32 %v3062, %v3170
      %v3172 = vsub.f32 1.0, %v3171
      %v3173 = vmul.f32 %v3170, %v3172
      %v3174 = vadd.f32 %v3170, %v3173
      %vm3175 = vweird.f32 %v3062
      %vm3176 = vweird.f32 %v3170
      %vm3177 = vmor %vm3175, %vm3176
      %v3178 = vsel %vm3177, %v3170, %v3174
      %v3179 = vand.u32 2147483647, %v3062
      %vm3180 = vcmp.eq.f32.partialorder %v3179, 8.507059e+37
      %v3181 = vand.u32 %v3062, 2147483648
      %v3182 = vor.u32 1.1754944e-38, %v3181
      %v3183 = vsel %vm3180, %v3182, %v3178
      %v3184 = vmul.f32 1.0, %v3183
      %v3185 = vrcp.pop %v3063
      %v3186 = vmul.f32 %v3063, %v3185
      %v3187 = vsub.f32 1.0, %v3186
      %v3188 = vmul.f32 %v3185, %v3187
      %v3189 = vadd.f32 %v3185, %v3188
      %vm3190 = vweird.f32 %v3063
      %vm3191 = vweird.f32 %v3185
      %vm3192 = vmor %vm3190, %vm3191
      %v3193 = vsel %vm3192, %v3185, %v3189
      %v3194 = vand.u32 2147483647, %v3063
      %vm3195 = vcmp.eq.f32.partialorder %v3194, 8.507059e+37
      %v3196 = vand.u32 %v3063, 2147483648
      %v3197 = vor.u32 1.1754944e-38, %v3196
      %v3198 = vsel %vm3195, %v3197, %v3193
      %v3199 = vmul.f32 1.0, %v3198
      %v3200 = vrcp.pop %v3064
      %v3201 = vmul.f32 %v3064, %v3200
      %v3202 = vsub.f32 1.0, %v3201
      %v3203 = vmul.f32 %v3200, %v3202
      %v3204 = vadd.f32 %v3200, %v3203
      %vm3205 = vweird.f32 %v3064
      %vm3206 = vweird.f32 %v3200
      %vm3207 = vmor %vm3205, %vm3206
      %v3208 = vsel %vm3207, %v3200, %v3204
      %v3209 = vand.u32 2147483647, %v3064
      %vm3210 = vcmp.eq.f32.partialorder %v3209, 8.507059e+37
      %v3211 = vand.u32 %v3064, 2147483648
      %v3212 = vor.u32 1.1754944e-38, %v3211
      %v3213 = vsel %vm3210, %v3212, %v3208
      %v3214 = vmul.f32 1.0, %v3213
      %3225 = vrot.lane.b32.xlu0 %v3079, 80
      %v3226 = vpop.permute.xlu0 %3225
      %3227 = vrot.lane.b32.xlu0 %v3094, 80
      %v3228 = vpop.permute.xlu0 %3227
      %3229 = vrot.lane.b32.xlu0 %v3109, 80
      %v3230 = vpop.permute.xlu0 %3229
      %3231 = vrot.lane.b32.xlu0 %v3124, 80
      %v3232 = vpop.permute.xlu0 %3231
      %3233 = vrot.lane.b32.xlu0 %v3139, 80
      %v3234 = vpop.permute.xlu0 %3233
      %3235 = vrot.lane.b32.xlu0 %v3154, 80
      %v3236 = vpop.permute.xlu0 %3235
      %3237 = vrot.lane.b32.xlu0 %v3169, 80
      %v3238 = vpop.permute.xlu0 %3237
      %3239 = vrot.lane.b32.xlu0 %v3184, 80
      %v3240 = vpop.permute.xlu0 %3239
      %3241 = vrot.lane.b32.xlu0 %v3199, 80
      %v3242 = vpop.permute.xlu0 %3241
      %3243 = vrot.lane.b32.xlu0 %v3214, 80
      %v3244 = vpop.permute.xlu0 %3243
      %v3255 = vmul.f32 %v2996, %v3226
      %v3256 = vmul.f32 %v2999, %v3228
      %v3257 = vmul.f32 %v3002, %v3230
      %v3258 = vmul.f32 %v3005, %v3232
      %v3259 = vmul.f32 %v3008, %v3234
      %v3260 = vmul.f32 %v3011, %v3236
      %v3261 = vmul.f32 %v3014, %v3238
      %v3262 = vmul.f32 %v3017, %v3240
      %v3263 = vmul.f32 %v3020, %v3242
      %v3264 = vmul.f32 %v3023, %v3244
      %vm3265 = vcmask 392192
      %3266 = vst.msk [vmem:[%s313] sm:$0xff] %vm3265, %v3255
      %3267 = vst.msk [vmem:[%s313 + $0x8] sm:$0xff] %vm3265, %v3256
      %3268 = vst.msk [vmem:[%s313 + $0x10] sm:$0xff] %vm3265, %v3257
      %3269 = vst.msk [vmem:[%s313 + $0x18] sm:$0xff] %vm3265, %v3258
      %3270 = vst.msk [vmem:[%s313 + $0x20] sm:$0xff] %vm3265, %v3259
      %3271 = vst.msk [vmem:[%s313 + $0x28] sm:$0xff] %vm3265, %v3260
      %3272 = vst.msk [vmem:[%s313 + $0x30] sm:$0xff] %vm3265, %v3261
      %3273 = vst.msk [vmem:[%s313 + $0x38] sm:$0xff] %vm3265, %v3262
      %3274 = vst.msk [vmem:[%s313 + $0x40] sm:$0xff] %vm3265, %v3263
      %3275 = vst.msk [vmem:[%s313 + $0x48] sm:$0xff] %vm3265, %v3264
      %p3276 = scmp.lt.s32.totalorder %s20, 1
      %s3277 = scalar_select %p3276, %s20, 1
      %s3278 = smul.addr %s3277, 10
      %s3279 = smul.addr %s3278, 8
      %s3280 = scalar_lea.vmem %s7, %s3279
      %p3281 = scmp.lt.s32.totalorder %s20, 1
      %s3282 = scalar_select %p3281, %s20, 1
      %s3283 = smul.addr %s3282, 20
      %s3284 = smul.addr %s3283, 8
      %s3285 = scalar_lea.vmem %s8, %s3284
      // Predicated region
      $region49: #{st_block_forward.2} parent=47 // pred_check
        %p3286 = pneg %p190
      $region50: #{st_block_forward.2} parent=47 // pred_check_branch
        %3288 = sbr.rel (%p3286) target = $region52
      $region51: #{st_block_forward.2} parent=47 // pred_region
        _
      $region52: #{st_block_forward.2} parent=47 // pred_fallthru
        _
      // Predicated region
      $region53: #{st_block_forward.2} parent=47 // pred_check
        %p3289 = pneg %p216
      $region54: #{st_block_forward.2} parent=47 // pred_check_branch
        %3291 = sbr.rel (%p3289) target = $region56
      $region55: #{st_block_forward.2} parent=47 // pred_region
        _
      $region56: #{st_block_forward.2} parent=47 // pred_fallthru
        _
    $region48: #{st_block_forward.2} parent=5 // pred_fallthru
      _
    %p3292 = scmp.le.s32.totalorder 2, %s15
    // Predicated region
    $region57: #{st_block_forward.2} parent=5 // pred_check
      %p3293 = pneg %p3292
    $region58: #{st_block_forward.2} parent=5 // pred_check_branch
      %3295 = sbr.rel (%p3293) target = $region60
    $region59: #{st_block_forward.2} parent=5 // pred_region
      %s3296 = ssub.s32 %s15, 2
      // Predicated region
      $region61: #{st_block_forward.2} parent=59 // pred_check
        %p3297 = pneg %p196
      $region62: #{st_block_forward.2} parent=59 // pred_check_branch
        %3299 = sbr.rel (%p3297) target = $region64
      $region63: #{st_block_forward.2} parent=59 // pred_region
        %p3300 = scmp.lt.s32.totalorder %s21, 1
        %s3301 = scalar_select %p3300, %s21, 1
        %s3302 = smul.addr %s3301, 10
        %s3303 = smul.addr %s3302, 8
        %s3304 = scalar_lea.vmem %s7, %s3303
      $region64: #{st_block_forward.2} parent=59 // pred_fallthru
        _
      // Predicated region
      $region65: #{st_block_forward.2} parent=59 // pred_check
        %p3305 = pneg %p222
      $region66: #{st_block_forward.2} parent=59 // pred_check_branch
        %3307 = sbr.rel (%p3305) target = $region68
      $region67: #{st_block_forward.2} parent=59 // pred_region
        %p3308 = scmp.lt.s32.totalorder %s21, 1
        %s3309 = scalar_select %p3308, %s21, 1
        %s3310 = smul.addr %s3309, 20
        %s3311 = smul.addr %s3310, 8
        %s3312 = scalar_lea.vmem %s8, %s3311
      $region68: #{st_block_forward.2} parent=59 // pred_fallthru
        _
    $region60: #{st_block_forward.2} parent=5 // pred_fallthru
      _
  $region6: #{st_block_forward.2} parent=0 // loop_footer
    %s19 = sadd.s32 1, %s15
  $region7: #{st_block_forward.2} parent=0 // loop_footer_branch
    %14 = sbr.rel target = $region3
  $region8: #{st_block_forward.2} parent=0 // loop_exit
    _

// kernel: st_block_forward.3
$region0: #{st_block_forward.3}
  #allocation0 [shape = 'u32[]', space=smem, size = 0x4, offset = 0x4, fixed_abs, tag = 'smem constant byte address 0x4 - core index']
  #allocation1 [shape = 'u32[72,128]{1,0:T(1,128)}', space=vmem, size = 0x9000, scoped, tag = 'internal scratch']
  %s0 = inlined_call_operand.vmem [shape: f32[2,8,10,48], index: 0, kind: input, shape index: {}]
  %s1 = inlined_call_operand.vmem [shape: f32[48,144], index: 1, kind: input, shape index: {}]
  %s2 = inlined_call_operand.vmem [shape: f32[1,144], index: 2, kind: input, shape index: {}]
  %s3 = inlined_call_operand.vmem [shape: f32[48,48], index: 3, kind: input, shape index: {}]
  %s4 = inlined_call_operand.vmem [shape: f32[1,48], index: 4, kind: input, shape index: {}]
  %s5 = inlined_call_operand.vmem [shape: f32[48,32], index: 5, kind: input, shape index: {}]
  %s6 = inlined_call_operand.vmem [shape: f32[1,32], index: 6, kind: input, shape index: {}]
  %s7 = inlined_call_operand.vmem [shape: f32[8,10,10], index: 7, kind: input, shape index: {}]
  %s8 = inlined_call_operand.vmem [shape: f32[96,32], index: 8, kind: input, shape index: {}]
  %s9 = inlined_call_operand.vmem [shape: f32[1,32], index: 9, kind: input, shape index: {}]
  %s10 = inlined_call_operand.vmem [shape: f32[2,8,10,32], index: 10, kind: output, shape index: {0}]
  %s11 = inlined_call_operand.vmem [shape: f32[2,8,10,10], index: 11, kind: output, shape index: {1}]
  %12 = xla_tuple %s10, %s11
  %s13 = sld [smem:[#allocation0]]
  $region81: #{st_block_forward.3} parent=0
    _
  %s15 = ssub.s32 1, %s13
  %s16 = scalar_select 0, %s15, %s13
  loop: start=0, step=1, limit=4
  $region2: #{st_block_forward.3} parent=0 // loop_pre_header
    _
  $region3: #{st_block_forward.3} parent=0 // loop_header
    %s18 = sphi 0, %s22
    %p19 = scmp.ge.s32.totalorder %s18, 4
    %s28 = sphi 0, %s30
    %s31 = sphi 0, %s28
    %s32 = sphi 0, %s31
    %s48 = sphi 0, %s32
    %s52 = sphi 0, %s52
    %s54 = sphi 0, %s52
    %s55 = sphi 0, %s54
    %s69 = sphi 0, %s55
    %s73 = sphi 0, %s73
    %s75 = sphi 0, %s73
    %s76 = sphi 0, %s75
    %s90 = sphi 0, %s76
    %s94 = sphi 0, %s94
    %s96 = sphi 0, %s94
    %s97 = sphi 0, %s96
    %s111 = sphi 0, %s97
    %s115 = sphi 0, %s115
    %s117 = sphi 0, %s115
    %s118 = sphi 0, %s117
    %s132 = sphi 0, %s118
    %s136 = sphi 0, %s136
    %s138 = sphi 0, %s136
    %s139 = sphi 0, %s138
    %s153 = sphi 0, %s139
    %s157 = sphi 0, %s157
    %s159 = sphi 0, %s157
    %s160 = sphi 0, %s159
    %s174 = sphi 0, %s160
    %s178 = sphi 0, %s178
    %s180 = sphi 0, %s178
    %s181 = sphi 0, %s180
    %s195 = sphi 0, %s181
    %s199 = sphi 0, %s199
    %s201 = sphi 0, %s199
    %s202 = sphi 0, %s201
    %s216 = sphi 0, %s202
    %s220 = sphi 0, %s220
    %s222 = sphi 0, %s220
    %s223 = sphi 0, %s222
    %s237 = sphi 0, %s223
    %s243 = sphi 0, %s245
    %s246 = sphi 0, %s243
    %s247 = sphi 0, %s246
    %s263 = sphi 0, %s247
    %s269 = sphi 0, %s271
    %s272 = sphi 0, %s269
    %s273 = sphi 0, %s272
    %s289 = sphi 0, %s273
  $region4: #{st_block_forward.3} parent=0 // loop_header_branch
    %21 = sbr.rel (%p19) target = $region8
  $region5: #{st_block_forward.3} parent=0 // loop_body
    %s23 = ssub.s32 %s18, 1
    %s24 = ssub.s32 %s18, 2
    %s25 = sadd.s32 %s18, 1
    %s26 = ssub.s32 %s18, %s25
    %p27 = scmp.eq.s32.totalorder %s26, 0
    %s29 = sadd.s32 %s28, 1
    %s30 = scalar_select %p27, %s28, %s29
    %p33 = pneg %p27
    %p34 = scmp.eq.s32.totalorder %s18, 1
    %p35 = por %p33, %p34
    %p36 = scmp.ne.s32.totalorder %s28, %s31
    %p37 = scmp.eq.s32.totalorder %s18, 0
    %p38 = por %p36, %p37
    %p39 = scmp.ne.s32.totalorder %s28, %s31
    %p40 = scmp.eq.s32.totalorder %s23, 1
    %p41 = por %p39, %p40
    %p42 = scmp.ne.s32.totalorder %s31, %s32
    %p43 = scmp.eq.s32.totalorder %s23, 0
    %p44 = por %p42, %p43
    %p45 = scmp.ne.s32.totalorder %s31, %s32
    %p46 = scmp.eq.s32.totalorder %s24, 1
    %p47 = por %p45, %p46
    %p49 = scmp.ne.s32.totalorder %s32, %s48
    %p50 = scmp.eq.s32.totalorder %s24, 0
    %p51 = por %p49, %p50
    %s53 = sadd.s32 %s52, 1
    %p56 = scmp.eq.s32.totalorder %s18, 1
    %p57 = scmp.ne.s32.totalorder %s52, %s54
    %p58 = scmp.eq.s32.totalorder %s18, 0
    %p59 = por %p57, %p58
    %p60 = scmp.ne.s32.totalorder %s52, %s54
    %p61 = scmp.eq.s32.totalorder %s23, 1
    %p62 = por %p60, %p61
    %p63 = scmp.ne.s32.totalorder %s54, %s55
    %p64 = scmp.eq.s32.totalorder %s23, 0
    %p65 = por %p63, %p64
    %p66 = scmp.ne.s32.totalorder %s54, %s55
    %p67 = scmp.eq.s32.totalorder %s24, 1
    %p68 = por %p66, %p67
    %p70 = scmp.ne.s32.totalorder %s55, %s69
    %p71 = scmp.eq.s32.totalorder %s24, 0
    %p72 = por %p70, %p71
    %s74 = sadd.s32 %s73, 1
    %p77 = scmp.eq.s32.totalorder %s18, 1
    %p78 = scmp.ne.s32.totalorder %s73, %s75
    %p79 = scmp.eq.s32.totalorder %s18, 0
    %p80 = por %p78, %p79
    %p81 = scmp.ne.s32.totalorder %s73, %s75
    %p82 = scmp.eq.s32.totalorder %s23, 1
    %p83 = por %p81, %p82
    %p84 = scmp.ne.s32.totalorder %s75, %s76
    %p85 = scmp.eq.s32.totalorder %s23, 0
    %p86 = por %p84, %p85
    %p87 = scmp.ne.s32.totalorder %s75, %s76
    %p88 = scmp.eq.s32.totalorder %s24, 1
    %p89 = por %p87, %p88
    %p91 = scmp.ne.s32.totalorder %s76, %s90
    %p92 = scmp.eq.s32.totalorder %s24, 0
    %p93 = por %p91, %p92
    %s95 = sadd.s32 %s94, 1
    %p98 = scmp.eq.s32.totalorder %s18, 1
    %p99 = scmp.ne.s32.totalorder %s94, %s96
    %p100 = scmp.eq.s32.totalorder %s18, 0
    %p101 = por %p99, %p100
    %p102 = scmp.ne.s32.totalorder %s94, %s96
    %p103 = scmp.eq.s32.totalorder %s23, 1
    %p104 = por %p102, %p103
    %p105 = scmp.ne.s32.totalorder %s96, %s97
    %p106 = scmp.eq.s32.totalorder %s23, 0
    %p107 = por %p105, %p106
    %p108 = scmp.ne.s32.totalorder %s96, %s97
    %p109 = scmp.eq.s32.totalorder %s24, 1
    %p110 = por %p108, %p109
    %p112 = scmp.ne.s32.totalorder %s97, %s111
    %p113 = scmp.eq.s32.totalorder %s24, 0
    %p114 = por %p112, %p113
    %s116 = sadd.s32 %s115, 1
    %p119 = scmp.eq.s32.totalorder %s18, 1
    %p120 = scmp.ne.s32.totalorder %s115, %s117
    %p121 = scmp.eq.s32.totalorder %s18, 0
    %p122 = por %p120, %p121
    %p123 = scmp.ne.s32.totalorder %s115, %s117
    %p124 = scmp.eq.s32.totalorder %s23, 1
    %p125 = por %p123, %p124
    %p126 = scmp.ne.s32.totalorder %s117, %s118
    %p127 = scmp.eq.s32.totalorder %s23, 0
    %p128 = por %p126, %p127
    %p129 = scmp.ne.s32.totalorder %s117, %s118
    %p130 = scmp.eq.s32.totalorder %s24, 1
    %p131 = por %p129, %p130
    %p133 = scmp.ne.s32.totalorder %s118, %s132
    %p134 = scmp.eq.s32.totalorder %s24, 0
    %p135 = por %p133, %p134
    %s137 = sadd.s32 %s136, 1
    %p140 = scmp.eq.s32.totalorder %s18, 1
    %p141 = scmp.ne.s32.totalorder %s136, %s138
    %p142 = scmp.eq.s32.totalorder %s18, 0
    %p143 = por %p141, %p142
    %p144 = scmp.ne.s32.totalorder %s136, %s138
    %p145 = scmp.eq.s32.totalorder %s23, 1
    %p146 = por %p144, %p145
    %p147 = scmp.ne.s32.totalorder %s138, %s139
    %p148 = scmp.eq.s32.totalorder %s23, 0
    %p149 = por %p147, %p148
    %p150 = scmp.ne.s32.totalorder %s138, %s139
    %p151 = scmp.eq.s32.totalorder %s24, 1
    %p152 = por %p150, %p151
    %p154 = scmp.ne.s32.totalorder %s139, %s153
    %p155 = scmp.eq.s32.totalorder %s24, 0
    %p156 = por %p154, %p155
    %s158 = sadd.s32 %s157, 1
    %p161 = scmp.eq.s32.totalorder %s18, 1
    %p162 = scmp.ne.s32.totalorder %s157, %s159
    %p163 = scmp.eq.s32.totalorder %s18, 0
    %p164 = por %p162, %p163
    %p165 = scmp.ne.s32.totalorder %s157, %s159
    %p166 = scmp.eq.s32.totalorder %s23, 1
    %p167 = por %p165, %p166
    %p168 = scmp.ne.s32.totalorder %s159, %s160
    %p169 = scmp.eq.s32.totalorder %s23, 0
    %p170 = por %p168, %p169
    %p171 = scmp.ne.s32.totalorder %s159, %s160
    %p172 = scmp.eq.s32.totalorder %s24, 1
    %p173 = por %p171, %p172
    %p175 = scmp.ne.s32.totalorder %s160, %s174
    %p176 = scmp.eq.s32.totalorder %s24, 0
    %p177 = por %p175, %p176
    %s179 = sadd.s32 %s178, 1
    %p182 = scmp.eq.s32.totalorder %s18, 1
    %p183 = scmp.ne.s32.totalorder %s178, %s180
    %p184 = scmp.eq.s32.totalorder %s18, 0
    %p185 = por %p183, %p184
    %p186 = scmp.ne.s32.totalorder %s178, %s180
    %p187 = scmp.eq.s32.totalorder %s23, 1
    %p188 = por %p186, %p187
    %p189 = scmp.ne.s32.totalorder %s180, %s181
    %p190 = scmp.eq.s32.totalorder %s23, 0
    %p191 = por %p189, %p190
    %p192 = scmp.ne.s32.totalorder %s180, %s181
    %p193 = scmp.eq.s32.totalorder %s24, 1
    %p194 = por %p192, %p193
    %p196 = scmp.ne.s32.totalorder %s181, %s195
    %p197 = scmp.eq.s32.totalorder %s24, 0
    %p198 = por %p196, %p197
    %s200 = sadd.s32 %s199, 1
    %p203 = scmp.eq.s32.totalorder %s18, 1
    %p204 = scmp.ne.s32.totalorder %s199, %s201
    %p205 = scmp.eq.s32.totalorder %s18, 0
    %p206 = por %p204, %p205
    %p207 = scmp.ne.s32.totalorder %s199, %s201
    %p208 = scmp.eq.s32.totalorder %s23, 1
    %p209 = por %p207, %p208
    %p210 = scmp.ne.s32.totalorder %s201, %s202
    %p211 = scmp.eq.s32.totalorder %s23, 0
    %p212 = por %p210, %p211
    %p213 = scmp.ne.s32.totalorder %s201, %s202
    %p214 = scmp.eq.s32.totalorder %s24, 1
    %p215 = por %p213, %p214
    %p217 = scmp.ne.s32.totalorder %s202, %s216
    %p218 = scmp.eq.s32.totalorder %s24, 0
    %p219 = por %p217, %p218
    %s221 = sadd.s32 %s220, 1
    %p224 = scmp.eq.s32.totalorder %s18, 1
    %p225 = scmp.ne.s32.totalorder %s220, %s222
    %p226 = scmp.eq.s32.totalorder %s18, 0
    %p227 = por %p225, %p226
    %p228 = scmp.ne.s32.totalorder %s220, %s222
    %p229 = scmp.eq.s32.totalorder %s23, 1
    %p230 = por %p228, %p229
    %p231 = scmp.ne.s32.totalorder %s222, %s223
    %p232 = scmp.eq.s32.totalorder %s23, 0
    %p233 = por %p231, %p232
    %p234 = scmp.ne.s32.totalorder %s222, %s223
    %p235 = scmp.eq.s32.totalorder %s24, 1
    %p236 = por %p234, %p235
    %p238 = scmp.ne.s32.totalorder %s223, %s237
    %p239 = scmp.eq.s32.totalorder %s24, 0
    %p240 = por %p238, %p239
    %s241 = ssub.s32 %s18, %s25
    %p242 = scmp.eq.s32.totalorder %s241, 0
    %s244 = sadd.s32 %s243, 1
    %s245 = scalar_select %p242, %s243, %s244
    %p248 = pneg %p242
    %p249 = scmp.eq.s32.totalorder %s18, 1
    %p250 = por %p248, %p249
    %p251 = scmp.ne.s32.totalorder %s243, %s246
    %p252 = scmp.eq.s32.totalorder %s18, 0
    %p253 = por %p251, %p252
    %p254 = scmp.ne.s32.totalorder %s243, %s246
    %p255 = scmp.eq.s32.totalorder %s23, 1
    %p256 = por %p254, %p255
    %p257 = scmp.ne.s32.totalorder %s246, %s247
    %p258 = scmp.eq.s32.totalorder %s23, 0
    %p259 = por %p257, %p258
    %p260 = scmp.ne.s32.totalorder %s246, %s247
    %p261 = scmp.eq.s32.totalorder %s24, 1
    %p262 = por %p260, %p261
    %p264 = scmp.ne.s32.totalorder %s247, %s263
    %p265 = scmp.eq.s32.totalorder %s24, 0
    %p266 = por %p264, %p265
    %s267 = ssub.s32 %s18, %s25
    %p268 = scmp.eq.s32.totalorder %s267, 0
    %s270 = sadd.s32 %s269, 1
    %s271 = scalar_select %p268, %s269, %s270
    %p274 = pneg %p268
    %p275 = scmp.eq.s32.totalorder %s18, 1
    %p276 = por %p274, %p275
    %p277 = scmp.ne.s32.totalorder %s269, %s272
    %p278 = scmp.eq.s32.totalorder %s18, 0
    %p279 = por %p277, %p278
    %p280 = scmp.ne.s32.totalorder %s269, %s272
    %p281 = scmp.eq.s32.totalorder %s23, 1
    %p282 = por %p280, %p281
    %p283 = scmp.ne.s32.totalorder %s272, %s273
    %p284 = scmp.eq.s32.totalorder %s23, 0
    %p285 = por %p283, %p284
    %p286 = scmp.ne.s32.totalorder %s272, %s273
    %p287 = scmp.eq.s32.totalorder %s24, 1
    %p288 = por %p286, %p287
    %p290 = scmp.ne.s32.totalorder %s273, %s289
    %p291 = scmp.eq.s32.totalorder %s24, 0
    %p292 = por %p290, %p291
    %p293 = scmp.le.s32.totalorder 1, %s18
    %p294 = scmp.lt.s32.totalorder %s18, 3
    %p295 = pnand %p293, %p294
    %p296 = pneg %p295
    // Predicated region
    $region9: #{st_block_forward.3} parent=5 // pred_check
      _
    $region10: #{st_block_forward.3} parent=5 // pred_check_branch
      %298 = sbr.rel (%p295) target = $region12
    $region11: #{st_block_forward.3} parent=5 // pred_region
      %s299 = ssub.s32 %s18, 1
      // Predicated region
      $region13: #{st_block_forward.3} parent=11 // pred_check
        %p300 = pneg %p65
      $region14: #{st_block_forward.3} parent=11 // pred_check_branch
        %302 = sbr.rel (%p300) target = $region16
      $region15: #{st_block_forward.3} parent=11 // pred_region
        _
      $region16: #{st_block_forward.3} parent=11 // pred_fallthru
        _
      // Predicated region
      $region17: #{st_block_forward.3} parent=11 // pred_check
        %p303 = pneg %p86
      $region18: #{st_block_forward.3} parent=11 // pred_check_branch
        %305 = sbr.rel (%p303) target = $region20
      $region19: #{st_block_forward.3} parent=11 // pred_region
        _
      $region20: #{st_block_forward.3} parent=11 // pred_fallthru
        _
      // Predicated region
      $region21: #{st_block_forward.3} parent=11 // pred_check
        %p306 = pneg %p107
      $region22: #{st_block_forward.3} parent=11 // pred_check_branch
        %308 = sbr.rel (%p306) target = $region24
      $region23: #{st_block_forward.3} parent=11 // pred_region
        _
      $region24: #{st_block_forward.3} parent=11 // pred_fallthru
        _
      // Predicated region
      $region25: #{st_block_forward.3} parent=11 // pred_check
        %p309 = pneg %p128
      $region26: #{st_block_forward.3} parent=11 // pred_check_branch
        %311 = sbr.rel (%p309) target = $region28
      $region27: #{st_block_forward.3} parent=11 // pred_region
        _
      $region28: #{st_block_forward.3} parent=11 // pred_fallthru
        _
      // Predicated region
      $region29: #{st_block_forward.3} parent=11 // pred_check
        %p312 = pneg %p149
      $region30: #{st_block_forward.3} parent=11 // pred_check_branch
        %314 = sbr.rel (%p312) target = $region32
      $region31: #{st_block_forward.3} parent=11 // pred_region
        _
      $region32: #{st_block_forward.3} parent=11 // pred_fallthru
        _
      // Predicated region
      $region33: #{st_block_forward.3} parent=11 // pred_check
        %p315 = pneg %p170
      $region34: #{st_block_forward.3} parent=11 // pred_check_branch
        %317 = sbr.rel (%p315) target = $region36
      $region35: #{st_block_forward.3} parent=11 // pred_region
        _
      $region36: #{st_block_forward.3} parent=11 // pred_fallthru
        _
      // Predicated region
      $region37: #{st_block_forward.3} parent=11 // pred_check
        %p318 = pneg %p191
      $region38: #{st_block_forward.3} parent=11 // pred_check_branch
        %320 = sbr.rel (%p318) target = $region40
      $region39: #{st_block_forward.3} parent=11 // pred_region
        _
      $region40: #{st_block_forward.3} parent=11 // pred_fallthru
        _
      // Predicated region
      $region41: #{st_block_forward.3} parent=11 // pred_check
        %p321 = pneg %p212
      $region42: #{st_block_forward.3} parent=11 // pred_check_branch
        %323 = sbr.rel (%p321) target = $region44
      $region43: #{st_block_forward.3} parent=11 // pred_region
        _
      $region44: #{st_block_forward.3} parent=11 // pred_fallthru
        _
      // Predicated region
      $region45: #{st_block_forward.3} parent=11 // pred_check
        %p324 = pneg %p233
      $region46: #{st_block_forward.3} parent=11 // pred_check_branch
        %326 = sbr.rel (%p324) target = $region48
      $region47: #{st_block_forward.3} parent=11 // pred_region
        _
      $region48: #{st_block_forward.3} parent=11 // pred_fallthru
        _
    $region12: #{st_block_forward.3} parent=5 // pred_fallthru
      _
    %p327 = scmp.lt.s32.totalorder %s18, 2
    // Predicated region
    $region49: #{st_block_forward.3} parent=5 // pred_check
      %p328 = pneg %p327
    $region50: #{st_block_forward.3} parent=5 // pred_check_branch
      %330 = sbr.rel (%p328) target = $region52
    $region51: #{st_block_forward.3} parent=5 // pred_region
      // Predicated region
      $region53: #{st_block_forward.3} parent=51 // pred_check
        %p331 = pneg %p38
      $region54: #{st_block_forward.3} parent=51 // pred_check_branch
        %333 = sbr.rel (%p331) target = $region56
      $region55: #{st_block_forward.3} parent=51 // pred_region
        %p334 = scmp.lt.s32.totalorder %s18, 1
        %s335 = scalar_select %p334, %s18, 1
        %s336 = smul.addr %s335, 16
        %s337 = smul.addr %s336, 8
        %s338 = scalar_lea.vmem %s0, %s337
      $region56: #{st_block_forward.3} parent=51 // pred_fallthru
        _
    $region52: #{st_block_forward.3} parent=5 // pred_fallthru
      _
    %p339 = scmp.le.s32.totalorder 1, %s18
    %p340 = scmp.lt.s32.totalorder %s18, 3
    %p341 = pnand %p339, %p340
    %p342 = pneg %p341
    // Predicated region
    $region57: #{st_block_forward.3} parent=5 // pred_check
      _
    $region58: #{st_block_forward.3} parent=5 // pred_check_branch
      %344 = sbr.rel (%p341) target = $region60
    $region59: #{st_block_forward.3} parent=5 // pred_region
      %s345 = ssub.s32 %s18, 1
      %p346 = scmp.lt.s32.totalorder %s23, 1
      %s347 = scalar_select %p346, %s23, 1
      %s348 = smul.addr %s347, 16
      %s349 = smul.addr %s348, 8
      %s350 = scalar_lea.vmem %s0, %s349
      %p351 = pneg %p44
      %p352 = pneg %p41
      %p353 = pneg %p65
      %p354 = pneg %p62
      %p355 = pneg %p86
      %p356 = pneg %p83
      %p357 = pneg %p107
      %p358 = pneg %p104
      %p359 = pneg %p128
      %p360 = pneg %p125
      %p361 = pneg %p149
      %p362 = pneg %p146
      %p363 = pneg %p170
      %p364 = pneg %p167
      %p365 = pneg %p191
      %p366 = pneg %p188
      %p367 = pneg %p212
      %p368 = pneg %p209
      %p369 = pneg %p233
      %p370 = pneg %p230
      %p371 = pneg %p259
      %p372 = pneg %p256
      %p373 = scmp.lt.s32.totalorder %s23, 1
      %s374 = scalar_select %p373, %s23, 1
      %s375 = smul.addr %s374, 16
      %s376 = smul.addr %s375, 8
      %s377 = scalar_lea.vmem %s10, %s376
      %p378 = pneg %p285
      %p379 = pneg %p282
      %p380 = scmp.lt.s32.totalorder %s23, 1
      %s381 = scalar_select %p380, %s23, 1
      %s382 = smul.addr %s381, 16
      %s383 = smul.addr %s382, 8
      %s384 = scalar_lea.vmem %s11, %s383
      %p385 = scmp.lt.s32.totalorder %s23, 1
      %s386 = scalar_select %p385, %s23, 1
      %s387 = smul.addr %s386, 16
      %s388 = smul.addr %s387, 8
      %s389 = scalar_lea.vmem %s0, %s388
      %p390 = scmp.lt.s32.totalorder %s23, 1
      %s391 = scalar_select %p390, %s23, 1
      %s392 = smul.addr %s391, 16
      %s393 = smul.addr %s392, 8
      %s394 = scalar_lea.vmem %s10, %s393
      %p395 = scmp.lt.s32.totalorder %s23, 1
      %s396 = scalar_select %p395, %s23, 1
      %s397 = smul.addr %s396, 16
      %s398 = smul.addr %s397, 8
      %s399 = scalar_lea.vmem %s11, %s398
      %v400 = vld [vmem:[%s389] sm:$0xff]
      %v401 = vld [vmem:[%s389 + $0x8] sm:$0x3]
      %v402 = vld [vmem:[%s389 + $0x10] sm:$0xff]
      %v403 = vld [vmem:[%s389 + $0x18] sm:$0x3]
      %v404 = vld [vmem:[%s389 + $0x20] sm:$0xff]
      %v405 = vld [vmem:[%s389 + $0x28] sm:$0x3]
      %v406 = vld [vmem:[%s389 + $0x30] sm:$0xff]
      %v407 = vld [vmem:[%s389 + $0x38] sm:$0x3]
      %v408 = vld [vmem:[%s389 + $0x40] sm:$0xff]
      %v409 = vld [vmem:[%s389 + $0x48] sm:$0x3]
      %v410 = vld [vmem:[%s389 + $0x50] sm:$0xff]
      %v411 = vld [vmem:[%s389 + $0x58] sm:$0x3]
      %v412 = vld [vmem:[%s389 + $0x60] sm:$0xff]
      %v413 = vld [vmem:[%s389 + $0x68] sm:$0x3]
      %v414 = vld [vmem:[%s389 + $0x70] sm:$0xff]
      %v415 = vld [vmem:[%s389 + $0x78] sm:$0x3]
      %v432 = vrot.slane %v400, 2
      %v433 = vrot.slane %v400, 4
      %v434 = vrot.slane %v400, 6
      %v435 = vrot.slane %v402, 2
      %v436 = vrot.slane %v402, 4
      %v437 = vrot.slane %v402, 6
      %v438 = vrot.slane %v404, 2
      %v439 = vrot.slane %v404, 4
      %v440 = vrot.slane %v404, 6
      %v441 = vrot.slane %v406, 2
      %v442 = vrot.slane %v406, 4
      %v443 = vrot.slane %v406, 6
      %v444 = vrot.slane %v408, 2
      %v445 = vrot.slane %v408, 4
      %v446 = vrot.slane %v408, 6
      %v447 = vrot.slane %v410, 2
      %v448 = vrot.slane %v410, 4
      %v449 = vrot.slane %v410, 6
      %v450 = vrot.slane %v412, 2
      %v451 = vrot.slane %v412, 4
      %v452 = vrot.slane %v412, 6
      %v453 = vrot.slane %v414, 2
      %v454 = vrot.slane %v414, 4
      %v455 = vrot.slane %v414, 6
      %v456 = vld [vmem:[%s1] sm:$0xff]
      %v457 = vld [vmem:[%s1 + $0x8] sm:$0xff]
      %v458 = vld [vmem:[%s1 + $0x10] sm:$0xff]
      %v459 = vld [vmem:[%s1 + $0x18] sm:$0xff]
      %v460 = vld [vmem:[%s1 + $0x20] sm:$0xff]
      %v461 = vld [vmem:[%s1 + $0x28] sm:$0xff]
      %v462 = vld [vmem:[%s1 + $0x30] sm:$0xff]
      %v463 = vld [vmem:[%s1 + $0x38] sm:$0xff]
      %v464 = vld [vmem:[%s1 + $0x40] sm:$0xff]
      %v465 = vld [vmem:[%s1 + $0x48] sm:$0xff]
      %v466 = vld [vmem:[%s1 + $0x50] sm:$0xff]
      %v467 = vld [vmem:[%s1 + $0x58] sm:$0xff]
      %v468 = vld [vmem:[%s2] sm:$0x3]
      %v470 = vperm.slane %v468, 0
      %v471 = vperm.slane %v468, 1
      %474 = vst [vmem:[#allocation1] ss:$4 sm:$0xff] %v400
      %s475 = scalar_lea.vmem [#allocation1], 1
      %476 = vst [vmem:[%s475] ss:$4 sm:$0xff] %v432
      %s477 = scalar_lea.vmem [#allocation1], 2
      %478 = vst [vmem:[%s477] ss:$4 sm:$0xff] %v433
      %s479 = scalar_lea.vmem [#allocation1], 3
      %480 = vst [vmem:[%s479] ss:$4 sm:$0xff] %v434
      %s481 = scalar_lea.vmem [#allocation1], 32
      %482 = vst [vmem:[%s481] ss:$4 sm:$0xff] %v401
      %s483 = scalar_lea.vmem [#allocation1], 33
      %484 = vst [vmem:[%s483] ss:$4 sm:$0xff] %v402
      %s485 = scalar_lea.vmem [#allocation1], 34
      %486 = vst [vmem:[%s485] ss:$4 sm:$0xff] %v435
      %s487 = scalar_lea.vmem [#allocation1], 35
      %488 = vst [vmem:[%s487] ss:$4 sm:$0xff] %v436
      %v489 = vld.sshfl [vmem:[#allocation1] sm:$0xff pattern:$0x73625140]
      %v490 = vld.sshfl [vmem:[#allocation1 + $0x20] sm:$0xff pattern:$0x73625140]
      %491 = vst [vmem:[#allocation1] ss:$4 sm:$0xff] %v437
      %492 = vst [vmem:[%s475] ss:$4 sm:$0xff] %v403
      %493 = vst [vmem:[%s477] ss:$4 sm:$0xff] %v404
      %494 = vst [vmem:[%s479] ss:$4 sm:$0xff] %v438
      %495 = vst [vmem:[%s481] ss:$4 sm:$0xff] %v439
      %496 = vst [vmem:[%s483] ss:$4 sm:$0xff] %v440
      %497 = vst [vmem:[%s485] ss:$4 sm:$0xff] %v405
      %498 = vst [vmem:[%s487] ss:$4 sm:$0xff] %v406
      %v499 = vld.sshfl [vmem:[#allocation1] sm:$0xff pattern:$0x73625140]
      %v500 = vld.sshfl [vmem:[#allocation1 + $0x20] sm:$0xff pattern:$0x73625140]
      %501 = vst [vmem:[#allocation1] ss:$4 sm:$0xff] %v441
      %502 = vst [vmem:[%s475] ss:$4 sm:$0xff] %v442
      %503 = vst [vmem:[%s477] ss:$4 sm:$0xff] %v443
      %504 = vst [vmem:[%s479] ss:$4 sm:$0xff] %v407
      %505 = vst [vmem:[%s481] ss:$4 sm:$0xff] %v408
      %506 = vst [vmem:[%s483] ss:$4 sm:$0xff] %v444
      %507 = vst [vmem:[%s485] ss:$4 sm:$0xff] %v445
      %508 = vst [vmem:[%s487] ss:$4 sm:$0xff] %v446
      %v509 = vld.sshfl [vmem:[#allocation1] sm:$0xff pattern:$0x73625140]
      %v510 = vld.sshfl [vmem:[#allocation1 + $0x20] sm:$0xff pattern:$0x73625140]
      %511 = vst [vmem:[#allocation1] ss:$4 sm:$0xff] %v409
      %512 = vst [vmem:[%s475] ss:$4 sm:$0xff] %v410
      %513 = vst [vmem:[%s477] ss:$4 sm:$0xff] %v447
      %514 = vst [vmem:[%s479] ss:$4 sm:$0xff] %v448
      %515 = vst [vmem:[%s481] ss:$4 sm:$0xff] %v449
      %516 = vst [vmem:[%s483] ss:$4 sm:$0xff] %v411
      %517 = vst [vmem:[%s485] ss:$4 sm:$0xff] %v412
      %518 = vst [vmem:[%s487] ss:$4 sm:$0xff] %v450
      %v519 = vld.sshfl [vmem:[#allocation1] sm:$0xff pattern:$0x73625140]
      %v520 = vld.sshfl [vmem:[#allocation1 + $0x20] sm:$0xff pattern:$0x73625140]
      %521 = vst [vmem:[#allocation1] ss:$4 sm:$0xff] %v451
      %522 = vst [vmem:[%s475] ss:$4 sm:$0xff] %v452
      %523 = vst [vmem:[%s477] ss:$4 sm:$0xff] %v413
      %524 = vst [vmem:[%s479] ss:$4 sm:$0xff] %v414
      %525 = vst [vmem:[%s481] ss:$4 sm:$0xff] %v453
      %526 = vst [vmem:[%s483] ss:$4 sm:$0xff] %v454
      %527 = vst [vmem:[%s485] ss:$4 sm:$0xff] %v455
      %528 = vst [vmem:[%s487] ss:$4 sm:$0xff] %v415
      %v529 = vld.sshfl [vmem:[#allocation1] sm:$0xff pattern:$0x73625140]
      %v530 = vld.sshfl [vmem:[#allocation1 + $0x20] sm:$0xff pattern:$0x73625140]
      %vm531 = vcmask 392192
      %v532 = vsel %vm531, %v489, 0
      %v534 = vsel %vm531, %v490, 0
      %v536 = vsel %vm531, %v499, 0
      %v538 = vsel %vm531, %v500, 0
      %v540 = vsel %vm531, %v509, 0
      %v542 = vsel %vm531, %v510, 0
      %v544 = vsel %vm531, %v519, 0
      %v546 = vsel %vm531, %v520, 0
      %v548 = vsel %vm531, %v529, 0
      %v550 = vsel %vm531, %v530, 0
      %552 = vmatpush.msra.mxu0 0.0
      %553 = vmatpush.msra.mxu0 0.0
      %554 = vmatpush.msra.mxu0 0.0
      %555 = vmatpush.msra.mxu0 0.0
      %556 = vmatpush.msra.mxu0 0.0
      %557 = vmatpush.msra.mxu0 0.0
      %558 = vmatpush.msra.mxu0 0.0
      %559 = vmatpush.msra.mxu0 0.0
      %560 = vmatpush.msra.mxu0 0.0
      %561 = vmatpush.msra.mxu0 0.0
      %562 = vmatpush.msra.mxu0 %v466
      %563 = vmatpush.msra.mxu0 %v464
      %564 = vmatpush.msra.mxu0 %v462
      %565 = vmatpush.msra.mxu0 %v460
      %566 = vmatpush.msra.mxu0 %v458
      %567 = vmatpush.msra.mxu0 %v456
      %568 = vmatmul.f32.gmra.mxu0 %v532
      %v569 = vpop.f32.mrf.mxu0
      %v570 = vadd.f32 %v470, %v569
      %571 = vmatmul.f32.gmra.mxu0 %v534
      %v572 = vpop.f32.mrf.mxu0
      %v573 = vadd.f32 %v470, %v572
      %574 = vmatmul.f32.gmra.mxu0 %v536
      %v575 = vpop.f32.mrf.mxu0
      %v576 = vadd.f32 %v470, %v575
      %577 = vmatmul.f32.gmra.mxu0 %v538
      %v578 = vpop.f32.mrf.mxu0
      %v579 = vadd.f32 %v470, %v578
      %580 = vmatmul.f32.gmra.mxu0 %v540
      %v581 = vpop.f32.mrf.mxu0
      %v582 = vadd.f32 %v470, %v581
      %583 = vmatmul.f32.gmra.mxu0 %v542
      %v584 = vpop.f32.mrf.mxu0
      %v585 = vadd.f32 %v470, %v584
      %586 = vmatmul.f32.gmra.mxu0 %v544
      %v587 = vpop.f32.mrf.mxu0
      %v588 = vadd.f32 %v470, %v587
      %589 = vmatmul.f32.gmra.mxu0 %v546
      %v590 = vpop.f32.mrf.mxu0
      %v591 = vadd.f32 %v470, %v590
      %592 = vmatmul.f32.gmra.mxu0 %v548
      %v593 = vpop.f32.mrf.mxu0
      %v594 = vadd.f32 %v470, %v593
      %595 = vmatmul.f32.gmra.mxu0 %v550
      %v596 = vpop.f32.mrf.mxu0
      %v597 = vadd.f32 %v470, %v596
      %598 = vdwg.mxu0
      %599 = vmatpush.msra.mxu0 0.0
      %600 = vmatpush.msra.mxu0 0.0
      %601 = vmatpush.msra.mxu0 0.0
      %602 = vmatpush.msra.mxu0 0.0
      %603 = vmatpush.msra.mxu0 0.0
      %604 = vmatpush.msra.mxu0 0.0
      %605 = vmatpush.msra.mxu0 0.0
      %606 = vmatpush.msra.mxu0 0.0
      %607 = vmatpush.msra.mxu0 0.0
      %608 = vmatpush.msra.mxu0 0.0
      %609 = vmatpush.msra.mxu0 %v467
      %610 = vmatpush.msra.mxu0 %v465
      %611 = vmatpush.msra.mxu0 %v463
      %612 = vmatpush.msra.mxu0 %v461
      %613 = vmatpush.msra.mxu0 %v459
      %614 = vmatpush.msra.mxu0 %v457
      %615 = vmatmul.f32.gmra.mxu0 %v532
      %v616 = vpop.f32.mrf.mxu0
      %v617 = vadd.f32 %v471, %v616
      %618 = vmatmul.f32.gmra.mxu0 %v534
      %v619 = vpop.f32.mrf.mxu0
      %v620 = vadd.f32 %v471, %v619
      %621 = vmatmul.f32.gmra.mxu0 %v536
      %v622 = vpop.f32.mrf.mxu0
      %v623 = vadd.f32 %v471, %v622
      %624 = vmatmul.f32.gmra.mxu0 %v538
      %v625 = vpop.f32.mrf.mxu0
      %v626 = vadd.f32 %v471, %v625
      %627 = vmatmul.f32.gmra.mxu0 %v540
      %v628 = vpop.f32.mrf.mxu0
      %v629 = vadd.f32 %v471, %v628
      %630 = vmatmul.f32.gmra.mxu0 %v542
      %v631 = vpop.f32.mrf.mxu0
      %v632 = vadd.f32 %v471, %v631
      %633 = vmatmul.f32.gmra.mxu0 %v544
      %v634 = vpop.f32.mrf.mxu0
      %v635 = vadd.f32 %v471, %v634
      %636 = vmatmul.f32.gmra.mxu0 %v546
      %v637 = vpop.f32.mrf.mxu0
      %v638 = vadd.f32 %v471, %v637
      %639 = vmatmul.f32.gmra.mxu0 %v548
      %v640 = vpop.f32.mrf.mxu0
      %v641 = vadd.f32 %v471, %v640
      %642 = vmatmul.f32.gmra.mxu0 %v550
      %v643 = vpop.f32.mrf.mxu0
      %v644 = vadd.f32 %v471, %v643
      %645 = vdwg.mxu0
      %v656 = vrot.slane %v570, 2
      %v657 = vrot.slane %v570, 4
      %v658 = vrot.slane %v570, 6
      %v659 = vrot.slane %v573, 2
      %v660 = vrot.slane %v573, 4
      %v661 = vrot.slane %v573, 6
      %v662 = vrot.slane %v576, 2
      %v663 = vrot.slane %v576, 4
      %v664 = vrot.slane %v576, 6
      %v665 = vrot.slane %v579, 2
      %v666 = vrot.slane %v579, 4
      %v667 = vrot.slane %v579, 6
      %v668 = vrot.slane %v582, 2
      %v669 = vrot.slane %v582, 4
      %v670 = vrot.slane %v582, 6
      %v671 = vrot.slane %v585, 2
      %v672 = vrot.slane %v585, 4
      %v673 = vrot.slane %v585, 6
      %v674 = vrot.slane %v588, 2
      %v675 = vrot.slane %v588, 4
      %v676 = vrot.slane %v588, 6
      %v677 = vrot.slane %v591, 2
      %v678 = vrot.slane %v591, 4
      %v679 = vrot.slane %v591, 6
      %v680 = vrot.slane %v594, 2
      %v681 = vrot.slane %v594, 4
      %v682 = vrot.slane %v594, 6
      %v683 = vrot.slane %v597, 2
      %v684 = vrot.slane %v597, 4
      %v685 = vrot.slane %v597, 6
      %v696 = vrot.slane %v617, 6
      %v697 = vrot.slane %v620, 6
      %v698 = vrot.slane %v623, 6
      %v699 = vrot.slane %v626, 6
      %v700 = vrot.slane %v629, 6
      %v701 = vrot.slane %v632, 6
      %v702 = vrot.slane %v635, 6
      %v703 = vrot.slane %v638, 6
      %v704 = vrot.slane %v641, 6
      %v705 = vrot.slane %v644, 6
      %vm706 = vcmask 1041408
      %v707 = vsel %vm706, %v570, %v696
      %vm708 = vcmask 1043458
      %v709 = vsel %vm708, %v570, %v696
      %v710 = vrot.slane %v709, 2
      %vm711 = vcmask 1045508
      %v712 = vsel %vm711, %v570, %v696
      %v713 = vrot.slane %v712, 4
      %vm714 = vcmask 1045504
      %v715 = vsel %vm714, %v696, %v570
      %v716 = vrot.slane %v715, 6
      %v717 = vsel %vm706, %v573, %v697
      %v718 = vsel %vm708, %v573, %v697
      %v719 = vrot.slane %v718, 2
      %v720 = vsel %vm711, %v573, %v697
      %v721 = vrot.slane %v720, 4
      %v722 = vsel %vm714, %v697, %v573
      %v723 = vrot.slane %v722, 6
      %v724 = vsel %vm706, %v576, %v698
      %v725 = vsel %vm708, %v576, %v698
      %v726 = vrot.slane %v725, 2
      %v727 = vsel %vm711, %v576, %v698
      %v728 = vrot.slane %v727, 4
      %v729 = vsel %vm714, %v698, %v576
      %v730 = vrot.slane %v729, 6
      %v731 = vsel %vm706, %v579, %v699
      %v732 = vsel %vm708, %v579, %v699
      %v733 = vrot.slane %v732, 2
      %v734 = vsel %vm711, %v579, %v699
      %v735 = vrot.slane %v734, 4
      %v736 = vsel %vm714, %v699, %v579
      %v737 = vrot.slane %v736, 6
      %v738 = vsel %vm706, %v582, %v700
      %v739 = vsel %vm708, %v582, %v700
      %v740 = vrot.slane %v739, 2
      %v741 = vsel %vm711, %v582, %v700
      %v742 = vrot.slane %v741, 4
      %v743 = vsel %vm714, %v700, %v582
      %v744 = vrot.slane %v743, 6
      %v745 = vsel %vm706, %v585, %v701
      %v746 = vsel %vm708, %v585, %v701
      %v747 = vrot.slane %v746, 2
      %v748 = vsel %vm711, %v585, %v701
      %v749 = vrot.slane %v748, 4
      %v750 = vsel %vm714, %v701, %v585
      %v751 = vrot.slane %v750, 6
      %v752 = vsel %vm706, %v588, %v702
      %v753 = vsel %vm708, %v588, %v702
      %v754 = vrot.slane %v753, 2
      %v755 = vsel %vm711, %v588, %v702
      %v756 = vrot.slane %v755, 4
      %v757 = vsel %vm714, %v702, %v588
      %v758 = vrot.slane %v757, 6
      %v759 = vsel %vm706, %v591, %v703
      %v760 = vsel %vm708, %v591, %v703
      %v761 = vrot.slane %v760, 2
      %v762 = vsel %vm711, %v591, %v703
      %v763 = vrot.slane %v762, 4
      %v764 = vsel %vm714, %v703, %v591
      %v765 = vrot.slane %v764, 6
      %v766 = vsel %vm706, %v594, %v704
      %v767 = vsel %vm708, %v594, %v704
      %v768 = vrot.slane %v767, 2
      %v769 = vsel %vm711, %v594, %v704
      %v770 = vrot.slane %v769, 4
      %v771 = vsel %vm714, %v704, %v594
      %v772 = vrot.slane %v771, 6
      %v773 = vsel %vm706, %v597, %v705
      %v774 = vsel %vm708, %v597, %v705
      %v775 = vrot.slane %v774, 2
      %v776 = vsel %vm711, %v597, %v705
      %v777 = vrot.slane %v776, 4
      %v778 = vsel %vm714, %v705, %v597
      %v779 = vrot.slane %v778, 6
      %780 = vst [vmem:[#allocation1] ss:$4 sm:$0xff] %v570
      %s781 = scalar_lea.vmem [#allocation1], 1
      %782 = vst [vmem:[%s781] ss:$4 sm:$0xff] %v656
      %s783 = scalar_lea.vmem [#allocation1], 2
      %784 = vst [vmem:[%s783] ss:$4 sm:$0xff] %v657
      %s785 = scalar_lea.vmem [#allocation1], 3
      %786 = vst [vmem:[%s785] ss:$4 sm:$0xff] %v658
      %s787 = scalar_lea.vmem [#allocation1], 32
      %788 = vst [vmem:[%s787] ss:$4 sm:$0xff] %v573
      %v789 = vld.sshfl [vmem:[#allocation1] sm:$0xff pattern:$0x73625140]
      %v790 = vld.sshfl [vmem:[#allocation1 + $0x20] sm:$0xff pattern:$0x73625140]
      %791 = vst [vmem:[#allocation1] ss:$4 sm:$0xff] %v570
      %s792 = scalar_lea.vmem [#allocation1], 1
      %793 = vst [vmem:[%s792] ss:$4 sm:$0xff] %v656
      %s794 = scalar_lea.vmem [#allocation1], 2
      %795 = vst [vmem:[%s794] ss:$4 sm:$0xff] %v657
      %s796 = scalar_lea.vmem [#allocation1], 3
      %797 = vst [vmem:[%s796] ss:$4 sm:$0xff] %v658
      %s798 = scalar_lea.vmem [#allocation1], 32
      %799 = vst [vmem:[%s798] ss:$4 sm:$0xff] %v573
      %v800 = vld.sshfl [vmem:[#allocation1] sm:$0xff pattern:$0x73625140]
      %v801 = vld.sshfl [vmem:[#allocation1 + $0x20] sm:$0xff pattern:$0x73625140]
      %802 = vrot.lane.b32.xlu0 %v800, 80
      %v803 = vpop.permute.xlu0 %802
      %804 = vrot.lane.b32.xlu0 %v801, 80
      %v805 = vpop.permute.xlu0 %804
      %v806 = vsel %vm531, %v789, 0
      %v808 = vsel %vm531, %v790, 0
      %v810 = vsel %vm531, %v803, 0
      %v812 = vsel %vm531, %v805, 0
      %814 = vmatpush.xpose.msra.mxu0 0.0
      %815 = vmatpush.xpose.msra.mxu0 0.0
      %816 = vmatpush.xpose.msra.mxu0 0.0
      %817 = vmatpush.xpose.msra.mxu0 0.0
      %818 = vmatpush.xpose.msra.mxu0 0.0
      %819 = vmatpush.xpose.msra.mxu0 0.0
      %820 = vmatpush.xpose.msra.mxu0 0.0
      %821 = vmatpush.xpose.msra.mxu0 0.0
      %822 = vmatpush.xpose.msra.mxu0 0.0
      %823 = vmatpush.xpose.msra.mxu0 0.0
      %824 = vmatpush.xpose.msra.mxu0 0.0
      %825 = vmatpush.xpose.msra.mxu0 0.0
      %826 = vmatpush.xpose.msra.mxu0 0.0
      %827 = vmatpush.xpose.msra.mxu0 0.0
      %828 = vmatpush.xpose.msra.mxu0 %v812
      %829 = vmatpush.xpose.msra.mxu0 %v810
      %830 = vmatmul.f32.gmra.mxu0 %v806
      %v831 = vpop.f32.mrf.mxu0
      %v832 = vadd.f32 0.0, %v831
      %833 = vmatmul.f32.gmra.mxu0 %v808
      %v834 = vpop.f32.mrf.mxu0
      %v835 = vadd.f32 0.0, %v834
      %836 = vdwg.mxu0
      %837 = vst [vmem:[#allocation1] ss:$4 sm:$0xff] %v659
      %s838 = scalar_lea.vmem [#allocation1], 1
      %839 = vst [vmem:[%s838] ss:$4 sm:$0xff] %v660
      %s840 = scalar_lea.vmem [#allocation1], 2
      %841 = vst [vmem:[%s840] ss:$4 sm:$0xff] %v661
      %s842 = scalar_lea.vmem [#allocation1], 3
      %843 = vst [vmem:[%s842] ss:$4 sm:$0xff] %v576
      %s844 = scalar_lea.vmem [#allocation1], 32
      %845 = vst [vmem:[%s844] ss:$4 sm:$0xff] %v662
      %v846 = vld.sshfl [vmem:[#allocation1] sm:$0xff pattern:$0x73625140]
      %v847 = vld.sshfl [vmem:[#allocation1 + $0x20] sm:$0xff pattern:$0x73625140]
      %848 = vst [vmem:[#allocation1] ss:$4 sm:$0xff] %v659
      %s849 = scalar_lea.vmem [#allocation1], 1
      %850 = vst [vmem:[%s849] ss:$4 sm:$0xff] %v660
      %s851 = scalar_lea.vmem [#allocation1], 2
      %852 = vst [vmem:[%s851] ss:$4 sm:$0xff] %v661
      %s853 = scalar_lea.vmem [#allocation1], 3
      %854 = vst [vmem:[%s853] ss:$4 sm:$0xff] %v576
      %s855 = scalar_lea.vmem [#allocation1], 32
      %856 = vst [vmem:[%s855] ss:$4 sm:$0xff] %v662
      %v857 = vld.sshfl [vmem:[#allocation1] sm:$0xff pattern:$0x73625140]
      %v858 = vld.sshfl [vmem:[#allocation1 + $0x20] sm:$0xff pattern:$0x73625140]
      %859 = vrot.lane.b32.xlu0 %v857, 80
      %v860 = vpop.permute.xlu0 %859
      %861 = vrot.lane.b32.xlu0 %v858, 80
      %v862 = vpop.permute.xlu0 %861
      %v863 = vsel %vm531, %v846, 0
      %v865 = vsel %vm531, %v847, 0
      %v867 = vsel %vm531, %v860, 0
      %v869 = vsel %vm531, %v862, 0
      %871 = vmatpush.xpose.msra.mxu0 0.0
      %872 = vmatpush.xpose.msra.mxu0 0.0
      %873 = vmatpush.xpose.msra.mxu0 0.0
      %874 = vmatpush.xpose.msra.mxu0 0.0
      %875 = vmatpush.xpose.msra.mxu0 0.0
      %876 = vmatpush.xpose.msra.mxu0 0.0
      %877 = vmatpush.xpose.msra.mxu0 0.0
      %878 = vmatpush.xpose.msra.mxu0 0.0
      %879 = vmatpush.xpose.msra.mxu0 0.0
      %880 = vmatpush.xpose.msra.mxu0 0.0
      %881 = vmatpush.xpose.msra.mxu0 0.0
      %882 = vmatpush.xpose.msra.mxu0 0.0
      %883 = vmatpush.xpose.msra.mxu0 0.0
      %884 = vmatpush.xpose.msra.mxu0 0.0
      %885 = vmatpush.xpose.msra.mxu0 %v869
      %886 = vmatpush.xpose.msra.mxu0 %v867
      %887 = vmatmul.f32.gmra.mxu0 %v863
      %v888 = vpop.f32.mrf.mxu0
      %v889 = vadd.f32 0.0, %v888
      %890 = vmatmul.f32.gmra.mxu0 %v865
      %v891 = vpop.f32.mrf.mxu0
      %v892 = vadd.f32 0.0, %v891
      %893 = vdwg.mxu0
      %894 = vst [vmem:[#allocation1] ss:$4 sm:$0xff] %v663
      %s895 = scalar_lea.vmem [#allocation1], 1
      %896 = vst [vmem:[%s895] ss:$4 sm:$0xff] %v664
      %s897 = scalar_lea.vmem [#allocation1], 2
      %898 = vst [vmem:[%s897] ss:$4 sm:$0xff] %v579
      %s899 = scalar_lea.vmem [#allocation1], 3
      %900 = vst [vmem:[%s899] ss:$4 sm:$0xff] %v665
      %s901 = scalar_lea.vmem [#allocation1], 32
      %902 = vst [vmem:[%s901] ss:$4 sm:$0xff] %v666
      %v903 = vld.sshfl [vmem:[#allocation1] sm:$0xff pattern:$0x73625140]
      %v904 = vld.sshfl [vmem:[#allocation1 + $0x20] sm:$0xff pattern:$0x73625140]
      %905 = vst [vmem:[#allocation1] ss:$4 sm:$0xff] %v663
      %s906 = scalar_lea.vmem [#allocation1], 1
      %907 = vst [vmem:[%s906] ss:$4 sm:$0xff] %v664
      %s908 = scalar_lea.vmem [#allocation1], 2
      %909 = vst [vmem:[%s908] ss:$4 sm:$0xff] %v579
      %s910 = scalar_lea.vmem [#allocation1], 3
      %911 = vst [vmem:[%s910] ss:$4 sm:$0xff] %v665
      %s912 = scalar_lea.vmem [#allocation1], 32
      %913 = vst [vmem:[%s912] ss:$4 sm:$0xff] %v666
      %v914 = vld.sshfl [vmem:[#allocation1] sm:$0xff pattern:$0x73625140]
      %v915 = vld.sshfl [vmem:[#allocation1 + $0x20] sm:$0xff pattern:$0x73625140]
      %916 = vrot.lane.b32.xlu0 %v914, 80
      %v917 = vpop.permute.xlu0 %916
      %918 = vrot.lane.b32.xlu0 %v915, 80
      %v919 = vpop.permute.xlu0 %918
      %v920 = vsel %vm531, %v903, 0
      %v922 = vsel %vm531, %v904, 0
      %v924 = vsel %vm531, %v917, 0
      %v926 = vsel %vm531, %v919, 0
      %928 = vmatpush.xpose.msra.mxu0 0.0
      %929 = vmatpush.xpose.msra.mxu0 0.0
      %930 = vmatpush.xpose.msra.mxu0 0.0
      %931 = vmatpush.xpose.msra.mxu0 0.0
      %932 = vmatpush.xpose.msra.mxu0 0.0
      %933 = vmatpush.xpose.msra.mxu0 0.0
      %934 = vmatpush.xpose.msra.mxu0 0.0
      %935 = vmatpush.xpose.msra.mxu0 0.0
      %936 = vmatpush.xpose.msra.mxu0 0.0
      %937 = vmatpush.xpose.msra.mxu0 0.0
      %938 = vmatpush.xpose.msra.mxu0 0.0
      %939 = vmatpush.xpose.msra.mxu0 0.0
      %940 = vmatpush.xpose.msra.mxu0 0.0
      %941 = vmatpush.xpose.msra.mxu0 0.0
      %942 = vmatpush.xpose.msra.mxu0 %v926
      %943 = vmatpush.xpose.msra.mxu0 %v924
      %944 = vmatmul.f32.gmra.mxu0 %v920
      %v945 = vpop.f32.mrf.mxu0
      %v946 = vadd.f32 0.0, %v945
      %947 = vmatmul.f32.gmra.mxu0 %v922
      %v948 = vpop.f32.mrf.mxu0
      %v949 = vadd.f32 0.0, %v948
      %950 = vdwg.mxu0
      %951 = vst [vmem:[#allocation1] ss:$4 sm:$0xff] %v667
      %s952 = scalar_lea.vmem [#allocation1], 1
      %953 = vst [vmem:[%s952] ss:$4 sm:$0xff] %v582
      %s954 = scalar_lea.vmem [#allocation1], 2
      %955 = vst [vmem:[%s954] ss:$4 sm:$0xff] %v668
      %s956 = scalar_lea.vmem [#allocation1], 3
      %957 = vst [vmem:[%s956] ss:$4 sm:$0xff] %v669
      %s958 = scalar_lea.vmem [#allocation1], 32
      %959 = vst [vmem:[%s958] ss:$4 sm:$0xff] %v670
      %v960 = vld.sshfl [vmem:[#allocation1] sm:$0xff pattern:$0x73625140]
      %v961 = vld.sshfl [vmem:[#allocation1 + $0x20] sm:$0xff pattern:$0x73625140]
      %962 = vst [vmem:[#allocation1] ss:$4 sm:$0xff] %v667
      %s963 = scalar_lea.vmem [#allocation1], 1
      %964 = vst [vmem:[%s963] ss:$4 sm:$0xff] %v582
      %s965 = scalar_lea.vmem [#allocation1], 2
      %966 = vst [vmem:[%s965] ss:$4 sm:$0xff] %v668
      %s967 = scalar_lea.vmem [#allocation1], 3
      %968 = vst [vmem:[%s967] ss:$4 sm:$0xff] %v669
      %s969 = scalar_lea.vmem [#allocation1], 32
      %970 = vst [vmem:[%s969] ss:$4 sm:$0xff] %v670
      %v971 = vld.sshfl [vmem:[#allocation1] sm:$0xff pattern:$0x73625140]
      %v972 = vld.sshfl [vmem:[#allocation1 + $0x20] sm:$0xff pattern:$0x73625140]
      %973 = vrot.lane.b32.xlu0 %v971, 80
      %v974 = vpop.permute.xlu0 %973
      %975 = vrot.lane.b32.xlu0 %v972, 80
      %v976 = vpop.permute.xlu0 %975
      %v977 = vsel %vm531, %v960, 0
      %v979 = vsel %vm531, %v961, 0
      %v981 = vsel %vm531, %v974, 0
      %v983 = vsel %vm531, %v976, 0
      %985 = vmatpush.xpose.msra.mxu0 0.0
      %986 = vmatpush.xpose.msra.mxu0 0.0
      %987 = vmatpush.xpose.msra.mxu0 0.0
      %988 = vmatpush.xpose.msra.mxu0 0.0
      %989 = vmatpush.xpose.msra.mxu0 0.0
      %990 = vmatpush.xpose.msra.mxu0 0.0
      %991 = vmatpush.xpose.msra.mxu0 0.0
      %992 = vmatpush.xpose.msra.mxu0 0.0
      %993 = vmatpush.xpose.msra.mxu0 0.0
      %994 = vmatpush.xpose.msra.mxu0 0.0
      %995 = vmatpush.xpose.msra.mxu0 0.0
      %996 = vmatpush.xpose.msra.mxu0 0.0
      %997 = vmatpush.xpose.msra.mxu0 0.0
      %998 = vmatpush.xpose.msra.mxu0 0.0
      %999 = vmatpush.xpose.msra.mxu0 %v983
      %1000 = vmatpush.xpose.msra.mxu0 %v981
      %1001 = vmatmul.f32.gmra.mxu0 %v977
      %v1002 = vpop.f32.mrf.mxu0
      %v1003 = vadd.f32 0.0, %v1002
      %1004 = vmatmul.f32.gmra.mxu0 %v979
      %v1005 = vpop.f32.mrf.mxu0
      %v1006 = vadd.f32 0.0, %v1005
      %1007 = vdwg.mxu0
      %1008 = vst [vmem:[#allocation1] ss:$4 sm:$0xff] %v585
      %s1009 = scalar_lea.vmem [#allocation1], 1
      %1010 = vst [vmem:[%s1009] ss:$4 sm:$0xff] %v671
      %s1011 = scalar_lea.vmem [#allocation1], 2
      %1012 = vst [vmem:[%s1011] ss:$4 sm:$0xff] %v672
      %s1013 = scalar_lea.vmem [#allocation1], 3
      %1014 = vst [vmem:[%s1013] ss:$4 sm:$0xff] %v673
      %s1015 = scalar_lea.vmem [#allocation1], 32
      %1016 = vst [vmem:[%s1015] ss:$4 sm:$0xff] %v588
      %v1017 = vld.sshfl [vmem:[#allocation1] sm:$0xff pattern:$0x73625140]
      %v1018 = vld.sshfl [vmem:[#allocation1 + $0x20] sm:$0xff pattern:$0x73625140]
      %1019 = vst [vmem:[#allocation1] ss:$4 sm:$0xff] %v585
      %s1020 = scalar_lea.vmem [#allocation1], 1
      %1021 = vst [vmem:[%s1020] ss:$4 sm:$0xff] %v671
      %s1022 = scalar_lea.vmem [#allocation1], 2
      %1023 = vst [vmem:[%s1022] ss:$4 sm:$0xff] %v672
      %s1024 = scalar_lea.vmem [#allocation1], 3
      %1025 = vst [vmem:[%s1024] ss:$4 sm:$0xff] %v673
      %s1026 = scalar_lea.vmem [#allocation1], 32
      %1027 = vst [vmem:[%s1026] ss:$4 sm:$0xff] %v588
      %v1028 = vld.sshfl [vmem:[#allocation1] sm:$0xff pattern:$0x73625140]
      %v1029 = vld.sshfl [vmem:[#allocation1 + $0x20] sm:$0xff pattern:$0x73625140]
      %1030 = vrot.lane.b32.xlu0 %v1028, 80
      %v1031 = vpop.permute.xlu0 %1030
      %1032 = vrot.lane.b32.xlu0 %v1029, 80
      %v1033 = vpop.permute.xlu0 %1032
      %v1034 = vsel %vm531, %v1017, 0
      %v1036 = vsel %vm531, %v1018, 0
      %v1038 = vsel %vm531, %v1031, 0
      %v1040 = vsel %vm531, %v1033, 0
      %1042 = vmatpush.xpose.msra.mxu0 0.0
      %1043 = vmatpush.xpose.msra.mxu0 0.0
      %1044 = vmatpush.xpose.msra.mxu0 0.0
      %1045 = vmatpush.xpose.msra.mxu0 0.0
      %1046 = vmatpush.xpose.msra.mxu0 0.0
      %1047 = vmatpush.xpose.msra.mxu0 0.0
      %1048 = vmatpush.xpose.msra.mxu0 0.0
      %1049 = vmatpush.xpose.msra.mxu0 0.0
      %1050 = vmatpush.xpose.msra.mxu0 0.0
      %1051 = vmatpush.xpose.msra.mxu0 0.0
      %1052 = vmatpush.xpose.msra.mxu0 0.0
      %1053 = vmatpush.xpose.msra.mxu0 0.0
      %1054 = vmatpush.xpose.msra.mxu0 0.0
      %1055 = vmatpush.xpose.msra.mxu0 0.0
      %1056 = vmatpush.xpose.msra.mxu0 %v1040
      %1057 = vmatpush.xpose.msra.mxu0 %v1038
      %1058 = vmatmul.f32.gmra.mxu0 %v1034
      %v1059 = vpop.f32.mrf.mxu0
      %v1060 = vadd.f32 0.0, %v1059
      %1061 = vmatmul.f32.gmra.mxu0 %v1036
      %v1062 = vpop.f32.mrf.mxu0
      %v1063 = vadd.f32 0.0, %v1062
      %1064 = vdwg.mxu0
      %1065 = vst [vmem:[#allocation1] ss:$4 sm:$0xff] %v674
      %s1066 = scalar_lea.vmem [#allocation1], 1
      %1067 = vst [vmem:[%s1066] ss:$4 sm:$0xff] %v675
      %s1068 = scalar_lea.vmem [#allocation1], 2
      %1069 = vst [vmem:[%s1068] ss:$4 sm:$0xff] %v676
      %s1070 = scalar_lea.vmem [#allocation1], 3
      %1071 = vst [vmem:[%s1070] ss:$4 sm:$0xff] %v591
      %s1072 = scalar_lea.vmem [#allocation1], 32
      %1073 = vst [vmem:[%s1072] ss:$4 sm:$0xff] %v677
      %v1074 = vld.sshfl [vmem:[#allocation1] sm:$0xff pattern:$0x73625140]
      %v1075 = vld.sshfl [vmem:[#allocation1 + $0x20] sm:$0xff pattern:$0x73625140]
      %1076 = vst [vmem:[#allocation1] ss:$4 sm:$0xff] %v674
      %s1077 = scalar_lea.vmem [#allocation1], 1
      %1078 = vst [vmem:[%s1077] ss:$4 sm:$0xff] %v675
      %s1079 = scalar_lea.vmem [#allocation1], 2
      %1080 = vst [vmem:[%s1079] ss:$4 sm:$0xff] %v676
      %s1081 = scalar_lea.vmem [#allocation1], 3
      %1082 = vst [vmem:[%s1081] ss:$4 sm:$0xff] %v591
      %s1083 = scalar_lea.vmem [#allocation1], 32
      %1084 = vst [vmem:[%s1083] ss:$4 sm:$0xff] %v677
      %v1085 = vld.sshfl [vmem:[#allocation1] sm:$0xff pattern:$0x73625140]
      %v1086 = vld.sshfl [vmem:[#allocation1 + $0x20] sm:$0xff pattern:$0x73625140]
      %1087 = vrot.lane.b32.xlu0 %v1085, 80
      %v1088 = vpop.permute.xlu0 %1087
      %1089 = vrot.lane.b32.xlu0 %v1086, 80
      %v1090 = vpop.permute.xlu0 %1089
      %v1091 = vsel %vm531, %v1074, 0
      %v1093 = vsel %vm531, %v1075, 0
      %v1095 = vsel %vm531, %v1088, 0
      %v1097 = vsel %vm531, %v1090, 0
      %1099 = vmatpush.xpose.msra.mxu0 0.0
      %1100 = vmatpush.xpose.msra.mxu0 0.0
      %1101 = vmatpush.xpose.msra.mxu0 0.0
      %1102 = vmatpush.xpose.msra.mxu0 0.0
      %1103 = vmatpush.xpose.msra.mxu0 0.0
      %1104 = vmatpush.xpose.msra.mxu0 0.0
      %1105 = vmatpush.xpose.msra.mxu0 0.0
      %1106 = vmatpush.xpose.msra.mxu0 0.0
      %1107 = vmatpush.xpose.msra.mxu0 0.0
      %1108 = vmatpush.xpose.msra.mxu0 0.0
      %1109 = vmatpush.xpose.msra.mxu0 0.0
      %1110 = vmatpush.xpose.msra.mxu0 0.0
      %1111 = vmatpush.xpose.msra.mxu0 0.0
      %1112 = vmatpush.xpose.msra.mxu0 0.0
      %1113 = vmatpush.xpose.msra.mxu0 %v1097
      %1114 = vmatpush.xpose.msra.mxu0 %v1095
      %1115 = vmatmul.f32.gmra.mxu0 %v1091
      %v1116 = vpop.f32.mrf.mxu0
      %v1117 = vadd.f32 0.0, %v1116
      %1118 = vmatmul.f32.gmra.mxu0 %v1093
      %v1119 = vpop.f32.mrf.mxu0
      %v1120 = vadd.f32 0.0, %v1119
      %1121 = vdwg.mxu0
      %1122 = vst [vmem:[#allocation1] ss:$4 sm:$0xff] %v678
      %s1123 = scalar_lea.vmem [#allocation1], 1
      %1124 = vst [vmem:[%s1123] ss:$4 sm:$0xff] %v679
      %s1125 = scalar_lea.vmem [#allocation1], 2
      %1126 = vst [vmem:[%s1125] ss:$4 sm:$0xff] %v594
      %s1127 = scalar_lea.vmem [#allocation1], 3
      %1128 = vst [vmem:[%s1127] ss:$4 sm:$0xff] %v680
      %s1129 = scalar_lea.vmem [#allocation1], 32
      %1130 = vst [vmem:[%s1129] ss:$4 sm:$0xff] %v681
      %v1131 = vld.sshfl [vmem:[#allocation1] sm:$0xff pattern:$0x73625140]
      %v1132 = vld.sshfl [vmem:[#allocation1 + $0x20] sm:$0xff pattern:$0x73625140]
      %1133 = vst [vmem:[#allocation1] ss:$4 sm:$0xff] %v678
      %s1134 = scalar_lea.vmem [#allocation1], 1
      %1135 = vst [vmem:[%s1134] ss:$4 sm:$0xff] %v679
      %s1136 = scalar_lea.vmem [#allocation1], 2
      %1137 = vst [vmem:[%s1136] ss:$4 sm:$0xff] %v594
      %s1138 = scalar_lea.vmem [#allocation1], 3
      %1139 = vst [vmem:[%s1138] ss:$4 sm:$0xff] %v680
      %s1140 = scalar_lea.vmem [#allocation1], 32
      %1141 = vst [vmem:[%s1140] ss:$4 sm:$0xff] %v681
      %v1142 = vld.sshfl [vmem:[#allocation1] sm:$0xff pattern:$0x73625140]
      %v1143 = vld.sshfl [vmem:[#allocation1 + $0x20] sm:$0xff pattern:$0x73625140]
      %1144 = vrot.lane.b32.xlu0 %v1142, 80
      %v1145 = vpop.permute.xlu0 %1144
      %1146 = vrot.lane.b32.xlu0 %v1143, 80
      %v1147 = vpop.permute.xlu0 %1146
      %v1148 = vsel %vm531, %v1131, 0
      %v1150 = vsel %vm531, %v1132, 0
      %v1152 = vsel %vm531, %v1145, 0
      %v1154 = vsel %vm531, %v1147, 0
      %1156 = vmatpush.xpose.msra.mxu0 0.0
      %1157 = vmatpush.xpose.msra.mxu0 0.0
      %1158 = vmatpush.xpose.msra.mxu0 0.0
      %1159 = vmatpush.xpose.msra.mxu0 0.0
      %1160 = vmatpush.xpose.msra.mxu0 0.0
      %1161 = vmatpush.xpose.msra.mxu0 0.0
      %1162 = vmatpush.xpose.msra.mxu0 0.0
      %1163 = vmatpush.xpose.msra.mxu0 0.0
      %1164 = vmatpush.xpose.msra.mxu0 0.0
      %1165 = vmatpush.xpose.msra.mxu0 0.0
      %1166 = vmatpush.xpose.msra.mxu0 0.0
      %1167 = vmatpush.xpose.msra.mxu0 0.0
      %1168 = vmatpush.xpose.msra.mxu0 0.0
      %1169 = vmatpush.xpose.msra.mxu0 0.0
      %1170 = vmatpush.xpose.msra.mxu0 %v1154
      %1171 = vmatpush.xpose.msra.mxu0 %v1152
      %1172 = vmatmul.f32.gmra.mxu0 %v1148
      %v1173 = vpop.f32.mrf.mxu0
      %v1174 = vadd.f32 0.0, %v1173
      %1175 = vmatmul.f32.gmra.mxu0 %v1150
      %v1176 = vpop.f32.mrf.mxu0
      %v1177 = vadd.f32 0.0, %v1176
      %1178 = vdwg.mxu0
      %1179 = vst [vmem:[#allocation1] ss:$4 sm:$0xff] %v682
      %s1180 = scalar_lea.vmem [#allocation1], 1
      %1181 = vst [vmem:[%s1180] ss:$4 sm:$0xff] %v597
      %s1182 = scalar_lea.vmem [#allocation1], 2
      %1183 = vst [vmem:[%s1182] ss:$4 sm:$0xff] %v683
      %s1184 = scalar_lea.vmem [#allocation1], 3
      %1185 = vst [vmem:[%s1184] ss:$4 sm:$0xff] %v684
      %s1186 = scalar_lea.vmem [#allocation1], 32
      %1187 = vst [vmem:[%s1186] ss:$4 sm:$0xff] %v685
      %v1188 = vld.sshfl [vmem:[#allocation1] sm:$0xff pattern:$0x73625140]
      %v1189 = vld.sshfl [vmem:[#allocation1 + $0x20] sm:$0xff pattern:$0x73625140]
      %1190 = vst [vmem:[#allocation1] ss:$4 sm:$0xff] %v682
      %s1191 = scalar_lea.vmem [#allocation1], 1
      %1192 = vst [vmem:[%s1191] ss:$4 sm:$0xff] %v597
      %s1193 = scalar_lea.vmem [#allocation1], 2
      %1194 = vst [vmem:[%s1193] ss:$4 sm:$0xff] %v683
      %s1195 = scalar_lea.vmem [#allocation1], 3
      %1196 = vst [vmem:[%s1195] ss:$4 sm:$0xff] %v684
      %s1197 = scalar_lea.vmem [#allocation1], 32
      %1198 = vst [vmem:[%s1197] ss:$4 sm:$0xff] %v685
      %v1199 = vld.sshfl [vmem:[#allocation1] sm:$0xff pattern:$0x73625140]
      %v1200 = vld.sshfl [vmem:[#allocation1 + $0x20] sm:$0xff pattern:$0x73625140]
      %1201 = vrot.lane.b32.xlu0 %v1199, 80
      %v1202 = vpop.permute.xlu0 %1201
      %1203 = vrot.lane.b32.xlu0 %v1200, 80
      %v1204 = vpop.permute.xlu0 %1203
      %v1205 = vsel %vm531, %v1188, 0
      %v1207 = vsel %vm531, %v1189, 0
      %v1209 = vsel %vm531, %v1202, 0
      %v1211 = vsel %vm531, %v1204, 0
      %1213 = vmatpush.xpose.msra.mxu0 0.0
      %1214 = vmatpush.xpose.msra.mxu0 0.0
      %1215 = vmatpush.xpose.msra.mxu0 0.0
      %1216 = vmatpush.xpose.msra.mxu0 0.0
      %1217 = vmatpush.xpose.msra.mxu0 0.0
      %1218 = vmatpush.xpose.msra.mxu0 0.0
      %1219 = vmatpush.xpose.msra.mxu0 0.0
      %1220 = vmatpush.xpose.msra.mxu0 0.0
      %1221 = vmatpush.xpose.msra.mxu0 0.0
      %1222 = vmatpush.xpose.msra.mxu0 0.0
      %1223 = vmatpush.xpose.msra.mxu0 0.0
      %1224 = vmatpush.xpose.msra.mxu0 0.0
      %1225 = vmatpush.xpose.msra.mxu0 0.0
      %1226 = vmatpush.xpose.msra.mxu0 0.0
      %1227 = vmatpush.xpose.msra.mxu0 %v1211
      %1228 = vmatpush.xpose.msra.mxu0 %v1209
      %1229 = vmatmul.f32.gmra.mxu0 %v1205
      %v1230 = vpop.f32.mrf.mxu0
      %v1231 = vadd.f32 0.0, %v1230
      %1232 = vmatmul.f32.gmra.mxu0 %v1207
      %v1233 = vpop.f32.mrf.mxu0
      %v1234 = vadd.f32 0.0, %v1233
      %1235 = vdwg.mxu0
      %v1236 = vmul.f32 %v832, 0.14433756
      %v1237 = vmul.f32 %v835, 0.14433756
      %v1238 = vmul.f32 %v889, 0.14433756
      %v1239 = vmul.f32 %v892, 0.14433756
      %v1240 = vmul.f32 %v946, 0.14433756
      %v1241 = vmul.f32 %v949, 0.14433756
      %v1242 = vmul.f32 %v1003, 0.14433756
      %v1243 = vmul.f32 %v1006, 0.14433756
      %v1244 = vmul.f32 %v1060, 0.14433756
      %v1245 = vmul.f32 %v1063, 0.14433756
      %v1246 = vmul.f32 %v1117, 0.14433756
      %v1247 = vmul.f32 %v1120, 0.14433756
      %v1248 = vmul.f32 %v1174, 0.14433756
      %v1249 = vmul.f32 %v1177, 0.14433756
      %v1250 = vmul.f32 %v1231, 0.14433756
      %v1251 = vmul.f32 %v1234, 0.14433756
      %vm1252 = vcmask 80896
      %v1253 = vsel %vm1252, %v1236, -inf
      %1254 = vmax.xlane.f32.xlu0 %v1253
      %v1255 = vpop.xlane.xlu0 %1254
      %vm1256 = vcmask 74752
      %v1257 = vsel %vm1256, %v1237, -inf
      %1258 = vmax.xlane.f32.xlu0 %v1257
      %v1259 = vpop.xlane.xlu0 %1258
      %v1260 = vsel %vm1252, %v1238, -inf
      %1261 = vmax.xlane.f32.xlu0 %v1260
      %v1262 = vpop.xlane.xlu0 %1261
      %v1263 = vsel %vm1256, %v1239, -inf
      %1264 = vmax.xlane.f32.xlu0 %v1263
      %v1265 = vpop.xlane.xlu0 %1264
      %v1266 = vsel %vm1252, %v1240, -inf
      %1267 = vmax.xlane.f32.xlu0 %v1266
      %v1268 = vpop.xlane.xlu0 %1267
      %v1269 = vsel %vm1256, %v1241, -inf
      %1270 = vmax.xlane.f32.xlu0 %v1269
      %v1271 = vpop.xlane.xlu0 %1270
      %v1272 = vsel %vm1252, %v1242, -inf
      %1273 = vmax.xlane.f32.xlu0 %v1272
      %v1274 = vpop.xlane.xlu0 %1273
      %v1275 = vsel %vm1256, %v1243, -inf
      %1276 = vmax.xlane.f32.xlu0 %v1275
      %v1277 = vpop.xlane.xlu0 %1276
      %v1278 = vsel %vm1252, %v1244, -inf
      %1279 = vmax.xlane.f32.xlu0 %v1278
      %v1280 = vpop.xlane.xlu0 %1279
      %v1281 = vsel %vm1256, %v1245, -inf
      %1282 = vmax.xlane.f32.xlu0 %v1281
      %v1283 = vpop.xlane.xlu0 %1282
      %v1284 = vsel %vm1252, %v1246, -inf
      %1285 = vmax.xlane.f32.xlu0 %v1284
      %v1286 = vpop.xlane.xlu0 %1285
      %v1287 = vsel %vm1256, %v1247, -inf
      %1288 = vmax.xlane.f32.xlu0 %v1287
      %v1289 = vpop.xlane.xlu0 %1288
      %v1290 = vsel %vm1252, %v1248, -inf
      %1291 = vmax.xlane.f32.xlu0 %v1290
      %v1292 = vpop.xlane.xlu0 %1291
      %v1293 = vsel %vm1256, %v1249, -inf
      %1294 = vmax.xlane.f32.xlu0 %v1293
      %v1295 = vpop.xlane.xlu0 %1294
      %v1296 = vsel %vm1252, %v1250, -inf
      %1297 = vmax.xlane.f32.xlu0 %v1296
      %v1298 = vpop.xlane.xlu0 %1297
      %v1299 = vsel %vm1256, %v1251, -inf
      %1300 = vmax.xlane.f32.xlu0 %v1299
      %v1301 = vpop.xlane.xlu0 %1300
      %v1302 = vsub.f32 %v1236, %v1255
      %v1303 = vsub.f32 %v1237, %v1259
      %v1304 = vsub.f32 %v1238, %v1262
      %v1305 = vsub.f32 %v1239, %v1265
      %v1306 = vsub.f32 %v1240, %v1268
      %v1307 = vsub.f32 %v1241, %v1271
      %v1308 = vsub.f32 %v1242, %v1274
      %v1309 = vsub.f32 %v1243, %v1277
      %v1310 = vsub.f32 %v1244, %v1280
      %v1311 = vsub.f32 %v1245, %v1283
      %v1312 = vsub.f32 %v1246, %v1286
      %v1313 = vsub.f32 %v1247, %v1289
      %v1314 = vsub.f32 %v1248, %v1292
      %v1315 = vsub.f32 %v1249, %v1295
      %v1316 = vsub.f32 %v1250, %v1298
      %v1317 = vsub.f32 %v1251, %v1301
      %v1318 = vmul.f32 %v1302, 1.442695
      %v1319 = vpow.pop %v1318
      %v1320 = vmul.f32 %v1303, 1.442695
      %v1321 = vpow.pop %v1320
      %v1322 = vmul.f32 %v1304, 1.442695
      %v1323 = vpow.pop %v1322
      %v1324 = vmul.f32 %v1305, 1.442695
      %v1325 = vpow.pop %v1324
      %v1326 = vmul.f32 %v1306, 1.442695
      %v1327 = vpow.pop %v1326
      %v1328 = vmul.f32 %v1307, 1.442695
      %v1329 = vpow.pop %v1328
      %v1330 = vmul.f32 %v1308, 1.442695
      %v1331 = vpow.pop %v1330
      %v1332 = vmul.f32 %v1309, 1.442695
      %v1333 = vpow.pop %v1332
      %v1334 = vmul.f32 %v1310, 1.442695
      %v1335 = vpow.pop %v1334
      %v1336 = vmul.f32 %v1311, 1.442695
      %v1337 = vpow.pop %v1336
      %v1338 = vmul.f32 %v1312, 1.442695
      %v1339 = vpow.pop %v1338
      %v1340 = vmul.f32 %v1313, 1.442695
      %v1341 = vpow.pop %v1340
      %v1342 = vmul.f32 %v1314, 1.442695
      %v1343 = vpow.pop %v1342
      %v1344 = vmul.f32 %v1315, 1.442695
      %v1345 = vpow.pop %v1344
      %v1346 = vmul.f32 %v1316, 1.442695
      %v1347 = vpow.pop %v1346
      %v1348 = vmul.f32 %v1317, 1.442695
      %v1349 = vpow.pop %v1348
      %v1350 = vsel %vm1252, %v1319, 0.0
      %1351 = vadd.xlane.f32.xlu0 %v1350
      %v1352 = vpop.xlane.xlu0 %1351
      %v1353 = vsel %vm1256, %v1321, 0.0
      %1354 = vadd.xlane.f32.xlu0 %v1353
      %v1355 = vpop.xlane.xlu0 %1354
      %v1356 = vsel %vm1252, %v1323, 0.0
      %1357 = vadd.xlane.f32.xlu0 %v1356
      %v1358 = vpop.xlane.xlu0 %1357
      %v1359 = vsel %vm1256, %v1325, 0.0
      %1360 = vadd.xlane.f32.xlu0 %v1359
      %v1361 = vpop.xlane.xlu0 %1360
      %v1362 = vsel %vm1252, %v1327, 0.0
      %1363 = vadd.xlane.f32.xlu0 %v1362
      %v1364 = vpop.xlane.xlu0 %1363
      %v1365 = vsel %vm1256, %v1329, 0.0
      %1366 = vadd.xlane.f32.xlu0 %v1365
      %v1367 = vpop.xlane.xlu0 %1366
      %v1368 = vsel %vm1252, %v1331, 0.0
      %1369 = vadd.xlane.f32.xlu0 %v1368
      %v1370 = vpop.xlane.xlu0 %1369
      %v1371 = vsel %vm1256, %v1333, 0.0
      %1372 = vadd.xlane.f32.xlu0 %v1371
      %v1373 = vpop.xlane.xlu0 %1372
      %v1374 = vsel %vm1252, %v1335, 0.0
      %1375 = vadd.xlane.f32.xlu0 %v1374
      %v1376 = vpop.xlane.xlu0 %1375
      %v1377 = vsel %vm1256, %v1337, 0.0
      %1378 = vadd.xlane.f32.xlu0 %v1377
      %v1379 = vpop.xlane.xlu0 %1378
      %v1380 = vsel %vm1252, %v1339, 0.0
      %1381 = vadd.xlane.f32.xlu0 %v1380
      %v1382 = vpop.xlane.xlu0 %1381
      %v1383 = vsel %vm1256, %v1341, 0.0
      %1384 = vadd.xlane.f32.xlu0 %v1383
      %v1385 = vpop.xlane.xlu0 %1384
      %v1386 = vsel %vm1252, %v1343, 0.0
      %1387 = vadd.xlane.f32.xlu0 %v1386
      %v1388 = vpop.xlane.xlu0 %1387
      %v1389 = vsel %vm1256, %v1345, 0.0
      %1390 = vadd.xlane.f32.xlu0 %v1389
      %v1391 = vpop.xlane.xlu0 %1390
      %v1392 = vsel %vm1252, %v1347, 0.0
      %1393 = vadd.xlane.f32.xlu0 %v1392
      %v1394 = vpop.xlane.xlu0 %1393
      %v1395 = vsel %vm1256, %v1349, 0.0
      %1396 = vadd.xlane.f32.xlu0 %v1395
      %v1397 = vpop.xlane.xlu0 %1396
      %v1398 = vrcp.pop %v1352
      %v1399 = vmul.f32 %v1352, %v1398
      %v1400 = vsub.f32 1.0, %v1399
      %v1401 = vmul.f32 %v1398, %v1400
      %v1402 = vadd.f32 %v1398, %v1401
      %vm1403 = vweird.f32 %v1352
      %vm1404 = vweird.f32 %v1398
      %vm1405 = vmor %vm1403, %vm1404
      %v1406 = vsel %vm1405, %v1398, %v1402
      %v1407 = vand.u32 2147483647, %v1352
      %vm1408 = vcmp.eq.f32.partialorder %v1407, 8.507059e+37
      %v1409 = vand.u32 %v1352, 2147483648
      %v1410 = vor.u32 1.1754944e-38, %v1409
      %v1411 = vsel %vm1408, %v1410, %v1406
      %v1412 = vmul.f32 %v1319, %v1411
      %v1413 = vrcp.pop %v1355
      %v1414 = vmul.f32 %v1355, %v1413
      %v1415 = vsub.f32 1.0, %v1414
      %v1416 = vmul.f32 %v1413, %v1415
      %v1417 = vadd.f32 %v1413, %v1416
      %vm1418 = vweird.f32 %v1355
      %vm1419 = vweird.f32 %v1413
      %vm1420 = vmor %vm1418, %vm1419
      %v1421 = vsel %vm1420, %v1413, %v1417
      %v1422 = vand.u32 2147483647, %v1355
      %vm1423 = vcmp.eq.f32.partialorder %v1422, 8.507059e+37
      %v1424 = vand.u32 %v1355, 2147483648
      %v1425 = vor.u32 1.1754944e-38, %v1424
      %v1426 = vsel %vm1423, %v1425, %v1421
      %v1427 = vmul.f32 %v1321, %v1426
      %v1428 = vrcp.pop %v1358
      %v1429 = vmul.f32 %v1358, %v1428
      %v1430 = vsub.f32 1.0, %v1429
      %v1431 = vmul.f32 %v1428, %v1430
      %v1432 = vadd.f32 %v1428, %v1431
      %vm1433 = vweird.f32 %v1358
      %vm1434 = vweird.f32 %v1428
      %vm1435 = vmor %vm1433, %vm1434
      %v1436 = vsel %vm1435, %v1428, %v1432
      %v1437 = vand.u32 2147483647, %v1358
      %vm1438 = vcmp.eq.f32.partialorder %v1437, 8.507059e+37
      %v1439 = vand.u32 %v1358, 2147483648
      %v1440 = vor.u32 1.1754944e-38, %v1439
      %v1441 = vsel %vm1438, %v1440, %v1436
      %v1442 = vmul.f32 %v1323, %v1441
      %v1443 = vrcp.pop %v1361
      %v1444 = vmul.f32 %v1361, %v1443
      %v1445 = vsub.f32 1.0, %v1444
      %v1446 = vmul.f32 %v1443, %v1445
      %v1447 = vadd.f32 %v1443, %v1446
      %vm1448 = vweird.f32 %v1361
      %vm1449 = vweird.f32 %v1443
      %vm1450 = vmor %vm1448, %vm1449
      %v1451 = vsel %vm1450, %v1443, %v1447
      %v1452 = vand.u32 2147483647, %v1361
      %vm1453 = vcmp.eq.f32.partialorder %v1452, 8.507059e+37
      %v1454 = vand.u32 %v1361, 2147483648
      %v1455 = vor.u32 1.1754944e-38, %v1454
      %v1456 = vsel %vm1453, %v1455, %v1451
      %v1457 = vmul.f32 %v1325, %v1456
      %v1458 = vrcp.pop %v1364
      %v1459 = vmul.f32 %v1364, %v1458
      %v1460 = vsub.f32 1.0, %v1459
      %v1461 = vmul.f32 %v1458, %v1460
      %v1462 = vadd.f32 %v1458, %v1461
      %vm1463 = vweird.f32 %v1364
      %vm1464 = vweird.f32 %v1458
      %vm1465 = vmor %vm1463, %vm1464
      %v1466 = vsel %vm1465, %v1458, %v1462
      %v1467 = vand.u32 2147483647, %v1364
      %vm1468 = vcmp.eq.f32.partialorder %v1467, 8.507059e+37
      %v1469 = vand.u32 %v1364, 2147483648
      %v1470 = vor.u32 1.1754944e-38, %v1469
      %v1471 = vsel %vm1468, %v1470, %v1466
      %v1472 = vmul.f32 %v1327, %v1471
      %v1473 = vrcp.pop %v1367
      %v1474 = vmul.f32 %v1367, %v1473
      %v1475 = vsub.f32 1.0, %v1474
      %v1476 = vmul.f32 %v1473, %v1475
      %v1477 = vadd.f32 %v1473, %v1476
      %vm1478 = vweird.f32 %v1367
      %vm1479 = vweird.f32 %v1473
      %vm1480 = vmor %vm1478, %vm1479
      %v1481 = vsel %vm1480, %v1473, %v1477
      %v1482 = vand.u32 2147483647, %v1367
      %vm1483 = vcmp.eq.f32.partialorder %v1482, 8.507059e+37
      %v1484 = vand.u32 %v1367, 2147483648
      %v1485 = vor.u32 1.1754944e-38, %v1484
      %v1486 = vsel %vm1483, %v1485, %v1481
      %v1487 = vmul.f32 %v1329, %v1486
      %v1488 = vrcp.pop %v1370
      %v1489 = vmul.f32 %v1370, %v1488
      %v1490 = vsub.f32 1.0, %v1489
      %v1491 = vmul.f32 %v1488, %v1490
      %v1492 = vadd.f32 %v1488, %v1491
      %vm1493 = vweird.f32 %v1370
      %vm1494 = vweird.f32 %v1488
      %vm1495 = vmor %vm1493, %vm1494
      %v1496 = vsel %vm1495, %v1488, %v1492
      %v1497 = vand.u32 2147483647, %v1370
      %vm1498 = vcmp.eq.f32.partialorder %v1497, 8.507059e+37
      %v1499 = vand.u32 %v1370, 2147483648
      %v1500 = vor.u32 1.1754944e-38, %v1499
      %v1501 = vsel %vm1498, %v1500, %v1496
      %v1502 = vmul.f32 %v1331, %v1501
      %v1503 = vrcp.pop %v1373
      %v1504 = vmul.f32 %v1373, %v1503
      %v1505 = vsub.f32 1.0, %v1504
      %v1506 = vmul.f32 %v1503, %v1505
      %v1507 = vadd.f32 %v1503, %v1506
      %vm1508 = vweird.f32 %v1373
      %vm1509 = vweird.f32 %v1503
      %vm1510 = vmor %vm1508, %vm1509
      %v1511 = vsel %vm1510, %v1503, %v1507
      %v1512 = vand.u32 2147483647, %v1373
      %vm1513 = vcmp.eq.f32.partialorder %v1512, 8.507059e+37
      %v1514 = vand.u32 %v1373, 2147483648
      %v1515 = vor.u32 1.1754944e-38, %v1514
      %v1516 = vsel %vm1513, %v1515, %v1511
      %v1517 = vmul.f32 %v1333, %v1516
      %v1518 = vrcp.pop %v1376
      %v1519 = vmul.f32 %v1376, %v1518
      %v1520 = vsub.f32 1.0, %v1519
      %v1521 = vmul.f32 %v1518, %v1520
      %v1522 = vadd.f32 %v1518, %v1521
      %vm1523 = vweird.f32 %v1376
      %vm1524 = vweird.f32 %v1518
      %vm1525 = vmor %vm1523, %vm1524
      %v1526 = vsel %vm1525, %v1518, %v1522
      %v1527 = vand.u32 2147483647, %v1376
      %vm1528 = vcmp.eq.f32.partialorder %v1527, 8.507059e+37
      %v1529 = vand.u32 %v1376, 2147483648
      %v1530 = vor.u32 1.1754944e-38, %v1529
      %v1531 = vsel %vm1528, %v1530, %v1526
      %v1532 = vmul.f32 %v1335, %v1531
      %v1533 = vrcp.pop %v1379
      %v1534 = vmul.f32 %v1379, %v1533
      %v1535 = vsub.f32 1.0, %v1534
      %v1536 = vmul.f32 %v1533, %v1535
      %v1537 = vadd.f32 %v1533, %v1536
      %vm1538 = vweird.f32 %v1379
      %vm1539 = vweird.f32 %v1533
      %vm1540 = vmor %vm1538, %vm1539
      %v1541 = vsel %vm1540, %v1533, %v1537
      %v1542 = vand.u32 2147483647, %v1379
      %vm1543 = vcmp.eq.f32.partialorder %v1542, 8.507059e+37
      %v1544 = vand.u32 %v1379, 2147483648
      %v1545 = vor.u32 1.1754944e-38, %v1544
      %v1546 = vsel %vm1543, %v1545, %v1541
      %v1547 = vmul.f32 %v1337, %v1546
      %v1548 = vrcp.pop %v1382
      %v1549 = vmul.f32 %v1382, %v1548
      %v1550 = vsub.f32 1.0, %v1549
      %v1551 = vmul.f32 %v1548, %v1550
      %v1552 = vadd.f32 %v1548, %v1551
      %vm1553 = vweird.f32 %v1382
      %vm1554 = vweird.f32 %v1548
      %vm1555 = vmor %vm1553, %vm1554
      %v1556 = vsel %vm1555, %v1548, %v1552
      %v1557 = vand.u32 2147483647, %v1382
      %vm1558 = vcmp.eq.f32.partialorder %v1557, 8.507059e+37
      %v1559 = vand.u32 %v1382, 2147483648
      %v1560 = vor.u32 1.1754944e-38, %v1559
      %v1561 = vsel %vm1558, %v1560, %v1556
      %v1562 = vmul.f32 %v1339, %v1561
      %v1563 = vrcp.pop %v1385
      %v1564 = vmul.f32 %v1385, %v1563
      %v1565 = vsub.f32 1.0, %v1564
      %v1566 = vmul.f32 %v1563, %v1565
      %v1567 = vadd.f32 %v1563, %v1566
      %vm1568 = vweird.f32 %v1385
      %vm1569 = vweird.f32 %v1563
      %vm1570 = vmor %vm1568, %vm1569
      %v1571 = vsel %vm1570, %v1563, %v1567
      %v1572 = vand.u32 2147483647, %v1385
      %vm1573 = vcmp.eq.f32.partialorder %v1572, 8.507059e+37
      %v1574 = vand.u32 %v1385, 2147483648
      %v1575 = vor.u32 1.1754944e-38, %v1574
      %v1576 = vsel %vm1573, %v1575, %v1571
      %v1577 = vmul.f32 %v1341, %v1576
      %v1578 = vrcp.pop %v1388
      %v1579 = vmul.f32 %v1388, %v1578
      %v1580 = vsub.f32 1.0, %v1579
      %v1581 = vmul.f32 %v1578, %v1580
      %v1582 = vadd.f32 %v1578, %v1581
      %vm1583 = vweird.f32 %v1388
      %vm1584 = vweird.f32 %v1578
      %vm1585 = vmor %vm1583, %vm1584
      %v1586 = vsel %vm1585, %v1578, %v1582
      %v1587 = vand.u32 2147483647, %v1388
      %vm1588 = vcmp.eq.f32.partialorder %v1587, 8.507059e+37
      %v1589 = vand.u32 %v1388, 2147483648
      %v1590 = vor.u32 1.1754944e-38, %v1589
      %v1591 = vsel %vm1588, %v1590, %v1586
      %v1592 = vmul.f32 %v1343, %v1591
      %v1593 = vrcp.pop %v1391
      %v1594 = vmul.f32 %v1391, %v1593
      %v1595 = vsub.f32 1.0, %v1594
      %v1596 = vmul.f32 %v1593, %v1595
      %v1597 = vadd.f32 %v1593, %v1596
      %vm1598 = vweird.f32 %v1391
      %vm1599 = vweird.f32 %v1593
      %vm1600 = vmor %vm1598, %vm1599
      %v1601 = vsel %vm1600, %v1593, %v1597
      %v1602 = vand.u32 2147483647, %v1391
      %vm1603 = vcmp.eq.f32.partialorder %v1602, 8.507059e+37
      %v1604 = vand.u32 %v1391, 2147483648
      %v1605 = vor.u32 1.1754944e-38, %v1604
      %v1606 = vsel %vm1603, %v1605, %v1601
      %v1607 = vmul.f32 %v1345, %v1606
      %v1608 = vrcp.pop %v1394
      %v1609 = vmul.f32 %v1394, %v1608
      %v1610 = vsub.f32 1.0, %v1609
      %v1611 = vmul.f32 %v1608, %v1610
      %v1612 = vadd.f32 %v1608, %v1611
      %vm1613 = vweird.f32 %v1394
      %vm1614 = vweird.f32 %v1608
      %vm1615 = vmor %vm1613, %vm1614
      %v1616 = vsel %vm1615, %v1608, %v1612
      %v1617 = vand.u32 2147483647, %v1394
      %vm1618 = vcmp.eq.f32.partialorder %v1617, 8.507059e+37
      %v1619 = vand.u32 %v1394, 2147483648
      %v1620 = vor.u32 1.1754944e-38, %v1619
      %v1621 = vsel %vm1618, %v1620, %v1616
      %v1622 = vmul.f32 %v1347, %v1621
      %v1623 = vrcp.pop %v1397
      %v1624 = vmul.f32 %v1397, %v1623
      %v1625 = vsub.f32 1.0, %v1624
      %v1626 = vmul.f32 %v1623, %v1625
      %v1627 = vadd.f32 %v1623, %v1626
      %vm1628 = vweird.f32 %v1397
      %vm1629 = vweird.f32 %v1623
      %vm1630 = vmor %vm1628, %vm1629
      %v1631 = vsel %vm1630, %v1623, %v1627
      %v1632 = vand.u32 2147483647, %v1397
      %vm1633 = vcmp.eq.f32.partialorder %v1632, 8.507059e+37
      %v1634 = vand.u32 %v1397, 2147483648
      %v1635 = vor.u32 1.1754944e-38, %v1634
      %v1636 = vsel %vm1633, %v1635, %v1631
      %v1637 = vmul.f32 %v1349, %v1636
      %1638 = vst.msk [vmem:[%s399] sm:$0xff] %vm1252, %v1412
      %1639 = vst.msk [vmem:[%s399 + $0x8] sm:$0x3] %vm1256, %v1427
      %1640 = vst.msk [vmem:[%s399 + $0x10] sm:$0xff] %vm1252, %v1442
      %1641 = vst.msk [vmem:[%s399 + $0x18] sm:$0x3] %vm1256, %v1457
      %1642 = vst.msk [vmem:[%s399 + $0x20] sm:$0xff] %vm1252, %v1472
      %1643 = vst.msk [vmem:[%s399 + $0x28] sm:$0x3] %vm1256, %v1487
      %1644 = vst.msk [vmem:[%s399 + $0x30] sm:$0xff] %vm1252, %v1502
      %1645 = vst.msk [vmem:[%s399 + $0x38] sm:$0x3] %vm1256, %v1517
      %1646 = vst.msk [vmem:[%s399 + $0x40] sm:$0xff] %vm1252, %v1532
      %1647 = vst.msk [vmem:[%s399 + $0x48] sm:$0x3] %vm1256, %v1547
      %1648 = vst.msk [vmem:[%s399 + $0x50] sm:$0xff] %vm1252, %v1562
      %1649 = vst.msk [vmem:[%s399 + $0x58] sm:$0x3] %vm1256, %v1577
      %1650 = vst.msk [vmem:[%s399 + $0x60] sm:$0xff] %vm1252, %v1592
      %1651 = vst.msk [vmem:[%s399 + $0x68] sm:$0x3] %vm1256, %v1607
      %1652 = vst.msk [vmem:[%s399 + $0x70] sm:$0xff] %vm1252, %v1622
      %1653 = vst.msk [vmem:[%s399 + $0x78] sm:$0x3] %vm1256, %v1637
      %1654 = vst [vmem:[#allocation1] ss:$4 sm:$0xff] %v707
      %s1655 = scalar_lea.vmem [#allocation1], 1
      %1656 = vst [vmem:[%s1655] ss:$4 sm:$0xff] %v710
      %s1657 = scalar_lea.vmem [#allocation1], 2
      %1658 = vst [vmem:[%s1657] ss:$4 sm:$0xff] %v713
      %s1659 = scalar_lea.vmem [#allocation1], 3
      %1660 = vst [vmem:[%s1659] ss:$4 sm:$0xff] %v716
      %s1661 = scalar_lea.vmem [#allocation1], 32
      %1662 = vst [vmem:[%s1661] ss:$4 sm:$0xff] %v717
      %v1663 = vld.sshfl [vmem:[#allocation1] sm:$0xff pattern:$0x73625140]
      %v1664 = vld.sshfl [vmem:[#allocation1 + $0x8] sm:$0xff pattern:$0x73625140]
      %v1665 = vld.sshfl [vmem:[#allocation1 + $0x20] sm:$0xff pattern:$0x73625140]
      %v1666 = vld.sshfl [vmem:[#allocation1 + $0x28] sm:$0xff pattern:$0x73625140]
      %1667 = vrot.lane.b32.xlu0 %v1663, 32
      %v1668 = vpop.permute.xlu0 %1667
      %1669 = vrot.lane.b32.xlu0 %v1664, 32
      %v1670 = vpop.permute.xlu0 %1669
      %1671 = vrot.lane.b32.xlu0 %v1665, 32
      %v1672 = vpop.permute.xlu0 %1671
      %1673 = vrot.lane.b32.xlu0 %v1666, 32
      %v1674 = vpop.permute.xlu0 %1673
      %vm1675 = vcmask 261120
      %v1676 = vsel %vm1675, %v1668, %v1670
      %v1677 = vsel %vm1675, %v1672, %v1674
      %v1680 = vsel %vm1252, %v1412, 0
      %v1683 = vsel %vm1252, %v1427, 0
      %v1685 = vsel %vm706, %v1677, 0
      %1687 = vmatpush.msra.mxu0 0.0
      %1688 = vmatpush.msra.mxu0 0.0
      %1689 = vmatpush.msra.mxu0 0.0
      %1690 = vmatpush.msra.mxu0 0.0
      %1691 = vmatpush.msra.mxu0 0.0
      %1692 = vmatpush.msra.mxu0 0.0
      %1693 = vmatpush.msra.mxu0 0.0
      %1694 = vmatpush.msra.mxu0 0.0
      %1695 = vmatpush.msra.mxu0 0.0
      %1696 = vmatpush.msra.mxu0 0.0
      %1697 = vmatpush.msra.mxu0 0.0
      %1698 = vmatpush.msra.mxu0 0.0
      %1699 = vmatpush.msra.mxu0 0.0
      %1700 = vmatpush.msra.mxu0 0.0
      %1701 = vmatpush.msra.mxu0 %v1685
      %1702 = vmatpush.msra.mxu0 %v1676
      %1703 = vmatmul.f32.gmra.mxu0 %v1680
      %v1704 = vpop.f32.mrf.mxu0
      %v1705 = vadd.f32 0.0, %v1704
      %1706 = vmatmul.f32.gmra.mxu0 %v1683
      %v1707 = vpop.f32.mrf.mxu0
      %v1708 = vadd.f32 0.0, %v1707
      %1709 = vdwg.mxu0
      %1710 = vst [vmem:[#allocation1] ss:$4 sm:$0xff] %v719
      %s1711 = scalar_lea.vmem [#allocation1], 1
      %1712 = vst [vmem:[%s1711] ss:$4 sm:$0xff] %v721
      %s1713 = scalar_lea.vmem [#allocation1], 2
      %1714 = vst [vmem:[%s1713] ss:$4 sm:$0xff] %v723
      %s1715 = scalar_lea.vmem [#allocation1], 3
      %1716 = vst [vmem:[%s1715] ss:$4 sm:$0xff] %v724
      %s1717 = scalar_lea.vmem [#allocation1], 32
      %1718 = vst [vmem:[%s1717] ss:$4 sm:$0xff] %v726
      %v1719 = vld.sshfl [vmem:[#allocation1] sm:$0xff pattern:$0x73625140]
      %v1720 = vld.sshfl [vmem:[#allocation1 + $0x8] sm:$0xff pattern:$0x73625140]
      %v1721 = vld.sshfl [vmem:[#allocation1 + $0x20] sm:$0xff pattern:$0x73625140]
      %v1722 = vld.sshfl [vmem:[#allocation1 + $0x28] sm:$0xff pattern:$0x73625140]
      %1723 = vrot.lane.b32.xlu0 %v1719, 32
      %v1724 = vpop.permute.xlu0 %1723
      %1725 = vrot.lane.b32.xlu0 %v1720, 32
      %v1726 = vpop.permute.xlu0 %1725
      %1727 = vrot.lane.b32.xlu0 %v1721, 32
      %v1728 = vpop.permute.xlu0 %1727
      %1729 = vrot.lane.b32.xlu0 %v1722, 32
      %v1730 = vpop.permute.xlu0 %1729
      %v1731 = vsel %vm1675, %v1724, %v1726
      %v1732 = vsel %vm1675, %v1728, %v1730
      %v1735 = vsel %vm1252, %v1442, 0
      %v1738 = vsel %vm1252, %v1457, 0
      %v1740 = vsel %vm706, %v1732, 0
      %1742 = vmatpush.msra.mxu0 0.0
      %1743 = vmatpush.msra.mxu0 0.0
      %1744 = vmatpush.msra.mxu0 0.0
      %1745 = vmatpush.msra.mxu0 0.0
      %1746 = vmatpush.msra.mxu0 0.0
      %1747 = vmatpush.msra.mxu0 0.0
      %1748 = vmatpush.msra.mxu0 0.0
      %1749 = vmatpush.msra.mxu0 0.0
      %1750 = vmatpush.msra.mxu0 0.0
      %1751 = vmatpush.msra.mxu0 0.0
      %1752 = vmatpush.msra.mxu0 0.0
      %1753 = vmatpush.msra.mxu0 0.0
      %1754 = vmatpush.msra.mxu0 0.0
      %1755 = vmatpush.msra.mxu0 0.0
      %1756 = vmatpush.msra.mxu0 %v1740
      %1757 = vmatpush.msra.mxu0 %v1731
      %1758 = vmatmul.f32.gmra.mxu0 %v1735
      %v1759 = vpop.f32.mrf.mxu0
      %v1760 = vadd.f32 0.0, %v1759
      %1761 = vmatmul.f32.gmra.mxu0 %v1738
      %v1762 = vpop.f32.mrf.mxu0
      %v1763 = vadd.f32 0.0, %v1762
      %1764 = vdwg.mxu0
      %1765 = vst [vmem:[#allocation1] ss:$4 sm:$0xff] %v728
      %s1766 = scalar_lea.vmem [#allocation1], 1
      %1767 = vst [vmem:[%s1766] ss:$4 sm:$0xff] %v730
      %s1768 = scalar_lea.vmem [#allocation1], 2
      %1769 = vst [vmem:[%s1768] ss:$4 sm:$0xff] %v731
      %s1770 = scalar_lea.vmem [#allocation1], 3
      %1771 = vst [vmem:[%s1770] ss:$4 sm:$0xff] %v733
      %s1772 = scalar_lea.vmem [#allocation1], 32
      %1773 = vst [vmem:[%s1772] ss:$4 sm:$0xff] %v735
      %v1774 = vld.sshfl [vmem:[#allocation1] sm:$0xff pattern:$0x73625140]
      %v1775 = vld.sshfl [vmem:[#allocation1 + $0x8] sm:$0xff pattern:$0x73625140]
      %v1776 = vld.sshfl [vmem:[#allocation1 + $0x20] sm:$0xff pattern:$0x73625140]
      %v1777 = vld.sshfl [vmem:[#allocation1 + $0x28] sm:$0xff pattern:$0x73625140]
      %1778 = vrot.lane.b32.xlu0 %v1774, 32
      %v1779 = vpop.permute.xlu0 %1778
      %1780 = vrot.lane.b32.xlu0 %v1775, 32
      %v1781 = vpop.permute.xlu0 %1780
      %1782 = vrot.lane.b32.xlu0 %v1776, 32
      %v1783 = vpop.permute.xlu0 %1782
      %1784 = vrot.lane.b32.xlu0 %v1777, 32
      %v1785 = vpop.permute.xlu0 %1784
      %v1786 = vsel %vm1675, %v1779, %v1781
      %v1787 = vsel %vm1675, %v1783, %v1785
      %v1790 = vsel %vm1252, %v1472, 0
      %v1793 = vsel %vm1252, %v1487, 0
      %v1795 = vsel %vm706, %v1787, 0
      %1797 = vmatpush.msra.mxu0 0.0
      %1798 = vmatpush.msra.mxu0 0.0
      %1799 = vmatpush.msra.mxu0 0.0
      %1800 = vmatpush.msra.mxu0 0.0
      %1801 = vmatpush.msra.mxu0 0.0
      %1802 = vmatpush.msra.mxu0 0.0
      %1803 = vmatpush.msra.mxu0 0.0
      %1804 = vmatpush.msra.mxu0 0.0
      %1805 = vmatpush.msra.mxu0 0.0
      %1806 = vmatpush.msra.mxu0 0.0
      %1807 = vmatpush.msra.mxu0 0.0
      %1808 = vmatpush.msra.mxu0 0.0
      %1809 = vmatpush.msra.mxu0 0.0
      %1810 = vmatpush.msra.mxu0 0.0
      %1811 = vmatpush.msra.mxu0 %v1795
      %1812 = vmatpush.msra.mxu0 %v1786
      %1813 = vmatmul.f32.gmra.mxu0 %v1790
      %v1814 = vpop.f32.mrf.mxu0
      %v1815 = vadd.f32 0.0, %v1814
      %1816 = vmatmul.f32.gmra.mxu0 %v1793
      %v1817 = vpop.f32.mrf.mxu0
      %v1818 = vadd.f32 0.0, %v1817
      %1819 = vdwg.mxu0
      %1820 = vst [vmem:[#allocation1] ss:$4 sm:$0xff] %v737
      %s1821 = scalar_lea.vmem [#allocation1], 1
      %1822 = vst [vmem:[%s1821] ss:$4 sm:$0xff] %v738
      %s1823 = scalar_lea.vmem [#allocation1], 2
      %1824 = vst [vmem:[%s1823] ss:$4 sm:$0xff] %v740
      %s1825 = scalar_lea.vmem [#allocation1], 3
      %1826 = vst [vmem:[%s1825] ss:$4 sm:$0xff] %v742
      %s1827 = scalar_lea.vmem [#allocation1], 32
      %1828 = vst [vmem:[%s1827] ss:$4 sm:$0xff] %v744
      %v1829 = vld.sshfl [vmem:[#allocation1] sm:$0xff pattern:$0x73625140]
      %v1830 = vld.sshfl [vmem:[#allocation1 + $0x8] sm:$0xff pattern:$0x73625140]
      %v1831 = vld.sshfl [vmem:[#allocation1 + $0x20] sm:$0xff pattern:$0x73625140]
      %v1832 = vld.sshfl [vmem:[#allocation1 + $0x28] sm:$0xff pattern:$0x73625140]
      %1833 = vrot.lane.b32.xlu0 %v1829, 32
      %v1834 = vpop.permute.xlu0 %1833
      %1835 = vrot.lane.b32.xlu0 %v1830, 32
      %v1836 = vpop.permute.xlu0 %1835
      %1837 = vrot.lane.b32.xlu0 %v1831, 32
      %v1838 = vpop.permute.xlu0 %1837
      %1839 = vrot.lane.b32.xlu0 %v1832, 32
      %v1840 = vpop.permute.xlu0 %1839
      %v1841 = vsel %vm1675, %v1834, %v1836
      %v1842 = vsel %vm1675, %v1838, %v1840
      %v1845 = vsel %vm1252, %v1502, 0
      %v1848 = vsel %vm1252, %v1517, 0
      %v1850 = vsel %vm706, %v1842, 0
      %1852 = vmatpush.msra.mxu0 0.0
      %1853 = vmatpush.msra.mxu0 0.0
      %1854 = vmatpush.msra.mxu0 0.0
      %1855 = vmatpush.msra.mxu0 0.0
      %1856 = vmatpush.msra.mxu0 0.0
      %1857 = vmatpush.msra.mxu0 0.0
      %1858 = vmatpush.msra.mxu0 0.0
      %1859 = vmatpush.msra.mxu0 0.0
      %1860 = vmatpush.msra.mxu0 0.0
      %1861 = vmatpush.msra.mxu0 0.0
      %1862 = vmatpush.msra.mxu0 0.0
      %1863 = vmatpush.msra.mxu0 0.0
      %1864 = vmatpush.msra.mxu0 0.0
      %1865 = vmatpush.msra.mxu0 0.0
      %1866 = vmatpush.msra.mxu0 %v1850
      %1867 = vmatpush.msra.mxu0 %v1841
      %1868 = vmatmul.f32.gmra.mxu0 %v1845
      %v1869 = vpop.f32.mrf.mxu0
      %v1870 = vadd.f32 0.0, %v1869
      %1871 = vmatmul.f32.gmra.mxu0 %v1848
      %v1872 = vpop.f32.mrf.mxu0
      %v1873 = vadd.f32 0.0, %v1872
      %1874 = vdwg.mxu0
      %1875 = vst [vmem:[#allocation1] ss:$4 sm:$0xff] %v745
      %s1876 = scalar_lea.vmem [#allocation1], 1
      %1877 = vst [vmem:[%s1876] ss:$4 sm:$0xff] %v747
      %s1878 = scalar_lea.vmem [#allocation1], 2
      %1879 = vst [vmem:[%s1878] ss:$4 sm:$0xff] %v749
      %s1880 = scalar_lea.vmem [#allocation1], 3
      %1881 = vst [vmem:[%s1880] ss:$4 sm:$0xff] %v751
      %s1882 = scalar_lea.vmem [#allocation1], 32
      %1883 = vst [vmem:[%s1882] ss:$4 sm:$0xff] %v752
      %v1884 = vld.sshfl [vmem:[#allocation1] sm:$0xff pattern:$0x73625140]
      %v1885 = vld.sshfl [vmem:[#allocation1 + $0x8] sm:$0xff pattern:$0x73625140]
      %v1886 = vld.sshfl [vmem:[#allocation1 + $0x20] sm:$0xff pattern:$0x73625140]
      %v1887 = vld.sshfl [vmem:[#allocation1 + $0x28] sm:$0xff pattern:$0x73625140]
      %1888 = vrot.lane.b32.xlu0 %v1884, 32
      %v1889 = vpop.permute.xlu0 %1888
      %1890 = vrot.lane.b32.xlu0 %v1885, 32
      %v1891 = vpop.permute.xlu0 %1890
      %1892 = vrot.lane.b32.xlu0 %v1886, 32
      %v1893 = vpop.permute.xlu0 %1892
      %1894 = vrot.lane.b32.xlu0 %v1887, 32
      %v1895 = vpop.permute.xlu0 %1894
      %v1896 = vsel %vm1675, %v1889, %v1891
      %v1897 = vsel %vm1675, %v1893, %v1895
      %v1900 = vsel %vm1252, %v1532, 0
      %v1903 = vsel %vm1252, %v1547, 0
      %v1905 = vsel %vm706, %v1897, 0
      %1907 = vmatpush.msra.mxu0 0.0
      %1908 = vmatpush.msra.mxu0 0.0
      %1909 = vmatpush.msra.mxu0 0.0
      %1910 = vmatpush.msra.mxu0 0.0
      %1911 = vmatpush.msra.mxu0 0.0
      %1912 = vmatpush.msra.mxu0 0.0
      %1913 = vmatpush.msra.mxu0 0.0
      %1914 = vmatpush.msra.mxu0 0.0
      %1915 = vmatpush.msra.mxu0 0.0
      %1916 = vmatpush.msra.mxu0 0.0
      %1917 = vmatpush.msra.mxu0 0.0
      %1918 = vmatpush.msra.mxu0 0.0
      %1919 = vmatpush.msra.mxu0 0.0
      %1920 = vmatpush.msra.mxu0 0.0
      %1921 = vmatpush.msra.mxu0 %v1905
      %1922 = vmatpush.msra.mxu0 %v1896
      %1923 = vmatmul.f32.gmra.mxu0 %v1900
      %v1924 = vpop.f32.mrf.mxu0
      %v1925 = vadd.f32 0.0, %v1924
      %1926 = vmatmul.f32.gmra.mxu0 %v1903
      %v1927 = vpop.f32.mrf.mxu0
      %v1928 = vadd.f32 0.0, %v1927
      %1929 = vdwg.mxu0
      %1930 = vst [vmem:[#allocation1] ss:$4 sm:$0xff] %v754
      %s1931 = scalar_lea.vmem [#allocation1], 1
      %1932 = vst [vmem:[%s1931] ss:$4 sm:$0xff] %v756
      %s1933 = scalar_lea.vmem [#allocation1], 2
      %1934 = vst [vmem:[%s1933] ss:$4 sm:$0xff] %v758
      %s1935 = scalar_lea.vmem [#allocation1], 3
      %1936 = vst [vmem:[%s1935] ss:$4 sm:$0xff] %v759
      %s1937 = scalar_lea.vmem [#allocation1], 32
      %1938 = vst [vmem:[%s1937] ss:$4 sm:$0xff] %v761
      %v1939 = vld.sshfl [vmem:[#allocation1] sm:$0xff pattern:$0x73625140]
      %v1940 = vld.sshfl [vmem:[#allocation1 + $0x8] sm:$0xff pattern:$0x73625140]
      %v1941 = vld.sshfl [vmem:[#allocation1 + $0x20] sm:$0xff pattern:$0x73625140]
      %v1942 = vld.sshfl [vmem:[#allocation1 + $0x28] sm:$0xff pattern:$0x73625140]
      %1943 = vrot.lane.b32.xlu0 %v1939, 32
      %v1944 = vpop.permute.xlu0 %1943
      %1945 = vrot.lane.b32.xlu0 %v1940, 32
      %v1946 = vpop.permute.xlu0 %1945
      %1947 = vrot.lane.b32.xlu0 %v1941, 32
      %v1948 = vpop.permute.xlu0 %1947
      %1949 = vrot.lane.b32.xlu0 %v1942, 32
      %v1950 = vpop.permute.xlu0 %1949
      %v1951 = vsel %vm1675, %v1944, %v1946
      %v1952 = vsel %vm1675, %v1948, %v1950
      %v1955 = vsel %vm1252, %v1562, 0
      %v1958 = vsel %vm1252, %v1577, 0
      %v1960 = vsel %vm706, %v1952, 0
      %1962 = vmatpush.msra.mxu0 0.0
      %1963 = vmatpush.msra.mxu0 0.0
      %1964 = vmatpush.msra.mxu0 0.0
      %1965 = vmatpush.msra.mxu0 0.0
      %1966 = vmatpush.msra.mxu0 0.0
      %1967 = vmatpush.msra.mxu0 0.0
      %1968 = vmatpush.msra.mxu0 0.0
      %1969 = vmatpush.msra.mxu0 0.0
      %1970 = vmatpush.msra.mxu0 0.0
      %1971 = vmatpush.msra.mxu0 0.0
      %1972 = vmatpush.msra.mxu0 0.0
      %1973 = vmatpush.msra.mxu0 0.0
      %1974 = vmatpush.msra.mxu0 0.0
      %1975 = vmatpush.msra.mxu0 0.0
      %1976 = vmatpush.msra.mxu0 %v1960
      %1977 = vmatpush.msra.mxu0 %v1951
      %1978 = vmatmul.f32.gmra.mxu0 %v1955
      %v1979 = vpop.f32.mrf.mxu0
      %v1980 = vadd.f32 0.0, %v1979
      %1981 = vmatmul.f32.gmra.mxu0 %v1958
      %v1982 = vpop.f32.mrf.mxu0
      %v1983 = vadd.f32 0.0, %v1982
      %1984 = vdwg.mxu0
      %1985 = vst [vmem:[#allocation1] ss:$4 sm:$0xff] %v763
      %s1986 = scalar_lea.vmem [#allocation1], 1
      %1987 = vst [vmem:[%s1986] ss:$4 sm:$0xff] %v765
      %s1988 = scalar_lea.vmem [#allocation1], 2
      %1989 = vst [vmem:[%s1988] ss:$4 sm:$0xff] %v766
      %s1990 = scalar_lea.vmem [#allocation1], 3
      %1991 = vst [vmem:[%s1990] ss:$4 sm:$0xff] %v768
      %s1992 = scalar_lea.vmem [#allocation1], 32
      %1993 = vst [vmem:[%s1992] ss:$4 sm:$0xff] %v770
      %v1994 = vld.sshfl [vmem:[#allocation1] sm:$0xff pattern:$0x73625140]
      %v1995 = vld.sshfl [vmem:[#allocation1 + $0x8] sm:$0xff pattern:$0x73625140]
      %v1996 = vld.sshfl [vmem:[#allocation1 + $0x20] sm:$0xff pattern:$0x73625140]
      %v1997 = vld.sshfl [vmem:[#allocation1 + $0x28] sm:$0xff pattern:$0x73625140]
      %1998 = vrot.lane.b32.xlu0 %v1994, 32
      %v1999 = vpop.permute.xlu0 %1998
      %2000 = vrot.lane.b32.xlu0 %v1995, 32
      %v2001 = vpop.permute.xlu0 %2000
      %2002 = vrot.lane.b32.xlu0 %v1996, 32
      %v2003 = vpop.permute.xlu0 %2002
      %2004 = vrot.lane.b32.xlu0 %v1997, 32
      %v2005 = vpop.permute.xlu0 %2004
      %v2006 = vsel %vm1675, %v1999, %v2001
      %v2007 = vsel %vm1675, %v2003, %v2005
      %v2010 = vsel %vm1252, %v1592, 0
      %v2013 = vsel %vm1252, %v1607, 0
      %v2015 = vsel %vm706, %v2007, 0
      %2017 = vmatpush.msra.mxu0 0.0
      %2018 = vmatpush.msra.mxu0 0.0
      %2019 = vmatpush.msra.mxu0 0.0
      %2020 = vmatpush.msra.mxu0 0.0
      %2021 = vmatpush.msra.mxu0 0.0
      %2022 = vmatpush.msra.mxu0 0.0
      %2023 = vmatpush.msra.mxu0 0.0
      %2024 = vmatpush.msra.mxu0 0.0
      %2025 = vmatpush.msra.mxu0 0.0
      %2026 = vmatpush.msra.mxu0 0.0
      %2027 = vmatpush.msra.mxu0 0.0
      %2028 = vmatpush.msra.mxu0 0.0
      %2029 = vmatpush.msra.mxu0 0.0
      %2030 = vmatpush.msra.mxu0 0.0
      %2031 = vmatpush.msra.mxu0 %v2015
      %2032 = vmatpush.msra.mxu0 %v2006
      %2033 = vmatmul.f32.gmra.mxu0 %v2010
      %v2034 = vpop.f32.mrf.mxu0
      %v2035 = vadd.f32 0.0, %v2034
      %2036 = vmatmul.f32.gmra.mxu0 %v2013
      %v2037 = vpop.f32.mrf.mxu0
      %v2038 = vadd.f32 0.0, %v2037
      %2039 = vdwg.mxu0
      %2040 = vst [vmem:[#allocation1] ss:$4 sm:$0xff] %v772
      %s2041 = scalar_lea.vmem [#allocation1], 1
      %2042 = vst [vmem:[%s2041] ss:$4 sm:$0xff] %v773
      %s2043 = scalar_lea.vmem [#allocation1], 2
      %2044 = vst [vmem:[%s2043] ss:$4 sm:$0xff] %v775
      %s2045 = scalar_lea.vmem [#allocation1], 3
      %2046 = vst [vmem:[%s2045] ss:$4 sm:$0xff] %v777
      %s2047 = scalar_lea.vmem [#allocation1], 32
      %2048 = vst [vmem:[%s2047] ss:$4 sm:$0xff] %v779
      %v2049 = vld.sshfl [vmem:[#allocation1] sm:$0xff pattern:$0x73625140]
      %v2050 = vld.sshfl [vmem:[#allocation1 + $0x8] sm:$0xff pattern:$0x73625140]
      %v2051 = vld.sshfl [vmem:[#allocation1 + $0x20] sm:$0xff pattern:$0x73625140]
      %v2052 = vld.sshfl [vmem:[#allocation1 + $0x28] sm:$0xff pattern:$0x73625140]
      %2053 = vrot.lane.b32.xlu0 %v2049, 32
      %v2054 = vpop.permute.xlu0 %2053
      %2055 = vrot.lane.b32.xlu0 %v2050, 32
      %v2056 = vpop.permute.xlu0 %2055
      %2057 = vrot.lane.b32.xlu0 %v2051, 32
      %v2058 = vpop.permute.xlu0 %2057
      %2059 = vrot.lane.b32.xlu0 %v2052, 32
      %v2060 = vpop.permute.xlu0 %2059
      %v2061 = vsel %vm1675, %v2054, %v2056
      %v2062 = vsel %vm1675, %v2058, %v2060
      %v2065 = vsel %vm1252, %v1622, 0
      %v2068 = vsel %vm1252, %v1637, 0
      %v2070 = vsel %vm706, %v2062, 0
      %2072 = vmatpush.msra.mxu0 0.0
      %2073 = vmatpush.msra.mxu0 0.0
      %2074 = vmatpush.msra.mxu0 0.0
      %2075 = vmatpush.msra.mxu0 0.0
      %2076 = vmatpush.msra.mxu0 0.0
      %2077 = vmatpush.msra.mxu0 0.0
      %2078 = vmatpush.msra.mxu0 0.0
      %2079 = vmatpush.msra.mxu0 0.0
      %2080 = vmatpush.msra.mxu0 0.0
      %2081 = vmatpush.msra.mxu0 0.0
      %2082 = vmatpush.msra.mxu0 0.0
      %2083 = vmatpush.msra.mxu0 0.0
      %2084 = vmatpush.msra.mxu0 0.0
      %2085 = vmatpush.msra.mxu0 0.0
      %2086 = vmatpush.msra.mxu0 %v2070
      %2087 = vmatpush.msra.mxu0 %v2061
      %2088 = vmatmul.f32.gmra.mxu0 %v2065
      %v2089 = vpop.f32.mrf.mxu0
      %v2090 = vadd.f32 0.0, %v2089
      %2091 = vmatmul.f32.gmra.mxu0 %v2068
      %v2092 = vpop.f32.mrf.mxu0
      %v2093 = vadd.f32 0.0, %v2092
      %2094 = vdwg.mxu0
      %v2111 = vrot.slane %v1705, 2
      %v2112 = vrot.slane %v1705, 4
      %v2113 = vrot.slane %v1705, 6
      %v2114 = vrot.slane %v1760, 2
      %v2115 = vrot.slane %v1760, 4
      %v2116 = vrot.slane %v1760, 6
      %v2117 = vrot.slane %v1815, 2
      %v2118 = vrot.slane %v1815, 4
      %v2119 = vrot.slane %v1815, 6
      %v2120 = vrot.slane %v1870, 2
      %v2121 = vrot.slane %v1870, 4
      %v2122 = vrot.slane %v1870, 6
      %v2123 = vrot.slane %v1925, 2
      %v2124 = vrot.slane %v1925, 4
      %v2125 = vrot.slane %v1925, 6
      %v2126 = vrot.slane %v1980, 2
      %v2127 = vrot.slane %v1980, 4
      %v2128 = vrot.slane %v1980, 6
      %v2129 = vrot.slane %v2035, 2
      %v2130 = vrot.slane %v2035, 4
      %v2131 = vrot.slane %v2035, 6
      %v2132 = vrot.slane %v2090, 2
      %v2133 = vrot.slane %v2090, 4
      %v2134 = vrot.slane %v2090, 6
      %v2135 = vld [vmem:[%s3] sm:$0xff]
      %v2136 = vld [vmem:[%s3 + $0x8] sm:$0xff]
      %v2137 = vld [vmem:[%s3 + $0x10] sm:$0xff]
      %v2138 = vld [vmem:[%s3 + $0x18] sm:$0xff]
      %v2139 = vld [vmem:[%s3 + $0x20] sm:$0xff]
      %v2140 = vld [vmem:[%s3 + $0x28] sm:$0xff]
      %v2141 = vld [vmem:[%s4] sm:$0x1]
      %v2143 = vperm.slane %v2141, 0
      %2145 = vst [vmem:[#allocation1] ss:$4 sm:$0xff] %v1705
      %s2146 = scalar_lea.vmem [#allocation1], 1
      %2147 = vst [vmem:[%s2146] ss:$4 sm:$0xff] %v2111
      %s2148 = scalar_lea.vmem [#allocation1], 2
      %2149 = vst [vmem:[%s2148] ss:$4 sm:$0xff] %v2112
      %s2150 = scalar_lea.vmem [#allocation1], 3
      %2151 = vst [vmem:[%s2150] ss:$4 sm:$0xff] %v2113
      %s2152 = scalar_lea.vmem [#allocation1], 32
      %2153 = vst [vmem:[%s2152] ss:$4 sm:$0xff] %v1708
      %s2154 = scalar_lea.vmem [#allocation1], 33
      %2155 = vst [vmem:[%s2154] ss:$4 sm:$0xff] %v1760
      %s2156 = scalar_lea.vmem [#allocation1], 34
      %2157 = vst [vmem:[%s2156] ss:$4 sm:$0xff] %v2114
      %s2158 = scalar_lea.vmem [#allocation1], 35
      %2159 = vst [vmem:[%s2158] ss:$4 sm:$0xff] %v2115
      %v2160 = vld.sshfl [vmem:[#allocation1] sm:$0xff pattern:$0x73625140]
      %v2161 = vld.sshfl [vmem:[#allocation1 + $0x20] sm:$0xff pattern:$0x73625140]
      %2162 = vst [vmem:[#allocation1] ss:$4 sm:$0xff] %v2116
      %2163 = vst [vmem:[%s2146] ss:$4 sm:$0xff] %v1763
      %2164 = vst [vmem:[%s2148] ss:$4 sm:$0xff] %v1815
      %2165 = vst [vmem:[%s2150] ss:$4 sm:$0xff] %v2117
      %2166 = vst [vmem:[%s2152] ss:$4 sm:$0xff] %v2118
      %2167 = vst [vmem:[%s2154] ss:$4 sm:$0xff] %v2119
      %2168 = vst [vmem:[%s2156] ss:$4 sm:$0xff] %v1818
      %2169 = vst [vmem:[%s2158] ss:$4 sm:$0xff] %v1870
      %v2170 = vld.sshfl [vmem:[#allocation1] sm:$0xff pattern:$0x73625140]
      %v2171 = vld.sshfl [vmem:[#allocation1 + $0x20] sm:$0xff pattern:$0x73625140]
      %2172 = vst [vmem:[#allocation1] ss:$4 sm:$0xff] %v2120
      %2173 = vst [vmem:[%s2146] ss:$4 sm:$0xff] %v2121
      %2174 = vst [vmem:[%s2148] ss:$4 sm:$0xff] %v2122
      %2175 = vst [vmem:[%s2150] ss:$4 sm:$0xff] %v1873
      %2176 = vst [vmem:[%s2152] ss:$4 sm:$0xff] %v1925
      %2177 = vst [vmem:[%s2154] ss:$4 sm:$0xff] %v2123
      %2178 = vst [vmem:[%s2156] ss:$4 sm:$0xff] %v2124
      %2179 = vst [vmem:[%s2158] ss:$4 sm:$0xff] %v2125
      %v2180 = vld.sshfl [vmem:[#allocation1] sm:$0xff pattern:$0x73625140]
      %v2181 = vld.sshfl [vmem:[#allocation1 + $0x20] sm:$0xff pattern:$0x73625140]
      %2182 = vst [vmem:[#allocation1] ss:$4 sm:$0xff] %v1928
      %2183 = vst [vmem:[%s2146] ss:$4 sm:$0xff] %v1980
      %2184 = vst [vmem:[%s2148] ss:$4 sm:$0xff] %v2126
      %2185 = vst [vmem:[%s2150] ss:$4 sm:$0xff] %v2127
      %2186 = vst [vmem:[%s2152] ss:$4 sm:$0xff] %v2128
      %2187 = vst [vmem:[%s2154] ss:$4 sm:$0xff] %v1983
      %2188 = vst [vmem:[%s2156] ss:$4 sm:$0xff] %v2035
      %2189 = vst [vmem:[%s2158] ss:$4 sm:$0xff] %v2129
      %v2190 = vld.sshfl [vmem:[#allocation1] sm:$0xff pattern:$0x73625140]
      %v2191 = vld.sshfl [vmem:[#allocation1 + $0x20] sm:$0xff pattern:$0x73625140]
      %2192 = vst [vmem:[#allocation1] ss:$4 sm:$0xff] %v2130
      %2193 = vst [vmem:[%s2146] ss:$4 sm:$0xff] %v2131
      %2194 = vst [vmem:[%s2148] ss:$4 sm:$0xff] %v2038
      %2195 = vst [vmem:[%s2150] ss:$4 sm:$0xff] %v2090
      %2196 = vst [vmem:[%s2152] ss:$4 sm:$0xff] %v2132
      %2197 = vst [vmem:[%s2154] ss:$4 sm:$0xff] %v2133
      %2198 = vst [vmem:[%s2156] ss:$4 sm:$0xff] %v2134
      %2199 = vst [vmem:[%s2158] ss:$4 sm:$0xff] %v2093
      %v2200 = vld.sshfl [vmem:[#allocation1] sm:$0xff pattern:$0x73625140]
      %v2201 = vld.sshfl [vmem:[#allocation1 + $0x20] sm:$0xff pattern:$0x73625140]
      %v2202 = vsel %vm531, %v2160, 0
      %v2204 = vsel %vm531, %v2161, 0
      %v2206 = vsel %vm531, %v2170, 0
      %v2208 = vsel %vm531, %v2171, 0
      %v2210 = vsel %vm531, %v2180, 0
      %v2212 = vsel %vm531, %v2181, 0
      %v2214 = vsel %vm531, %v2190, 0
      %v2216 = vsel %vm531, %v2191, 0
      %v2218 = vsel %vm531, %v2200, 0
      %v2220 = vsel %vm531, %v2201, 0
      %2222 = vmatpush.msra.mxu0 0.0
      %2223 = vmatpush.msra.mxu0 0.0
      %2224 = vmatpush.msra.mxu0 0.0
      %2225 = vmatpush.msra.mxu0 0.0
      %2226 = vmatpush.msra.mxu0 0.0
      %2227 = vmatpush.msra.mxu0 0.0
      %2228 = vmatpush.msra.mxu0 0.0
      %2229 = vmatpush.msra.mxu0 0.0
      %2230 = vmatpush.msra.mxu0 0.0
      %2231 = vmatpush.msra.mxu0 0.0
      %2232 = vmatpush.msra.mxu0 %v2140
      %2233 = vmatpush.msra.mxu0 %v2139
      %2234 = vmatpush.msra.mxu0 %v2138
      %2235 = vmatpush.msra.mxu0 %v2137
      %2236 = vmatpush.msra.mxu0 %v2136
      %2237 = vmatpush.msra.mxu0 %v2135
      %2238 = vmatmul.f32.gmra.mxu0 %v2202
      %v2239 = vpop.f32.mrf.mxu0
      %v2240 = vadd.f32 %v2143, %v2239
      %2241 = vmatmul.f32.gmra.mxu0 %v2204
      %v2242 = vpop.f32.mrf.mxu0
      %v2243 = vadd.f32 %v2143, %v2242
      %2244 = vmatmul.f32.gmra.mxu0 %v2206
      %v2245 = vpop.f32.mrf.mxu0
      %v2246 = vadd.f32 %v2143, %v2245
      %2247 = vmatmul.f32.gmra.mxu0 %v2208
      %v2248 = vpop.f32.mrf.mxu0
      %v2249 = vadd.f32 %v2143, %v2248
      %2250 = vmatmul.f32.gmra.mxu0 %v2210
      %v2251 = vpop.f32.mrf.mxu0
      %v2252 = vadd.f32 %v2143, %v2251
      %2253 = vmatmul.f32.gmra.mxu0 %v2212
      %v2254 = vpop.f32.mrf.mxu0
      %v2255 = vadd.f32 %v2143, %v2254
      %2256 = vmatmul.f32.gmra.mxu0 %v2214
      %v2257 = vpop.f32.mrf.mxu0
      %v2258 = vadd.f32 %v2143, %v2257
      %2259 = vmatmul.f32.gmra.mxu0 %v2216
      %v2260 = vpop.f32.mrf.mxu0
      %v2261 = vadd.f32 %v2143, %v2260
      %2262 = vmatmul.f32.gmra.mxu0 %v2218
      %v2263 = vpop.f32.mrf.mxu0
      %v2264 = vadd.f32 %v2143, %v2263
      %2265 = vmatmul.f32.gmra.mxu0 %v2220
      %v2266 = vpop.f32.mrf.mxu0
      %v2267 = vadd.f32 %v2143, %v2266
      %2268 = vdwg.mxu0
      %2269 = vst [vmem:[#allocation1] ss:$4 sm:$0xff] %v400
      %s2270 = scalar_lea.vmem [#allocation1], 1
      %2271 = vst [vmem:[%s2270] ss:$4 sm:$0xff] %v432
      %s2272 = scalar_lea.vmem [#allocation1], 2
      %2273 = vst [vmem:[%s2272] ss:$4 sm:$0xff] %v433
      %s2274 = scalar_lea.vmem [#allocation1], 3
      %2275 = vst [vmem:[%s2274] ss:$4 sm:$0xff] %v434
      %s2276 = scalar_lea.vmem [#allocation1], 32
      %2277 = vst [vmem:[%s2276] ss:$4 sm:$0xff] %v401
      %s2278 = scalar_lea.vmem [#allocation1], 33
      %2279 = vst [vmem:[%s2278] ss:$4 sm:$0xff] %v402
      %s2280 = scalar_lea.vmem [#allocation1], 34
      %2281 = vst [vmem:[%s2280] ss:$4 sm:$0xff] %v435
      %s2282 = scalar_lea.vmem [#allocation1], 35
      %2283 = vst [vmem:[%s2282] ss:$4 sm:$0xff] %v436
      %v2284 = vld.sshfl [vmem:[#allocation1] sm:$0xff pattern:$0x73625140]
      %v2285 = vld.sshfl [vmem:[#allocation1 + $0x20] sm:$0xff pattern:$0x73625140]
      %2286 = vst [vmem:[#allocation1] ss:$4 sm:$0xff] %v437
      %2287 = vst [vmem:[%s2270] ss:$4 sm:$0xff] %v403
      %2288 = vst [vmem:[%s2272] ss:$4 sm:$0xff] %v404
      %2289 = vst [vmem:[%s2274] ss:$4 sm:$0xff] %v438
      %2290 = vst [vmem:[%s2276] ss:$4 sm:$0xff] %v439
      %2291 = vst [vmem:[%s2278] ss:$4 sm:$0xff] %v440
      %2292 = vst [vmem:[%s2280] ss:$4 sm:$0xff] %v405
      %2293 = vst [vmem:[%s2282] ss:$4 sm:$0xff] %v406
      %v2294 = vld.sshfl [vmem:[#allocation1] sm:$0xff pattern:$0x73625140]
      %v2295 = vld.sshfl [vmem:[#allocation1 + $0x20] sm:$0xff pattern:$0x73625140]
      %2296 = vst [vmem:[#allocation1] ss:$4 sm:$0xff] %v441
      %2297 = vst [vmem:[%s2270] ss:$4 sm:$0xff] %v442
      %2298 = vst [vmem:[%s2272] ss:$4 sm:$0xff] %v443
      %2299 = vst [vmem:[%s2274] ss:$4 sm:$0xff] %v407
      %2300 = vst [vmem:[%s2276] ss:$4 sm:$0xff] %v408
      %2301 = vst [vmem:[%s2278] ss:$4 sm:$0xff] %v444
      %2302 = vst [vmem:[%s2280] ss:$4 sm:$0xff] %v445
      %2303 = vst [vmem:[%s2282] ss:$4 sm:$0xff] %v446
      %v2304 = vld.sshfl [vmem:[#allocation1] sm:$0xff pattern:$0x73625140]
      %v2305 = vld.sshfl [vmem:[#allocation1 + $0x20] sm:$0xff pattern:$0x73625140]
      %2306 = vst [vmem:[#allocation1] ss:$4 sm:$0xff] %v409
      %2307 = vst [vmem:[%s2270] ss:$4 sm:$0xff] %v410
      %2308 = vst [vmem:[%s2272] ss:$4 sm:$0xff] %v447
      %2309 = vst [vmem:[%s2274] ss:$4 sm:$0xff] %v448
      %2310 = vst [vmem:[%s2276] ss:$4 sm:$0xff] %v449
      %2311 = vst [vmem:[%s2278] ss:$4 sm:$0xff] %v411
      %2312 = vst [vmem:[%s2280] ss:$4 sm:$0xff] %v412
      %2313 = vst [vmem:[%s2282] ss:$4 sm:$0xff] %v450
      %v2314 = vld.sshfl [vmem:[#allocation1] sm:$0xff pattern:$0x73625140]
      %v2315 = vld.sshfl [vmem:[#allocation1 + $0x20] sm:$0xff pattern:$0x73625140]
      %2316 = vst [vmem:[#allocation1] ss:$4 sm:$0xff] %v451
      %2317 = vst [vmem:[%s2270] ss:$4 sm:$0xff] %v452
      %2318 = vst [vmem:[%s2272] ss:$4 sm:$0xff] %v413
      %2319 = vst [vmem:[%s2274] ss:$4 sm:$0xff] %v414
      %2320 = vst [vmem:[%s2276] ss:$4 sm:$0xff] %v453
      %2321 = vst [vmem:[%s2278] ss:$4 sm:$0xff] %v454
      %2322 = vst [vmem:[%s2280] ss:$4 sm:$0xff] %v455
      %2323 = vst [vmem:[%s2282] ss:$4 sm:$0xff] %v415
      %v2324 = vld.sshfl [vmem:[#allocation1] sm:$0xff pattern:$0x73625140]
      %v2325 = vld.sshfl [vmem:[#allocation1 + $0x20] sm:$0xff pattern:$0x73625140]
      %v2336 = vadd.f32 %v2240, %v2284
      %v2337 = vadd.f32 %v2243, %v2285
      %v2338 = vadd.f32 %v2246, %v2294
      %v2339 = vadd.f32 %v2249, %v2295
      %v2340 = vadd.f32 %v2252, %v2304
      %v2341 = vadd.f32 %v2255, %v2305
      %v2342 = vadd.f32 %v2258, %v2314
      %v2343 = vadd.f32 %v2261, %v2315
      %v2344 = vadd.f32 %v2264, %v2324
      %v2345 = vadd.f32 %v2267, %v2325
      %v2346 = vmax.f32 %v2336, 0.0
      %v2347 = vmax.f32 %v2337, 0.0
      %v2348 = vmax.f32 %v2338, 0.0
      %v2349 = vmax.f32 %v2339, 0.0
      %v2350 = vmax.f32 %v2340, 0.0
      %v2351 = vmax.f32 %v2341, 0.0
      %v2352 = vmax.f32 %v2342, 0.0
      %v2353 = vmax.f32 %v2343, 0.0
      %v2354 = vmax.f32 %v2344, 0.0
      %v2355 = vmax.f32 %v2345, 0.0
      %v2356 = vld [vmem:[%s5] sm:$0xff]
      %v2357 = vld [vmem:[%s5 + $0x8] sm:$0xff]
      %v2358 = vld [vmem:[%s5 + $0x10] sm:$0xff]
      %v2359 = vld [vmem:[%s5 + $0x18] sm:$0xff]
      %v2360 = vld [vmem:[%s5 + $0x20] sm:$0xff]
      %v2361 = vld [vmem:[%s5 + $0x28] sm:$0xff]
      %v2362 = vld [vmem:[%s6] sm:$0x1]
      %v2364 = vperm.slane %v2362, 0
      %v2367 = vsel %vm531, %v2346, 0
      %v2370 = vsel %vm531, %v2347, 0
      %v2373 = vsel %vm531, %v2348, 0
      %v2376 = vsel %vm531, %v2349, 0
      %v2379 = vsel %vm531, %v2350, 0
      %v2382 = vsel %vm531, %v2351, 0
      %v2385 = vsel %vm531, %v2352, 0
      %v2388 = vsel %vm531, %v2353, 0
      %v2391 = vsel %vm531, %v2354, 0
      %v2394 = vsel %vm531, %v2355, 0
      %2396 = vmatpush.msra.mxu0 0.0
      %2397 = vmatpush.msra.mxu0 0.0
      %2398 = vmatpush.msra.mxu0 0.0
      %2399 = vmatpush.msra.mxu0 0.0
      %2400 = vmatpush.msra.mxu0 0.0
      %2401 = vmatpush.msra.mxu0 0.0
      %2402 = vmatpush.msra.mxu0 0.0
      %2403 = vmatpush.msra.mxu0 0.0
      %2404 = vmatpush.msra.mxu0 0.0
      %2405 = vmatpush.msra.mxu0 0.0
      %2406 = vmatpush.msra.mxu0 %v2361
      %2407 = vmatpush.msra.mxu0 %v2360
      %2408 = vmatpush.msra.mxu0 %v2359
      %2409 = vmatpush.msra.mxu0 %v2358
      %2410 = vmatpush.msra.mxu0 %v2357
      %2411 = vmatpush.msra.mxu0 %v2356
      %2412 = vmatmul.f32.gmra.mxu0 %v2367
      %v2413 = vpop.f32.mrf.mxu0
      %v2414 = vadd.f32 %v2364, %v2413
      %2415 = vmatmul.f32.gmra.mxu0 %v2370
      %v2416 = vpop.f32.mrf.mxu0
      %v2417 = vadd.f32 %v2364, %v2416
      %2418 = vmatmul.f32.gmra.mxu0 %v2373
      %v2419 = vpop.f32.mrf.mxu0
      %v2420 = vadd.f32 %v2364, %v2419
      %2421 = vmatmul.f32.gmra.mxu0 %v2376
      %v2422 = vpop.f32.mrf.mxu0
      %v2423 = vadd.f32 %v2364, %v2422
      %2424 = vmatmul.f32.gmra.mxu0 %v2379
      %v2425 = vpop.f32.mrf.mxu0
      %v2426 = vadd.f32 %v2364, %v2425
      %2427 = vmatmul.f32.gmra.mxu0 %v2382
      %v2428 = vpop.f32.mrf.mxu0
      %v2429 = vadd.f32 %v2364, %v2428
      %2430 = vmatmul.f32.gmra.mxu0 %v2385
      %v2431 = vpop.f32.mrf.mxu0
      %v2432 = vadd.f32 %v2364, %v2431
      %2433 = vmatmul.f32.gmra.mxu0 %v2388
      %v2434 = vpop.f32.mrf.mxu0
      %v2435 = vadd.f32 %v2364, %v2434
      %2436 = vmatmul.f32.gmra.mxu0 %v2391
      %v2437 = vpop.f32.mrf.mxu0
      %v2438 = vadd.f32 %v2364, %v2437
      %2439 = vmatmul.f32.gmra.mxu0 %v2394
      %v2440 = vpop.f32.mrf.mxu0
      %v2441 = vadd.f32 %v2364, %v2440
      %2442 = vdwg.mxu0
      %v2453 = vrot.slane %v2414, 2
      %v2454 = vrot.slane %v2414, 4
      %v2455 = vrot.slane %v2414, 6
      %v2456 = vrot.slane %v2417, 2
      %v2457 = vrot.slane %v2417, 4
      %v2458 = vrot.slane %v2417, 6
      %v2459 = vrot.slane %v2420, 2
      %v2460 = vrot.slane %v2420, 4
      %v2461 = vrot.slane %v2420, 6
      %v2462 = vrot.slane %v2423, 2
      %v2463 = vrot.slane %v2423, 4
      %v2464 = vrot.slane %v2423, 6
      %v2465 = vrot.slane %v2426, 2
      %v2466 = vrot.slane %v2426, 4
      %v2467 = vrot.slane %v2426, 6
      %v2468 = vrot.slane %v2429, 2
      %v2469 = vrot.slane %v2429, 4
      %v2470 = vrot.slane %v2429, 6
      %v2471 = vrot.slane %v2432, 2
      %v2472 = vrot.slane %v2432, 4
      %v2473 = vrot.slane %v2432, 6
      %v2474 = vrot.slane %v2435, 2
      %v2475 = vrot.slane %v2435, 4
      %v2476 = vrot.slane %v2435, 6
      %v2477 = vrot.slane %v2438, 2
      %v2478 = vrot.slane %v2438, 4
      %v2479 = vrot.slane %v2438, 6
      %v2480 = vrot.slane %v2441, 2
      %v2481 = vrot.slane %v2441, 4
      %v2482 = vrot.slane %v2441, 6
      %v2483 = vld [vmem:[%s7] sm:$0xff]
      %v2484 = vld [vmem:[%s7 + $0x8] sm:$0x3]
      %v2485 = vld [vmem:[%s7 + $0x10] sm:$0xff]
      %v2486 = vld [vmem:[%s7 + $0x18] sm:$0x3]
      %v2487 = vld [vmem:[%s7 + $0x20] sm:$0xff]
      %v2488 = vld [vmem:[%s7 + $0x28] sm:$0x3]
      %v2489 = vld [vmem:[%s7 + $0x30] sm:$0xff]
      %v2490 = vld [vmem:[%s7 + $0x38] sm:$0x3]
      %v2491 = vld [vmem:[%s7 + $0x40] sm:$0xff]
      %v2492 = vld [vmem:[%s7 + $0x48] sm:$0x3]
      %v2493 = vld [vmem:[%s7 + $0x50] sm:$0xff]
      %v2494 = vld [vmem:[%s7 + $0x58] sm:$0x3]
      %v2495 = vld [vmem:[%s7 + $0x60] sm:$0xff]
      %v2496 = vld [vmem:[%s7 + $0x68] sm:$0x3]
      %v2497 = vld [vmem:[%s7 + $0x70] sm:$0xff]
      %v2498 = vld [vmem:[%s7 + $0x78] sm:$0x3]
      %2499 = vst [vmem:[#allocation1] ss:$4 sm:$0xff] %v2414
      %s2500 = scalar_lea.vmem [#allocation1], 1
      %2501 = vst [vmem:[%s2500] ss:$4 sm:$0xff] %v2453
      %s2502 = scalar_lea.vmem [#allocation1], 2
      %2503 = vst [vmem:[%s2502] ss:$4 sm:$0xff] %v2454
      %s2504 = scalar_lea.vmem [#allocation1], 3
      %2505 = vst [vmem:[%s2504] ss:$4 sm:$0xff] %v2455
      %s2506 = scalar_lea.vmem [#allocation1], 32
      %2507 = vst [vmem:[%s2506] ss:$4 sm:$0xff] %v2417
      %v2508 = vld.sshfl [vmem:[#allocation1] sm:$0xff pattern:$0x73625140]
      %v2509 = vld.sshfl [vmem:[#allocation1 + $0x20] sm:$0xff pattern:$0x73625140]
      %v2512 = vsel %vm1252, %v2483, 0
      %v2515 = vsel %vm1252, %v2484, 0
      %v2517 = vsel %vm706, %v2509, 0
      %2519 = vmatpush.msra.mxu0 0.0
      %2520 = vmatpush.msra.mxu0 0.0
      %2521 = vmatpush.msra.mxu0 0.0
      %2522 = vmatpush.msra.mxu0 0.0
      %2523 = vmatpush.msra.mxu0 0.0
      %2524 = vmatpush.msra.mxu0 0.0
      %2525 = vmatpush.msra.mxu0 0.0
      %2526 = vmatpush.msra.mxu0 0.0
      %2527 = vmatpush.msra.mxu0 0.0
      %2528 = vmatpush.msra.mxu0 0.0
      %2529 = vmatpush.msra.mxu0 0.0
      %2530 = vmatpush.msra.mxu0 0.0
      %2531 = vmatpush.msra.mxu0 0.0
      %2532 = vmatpush.msra.mxu0 0.0
      %2533 = vmatpush.msra.mxu0 %v2517
      %2534 = vmatpush.msra.mxu0 %v2508
      %2535 = vmatmul.f32.gmra.mxu0 %v2512
      %v2536 = vpop.f32.mrf.mxu0
      %v2537 = vadd.f32 0.0, %v2536
      %2538 = vmatmul.f32.gmra.mxu0 %v2515
      %v2539 = vpop.f32.mrf.mxu0
      %v2540 = vadd.f32 0.0, %v2539
      %2541 = vdwg.mxu0
      %2542 = vst [vmem:[#allocation1] ss:$4 sm:$0xff] %v2456
      %s2543 = scalar_lea.vmem [#allocation1], 1
      %2544 = vst [vmem:[%s2543] ss:$4 sm:$0xff] %v2457
      %s2545 = scalar_lea.vmem [#allocation1], 2
      %2546 = vst [vmem:[%s2545] ss:$4 sm:$0xff] %v2458
      %s2547 = scalar_lea.vmem [#allocation1], 3
      %2548 = vst [vmem:[%s2547] ss:$4 sm:$0xff] %v2420
      %s2549 = scalar_lea.vmem [#allocation1], 32
      %2550 = vst [vmem:[%s2549] ss:$4 sm:$0xff] %v2459
      %v2551 = vld.sshfl [vmem:[#allocation1] sm:$0xff pattern:$0x73625140]
      %v2552 = vld.sshfl [vmem:[#allocation1 + $0x20] sm:$0xff pattern:$0x73625140]
      %v2555 = vsel %vm1252, %v2485, 0
      %v2558 = vsel %vm1252, %v2486, 0
      %v2560 = vsel %vm706, %v2552, 0
      %2562 = vmatpush.msra.mxu0 0.0
      %2563 = vmatpush.msra.mxu0 0.0
      %2564 = vmatpush.msra.mxu0 0.0
      %2565 = vmatpush.msra.mxu0 0.0
      %2566 = vmatpush.msra.mxu0 0.0
      %2567 = vmatpush.msra.mxu0 0.0
      %2568 = vmatpush.msra.mxu0 0.0
      %2569 = vmatpush.msra.mxu0 0.0
      %2570 = vmatpush.msra.mxu0 0.0
      %2571 = vmatpush.msra.mxu0 0.0
      %2572 = vmatpush.msra.mxu0 0.0
      %2573 = vmatpush.msra.mxu0 0.0
      %2574 = vmatpush.msra.mxu0 0.0
      %2575 = vmatpush.msra.mxu0 0.0
      %2576 = vmatpush.msra.mxu0 %v2560
      %2577 = vmatpush.msra.mxu0 %v2551
      %2578 = vmatmul.f32.gmra.mxu0 %v2555
      %v2579 = vpop.f32.mrf.mxu0
      %v2580 = vadd.f32 0.0, %v2579
      %2581 = vmatmul.f32.gmra.mxu0 %v2558
      %v2582 = vpop.f32.mrf.mxu0
      %v2583 = vadd.f32 0.0, %v2582
      %2584 = vdwg.mxu0
      %2585 = vst [vmem:[#allocation1] ss:$4 sm:$0xff] %v2460
      %s2586 = scalar_lea.vmem [#allocation1], 1
      %2587 = vst [vmem:[%s2586] ss:$4 sm:$0xff] %v2461
      %s2588 = scalar_lea.vmem [#allocation1], 2
      %2589 = vst [vmem:[%s2588] ss:$4 sm:$0xff] %v2423
      %s2590 = scalar_lea.vmem [#allocation1], 3
      %2591 = vst [vmem:[%s2590] ss:$4 sm:$0xff] %v2462
      %s2592 = scalar_lea.vmem [#allocation1], 32
      %2593 = vst [vmem:[%s2592] ss:$4 sm:$0xff] %v2463
      %v2594 = vld.sshfl [vmem:[#allocation1] sm:$0xff pattern:$0x73625140]
      %v2595 = vld.sshfl [vmem:[#allocation1 + $0x20] sm:$0xff pattern:$0x73625140]
      %v2598 = vsel %vm1252, %v2487, 0
      %v2601 = vsel %vm1252, %v2488, 0
      %v2603 = vsel %vm706, %v2595, 0
      %2605 = vmatpush.msra.mxu0 0.0
      %2606 = vmatpush.msra.mxu0 0.0
      %2607 = vmatpush.msra.mxu0 0.0
      %2608 = vmatpush.msra.mxu0 0.0
      %2609 = vmatpush.msra.mxu0 0.0
      %2610 = vmatpush.msra.mxu0 0.0
      %2611 = vmatpush.msra.mxu0 0.0
      %2612 = vmatpush.msra.mxu0 0.0
      %2613 = vmatpush.msra.mxu0 0.0
      %2614 = vmatpush.msra.mxu0 0.0
      %2615 = vmatpush.msra.mxu0 0.0
      %2616 = vmatpush.msra.mxu0 0.0
      %2617 = vmatpush.msra.mxu0 0.0
      %2618 = vmatpush.msra.mxu0 0.0
      %2619 = vmatpush.msra.mxu0 %v2603
      %2620 = vmatpush.msra.mxu0 %v2594
      %2621 = vmatmul.f32.gmra.mxu0 %v2598
      %v2622 = vpop.f32.mrf.mxu0
      %v2623 = vadd.f32 0.0, %v2622
      %2624 = vmatmul.f32.gmra.mxu0 %v2601
      %v2625 = vpop.f32.mrf.mxu0
      %v2626 = vadd.f32 0.0, %v2625
      %2627 = vdwg.mxu0
      %2628 = vst [vmem:[#allocation1] ss:$4 sm:$0xff] %v2464
      %s2629 = scalar_lea.vmem [#allocation1], 1
      %2630 = vst [vmem:[%s2629] ss:$4 sm:$0xff] %v2426
      %s2631 = scalar_lea.vmem [#allocation1], 2
      %2632 = vst [vmem:[%s2631] ss:$4 sm:$0xff] %v2465
      %s2633 = scalar_lea.vmem [#allocation1], 3
      %2634 = vst [vmem:[%s2633] ss:$4 sm:$0xff] %v2466
      %s2635 = scalar_lea.vmem [#allocation1], 32
      %2636 = vst [vmem:[%s2635] ss:$4 sm:$0xff] %v2467
      %v2637 = vld.sshfl [vmem:[#allocation1] sm:$0xff pattern:$0x73625140]
      %v2638 = vld.sshfl [vmem:[#allocation1 + $0x20] sm:$0xff pattern:$0x73625140]
      %v2641 = vsel %vm1252, %v2489, 0
      %v2644 = vsel %vm1252, %v2490, 0
      %v2646 = vsel %vm706, %v2638, 0
      %2648 = vmatpush.msra.mxu0 0.0
      %2649 = vmatpush.msra.mxu0 0.0
      %2650 = vmatpush.msra.mxu0 0.0
      %2651 = vmatpush.msra.mxu0 0.0
      %2652 = vmatpush.msra.mxu0 0.0
      %2653 = vmatpush.msra.mxu0 0.0
      %2654 = vmatpush.msra.mxu0 0.0
      %2655 = vmatpush.msra.mxu0 0.0
      %2656 = vmatpush.msra.mxu0 0.0
      %2657 = vmatpush.msra.mxu0 0.0
      %2658 = vmatpush.msra.mxu0 0.0
      %2659 = vmatpush.msra.mxu0 0.0
      %2660 = vmatpush.msra.mxu0 0.0
      %2661 = vmatpush.msra.mxu0 0.0
      %2662 = vmatpush.msra.mxu0 %v2646
      %2663 = vmatpush.msra.mxu0 %v2637
      %2664 = vmatmul.f32.gmra.mxu0 %v2641
      %v2665 = vpop.f32.mrf.mxu0
      %v2666 = vadd.f32 0.0, %v2665
      %2667 = vmatmul.f32.gmra.mxu0 %v2644
      %v2668 = vpop.f32.mrf.mxu0
      %v2669 = vadd.f32 0.0, %v2668
      %2670 = vdwg.mxu0
      %2671 = vst [vmem:[#allocation1] ss:$4 sm:$0xff] %v2429
      %s2672 = scalar_lea.vmem [#allocation1], 1
      %2673 = vst [vmem:[%s2672] ss:$4 sm:$0xff] %v2468
      %s2674 = scalar_lea.vmem [#allocation1], 2
      %2675 = vst [vmem:[%s2674] ss:$4 sm:$0xff] %v2469
      %s2676 = scalar_lea.vmem [#allocation1], 3
      %2677 = vst [vmem:[%s2676] ss:$4 sm:$0xff] %v2470
      %s2678 = scalar_lea.vmem [#allocation1], 32
      %2679 = vst [vmem:[%s2678] ss:$4 sm:$0xff] %v2432
      %v2680 = vld.sshfl [vmem:[#allocation1] sm:$0xff pattern:$0x73625140]
      %v2681 = vld.sshfl [vmem:[#allocation1 + $0x20] sm:$0xff pattern:$0x73625140]
      %v2684 = vsel %vm1252, %v2491, 0
      %v2687 = vsel %vm1252, %v2492, 0
      %v2689 = vsel %vm706, %v2681, 0
      %2691 = vmatpush.msra.mxu0 0.0
      %2692 = vmatpush.msra.mxu0 0.0
      %2693 = vmatpush.msra.mxu0 0.0
      %2694 = vmatpush.msra.mxu0 0.0
      %2695 = vmatpush.msra.mxu0 0.0
      %2696 = vmatpush.msra.mxu0 0.0
      %2697 = vmatpush.msra.mxu0 0.0
      %2698 = vmatpush.msra.mxu0 0.0
      %2699 = vmatpush.msra.mxu0 0.0
      %2700 = vmatpush.msra.mxu0 0.0
      %2701 = vmatpush.msra.mxu0 0.0
      %2702 = vmatpush.msra.mxu0 0.0
      %2703 = vmatpush.msra.mxu0 0.0
      %2704 = vmatpush.msra.mxu0 0.0
      %2705 = vmatpush.msra.mxu0 %v2689
      %2706 = vmatpush.msra.mxu0 %v2680
      %2707 = vmatmul.f32.gmra.mxu0 %v2684
      %v2708 = vpop.f32.mrf.mxu0
      %v2709 = vadd.f32 0.0, %v2708
      %2710 = vmatmul.f32.gmra.mxu0 %v2687
      %v2711 = vpop.f32.mrf.mxu0
      %v2712 = vadd.f32 0.0, %v2711
      %2713 = vdwg.mxu0
      %2714 = vst [vmem:[#allocation1] ss:$4 sm:$0xff] %v2471
      %s2715 = scalar_lea.vmem [#allocation1], 1
      %2716 = vst [vmem:[%s2715] ss:$4 sm:$0xff] %v2472
      %s2717 = scalar_lea.vmem [#allocation1], 2
      %2718 = vst [vmem:[%s2717] ss:$4 sm:$0xff] %v2473
      %s2719 = scalar_lea.vmem [#allocation1], 3
      %2720 = vst [vmem:[%s2719] ss:$4 sm:$0xff] %v2435
      %s2721 = scalar_lea.vmem [#allocation1], 32
      %2722 = vst [vmem:[%s2721] ss:$4 sm:$0xff] %v2474
      %v2723 = vld.sshfl [vmem:[#allocation1] sm:$0xff pattern:$0x73625140]
      %v2724 = vld.sshfl [vmem:[#allocation1 + $0x20] sm:$0xff pattern:$0x73625140]
      %v2727 = vsel %vm1252, %v2493, 0
      %v2730 = vsel %vm1252, %v2494, 0
      %v2732 = vsel %vm706, %v2724, 0
      %2734 = vmatpush.msra.mxu0 0.0
      %2735 = vmatpush.msra.mxu0 0.0
      %2736 = vmatpush.msra.mxu0 0.0
      %2737 = vmatpush.msra.mxu0 0.0
      %2738 = vmatpush.msra.mxu0 0.0
      %2739 = vmatpush.msra.mxu0 0.0
      %2740 = vmatpush.msra.mxu0 0.0
      %2741 = vmatpush.msra.mxu0 0.0
      %2742 = vmatpush.msra.mxu0 0.0
      %2743 = vmatpush.msra.mxu0 0.0
      %2744 = vmatpush.msra.mxu0 0.0
      %2745 = vmatpush.msra.mxu0 0.0
      %2746 = vmatpush.msra.mxu0 0.0
      %2747 = vmatpush.msra.mxu0 0.0
      %2748 = vmatpush.msra.mxu0 %v2732
      %2749 = vmatpush.msra.mxu0 %v2723
      %2750 = vmatmul.f32.gmra.mxu0 %v2727
      %v2751 = vpop.f32.mrf.mxu0
      %v2752 = vadd.f32 0.0, %v2751
      %2753 = vmatmul.f32.gmra.mxu0 %v2730
      %v2754 = vpop.f32.mrf.mxu0
      %v2755 = vadd.f32 0.0, %v2754
      %2756 = vdwg.mxu0
      %2757 = vst [vmem:[#allocation1] ss:$4 sm:$0xff] %v2475
      %s2758 = scalar_lea.vmem [#allocation1], 1
      %2759 = vst [vmem:[%s2758] ss:$4 sm:$0xff] %v2476
      %s2760 = scalar_lea.vmem [#allocation1], 2
      %2761 = vst [vmem:[%s2760] ss:$4 sm:$0xff] %v2438
      %s2762 = scalar_lea.vmem [#allocation1], 3
      %2763 = vst [vmem:[%s2762] ss:$4 sm:$0xff] %v2477
      %s2764 = scalar_lea.vmem [#allocation1], 32
      %2765 = vst [vmem:[%s2764] ss:$4 sm:$0xff] %v2478
      %v2766 = vld.sshfl [vmem:[#allocation1] sm:$0xff pattern:$0x73625140]
      %v2767 = vld.sshfl [vmem:[#allocation1 + $0x20] sm:$0xff pattern:$0x73625140]
      %v2770 = vsel %vm1252, %v2495, 0
      %v2773 = vsel %vm1252, %v2496, 0
      %v2775 = vsel %vm706, %v2767, 0
      %2777 = vmatpush.msra.mxu0 0.0
      %2778 = vmatpush.msra.mxu0 0.0
      %2779 = vmatpush.msra.mxu0 0.0
      %2780 = vmatpush.msra.mxu0 0.0
      %2781 = vmatpush.msra.mxu0 0.0
      %2782 = vmatpush.msra.mxu0 0.0
      %2783 = vmatpush.msra.mxu0 0.0
      %2784 = vmatpush.msra.mxu0 0.0
      %2785 = vmatpush.msra.mxu0 0.0
      %2786 = vmatpush.msra.mxu0 0.0
      %2787 = vmatpush.msra.mxu0 0.0
      %2788 = vmatpush.msra.mxu0 0.0
      %2789 = vmatpush.msra.mxu0 0.0
      %2790 = vmatpush.msra.mxu0 0.0
      %2791 = vmatpush.msra.mxu0 %v2775
      %2792 = vmatpush.msra.mxu0 %v2766
      %2793 = vmatmul.f32.gmra.mxu0 %v2770
      %v2794 = vpop.f32.mrf.mxu0
      %v2795 = vadd.f32 0.0, %v2794
      %2796 = vmatmul.f32.gmra.mxu0 %v2773
      %v2797 = vpop.f32.mrf.mxu0
      %v2798 = vadd.f32 0.0, %v2797
      %2799 = vdwg.mxu0
      %2800 = vst [vmem:[#allocation1] ss:$4 sm:$0xff] %v2479
      %s2801 = scalar_lea.vmem [#allocation1], 1
      %2802 = vst [vmem:[%s2801] ss:$4 sm:$0xff] %v2441
      %s2803 = scalar_lea.vmem [#allocation1], 2
      %2804 = vst [vmem:[%s2803] ss:$4 sm:$0xff] %v2480
      %s2805 = scalar_lea.vmem [#allocation1], 3
      %2806 = vst [vmem:[%s2805] ss:$4 sm:$0xff] %v2481
      %s2807 = scalar_lea.vmem [#allocation1], 32
      %2808 = vst [vmem:[%s2807] ss:$4 sm:$0xff] %v2482
      %v2809 = vld.sshfl [vmem:[#allocation1] sm:$0xff pattern:$0x73625140]
      %v2810 = vld.sshfl [vmem:[#allocation1 + $0x20] sm:$0xff pattern:$0x73625140]
      %v2813 = vsel %vm1252, %v2497, 0
      %v2816 = vsel %vm1252, %v2498, 0
      %v2818 = vsel %vm706, %v2810, 0
      %2820 = vmatpush.msra.mxu0 0.0
      %2821 = vmatpush.msra.mxu0 0.0
      %2822 = vmatpush.msra.mxu0 0.0
      %2823 = vmatpush.msra.mxu0 0.0
      %2824 = vmatpush.msra.mxu0 0.0
      %2825 = vmatpush.msra.mxu0 0.0
      %2826 = vmatpush.msra.mxu0 0.0
      %2827 = vmatpush.msra.mxu0 0.0
      %2828 = vmatpush.msra.mxu0 0.0
      %2829 = vmatpush.msra.mxu0 0.0
      %2830 = vmatpush.msra.mxu0 0.0
      %2831 = vmatpush.msra.mxu0 0.0
      %2832 = vmatpush.msra.mxu0 0.0
      %2833 = vmatpush.msra.mxu0 0.0
      %2834 = vmatpush.msra.mxu0 %v2818
      %2835 = vmatpush.msra.mxu0 %v2809
      %2836 = vmatmul.f32.gmra.mxu0 %v2813
      %v2837 = vpop.f32.mrf.mxu0
      %v2838 = vadd.f32 0.0, %v2837
      %2839 = vmatmul.f32.gmra.mxu0 %v2816
      %v2840 = vpop.f32.mrf.mxu0
      %v2841 = vadd.f32 0.0, %v2840
      %2842 = vdwg.mxu0
      %v2859 = vrot.slane %v2537, 2
      %v2860 = vrot.slane %v2537, 4
      %v2861 = vrot.slane %v2537, 6
      %v2862 = vrot.slane %v2580, 2
      %v2863 = vrot.slane %v2580, 4
      %v2864 = vrot.slane %v2580, 6
      %v2865 = vrot.slane %v2623, 2
      %v2866 = vrot.slane %v2623, 4
      %v2867 = vrot.slane %v2623, 6
      %v2868 = vrot.slane %v2666, 2
      %v2869 = vrot.slane %v2666, 4
      %v2870 = vrot.slane %v2666, 6
      %v2871 = vrot.slane %v2709, 2
      %v2872 = vrot.slane %v2709, 4
      %v2873 = vrot.slane %v2709, 6
      %v2874 = vrot.slane %v2752, 2
      %v2875 = vrot.slane %v2752, 4
      %v2876 = vrot.slane %v2752, 6
      %v2877 = vrot.slane %v2795, 2
      %v2878 = vrot.slane %v2795, 4
      %v2879 = vrot.slane %v2795, 6
      %v2880 = vrot.slane %v2838, 2
      %v2881 = vrot.slane %v2838, 4
      %v2882 = vrot.slane %v2838, 6
      %v2883 = vsel %vm706, %v2540, 0
      %2885 = vmatpush.msra.mxu0 0.0
      %2886 = vmatpush.msra.mxu0 0.0
      %2887 = vmatpush.msra.mxu0 0.0
      %2888 = vmatpush.msra.mxu0 0.0
      %2889 = vmatpush.msra.mxu0 0.0
      %2890 = vmatpush.msra.mxu0 0.0
      %2891 = vmatpush.msra.mxu0 0.0
      %2892 = vmatpush.msra.mxu0 0.0
      %2893 = vmatpush.msra.mxu0 0.0
      %2894 = vmatpush.msra.mxu0 0.0
      %2895 = vmatpush.msra.mxu0 0.0
      %2896 = vmatpush.msra.mxu0 0.0
      %2897 = vmatpush.msra.mxu0 0.0
      %2898 = vmatpush.msra.mxu0 0.0
      %2899 = vmatpush.msra.mxu0 %v2883
      %2900 = vmatpush.msra.mxu0 %v2537
      %2901 = vmatmul.f32.gmra.mxu0 %v2512
      %v2902 = vpop.f32.mrf.mxu0
      %v2903 = vadd.f32 0.0, %v2902
      %2904 = vmatmul.f32.gmra.mxu0 %v2515
      %v2905 = vpop.f32.mrf.mxu0
      %v2906 = vadd.f32 0.0, %v2905
      %2907 = vdwg.mxu0
      %v2908 = vsel %vm706, %v2583, 0
      %2910 = vmatpush.msra.mxu0 0.0
      %2911 = vmatpush.msra.mxu0 0.0
      %2912 = vmatpush.msra.mxu0 0.0
      %2913 = vmatpush.msra.mxu0 0.0
      %2914 = vmatpush.msra.mxu0 0.0
      %2915 = vmatpush.msra.mxu0 0.0
      %2916 = vmatpush.msra.mxu0 0.0
      %2917 = vmatpush.msra.mxu0 0.0
      %2918 = vmatpush.msra.mxu0 0.0
      %2919 = vmatpush.msra.mxu0 0.0
      %2920 = vmatpush.msra.mxu0 0.0
      %2921 = vmatpush.msra.mxu0 0.0
      %2922 = vmatpush.msra.mxu0 0.0
      %2923 = vmatpush.msra.mxu0 0.0
      %2924 = vmatpush.msra.mxu0 %v2908
      %2925 = vmatpush.msra.mxu0 %v2580
      %2926 = vmatmul.f32.gmra.mxu0 %v2555
      %v2927 = vpop.f32.mrf.mxu0
      %v2928 = vadd.f32 0.0, %v2927
      %2929 = vmatmul.f32.gmra.mxu0 %v2558
      %v2930 = vpop.f32.mrf.mxu0
      %v2931 = vadd.f32 0.0, %v2930
      %2932 = vdwg.mxu0
      %v2933 = vsel %vm706, %v2626, 0
      %2935 = vmatpush.msra.mxu0 0.0
      %2936 = vmatpush.msra.mxu0 0.0
      %2937 = vmatpush.msra.mxu0 0.0
      %2938 = vmatpush.msra.mxu0 0.0
      %2939 = vmatpush.msra.mxu0 0.0
      %2940 = vmatpush.msra.mxu0 0.0
      %2941 = vmatpush.msra.mxu0 0.0
      %2942 = vmatpush.msra.mxu0 0.0
      %2943 = vmatpush.msra.mxu0 0.0
      %2944 = vmatpush.msra.mxu0 0.0
      %2945 = vmatpush.msra.mxu0 0.0
      %2946 = vmatpush.msra.mxu0 0.0
      %2947 = vmatpush.msra.mxu0 0.0
      %2948 = vmatpush.msra.mxu0 0.0
      %2949 = vmatpush.msra.mxu0 %v2933
      %2950 = vmatpush.msra.mxu0 %v2623
      %2951 = vmatmul.f32.gmra.mxu0 %v2598
      %v2952 = vpop.f32.mrf.mxu0
      %v2953 = vadd.f32 0.0, %v2952
      %2954 = vmatmul.f32.gmra.mxu0 %v2601
      %v2955 = vpop.f32.mrf.mxu0
      %v2956 = vadd.f32 0.0, %v2955
      %2957 = vdwg.mxu0
      %v2958 = vsel %vm706, %v2669, 0
      %2960 = vmatpush.msra.mxu0 0.0
      %2961 = vmatpush.msra.mxu0 0.0
      %2962 = vmatpush.msra.mxu0 0.0
      %2963 = vmatpush.msra.mxu0 0.0
      %2964 = vmatpush.msra.mxu0 0.0
      %2965 = vmatpush.msra.mxu0 0.0
      %2966 = vmatpush.msra.mxu0 0.0
      %2967 = vmatpush.msra.mxu0 0.0
      %2968 = vmatpush.msra.mxu0 0.0
      %2969 = vmatpush.msra.mxu0 0.0
      %2970 = vmatpush.msra.mxu0 0.0
      %2971 = vmatpush.msra.mxu0 0.0
      %2972 = vmatpush.msra.mxu0 0.0
      %2973 = vmatpush.msra.mxu0 0.0
      %2974 = vmatpush.msra.mxu0 %v2958
      %2975 = vmatpush.msra.mxu0 %v2666
      %2976 = vmatmul.f32.gmra.mxu0 %v2641
      %v2977 = vpop.f32.mrf.mxu0
      %v2978 = vadd.f32 0.0, %v2977
      %2979 = vmatmul.f32.gmra.mxu0 %v2644
      %v2980 = vpop.f32.mrf.mxu0
      %v2981 = vadd.f32 0.0, %v2980
      %2982 = vdwg.mxu0
      %v2983 = vsel %vm706, %v2712, 0
      %2985 = vmatpush.msra.mxu0 0.0
      %2986 = vmatpush.msra.mxu0 0.0
      %2987 = vmatpush.msra.mxu0 0.0
      %2988 = vmatpush.msra.mxu0 0.0
      %2989 = vmatpush.msra.mxu0 0.0
      %2990 = vmatpush.msra.mxu0 0.0
      %2991 = vmatpush.msra.mxu0 0.0
      %2992 = vmatpush.msra.mxu0 0.0
      %2993 = vmatpush.msra.mxu0 0.0
      %2994 = vmatpush.msra.mxu0 0.0
      %2995 = vmatpush.msra.mxu0 0.0
      %2996 = vmatpush.msra.mxu0 0.0
      %2997 = vmatpush.msra.mxu0 0.0
      %2998 = vmatpush.msra.mxu0 0.0
      %2999 = vmatpush.msra.mxu0 %v2983
      %3000 = vmatpush.msra.mxu0 %v2709
      %3001 = vmatmul.f32.gmra.mxu0 %v2684
      %v3002 = vpop.f32.mrf.mxu0
      %v3003 = vadd.f32 0.0, %v3002
      %3004 = vmatmul.f32.gmra.mxu0 %v2687
      %v3005 = vpop.f32.mrf.mxu0
      %v3006 = vadd.f32 0.0, %v3005
      %3007 = vdwg.mxu0
      %v3008 = vsel %vm706, %v2755, 0
      %3010 = vmatpush.msra.mxu0 0.0
      %3011 = vmatpush.msra.mxu0 0.0
      %3012 = vmatpush.msra.mxu0 0.0
      %3013 = vmatpush.msra.mxu0 0.0
      %3014 = vmatpush.msra.mxu0 0.0
      %3015 = vmatpush.msra.mxu0 0.0
      %3016 = vmatpush.msra.mxu0 0.0
      %3017 = vmatpush.msra.mxu0 0.0
      %3018 = vmatpush.msra.mxu0 0.0
      %3019 = vmatpush.msra.mxu0 0.0
      %3020 = vmatpush.msra.mxu0 0.0
      %3021 = vmatpush.msra.mxu0 0.0
      %3022 = vmatpush.msra.mxu0 0.0
      %3023 = vmatpush.msra.mxu0 0.0
      %3024 = vmatpush.msra.mxu0 %v3008
      %3025 = vmatpush.msra.mxu0 %v2752
      %3026 = vmatmul.f32.gmra.mxu0 %v2727
      %v3027 = vpop.f32.mrf.mxu0
      %v3028 = vadd.f32 0.0, %v3027
      %3029 = vmatmul.f32.gmra.mxu0 %v2730
      %v3030 = vpop.f32.mrf.mxu0
      %v3031 = vadd.f32 0.0, %v3030
      %3032 = vdwg.mxu0
      %v3033 = vsel %vm706, %v2798, 0
      %3035 = vmatpush.msra.mxu0 0.0
      %3036 = vmatpush.msra.mxu0 0.0
      %3037 = vmatpush.msra.mxu0 0.0
      %3038 = vmatpush.msra.mxu0 0.0
      %3039 = vmatpush.msra.mxu0 0.0
      %3040 = vmatpush.msra.mxu0 0.0
      %3041 = vmatpush.msra.mxu0 0.0
      %3042 = vmatpush.msra.mxu0 0.0
      %3043 = vmatpush.msra.mxu0 0.0
      %3044 = vmatpush.msra.mxu0 0.0
      %3045 = vmatpush.msra.mxu0 0.0
      %3046 = vmatpush.msra.mxu0 0.0
      %3047 = vmatpush.msra.mxu0 0.0
      %3048 = vmatpush.msra.mxu0 0.0
      %3049 = vmatpush.msra.mxu0 %v3033
      %3050 = vmatpush.msra.mxu0 %v2795
      %3051 = vmatmul.f32.gmra.mxu0 %v2770
      %v3052 = vpop.f32.mrf.mxu0
      %v3053 = vadd.f32 0.0, %v3052
      %3054 = vmatmul.f32.gmra.mxu0 %v2773
      %v3055 = vpop.f32.mrf.mxu0
      %v3056 = vadd.f32 0.0, %v3055
      %3057 = vdwg.mxu0
      %v3058 = vsel %vm706, %v2841, 0
      %3060 = vmatpush.msra.mxu0 0.0
      %3061 = vmatpush.msra.mxu0 0.0
      %3062 = vmatpush.msra.mxu0 0.0
      %3063 = vmatpush.msra.mxu0 0.0
      %3064 = vmatpush.msra.mxu0 0.0
      %3065 = vmatpush.msra.mxu0 0.0
      %3066 = vmatpush.msra.mxu0 0.0
      %3067 = vmatpush.msra.mxu0 0.0
      %3068 = vmatpush.msra.mxu0 0.0
      %3069 = vmatpush.msra.mxu0 0.0
      %3070 = vmatpush.msra.mxu0 0.0
      %3071 = vmatpush.msra.mxu0 0.0
      %3072 = vmatpush.msra.mxu0 0.0
      %3073 = vmatpush.msra.mxu0 0.0
      %3074 = vmatpush.msra.mxu0 %v3058
      %3075 = vmatpush.msra.mxu0 %v2838
      %3076 = vmatmul.f32.gmra.mxu0 %v2813
      %v3077 = vpop.f32.mrf.mxu0
      %v3078 = vadd.f32 0.0, %v3077
      %3079 = vmatmul.f32.gmra.mxu0 %v2816
      %v3080 = vpop.f32.mrf.mxu0
      %v3081 = vadd.f32 0.0, %v3080
      %3082 = vdwg.mxu0
      %v3083 = vmul.f32 %v2903, 2.0
      %v3084 = vmul.f32 %v2906, 2.0
      %v3085 = vmul.f32 %v2928, 2.0
      %v3086 = vmul.f32 %v2931, 2.0
      %v3087 = vmul.f32 %v2953, 2.0
      %v3088 = vmul.f32 %v2956, 2.0
      %v3089 = vmul.f32 %v2978, 2.0
      %v3090 = vmul.f32 %v2981, 2.0
      %v3091 = vmul.f32 %v3003, 2.0
      %v3092 = vmul.f32 %v3006, 2.0
      %v3093 = vmul.f32 %v3028, 2.0
      %v3094 = vmul.f32 %v3031, 2.0
      %v3095 = vmul.f32 %v3053, 2.0
      %v3096 = vmul.f32 %v3056, 2.0
      %v3097 = vmul.f32 %v3078, 2.0
      %v3098 = vmul.f32 %v3081, 2.0
      %3099 = vst [vmem:[#allocation1] ss:$4 sm:$0xff] %v2414
      %s3100 = scalar_lea.vmem [#allocation1], 1
      %3101 = vst [vmem:[%s3100] ss:$4 sm:$0xff] %v2453
      %s3102 = scalar_lea.vmem [#allocation1], 2
      %3103 = vst [vmem:[%s3102] ss:$4 sm:$0xff] %v2454
      %s3104 = scalar_lea.vmem [#allocation1], 3
      %3105 = vst [vmem:[%s3104] ss:$4 sm:$0xff] %v2455
      %s3106 = scalar_lea.vmem [#allocation1], 32
      %3107 = vst [vmem:[%s3106] ss:$4 sm:$0xff] %v2417
      %v3108 = vld.sshfl [vmem:[#allocation1] sm:$0xff pattern:$0x73625140]
      %v3109 = vld.sshfl [vmem:[#allocation1 + $0x20] sm:$0xff pattern:$0x73625140]
      %3110 = vst [vmem:[#allocation1] ss:$4 sm:$0xff] %v2456
      %3111 = vst [vmem:[%s3100] ss:$4 sm:$0xff] %v2457
      %3112 = vst [vmem:[%s3102] ss:$4 sm:$0xff] %v2458
      %3113 = vst [vmem:[%s3104] ss:$4 sm:$0xff] %v2420
      %3114 = vst [vmem:[%s3106] ss:$4 sm:$0xff] %v2459
      %v3115 = vld.sshfl [vmem:[#allocation1] sm:$0xff pattern:$0x73625140]
      %v3116 = vld.sshfl [vmem:[#allocation1 + $0x20] sm:$0xff pattern:$0x73625140]
      %3117 = vst [vmem:[#allocation1] ss:$4 sm:$0xff] %v2460
      %3118 = vst [vmem:[%s3100] ss:$4 sm:$0xff] %v2461
      %3119 = vst [vmem:[%s3102] ss:$4 sm:$0xff] %v2423
      %3120 = vst [vmem:[%s3104] ss:$4 sm:$0xff] %v2462
      %3121 = vst [vmem:[%s3106] ss:$4 sm:$0xff] %v2463
      %v3122 = vld.sshfl [vmem:[#allocation1] sm:$0xff pattern:$0x73625140]
      %v3123 = vld.sshfl [vmem:[#allocation1 + $0x20] sm:$0xff pattern:$0x73625140]
      %3124 = vst [vmem:[#allocation1] ss:$4 sm:$0xff] %v2464
      %3125 = vst [vmem:[%s3100] ss:$4 sm:$0xff] %v2426
      %3126 = vst [vmem:[%s3102] ss:$4 sm:$0xff] %v2465
      %3127 = vst [vmem:[%s3104] ss:$4 sm:$0xff] %v2466
      %3128 = vst [vmem:[%s3106] ss:$4 sm:$0xff] %v2467
      %v3129 = vld.sshfl [vmem:[#allocation1] sm:$0xff pattern:$0x73625140]
      %v3130 = vld.sshfl [vmem:[#allocation1 + $0x20] sm:$0xff pattern:$0x73625140]
      %3131 = vst [vmem:[#allocation1] ss:$4 sm:$0xff] %v2429
      %3132 = vst [vmem:[%s3100] ss:$4 sm:$0xff] %v2468
      %3133 = vst [vmem:[%s3102] ss:$4 sm:$0xff] %v2469
      %3134 = vst [vmem:[%s3104] ss:$4 sm:$0xff] %v2470
      %3135 = vst [vmem:[%s3106] ss:$4 sm:$0xff] %v2432
      %v3136 = vld.sshfl [vmem:[#allocation1] sm:$0xff pattern:$0x73625140]
      %v3137 = vld.sshfl [vmem:[#allocation1 + $0x20] sm:$0xff pattern:$0x73625140]
      %3138 = vst [vmem:[#allocation1] ss:$4 sm:$0xff] %v2471
      %3139 = vst [vmem:[%s3100] ss:$4 sm:$0xff] %v2472
      %3140 = vst [vmem:[%s3102] ss:$4 sm:$0xff] %v2473
      %3141 = vst [vmem:[%s3104] ss:$4 sm:$0xff] %v2435
      %3142 = vst [vmem:[%s3106] ss:$4 sm:$0xff] %v2474
      %v3143 = vld.sshfl [vmem:[#allocation1] sm:$0xff pattern:$0x73625140]
      %v3144 = vld.sshfl [vmem:[#allocation1 + $0x20] sm:$0xff pattern:$0x73625140]
      %3145 = vst [vmem:[#allocation1] ss:$4 sm:$0xff] %v2475
      %3146 = vst [vmem:[%s3100] ss:$4 sm:$0xff] %v2476
      %3147 = vst [vmem:[%s3102] ss:$4 sm:$0xff] %v2438
      %3148 = vst [vmem:[%s3104] ss:$4 sm:$0xff] %v2477
      %3149 = vst [vmem:[%s3106] ss:$4 sm:$0xff] %v2478
      %v3150 = vld.sshfl [vmem:[#allocation1] sm:$0xff pattern:$0x73625140]
      %v3151 = vld.sshfl [vmem:[#allocation1 + $0x20] sm:$0xff pattern:$0x73625140]
      %3152 = vst [vmem:[#allocation1] ss:$4 sm:$0xff] %v2479
      %3153 = vst [vmem:[%s3100] ss:$4 sm:$0xff] %v2441
      %3154 = vst [vmem:[%s3102] ss:$4 sm:$0xff] %v2480
      %3155 = vst [vmem:[%s3104] ss:$4 sm:$0xff] %v2481
      %3156 = vst [vmem:[%s3106] ss:$4 sm:$0xff] %v2482
      %v3157 = vld.sshfl [vmem:[#allocation1] sm:$0xff pattern:$0x73625140]
      %v3158 = vld.sshfl [vmem:[#allocation1 + $0x20] sm:$0xff pattern:$0x73625140]
      %v3175 = vsub.f32 %v3083, %v3108
      %v3176 = vsub.f32 %v3084, %v3109
      %v3177 = vsub.f32 %v3085, %v3115
      %v3178 = vsub.f32 %v3086, %v3116
      %v3179 = vsub.f32 %v3087, %v3122
      %v3180 = vsub.f32 %v3088, %v3123
      %v3181 = vsub.f32 %v3089, %v3129
      %v3182 = vsub.f32 %v3090, %v3130
      %v3183 = vsub.f32 %v3091, %v3136
      %v3184 = vsub.f32 %v3092, %v3137
      %v3185 = vsub.f32 %v3093, %v3143
      %v3186 = vsub.f32 %v3094, %v3144
      %v3187 = vsub.f32 %v3095, %v3150
      %v3188 = vsub.f32 %v3096, %v3151
      %v3189 = vsub.f32 %v3097, %v3157
      %v3190 = vsub.f32 %v3098, %v3158
      %v3207 = vrot.slane %v3175, 2
      %v3208 = vrot.slane %v3175, 4
      %v3209 = vrot.slane %v3175, 6
      %v3210 = vrot.slane %v3177, 2
      %v3211 = vrot.slane %v3177, 4
      %v3212 = vrot.slane %v3177, 6
      %v3213 = vrot.slane %v3179, 2
      %v3214 = vrot.slane %v3179, 4
      %v3215 = vrot.slane %v3179, 6
      %v3216 = vrot.slane %v3181, 2
      %v3217 = vrot.slane %v3181, 4
      %v3218 = vrot.slane %v3181, 6
      %v3219 = vrot.slane %v3183, 2
      %v3220 = vrot.slane %v3183, 4
      %v3221 = vrot.slane %v3183, 6
      %v3222 = vrot.slane %v3185, 2
      %v3223 = vrot.slane %v3185, 4
      %v3224 = vrot.slane %v3185, 6
      %v3225 = vrot.slane %v3187, 2
      %v3226 = vrot.slane %v3187, 4
      %v3227 = vrot.slane %v3187, 6
      %v3228 = vrot.slane %v3189, 2
      %v3229 = vrot.slane %v3189, 4
      %v3230 = vrot.slane %v3189, 6
      %3231 = vst [vmem:[#allocation1] ss:$4 sm:$0xff] %v2537
      %s3232 = scalar_lea.vmem [#allocation1], 1
      %3233 = vst [vmem:[%s3232] ss:$4 sm:$0xff] %v2859
      %s3234 = scalar_lea.vmem [#allocation1], 2
      %3235 = vst [vmem:[%s3234] ss:$4 sm:$0xff] %v2860
      %s3236 = scalar_lea.vmem [#allocation1], 3
      %3237 = vst [vmem:[%s3236] ss:$4 sm:$0xff] %v2861
      %s3238 = scalar_lea.vmem [#allocation1], 32
      %3239 = vst [vmem:[%s3238] ss:$4 sm:$0xff] %v2540
      %s3240 = scalar_lea.vmem [#allocation1], 33
      %3241 = vst [vmem:[%s3240] ss:$4 sm:$0xff] %v2580
      %s3242 = scalar_lea.vmem [#allocation1], 34
      %3243 = vst [vmem:[%s3242] ss:$4 sm:$0xff] %v2862
      %s3244 = scalar_lea.vmem [#allocation1], 35
      %3245 = vst [vmem:[%s3244] ss:$4 sm:$0xff] %v2863
      %v3246 = vld.sshfl [vmem:[#allocation1] sm:$0xff pattern:$0x73625140]
      %v3247 = vld.sshfl [vmem:[#allocation1 + $0x20] sm:$0xff pattern:$0x73625140]
      %3248 = vst [vmem:[#allocation1] ss:$4 sm:$0xff] %v2864
      %3249 = vst [vmem:[%s3232] ss:$4 sm:$0xff] %v2583
      %3250 = vst [vmem:[%s3234] ss:$4 sm:$0xff] %v2623
      %3251 = vst [vmem:[%s3236] ss:$4 sm:$0xff] %v2865
      %3252 = vst [vmem:[%s3238] ss:$4 sm:$0xff] %v2866
      %3253 = vst [vmem:[%s3240] ss:$4 sm:$0xff] %v2867
      %3254 = vst [vmem:[%s3242] ss:$4 sm:$0xff] %v2626
      %3255 = vst [vmem:[%s3244] ss:$4 sm:$0xff] %v2666
      %v3256 = vld.sshfl [vmem:[#allocation1] sm:$0xff pattern:$0x73625140]
      %v3257 = vld.sshfl [vmem:[#allocation1 + $0x20] sm:$0xff pattern:$0x73625140]
      %3258 = vst [vmem:[#allocation1] ss:$4 sm:$0xff] %v2868
      %3259 = vst [vmem:[%s3232] ss:$4 sm:$0xff] %v2869
      %3260 = vst [vmem:[%s3234] ss:$4 sm:$0xff] %v2870
      %3261 = vst [vmem:[%s3236] ss:$4 sm:$0xff] %v2669
      %3262 = vst [vmem:[%s3238] ss:$4 sm:$0xff] %v2709
      %3263 = vst [vmem:[%s3240] ss:$4 sm:$0xff] %v2871
      %3264 = vst [vmem:[%s3242] ss:$4 sm:$0xff] %v2872
      %3265 = vst [vmem:[%s3244] ss:$4 sm:$0xff] %v2873
      %v3266 = vld.sshfl [vmem:[#allocation1] sm:$0xff pattern:$0x73625140]
      %v3267 = vld.sshfl [vmem:[#allocation1 + $0x20] sm:$0xff pattern:$0x73625140]
      %3268 = vst [vmem:[#allocation1] ss:$4 sm:$0xff] %v2712
      %3269 = vst [vmem:[%s3232] ss:$4 sm:$0xff] %v2752
      %3270 = vst [vmem:[%s3234] ss:$4 sm:$0xff] %v2874
      %3271 = vst [vmem:[%s3236] ss:$4 sm:$0xff] %v2875
      %3272 = vst [vmem:[%s3238] ss:$4 sm:$0xff] %v2876
      %3273 = vst [vmem:[%s3240] ss:$4 sm:$0xff] %v2755
      %3274 = vst [vmem:[%s3242] ss:$4 sm:$0xff] %v2795
      %3275 = vst [vmem:[%s3244] ss:$4 sm:$0xff] %v2877
      %v3276 = vld.sshfl [vmem:[#allocation1] sm:$0xff pattern:$0x73625140]
      %v3277 = vld.sshfl [vmem:[#allocation1 + $0x20] sm:$0xff pattern:$0x73625140]
      %3278 = vst [vmem:[#allocation1] ss:$4 sm:$0xff] %v2878
      %3279 = vst [vmem:[%s3232] ss:$4 sm:$0xff] %v2879
      %3280 = vst [vmem:[%s3234] ss:$4 sm:$0xff] %v2798
      %3281 = vst [vmem:[%s3236] ss:$4 sm:$0xff] %v2838
      %3282 = vst [vmem:[%s3238] ss:$4 sm:$0xff] %v2880
      %3283 = vst [vmem:[%s3240] ss:$4 sm:$0xff] %v2881
      %3284 = vst [vmem:[%s3242] ss:$4 sm:$0xff] %v2882
      %3285 = vst [vmem:[%s3244] ss:$4 sm:$0xff] %v2841
      %v3286 = vld.sshfl [vmem:[#allocation1] sm:$0xff pattern:$0x73625140]
      %v3287 = vld.sshfl [vmem:[#allocation1 + $0x20] sm:$0xff pattern:$0x73625140]
      %3288 = vrot.lane.b32.xlu0 %v3246, 32
      %v3289 = vpop.permute.xlu0 %3288
      %3290 = vrot.lane.b32.xlu0 %v3247, 32
      %v3291 = vpop.permute.xlu0 %3290
      %3292 = vrot.lane.b32.xlu0 %v3256, 32
      %v3293 = vpop.permute.xlu0 %3292
      %3294 = vrot.lane.b32.xlu0 %v3257, 32
      %v3295 = vpop.permute.xlu0 %3294
      %3296 = vrot.lane.b32.xlu0 %v3266, 32
      %v3297 = vpop.permute.xlu0 %3296
      %3298 = vrot.lane.b32.xlu0 %v3267, 32
      %v3299 = vpop.permute.xlu0 %3298
      %3300 = vrot.lane.b32.xlu0 %v3276, 32
      %v3301 = vpop.permute.xlu0 %3300
      %3302 = vrot.lane.b32.xlu0 %v3277, 32
      %v3303 = vpop.permute.xlu0 %3302
      %3304 = vrot.lane.b32.xlu0 %v3286, 32
      %v3305 = vpop.permute.xlu0 %3304
      %3306 = vrot.lane.b32.xlu0 %v3287, 32
      %v3307 = vpop.permute.xlu0 %3306
      %3318 = vst [vmem:[#allocation1] ss:$4 sm:$0xff] %v3175
      %s3319 = scalar_lea.vmem [#allocation1], 1
      %3320 = vst [vmem:[%s3319] ss:$4 sm:$0xff] %v3207
      %s3321 = scalar_lea.vmem [#allocation1], 2
      %3322 = vst [vmem:[%s3321] ss:$4 sm:$0xff] %v3208
      %s3323 = scalar_lea.vmem [#allocation1], 3
      %3324 = vst [vmem:[%s3323] ss:$4 sm:$0xff] %v3209
      %s3325 = scalar_lea.vmem [#allocation1], 32
      %3326 = vst [vmem:[%s3325] ss:$4 sm:$0xff] %v3176
      %s3327 = scalar_lea.vmem [#allocation1], 33
      %3328 = vst [vmem:[%s3327] ss:$4 sm:$0xff] %v3177
      %s3329 = scalar_lea.vmem [#allocation1], 34
      %3330 = vst [vmem:[%s3329] ss:$4 sm:$0xff] %v3210
      %s3331 = scalar_lea.vmem [#allocation1], 35
      %3332 = vst [vmem:[%s3331] ss:$4 sm:$0xff] %v3211
      %v3333 = vld.sshfl [vmem:[#allocation1] sm:$0xff pattern:$0x73625140]
      %v3334 = vld.sshfl [vmem:[#allocation1 + $0x20] sm:$0xff pattern:$0x73625140]
      %3335 = vst [vmem:[#allocation1] ss:$4 sm:$0xff] %v3212
      %3336 = vst [vmem:[%s3319] ss:$4 sm:$0xff] %v3178
      %3337 = vst [vmem:[%s3321] ss:$4 sm:$0xff] %v3179
      %3338 = vst [vmem:[%s3323] ss:$4 sm:$0xff] %v3213
      %3339 = vst [vmem:[%s3325] ss:$4 sm:$0xff] %v3214
      %3340 = vst [vmem:[%s3327] ss:$4 sm:$0xff] %v3215
      %3341 = vst [vmem:[%s3329] ss:$4 sm:$0xff] %v3180
      %3342 = vst [vmem:[%s3331] ss:$4 sm:$0xff] %v3181
      %v3343 = vld.sshfl [vmem:[#allocation1] sm:$0xff pattern:$0x73625140]
      %v3344 = vld.sshfl [vmem:[#allocation1 + $0x20] sm:$0xff pattern:$0x73625140]
      %3345 = vst [vmem:[#allocation1] ss:$4 sm:$0xff] %v3216
      %3346 = vst [vmem:[%s3319] ss:$4 sm:$0xff] %v3217
      %3347 = vst [vmem:[%s3321] ss:$4 sm:$0xff] %v3218
      %3348 = vst [vmem:[%s3323] ss:$4 sm:$0xff] %v3182
      %3349 = vst [vmem:[%s3325] ss:$4 sm:$0xff] %v3183
      %3350 = vst [vmem:[%s3327] ss:$4 sm:$0xff] %v3219
      %3351 = vst [vmem:[%s3329] ss:$4 sm:$0xff] %v3220
      %3352 = vst [vmem:[%s3331] ss:$4 sm:$0xff] %v3221
      %v3353 = vld.sshfl [vmem:[#allocation1] sm:$0xff pattern:$0x73625140]
      %v3354 = vld.sshfl [vmem:[#allocation1 + $0x20] sm:$0xff pattern:$0x73625140]
      %3355 = vst [vmem:[#allocation1] ss:$4 sm:$0xff] %v3184
      %3356 = vst [vmem:[%s3319] ss:$4 sm:$0xff] %v3185
      %3357 = vst [vmem:[%s3321] ss:$4 sm:$0xff] %v3222
      %3358 = vst [vmem:[%s3323] ss:$4 sm:$0xff] %v3223
      %3359 = vst [vmem:[%s3325] ss:$4 sm:$0xff] %v3224
      %3360 = vst [vmem:[%s3327] ss:$4 sm:$0xff] %v3186
      %3361 = vst [vmem:[%s3329] ss:$4 sm:$0xff] %v3187
      %3362 = vst [vmem:[%s3331] ss:$4 sm:$0xff] %v3225
      %v3363 = vld.sshfl [vmem:[#allocation1] sm:$0xff pattern:$0x73625140]
      %v3364 = vld.sshfl [vmem:[#allocation1 + $0x20] sm:$0xff pattern:$0x73625140]
      %3365 = vst [vmem:[#allocation1] ss:$4 sm:$0xff] %v3226
      %3366 = vst [vmem:[%s3319] ss:$4 sm:$0xff] %v3227
      %3367 = vst [vmem:[%s3321] ss:$4 sm:$0xff] %v3188
      %3368 = vst [vmem:[%s3323] ss:$4 sm:$0xff] %v3189
      %3369 = vst [vmem:[%s3325] ss:$4 sm:$0xff] %v3228
      %3370 = vst [vmem:[%s3327] ss:$4 sm:$0xff] %v3229
      %3371 = vst [vmem:[%s3329] ss:$4 sm:$0xff] %v3230
      %3372 = vst [vmem:[%s3331] ss:$4 sm:$0xff] %v3190
      %v3373 = vld.sshfl [vmem:[#allocation1] sm:$0xff pattern:$0x73625140]
      %v3374 = vld.sshfl [vmem:[#allocation1 + $0x20] sm:$0xff pattern:$0x73625140]
      %3375 = vrot.lane.b32.xlu0 %v3333, 64
      %v3376 = vpop.permute.xlu0 %3375
      %3377 = vrot.lane.b32.xlu0 %v3334, 64
      %v3378 = vpop.permute.xlu0 %3377
      %3379 = vrot.lane.b32.xlu0 %v3343, 64
      %v3380 = vpop.permute.xlu0 %3379
      %3381 = vrot.lane.b32.xlu0 %v3344, 64
      %v3382 = vpop.permute.xlu0 %3381
      %3383 = vrot.lane.b32.xlu0 %v3353, 64
      %v3384 = vpop.permute.xlu0 %3383
      %3385 = vrot.lane.b32.xlu0 %v3354, 64
      %v3386 = vpop.permute.xlu0 %3385
      %3387 = vrot.lane.b32.xlu0 %v3363, 64
      %v3388 = vpop.permute.xlu0 %3387
      %3389 = vrot.lane.b32.xlu0 %v3364, 64
      %v3390 = vpop.permute.xlu0 %3389
      %3391 = vrot.lane.b32.xlu0 %v3373, 64
      %v3392 = vpop.permute.xlu0 %3391
      %3393 = vrot.lane.b32.xlu0 %v3374, 64
      %v3394 = vpop.permute.xlu0 %3393
      %v3405 = vsel %vm1675, %v2414, %v3289
      %v3406 = vsel %vm1675, %v2417, %v3291
      %v3407 = vsel %vm1675, %v2420, %v3293
      %v3408 = vsel %vm1675, %v2423, %v3295
      %v3409 = vsel %vm1675, %v2426, %v3297
      %v3410 = vsel %vm1675, %v2429, %v3299
      %v3411 = vsel %vm1675, %v2432, %v3301
      %v3412 = vsel %vm1675, %v2435, %v3303
      %v3413 = vsel %vm1675, %v2438, %v3305
      %v3414 = vsel %vm1675, %v2441, %v3307
      %vm3415 = vcmask 523264
      %v3416 = vsel %vm3415, %v3405, %v3376
      %v3417 = vsel %vm3415, %v3406, %v3378
      %v3418 = vsel %vm3415, %v3407, %v3380
      %v3419 = vsel %vm3415, %v3408, %v3382
      %v3420 = vsel %vm3415, %v3409, %v3384
      %v3421 = vsel %vm3415, %v3410, %v3386
      %v3422 = vsel %vm3415, %v3411, %v3388
      %v3423 = vsel %vm3415, %v3412, %v3390
      %v3424 = vsel %vm3415, %v3413, %v3392
      %v3425 = vsel %vm3415, %v3414, %v3394
      %v3426 = vld [vmem:[%s8] sm:$0xff]
      %v3427 = vld [vmem:[%s8 + $0x8] sm:$0xff]
      %v3428 = vld [vmem:[%s8 + $0x10] sm:$0xff]
      %v3429 = vld [vmem:[%s8 + $0x18] sm:$0xff]
      %v3430 = vld [vmem:[%s8 + $0x20] sm:$0xff]
      %v3431 = vld [vmem:[%s8 + $0x28] sm:$0xff]
      %v3432 = vld [vmem:[%s8 + $0x30] sm:$0xff]
      %v3433 = vld [vmem:[%s8 + $0x38] sm:$0xff]
      %v3434 = vld [vmem:[%s8 + $0x40] sm:$0xff]
      %v3435 = vld [vmem:[%s8 + $0x48] sm:$0xff]
      %v3436 = vld [vmem:[%s8 + $0x50] sm:$0xff]
      %v3437 = vld [vmem:[%s8 + $0x58] sm:$0xff]
      %v3438 = vld [vmem:[%s9] sm:$0x1]
      %v3440 = vperm.slane %v3438, 0
      %vm3442 = vcmask 785408
      %v3444 = vsel %vm3442, %v3416, 0
      %v3447 = vsel %vm3442, %v3417, 0
      %v3450 = vsel %vm3442, %v3418, 0
      %v3453 = vsel %vm3442, %v3419, 0
      %v3456 = vsel %vm3442, %v3420, 0
      %v3459 = vsel %vm3442, %v3421, 0
      %v3462 = vsel %vm3442, %v3422, 0
      %v3465 = vsel %vm3442, %v3423, 0
      %v3468 = vsel %vm3442, %v3424, 0
      %v3471 = vsel %vm3442, %v3425, 0
      %3473 = vmatpush.msra.mxu0 0.0
      %3474 = vmatpush.msra.mxu0 0.0
      %3475 = vmatpush.msra.mxu0 0.0
      %3476 = vmatpush.msra.mxu0 0.0
      %3477 = vmatpush.msra.mxu0 %v3437
      %3478 = vmatpush.msra.mxu0 %v3436
      %3479 = vmatpush.msra.mxu0 %v3435
      %3480 = vmatpush.msra.mxu0 %v3434
      %3481 = vmatpush.msra.mxu0 %v3433
      %3482 = vmatpush.msra.mxu0 %v3432
      %3483 = vmatpush.msra.mxu0 %v3431
      %3484 = vmatpush.msra.mxu0 %v3430
      %3485 = vmatpush.msra.mxu0 %v3429
      %3486 = vmatpush.msra.mxu0 %v3428
      %3487 = vmatpush.msra.mxu0 %v3427
      %3488 = vmatpush.msra.mxu0 %v3426
      %3489 = vmatmul.f32.gmra.mxu0 %v3444
      %v3490 = vpop.f32.mrf.mxu0
      %v3491 = vadd.f32 %v3440, %v3490
      %3492 = vmatmul.f32.gmra.mxu0 %v3447
      %v3493 = vpop.f32.mrf.mxu0
      %v3494 = vadd.f32 %v3440, %v3493
      %3495 = vmatmul.f32.gmra.mxu0 %v3450
      %v3496 = vpop.f32.mrf.mxu0
      %v3497 = vadd.f32 %v3440, %v3496
      %3498 = vmatmul.f32.gmra.mxu0 %v3453
      %v3499 = vpop.f32.mrf.mxu0
      %v3500 = vadd.f32 %v3440, %v3499
      %3501 = vmatmul.f32.gmra.mxu0 %v3456
      %v3502 = vpop.f32.mrf.mxu0
      %v3503 = vadd.f32 %v3440, %v3502
      %3504 = vmatmul.f32.gmra.mxu0 %v3459
      %v3505 = vpop.f32.mrf.mxu0
      %v3506 = vadd.f32 %v3440, %v3505
      %3507 = vmatmul.f32.gmra.mxu0 %v3462
      %v3508 = vpop.f32.mrf.mxu0
      %v3509 = vadd.f32 %v3440, %v3508
      %3510 = vmatmul.f32.gmra.mxu0 %v3465
      %v3511 = vpop.f32.mrf.mxu0
      %v3512 = vadd.f32 %v3440, %v3511
      %3513 = vmatmul.f32.gmra.mxu0 %v3468
      %v3514 = vpop.f32.mrf.mxu0
      %v3515 = vadd.f32 %v3440, %v3514
      %3516 = vmatmul.f32.gmra.mxu0 %v3471
      %v3517 = vpop.f32.mrf.mxu0
      %v3518 = vadd.f32 %v3440, %v3517
      %3519 = vdwg.mxu0
      %v3530 = vrot.slane %v3491, 2
      %v3531 = vrot.slane %v3491, 4
      %v3532 = vrot.slane %v3491, 6
      %v3533 = vrot.slane %v3494, 2
      %v3534 = vrot.slane %v3494, 4
      %v3535 = vrot.slane %v3494, 6
      %v3536 = vrot.slane %v3497, 2
      %v3537 = vrot.slane %v3497, 4
      %v3538 = vrot.slane %v3497, 6
      %v3539 = vrot.slane %v3500, 2
      %v3540 = vrot.slane %v3500, 4
      %v3541 = vrot.slane %v3500, 6
      %v3542 = vrot.slane %v3503, 2
      %v3543 = vrot.slane %v3503, 4
      %v3544 = vrot.slane %v3503, 6
      %v3545 = vrot.slane %v3506, 2
      %v3546 = vrot.slane %v3506, 4
      %v3547 = vrot.slane %v3506, 6
      %v3548 = vrot.slane %v3509, 2
      %v3549 = vrot.slane %v3509, 4
      %v3550 = vrot.slane %v3509, 6
      %v3551 = vrot.slane %v3512, 2
      %v3552 = vrot.slane %v3512, 4
      %v3553 = vrot.slane %v3512, 6
      %v3554 = vrot.slane %v3515, 2
      %v3555 = vrot.slane %v3515, 4
      %v3556 = vrot.slane %v3515, 6
      %v3557 = vrot.slane %v3518, 2
      %v3558 = vrot.slane %v3518, 4
      %v3559 = vrot.slane %v3518, 6
      %3560 = vst [vmem:[#allocation1] ss:$4 sm:$0xff] %v3491
      %s3561 = scalar_lea.vmem [#allocation1], 1
      %3562 = vst [vmem:[%s3561] ss:$4 sm:$0xff] %v3530
      %s3563 = scalar_lea.vmem [#allocation1], 2
      %3564 = vst [vmem:[%s3563] ss:$4 sm:$0xff] %v3531
      %s3565 = scalar_lea.vmem [#allocation1], 3
      %3566 = vst [vmem:[%s3565] ss:$4 sm:$0xff] %v3532
      %s3567 = scalar_lea.vmem [#allocation1], 32
      %3568 = vst [vmem:[%s3567] ss:$4 sm:$0xff] %v3494
      %v3569 = vld.sshfl [vmem:[#allocation1] sm:$0xff pattern:$0x73625140]
      %v3570 = vld.sshfl [vmem:[#allocation1 + $0x20] sm:$0xff pattern:$0x73625140]
      %3571 = vst [vmem:[#allocation1] ss:$4 sm:$0xff] %v3533
      %3572 = vst [vmem:[%s3561] ss:$4 sm:$0xff] %v3534
      %3573 = vst [vmem:[%s3563] ss:$4 sm:$0xff] %v3535
      %3574 = vst [vmem:[%s3565] ss:$4 sm:$0xff] %v3497
      %3575 = vst [vmem:[%s3567] ss:$4 sm:$0xff] %v3536
      %v3576 = vld.sshfl [vmem:[#allocation1] sm:$0xff pattern:$0x73625140]
      %v3577 = vld.sshfl [vmem:[#allocation1 + $0x20] sm:$0xff pattern:$0x73625140]
      %3578 = vst [vmem:[#allocation1] ss:$4 sm:$0xff] %v3537
      %3579 = vst [vmem:[%s3561] ss:$4 sm:$0xff] %v3538
      %3580 = vst [vmem:[%s3563] ss:$4 sm:$0xff] %v3500
      %3581 = vst [vmem:[%s3565] ss:$4 sm:$0xff] %v3539
      %3582 = vst [vmem:[%s3567] ss:$4 sm:$0xff] %v3540
      %v3583 = vld.sshfl [vmem:[#allocation1] sm:$0xff pattern:$0x73625140]
      %v3584 = vld.sshfl [vmem:[#allocation1 + $0x20] sm:$0xff pattern:$0x73625140]
      %3585 = vst [vmem:[#allocation1] ss:$4 sm:$0xff] %v3541
      %3586 = vst [vmem:[%s3561] ss:$4 sm:$0xff] %v3503
      %3587 = vst [vmem:[%s3563] ss:$4 sm:$0xff] %v3542
      %3588 = vst [vmem:[%s3565] ss:$4 sm:$0xff] %v3543
      %3589 = vst [vmem:[%s3567] ss:$4 sm:$0xff] %v3544
      %v3590 = vld.sshfl [vmem:[#allocation1] sm:$0xff pattern:$0x73625140]
      %v3591 = vld.sshfl [vmem:[#allocation1 + $0x20] sm:$0xff pattern:$0x73625140]
      %3592 = vst [vmem:[#allocation1] ss:$4 sm:$0xff] %v3506
      %3593 = vst [vmem:[%s3561] ss:$4 sm:$0xff] %v3545
      %3594 = vst [vmem:[%s3563] ss:$4 sm:$0xff] %v3546
      %3595 = vst [vmem:[%s3565] ss:$4 sm:$0xff] %v3547
      %3596 = vst [vmem:[%s3567] ss:$4 sm:$0xff] %v3509
      %v3597 = vld.sshfl [vmem:[#allocation1] sm:$0xff pattern:$0x73625140]
      %v3598 = vld.sshfl [vmem:[#allocation1 + $0x20] sm:$0xff pattern:$0x73625140]
      %3599 = vst [vmem:[#allocation1] ss:$4 sm:$0xff] %v3548
      %3600 = vst [vmem:[%s3561] ss:$4 sm:$0xff] %v3549
      %3601 = vst [vmem:[%s3563] ss:$4 sm:$0xff] %v3550
      %3602 = vst [vmem:[%s3565] ss:$4 sm:$0xff] %v3512
      %3603 = vst [vmem:[%s3567] ss:$4 sm:$0xff] %v3551
      %v3604 = vld.sshfl [vmem:[#allocation1] sm:$0xff pattern:$0x73625140]
      %v3605 = vld.sshfl [vmem:[#allocation1 + $0x20] sm:$0xff pattern:$0x73625140]
      %3606 = vst [vmem:[#allocation1] ss:$4 sm:$0xff] %v3552
      %3607 = vst [vmem:[%s3561] ss:$4 sm:$0xff] %v3553
      %3608 = vst [vmem:[%s3563] ss:$4 sm:$0xff] %v3515
      %3609 = vst [vmem:[%s3565] ss:$4 sm:$0xff] %v3554
      %3610 = vst [vmem:[%s3567] ss:$4 sm:$0xff] %v3555
      %v3611 = vld.sshfl [vmem:[#allocation1] sm:$0xff pattern:$0x73625140]
      %v3612 = vld.sshfl [vmem:[#allocation1 + $0x20] sm:$0xff pattern:$0x73625140]
      %3613 = vst [vmem:[#allocation1] ss:$4 sm:$0xff] %v3556
      %3614 = vst [vmem:[%s3561] ss:$4 sm:$0xff] %v3518
      %3615 = vst [vmem:[%s3563] ss:$4 sm:$0xff] %v3557
      %3616 = vst [vmem:[%s3565] ss:$4 sm:$0xff] %v3558
      %3617 = vst [vmem:[%s3567] ss:$4 sm:$0xff] %v3559
      %v3618 = vld.sshfl [vmem:[#allocation1] sm:$0xff pattern:$0x73625140]
      %v3619 = vld.sshfl [vmem:[#allocation1 + $0x20] sm:$0xff pattern:$0x73625140]
      %3636 = vst.msk [vmem:[%s394] sm:$0xff] %vm1675, %v3569
      %vm3637 = vcmask 254976
      %3638 = vst.msk [vmem:[%s394 + $0x8] sm:$0x3] %vm3637, %v3570
      %3639 = vst.msk [vmem:[%s394 + $0x10] sm:$0xff] %vm1675, %v3576
      %3640 = vst.msk [vmem:[%s394 + $0x18] sm:$0x3] %vm3637, %v3577
      %3641 = vst.msk [vmem:[%s394 + $0x20] sm:$0xff] %vm1675, %v3583
      %3642 = vst.msk [vmem:[%s394 + $0x28] sm:$0x3] %vm3637, %v3584
      %3643 = vst.msk [vmem:[%s394 + $0x30] sm:$0xff] %vm1675, %v3590
      %3644 = vst.msk [vmem:[%s394 + $0x38] sm:$0x3] %vm3637, %v3591
      %3645 = vst.msk [vmem:[%s394 + $0x40] sm:$0xff] %vm1675, %v3597
      %3646 = vst.msk [vmem:[%s394 + $0x48] sm:$0x3] %vm3637, %v3598
      %3647 = vst.msk [vmem:[%s394 + $0x50] sm:$0xff] %vm1675, %v3604
      %3648 = vst.msk [vmem:[%s394 + $0x58] sm:$0x3] %vm3637, %v3605
      %3649 = vst.msk [vmem:[%s394 + $0x60] sm:$0xff] %vm1675, %v3611
      %3650 = vst.msk [vmem:[%s394 + $0x68] sm:$0x3] %vm3637, %v3612
      %3651 = vst.msk [vmem:[%s394 + $0x70] sm:$0xff] %vm1675, %v3618
      %3652 = vst.msk [vmem:[%s394 + $0x78] sm:$0x3] %vm3637, %v3619
      %p3653 = scmp.lt.s32.totalorder %s23, 1
      %s3654 = scalar_select %p3653, %s23, 1
      %s3655 = smul.addr %s3654, 16
      %s3656 = smul.addr %s3655, 8
      %s3657 = scalar_lea.vmem %s10, %s3656
      %p3658 = scmp.lt.s32.totalorder %s23, 1
      %s3659 = scalar_select %p3658, %s23, 1
      %s3660 = smul.addr %s3659, 16
      %s3661 = smul.addr %s3660, 8
      %s3662 = scalar_lea.vmem %s11, %s3661
      // Predicated region
      $region61: #{st_block_forward.3} parent=59 // pred_check
        %p3663 = pneg %p256
      $region62: #{st_block_forward.3} parent=59 // pred_check_branch
        %3665 = sbr.rel (%p3663) target = $region64
      $region63: #{st_block_forward.3} parent=59 // pred_region
        _
      $region64: #{st_block_forward.3} parent=59 // pred_fallthru
        _
      // Predicated region
      $region65: #{st_block_forward.3} parent=59 // pred_check
        %p3666 = pneg %p282
      $region66: #{st_block_forward.3} parent=59 // pred_check_branch
        %3668 = sbr.rel (%p3666) target = $region68
      $region67: #{st_block_forward.3} parent=59 // pred_region
        _
      $region68: #{st_block_forward.3} parent=59 // pred_fallthru
        _
    $region60: #{st_block_forward.3} parent=5 // pred_fallthru
      _
    %p3669 = scmp.le.s32.totalorder 2, %s18
    // Predicated region
    $region69: #{st_block_forward.3} parent=5 // pred_check
      %p3670 = pneg %p3669
    $region70: #{st_block_forward.3} parent=5 // pred_check_branch
      %3672 = sbr.rel (%p3670) target = $region72
    $region71: #{st_block_forward.3} parent=5 // pred_region
      %s3673 = ssub.s32 %s18, 2
      // Predicated region
      $region73: #{st_block_forward.3} parent=71 // pred_check
        %p3674 = pneg %p262
      $region74: #{st_block_forward.3} parent=71 // pred_check_branch
        %3676 = sbr.rel (%p3674) target = $region76
      $region75: #{st_block_forward.3} parent=71 // pred_region
        %p3677 = scmp.lt.s32.totalorder %s24, 1
        %s3678 = scalar_select %p3677, %s24, 1
        %s3679 = smul.addr %s3678, 16
        %s3680 = smul.addr %s3679, 8
        %s3681 = scalar_lea.vmem %s10, %s3680
      $region76: #{st_block_forward.3} parent=71 // pred_fallthru
        _
      // Predicated region
      $region77: #{st_block_forward.3} parent=71 // pred_check
        %p3682 = pneg %p288
      $region78: #{st_block_forward.3} parent=71 // pred_check_branch
        %3684 = sbr.rel (%p3682) target = $region80
      $region79: #{st_block_forward.3} parent=71 // pred_region
        %p3685 = scmp.lt.s32.totalorder %s24, 1
        %s3686 = scalar_select %p3685, %s24, 1
        %s3687 = smul.addr %s3686, 16
        %s3688 = smul.addr %s3687, 8
        %s3689 = scalar_lea.vmem %s11, %s3688
      $region80: #{st_block_forward.3} parent=71 // pred_fallthru
        _
    $region72: #{st_block_forward.3} parent=5 // pred_fallthru
      _
  $region6: #{st_block_forward.3} parent=0 // loop_footer
    %s22 = sadd.s32 1, %s18
  $region7: #{st_block_forward.3} parent=0 // loop_footer_branch
    %17 = sbr.rel target = $region3
  $region8: #{st_block_forward.3} parent=0 // loop_exit
    _

</llo_original>
